<compile_context>
chip_gen: v7x
topology: tpu7x:2x2x1
jax: 0.10.0
libtpu: 0.0.40
codegen_flags: <defaults>
</compile_context>

<pallas_src>
import functools

import jax
import jax.numpy as jnp
from jax.experimental import pallas as pl
from jax.experimental.pallas import tpu as pltpu


def _mdn_kernel(
    x_ref,
    w1, b1, w2, b2, w3, b3, w4, b4, w5, b5, w6, b6,
    wh, bh,
    out_ref,
    *, pi_start, pi_end,
):
    h = x_ref[...]  # (TB, in_dim) f32

    # shared_layers: Linear + Tanh x6.  bf16 operands on the MXU, f32 accum;
    # bias add + tanh in f32 (EUP handles tanh, VPU the add).
    def lin_tanh(h, w_ref, b_ref):
        y = jnp.dot(h.astype(jnp.bfloat16), w_ref[...],
                    preferred_element_type=jnp.float32)
        return jnp.tanh(y + b_ref[...])

    h = lin_tanh(h, w1, b1)
    h = lin_tanh(h, w2, b2)
    h = lin_tanh(h, w3, b3)
    h = lin_tanh(h, w4, b4)
    h = lin_tanh(h, w5, b5)
    h = lin_tanh(h, w6, b6)

    # Fused heads: [mu | off-diag | diag | pi] zero-padded to 128 lanes.
    # One lane-dense matmul + one unmasked (TB, 128) store instead of four
    # sub-128-lane matmuls / masked stores.
    y = jnp.dot(h.astype(jnp.bfloat16), wh[...],
                preferred_element_type=jnp.float32) + bh[...]

    # pis = softmax(pi_logits) on the pi lane slice only.
    # PyTorch subtracts the global scalar max before softmax; softmax is
    # shift-invariant per row, so the (more stable) per-row max is identical.
    lane = jax.lax.broadcasted_iota(jnp.int32, y.shape, dimension=1)
    pi_mask = (lane >= pi_start) & (lane < pi_end)
    masked = jnp.where(pi_mask, y, jnp.float32(-1e30))
    m = jnp.max(masked, axis=-1, keepdims=True)
    e = jnp.exp(masked - m)                       # non-pi lanes underflow to 0
    s = jnp.sum(e, axis=-1, keepdims=True)
    pis = e * pl.reciprocal(s, approx=True)
    out_ref[...] = jnp.where(pi_mask, pis, y)


def mdn_forward(x, params, *, tb=128):
    """x: (B, input_dim) f32.  params: flat list of (w, b) arrays (see init)."""
    B, in_dim = x.shape
    trunk = params[:12]
    wmu, bmu, wod, bod, wsd, bsd, wpi, bpi = params[12:]

    c_mu, c_od, c_sd, c_pi = (wmu.shape[1], wod.shape[1],
                              wsd.shape[1], wpi.shape[1])
    C = c_mu + c_od + c_sd + c_pi
    C_pad = ((C + 127) // 128) * 128
    pi_start, pi_end = c_mu + c_od + c_sd, C

    # Fuse + zero-pad the four heads into one lane-dense matmul.
    wh = jnp.pad(jnp.concatenate([wmu, wod, wsd, wpi], axis=1),
                 ((0, 0), (0, C_pad - C)))
    bh = jnp.pad(jnp.concatenate([bmu, bod, bsd, bpi], axis=1),
                 ((0, 0), (0, C_pad - C)))

    # bf16 matmul operands (halves weight VMEM footprint to ~6 MiB); biases f32.
    trunk = [p.astype(jnp.bfloat16) if i % 2 == 0 else p
             for i, p in enumerate(trunk)]
    wh = wh.astype(jnp.bfloat16)
    weights = trunk + [wh, bh]

    # Adaptive batch tile: multiple of 8 (sublane), capped at `tb`.  Small
    # batches (e.g. B=8) then stream only 8 LHS rows through the MXU instead
    # of 128 zero-padded ones.
    tb = min(tb, max(8, ((B + 7) // 8) * 8))
    nb = pl.cdiv(B, tb)
    B_pad = nb * tb
    if B_pad != B:
        x = jnp.pad(x, ((0, B_pad - B), (0, 0)))

    def const_spec(arr):
        # Weights: full-array block, same block every grid step -> resident,
        # no re-DMA across the batch grid.
        return pl.BlockSpec(arr.shape, lambda i: (0, 0))

    in_specs = ([pl.BlockSpec((tb, in_dim), lambda i: (i, 0))]
                + [const_spec(a) for a in weights])
    out_spec = pl.BlockSpec((tb, C_pad), lambda i: (i, 0))

    kernel = functools.partial(_mdn_kernel, pi_start=pi_start, pi_end=pi_end)

    out = pl.pallas_call(
        kernel,
        out_shape=jax.ShapeDtypeStruct((B_pad, C_pad), jnp.float32),
        grid=(nb,),
        in_specs=in_specs,
        out_specs=out_spec,
        compiler_params=pltpu.CompilerParams(
            dimension_semantics=("parallel",),
            vmem_limit_bytes=32 * 1024 * 1024,
        ),
    )(x, *weights)

    # Output is already the concatenation [mus | off-diag | diag | pis];
    # just strip batch/lane padding.
    return out[:B, :C]


def init_params(key, input_dim, output_dim, num_gaussians):
    """PyTorch-style U[-1/sqrt(fan_in), 1/sqrt(fan_in)] init.

    Weights returned as (in_features, out_features); biases as (1, out)."""
    dims = [input_dim, 64, 128, 256, 512, 1024, 2048]
    head_dims = [
        output_dim * num_gaussians,                                   # mu
        int(num_gaussians * (output_dim * (output_dim - 1)) / 2),     # off-diag
        num_gaussians * output_dim,                                   # diag
        num_gaussians,                                                # pi
    ]
    params = []
    shapes = list(zip(dims[:-1], dims[1:])) + [(2048, h) for h in head_dims]
    keys = jax.random.split(key, 2 * len(shapes))
    for i, (fan_in, fan_out) in enumerate(shapes):
        bound = 1.0 / (fan_in ** 0.5)
        w = jax.random.uniform(keys[2 * i], (fan_in, fan_out),
                               minval=-bound, maxval=bound, dtype=jnp.float32)
        b = jax.random.uniform(keys[2 * i + 1], (1, fan_out),
                               minval=-bound, maxval=bound, dtype=jnp.float32)
        params += [w, b]
    return params


def reference_forward(x, params):
    """Pure-JAX f32 reference of the PyTorch forward."""
    h = x
    for i in range(6):
        h = jnp.tanh(h @ params[2 * i] + params[2 * i + 1])
    mus = h @ params[12] + params[13]
    od = h @ params[14] + params[15]
    sd = h @ params[16] + params[17]
    logits = h @ params[18] + params[19]
    logits = logits - jnp.max(logits)  # global scalar max, as in PyTorch
    pis = jax.nn.softmax(logits, axis=1)
    return jnp.concatenate([mus, od, sd, pis], axis=1)


if __name__ == "__main__":
    input_dim = 16
    output_dim = 3
    num_gaussians = 5
    batch = 8

    key = jax.random.PRNGKey(0)
    kx, kp = jax.random.split(key)
    x = jax.random.normal(kx, (batch, input_dim), dtype=jnp.float32)
    params = init_params(kp, input_dim, output_dim, num_gaussians)

    out = jax.block_until_ready(mdn_forward(x, params))

    ref = reference_forward(x, params)
    expected_cols = (output_dim * num_gaussians
                     + int(num_gaussians * (output_dim * (output_dim - 1)) / 2)
                     + num_gaussians * output_dim
                     + num_gaussians)
    assert out.shape == (batch, expected_cols), out.shape
    # bf16 matmul operands (f32 accumulation) -> looser tolerance vs f32 ref.
    assert jnp.allclose(out, ref, atol=5e-2, rtol=5e-2), \
        float(jnp.max(jnp.abs(out - ref)))

    print("KERNEL_OK")
</pallas_src>

<mosaic_0001>
module attributes {stable_mosaic.version = 11 : i64} {
  func.func @_mdn_kernel(%arg0: i32, %arg1: memref<8x16xf32, #tpu.memory_space<vmem>>, %arg2: memref<16x64xbf16, #tpu.memory_space<vmem>>, %arg3: memref<1x64xf32, #tpu.memory_space<vmem>>, %arg4: memref<64x128xbf16, #tpu.memory_space<vmem>>, %arg5: memref<1x128xf32, #tpu.memory_space<vmem>>, %arg6: memref<128x256xbf16, #tpu.memory_space<vmem>>, %arg7: memref<1x256xf32, #tpu.memory_space<vmem>>, %arg8: memref<256x512xbf16, #tpu.memory_space<vmem>>, %arg9: memref<1x512xf32, #tpu.memory_space<vmem>>, %arg10: memref<512x1024xbf16, #tpu.memory_space<vmem>>, %arg11: memref<1x1024xf32, #tpu.memory_space<vmem>>, %arg12: memref<1024x2048xbf16, #tpu.memory_space<vmem>>, %arg13: memref<1x2048xf32, #tpu.memory_space<vmem>>, %arg14: memref<2048x128xbf16, #tpu.memory_space<vmem>>, %arg15: memref<1x128xf32, #tpu.memory_space<vmem>>, %arg16: memref<8x128xf32, #tpu.memory_space<vmem>>) attributes {dimension_semantics = [#tpu.dimension_semantics<parallel>], iteration_bounds = array<i64: 1>, scalar_prefetch = 0 : i64, scratch_operands = 0 : i64, tpu.core_type = #tpu.core_type<tc>, window_params = [{transform_indices = @transform_0, window_bounds = array<i64: 8, 16>}, {pipeline_mode = #tpu.pipeline_mode<synchronous>, transform_indices = @transform_1, window_bounds = array<i64: 16, 64>}, {pipeline_mode = #tpu.pipeline_mode<synchronous>, transform_indices = @transform_2, window_bounds = array<i64: 1, 64>}, {pipeline_mode = #tpu.pipeline_mode<synchronous>, transform_indices = @transform_3, window_bounds = array<i64: 64, 128>}, {pipeline_mode = #tpu.pipeline_mode<synchronous>, transform_indices = @transform_4, window_bounds = array<i64: 1, 128>}, {pipeline_mode = #tpu.pipeline_mode<synchronous>, transform_indices = @transform_5, window_bounds = array<i64: 128, 256>}, {pipeline_mode = #tpu.pipeline_mode<synchronous>, transform_indices = @transform_6, window_bounds = array<i64: 1, 256>}, {pipeline_mode = #tpu.pipeline_mode<synchronous>, transform_indices = @transform_7, window_bounds = array<i64: 256, 512>}, {pipeline_mode = #tpu.pipeline_mode<synchronous>, transform_indices = @transform_8, window_bounds = array<i64: 1, 512>}, {pipeline_mode = #tpu.pipeline_mode<synchronous>, transform_indices = @transform_9, window_bounds = array<i64: 512, 1024>}, {pipeline_mode = #tpu.pipeline_mode<synchronous>, transform_indices = @transform_10, window_bounds = array<i64: 1, 1024>}, {pipeline_mode = #tpu.pipeline_mode<synchronous>, transform_indices = @transform_11, window_bounds = array<i64: 1024, 2048>}, {pipeline_mode = #tpu.pipeline_mode<synchronous>, transform_indices = @transform_12, window_bounds = array<i64: 1, 2048>}, {pipeline_mode = #tpu.pipeline_mode<synchronous>, transform_indices = @transform_13, window_bounds = array<i64: 2048, 128>}, {pipeline_mode = #tpu.pipeline_mode<synchronous>, transform_indices = @transform_14, window_bounds = array<i64: 1, 128>}, {transform_indices = @transform_15, window_bounds = array<i64: 8, 128>}]} {
    %c0 = arith.constant 0 : index
    %c0_0 = arith.constant 0 : index
    %0 = vector.load %arg1[%c0, %c0_0] : memref<8x16xf32, #tpu.memory_space<vmem>>, vector<8x16xf32>
    %1 = arith.truncf %0 : vector<8x16xf32> to vector<8x16xbf16>
    %c0_1 = arith.constant 0 : index
    %c0_2 = arith.constant 0 : index
    %2 = vector.load %arg2[%c0_1, %c0_2] : memref<16x64xbf16, #tpu.memory_space<vmem>>, vector<16x64xbf16>
    %cst = arith.constant dense<0.000000e+00> : vector<8x64xf32>
    %3 = tpu.matmul %1, %2, %cst {dimension_numbers = #tpu.dot_dimension_numbers<[1], [0], [0], [1], [0, 0, 1, 1], [], []>} : vector<8x16xbf16>, vector<16x64xbf16>, vector<8x64xf32> -> vector<8x64xf32>
    %c0_3 = arith.constant 0 : index
    %c0_4 = arith.constant 0 : index
    %4 = vector.load %arg3[%c0_3, %c0_4] : memref<1x64xf32, #tpu.memory_space<vmem>>, vector<1x64xf32>
    %5 = vector.broadcast %4 : vector<1x64xf32> to vector<8x64xf32>
    %6 = arith.addf %3, %5 : vector<8x64xf32>
    %7 = math.tanh %6 : vector<8x64xf32>
    %8 = arith.truncf %7 : vector<8x64xf32> to vector<8x64xbf16>
    %c0_5 = arith.constant 0 : index
    %c0_6 = arith.constant 0 : index
    %9 = vector.load %arg4[%c0_5, %c0_6] : memref<64x128xbf16, #tpu.memory_space<vmem>>, vector<64x128xbf16>
    %cst_7 = arith.constant dense<0.000000e+00> : vector<8x128xf32>
    %10 = tpu.matmul %8, %9, %cst_7 {dimension_numbers = #tpu.dot_dimension_numbers<[1], [0], [0], [1], [0, 0, 1, 1], [], []>} : vector<8x64xbf16>, vector<64x128xbf16>, vector<8x128xf32> -> vector<8x128xf32>
    %c0_8 = arith.constant 0 : index
    %c0_9 = arith.constant 0 : index
    %11 = vector.load %arg5[%c0_8, %c0_9] : memref<1x128xf32, #tpu.memory_space<vmem>>, vector<1x128xf32>
    %12 = vector.broadcast %11 : vector<1x128xf32> to vector<8x128xf32>
    %13 = arith.addf %10, %12 : vector<8x128xf32>
    %14 = math.tanh %13 : vector<8x128xf32>
    %15 = arith.truncf %14 : vector<8x128xf32> to vector<8x128xbf16>
    %c0_10 = arith.constant 0 : index
    %c0_11 = arith.constant 0 : index
    %16 = vector.load %arg6[%c0_10, %c0_11] : memref<128x256xbf16, #tpu.memory_space<vmem>>, vector<128x256xbf16>
    %cst_12 = arith.constant dense<0.000000e+00> : vector<8x256xf32>
    %17 = tpu.matmul %15, %16, %cst_12 {dimension_numbers = #tpu.dot_dimension_numbers<[1], [0], [0], [1], [0, 0, 1, 1], [], []>} : vector<8x128xbf16>, vector<128x256xbf16>, vector<8x256xf32> -> vector<8x256xf32>
    %c0_13 = arith.constant 0 : index
    %c0_14 = arith.constant 0 : index
    %18 = vector.load %arg7[%c0_13, %c0_14] : memref<1x256xf32, #tpu.memory_space<vmem>>, vector<1x256xf32>
    %19 = vector.broadcast %18 : vector<1x256xf32> to vector<8x256xf32>
    %20 = arith.addf %17, %19 : vector<8x256xf32>
    %21 = math.tanh %20 : vector<8x256xf32>
    %22 = arith.truncf %21 : vector<8x256xf32> to vector<8x256xbf16>
    %c0_15 = arith.constant 0 : index
    %c0_16 = arith.constant 0 : index
    %23 = vector.load %arg8[%c0_15, %c0_16] : memref<256x512xbf16, #tpu.memory_space<vmem>>, vector<256x512xbf16>
    %cst_17 = arith.constant dense<0.000000e+00> : vector<8x512xf32>
    %24 = tpu.matmul %22, %23, %cst_17 {dimension_numbers = #tpu.dot_dimension_numbers<[1], [0], [0], [1], [0, 0, 1, 1], [], []>} : vector<8x256xbf16>, vector<256x512xbf16>, vector<8x512xf32> -> vector<8x512xf32>
    %c0_18 = arith.constant 0 : index
    %c0_19 = arith.constant 0 : index
    %25 = vector.load %arg9[%c0_18, %c0_19] : memref<1x512xf32, #tpu.memory_space<vmem>>, vector<1x512xf32>
    %26 = vector.broadcast %25 : vector<1x512xf32> to vector<8x512xf32>
    %27 = arith.addf %24, %26 : vector<8x512xf32>
    %28 = math.tanh %27 : vector<8x512xf32>
    %29 = arith.truncf %28 : vector<8x512xf32> to vector<8x512xbf16>
    %c0_20 = arith.constant 0 : index
    %c0_21 = arith.constant 0 : index
    %30 = vector.load %arg10[%c0_20, %c0_21] : memref<512x1024xbf16, #tpu.memory_space<vmem>>, vector<512x1024xbf16>
    %cst_22 = arith.constant dense<0.000000e+00> : vector<8x1024xf32>
    %31 = tpu.matmul %29, %30, %cst_22 {dimension_numbers = #tpu.dot_dimension_numbers<[1], [0], [0], [1], [0, 0, 1, 1], [], []>} : vector<8x512xbf16>, vector<512x1024xbf16>, vector<8x1024xf32> -> vector<8x1024xf32>
    %c0_23 = arith.constant 0 : index
    %c0_24 = arith.constant 0 : index
    %32 = vector.load %arg11[%c0_23, %c0_24] : memref<1x1024xf32, #tpu.memory_space<vmem>>, vector<1x1024xf32>
    %33 = vector.broadcast %32 : vector<1x1024xf32> to vector<8x1024xf32>
    %34 = arith.addf %31, %33 : vector<8x1024xf32>
    %35 = math.tanh %34 : vector<8x1024xf32>
    %36 = arith.truncf %35 : vector<8x1024xf32> to vector<8x1024xbf16>
    %c0_25 = arith.constant 0 : index
    %c0_26 = arith.constant 0 : index
    %37 = vector.load %arg12[%c0_25, %c0_26] : memref<1024x2048xbf16, #tpu.memory_space<vmem>>, vector<1024x2048xbf16>
    %cst_27 = arith.constant dense<0.000000e+00> : vector<8x2048xf32>
    %38 = tpu.matmul %36, %37, %cst_27 {dimension_numbers = #tpu.dot_dimension_numbers<[1], [0], [0], [1], [0, 0, 1, 1], [], []>} : vector<8x1024xbf16>, vector<1024x2048xbf16>, vector<8x2048xf32> -> vector<8x2048xf32>
    %c0_28 = arith.constant 0 : index
    %c0_29 = arith.constant 0 : index
    %39 = vector.load %arg13[%c0_28, %c0_29] : memref<1x2048xf32, #tpu.memory_space<vmem>>, vector<1x2048xf32>
    %40 = vector.broadcast %39 : vector<1x2048xf32> to vector<8x2048xf32>
    %41 = arith.addf %38, %40 : vector<8x2048xf32>
    %42 = math.tanh %41 : vector<8x2048xf32>
    %43 = arith.truncf %42 : vector<8x2048xf32> to vector<8x2048xbf16>
    %c0_30 = arith.constant 0 : index
    %c0_31 = arith.constant 0 : index
    %44 = vector.load %arg14[%c0_30, %c0_31] : memref<2048x128xbf16, #tpu.memory_space<vmem>>, vector<2048x128xbf16>
    %cst_32 = arith.constant dense<0.000000e+00> : vector<8x128xf32>
    %45 = tpu.matmul %43, %44, %cst_32 {dimension_numbers = #tpu.dot_dimension_numbers<[1], [0], [0], [1], [0, 0, 1, 1], [], []>} : vector<8x2048xbf16>, vector<2048x128xbf16>, vector<8x128xf32> -> vector<8x128xf32>
    %c0_33 = arith.constant 0 : index
    %c0_34 = arith.constant 0 : index
    %46 = vector.load %arg15[%c0_33, %c0_34] : memref<1x128xf32, #tpu.memory_space<vmem>>, vector<1x128xf32>
    %47 = vector.broadcast %46 : vector<1x128xf32> to vector<8x128xf32>
    %48 = arith.addf %45, %47 : vector<8x128xf32>
    %49 = tpu.iota {dimensions = array<i32: 1>} : vector<8x128xi32>
    %c45_i32 = arith.constant 45 : i32
    %50 = vector.broadcast %c45_i32 : i32 to vector<8x128xi32>
    %51 = arith.cmpi sge, %49, %50 : vector<8x128xi32>
    %c50_i32 = arith.constant 50 : i32
    %52 = vector.broadcast %c50_i32 : i32 to vector<8x128xi32>
    %53 = arith.cmpi slt, %49, %52 : vector<8x128xi32>
    %54 = arith.andi %51, %53 : vector<8x128xi1>
    %cst_35 = arith.constant -1.000000e+30 : f32
    %55 = vector.broadcast %cst_35 : f32 to vector<8x128xf32>
    %56 = arith.select %54, %48, %55 : vector<8x128xi1>, vector<8x128xf32>
    %cst_36 = arith.constant dense<0xFF800000> : vector<8xf32>
    %57 = vector.multi_reduction <maximumf>, %56, %cst_36 [1] : vector<8x128xf32> to vector<8xf32>
    %58 = vector.shape_cast %57 : vector<8xf32> to vector<8x1xf32>
    %59 = vector.broadcast %58 : vector<8x1xf32> to vector<8x128xf32>
    %60 = arith.subf %56, %59 : vector<8x128xf32>
    %61 = math.exp %60 : vector<8x128xf32>
    %cst_37 = arith.constant dense<0.000000e+00> : vector<8xf32>
    %62 = vector.multi_reduction <add>, %61, %cst_37 [1] : vector<8x128xf32> to vector<8xf32>
    %63 = vector.shape_cast %62 : vector<8xf32> to vector<8x1xf32>
    %64 = tpu.reciprocal %63 {approx = true} : vector<8x1xf32> -> vector<8x1xf32>
    %65 = vector.broadcast %64 : vector<8x1xf32> to vector<8x128xf32>
    %66 = arith.mulf %61, %65 : vector<8x128xf32>
    %67 = arith.select %54, %66, %48 : vector<8x128xi1>, vector<8x128xf32>
    %c0_38 = arith.constant 0 : index
    %c0_39 = arith.constant 0 : index
    %68 = vector.load %arg16[%c0_38, %c0_39] : memref<8x128xf32, #tpu.memory_space<vmem>>, vector<8x128xf32>
    tpu.vector_store %arg16[%c0_38, %c0_39], %67 {strides = array<i32>} : memref<8x128xf32, #tpu.memory_space<vmem>>, vector<8x128xf32>,
    return
  }
  func.func @transform_0(%arg0: i32) -> (i32, i32) {
    %c0_i32 = arith.constant 0 : i32
    %c0_i32_0 = arith.constant 0 : i32
    return %arg0, %c0_i32 : i32, i32
  }
  func.func @transform_1(%arg0: i32) -> (i32, i32) {
    %c0_i32 = arith.constant 0 : i32
    %c0_i32_0 = arith.constant 0 : i32
    %c0_i32_1 = arith.constant 0 : i32
    return %c0_i32, %c0_i32_0 : i32, i32
  }
  func.func @transform_2(%arg0: i32) -> (i32, i32) {
    %c0_i32 = arith.constant 0 : i32
    %c0_i32_0 = arith.constant 0 : i32
    %c0_i32_1 = arith.constant 0 : i32
    return %c0_i32, %c0_i32_0 : i32, i32
  }
  func.func @transform_3(%arg0: i32) -> (i32, i32) {
    %c0_i32 = arith.constant 0 : i32
    %c0_i32_0 = arith.constant 0 : i32
    %c0_i32_1 = arith.constant 0 : i32
    return %c0_i32, %c0_i32_0 : i32, i32
  }
  func.func @transform_4(%arg0: i32) -> (i32, i32) {
    %c0_i32 = arith.constant 0 : i32
    %c0_i32_0 = arith.constant 0 : i32
    %c0_i32_1 = arith.constant 0 : i32
    return %c0_i32, %c0_i32_0 : i32, i32
  }
  func.func @transform_5(%arg0: i32) -> (i32, i32) {
    %c0_i32 = arith.constant 0 : i32
    %c0_i32_0 = arith.constant 0 : i32
    %c0_i32_1 = arith.constant 0 : i32
    return %c0_i32, %c0_i32_0 : i32, i32
  }
  func.func @transform_6(%arg0: i32) -> (i32, i32) {
    %c0_i32 = arith.constant 0 : i32
    %c0_i32_0 = arith.constant 0 : i32
    %c0_i32_1 = arith.constant 0 : i32
    return %c0_i32, %c0_i32_0 : i32, i32
  }
  func.func @transform_7(%arg0: i32) -> (i32, i32) {
    %c0_i32 = arith.constant 0 : i32
    %c0_i32_0 = arith.constant 0 : i32
    %c0_i32_1 = arith.constant 0 : i32
    return %c0_i32, %c0_i32_0 : i32, i32
  }
  func.func @transform_8(%arg0: i32) -> (i32, i32) {
    %c0_i32 = arith.constant 0 : i32
    %c0_i32_0 = arith.constant 0 : i32
    %c0_i32_1 = arith.constant 0 : i32
    return %c0_i32, %c0_i32_0 : i32, i32
  }
  func.func @transform_9(%arg0: i32) -> (i32, i32) {
    %c0_i32 = arith.constant 0 : i32
    %c0_i32_0 = arith.constant 0 : i32
    %c0_i32_1 = arith.constant 0 : i32
    return %c0_i32, %c0_i32_0 : i32, i32
  }
  func.func @transform_10(%arg0: i32) -> (i32, i32) {
    %c0_i32 = arith.constant 0 : i32
    %c0_i32_0 = arith.constant 0 : i32
    %c0_i32_1 = arith.constant 0 : i32
    return %c0_i32, %c0_i32_0 : i32, i32
  }
  func.func @transform_11(%arg0: i32) -> (i32, i32) {
    %c0_i32 = arith.constant 0 : i32
    %c0_i32_0 = arith.constant 0 : i32
    %c0_i32_1 = arith.constant 0 : i32
    return %c0_i32, %c0_i32_0 : i32, i32
  }
  func.func @transform_12(%arg0: i32) -> (i32, i32) {
    %c0_i32 = arith.constant 0 : i32
    %c0_i32_0 = arith.constant 0 : i32
    %c0_i32_1 = arith.constant 0 : i32
    return %c0_i32, %c0_i32_0 : i32, i32
  }
  func.func @transform_13(%arg0: i32) -> (i32, i32) {
    %c0_i32 = arith.constant 0 : i32
    %c0_i32_0 = arith.constant 0 : i32
    %c0_i32_1 = arith.constant 0 : i32
    return %c0_i32, %c0_i32_0 : i32, i32
  }
  func.func @transform_14(%arg0: i32) -> (i32, i32) {
    %c0_i32 = arith.constant 0 : i32
    %c0_i32_0 = arith.constant 0 : i32
    %c0_i32_1 = arith.constant 0 : i32
    return %c0_i32, %c0_i32_0 : i32, i32
  }
  func.func @transform_15(%arg0: i32) -> (i32, i32) {
    %c0_i32 = arith.constant 0 : i32
    %c0_i32_0 = arith.constant 0 : i32
    return %arg0, %c0_i32 : i32, i32
  }
}

</mosaic_0001>

<llo_original>
// kernel: tpu_custom_call.1
$region0: #{tpu_custom_call.1}
  #allocation0 [shape = 'u32[]', space=smem, size = 0x4, offset = 0x4, fixed_abs, tag = 'smem constant byte address 0x4 - core index']
  #allocation1 [shape = 'u32[144,128]{1,0:T(1,128)}', space=vmem, size = 0x12000, scoped, tag = 'internal scratch']
  %s0 = inlined_call_operand.hbm [shape: f32[8,16], index: 0, kind: input, shape index: {}]
  %s1 = inlined_call_operand.hbm [shape: bf16[16,64], index: 1, kind: input, shape index: {}]
  %s2 = inlined_call_operand.hbm [shape: f32[1,64], index: 2, kind: input, shape index: {}]
  %s3 = inlined_call_operand.hbm [shape: bf16[64,128], index: 3, kind: input, shape index: {}]
  %s4 = inlined_call_operand.hbm [shape: f32[1,128], index: 4, kind: input, shape index: {}]
  %s5 = inlined_call_operand.hbm [shape: bf16[128,256], index: 5, kind: input, shape index: {}]
  %s6 = inlined_call_operand.hbm [shape: f32[1,256], index: 6, kind: input, shape index: {}]
  %s7 = inlined_call_operand.hbm [shape: bf16[256,512], index: 7, kind: input, shape index: {}]
  %s8 = inlined_call_operand.hbm [shape: f32[1,512], index: 8, kind: input, shape index: {}]
  %s9 = inlined_call_operand.hbm [shape: bf16[512,1024], index: 9, kind: input, shape index: {}]
  %s10 = inlined_call_operand.hbm [shape: f32[1,1024], index: 10, kind: input, shape index: {}]
  %s11 = inlined_call_operand.hbm [shape: bf16[1024,2048], index: 11, kind: input, shape index: {}]
  %s12 = inlined_call_operand.hbm [shape: f32[1,2048], index: 12, kind: input, shape index: {}]
  %s13 = inlined_call_operand.hbm [shape: bf16[2048,128], index: 13, kind: input, shape index: {}]
  %s14 = inlined_call_operand.hbm [shape: f32[1,128], index: 14, kind: input, shape index: {}]
  %s15 = inlined_call_operand.hbm [shape: f32[8,128], index: 15, kind: output, shape index: {}]
  %s16 = sld [smem:[#allocation0]]
  $region130: #{tpu_custom_call.1} parent=0
    _
  %s18 = ssub.s32 1, %s16
  %s19 = scalar_select 0, %s18, %s16
  $region1: #{tpu_custom_call.1} parent=0
    #allocation2 [shape = 'u8[4096]{0}', space=vmem, size = 0x1000, scoped, tag = 'input window, operand 0, single buffered']
    #allocation3 [shape = 's32[1]{0}', space=sflag, size = 0x4, scoped, tag = 'scoped memory for tpu_custom_call.1']
    #allocation4 [shape = 's32[1]{0}', space=sflag, size = 0x4, scoped, tag = 'scoped memory for tpu_custom_call.1']
    #allocation5 [shape = 'u8[4096]{0}', space=vmem, size = 0x1000, scoped, tag = 'input window, operand 1, single buffered']
    #allocation6 [shape = 's32[1]{0}', space=sflag, size = 0x4, scoped, tag = 'scoped memory for tpu_custom_call.1']
    #allocation7 [shape = 'u8[512]{0}', space=vmem, size = 0x400, scoped, tag = 'input window, operand 2, single buffered']
    #allocation8 [shape = 'u8[16384]{0}', space=vmem, size = 0x4000, scoped, tag = 'input window, operand 3, single buffered']
    #allocation9 [shape = 's32[1]{0}', space=sflag, size = 0x4, scoped, tag = 'scoped memory for tpu_custom_call.1']
    #allocation10 [shape = 'u8[512]{0}', space=vmem, size = 0x400, scoped, tag = 'input window, operand 4, single buffered']
    #allocation11 [shape = 'u8[65536]{0}', space=vmem, size = 0x10000, scoped, tag = 'input window, operand 5, single buffered']
    #allocation12 [shape = 's32[1]{0}', space=sflag, size = 0x4, scoped, tag = 'scoped memory for tpu_custom_call.1']
    #allocation13 [shape = 'u8[1024]{0}', space=vmem, size = 0x400, scoped, tag = 'input window, operand 6, single buffered']
    #allocation14 [shape = 'u8[262144]{0}', space=vmem, size = 0x40000, scoped, tag = 'input window, operand 7, single buffered']
    #allocation15 [shape = 's32[1]{0}', space=sflag, size = 0x4, scoped, tag = 'scoped memory for tpu_custom_call.1']
    #allocation16 [shape = 'u8[2048]{0}', space=vmem, size = 0x800, scoped, tag = 'input window, operand 8, single buffered']
    #allocation17 [shape = 'u8[1048576]{0}', space=vmem, size = 0x100000, scoped, tag = 'input window, operand 9, single buffered']
    #allocation18 [shape = 's32[1]{0}', space=sflag, size = 0x4, scoped, tag = 'scoped memory for tpu_custom_call.1']
    #allocation19 [shape = 'u8[4096]{0}', space=vmem, size = 0x1000, scoped, tag = 'input window, operand 10, single buffered']
    #allocation20 [shape = 'u8[4194304]{0}', space=vmem, size = 0x400000, scoped, tag = 'input window, operand 11, single buffered']
    #allocation21 [shape = 's32[1]{0}', space=sflag, size = 0x4, scoped, tag = 'scoped memory for tpu_custom_call.1']
    #allocation22 [shape = 'u8[8192]{0}', space=vmem, size = 0x2000, scoped, tag = 'input window, operand 12, single buffered']
    #allocation23 [shape = 'u8[524288]{0}', space=vmem, size = 0x80000, scoped, tag = 'input window, operand 13, single buffered']
    #allocation24 [shape = 's32[1]{0}', space=sflag, size = 0x4, scoped, tag = 'scoped memory for tpu_custom_call.1']
    #allocation25 [shape = 'u8[512]{0}', space=vmem, size = 0x400, scoped, tag = 'input window, operand 14, single buffered']
    #allocation26 [shape = 'u8[4096]{0}', space=vmem, size = 0x1000, scoped, tag = 'output window, operand 0, single buffered']
    %20 = vsyncpa [#allocation3], 0
    %21 = vsyncpa [#allocation6], 0
    %22 = vsyncpa [#allocation9], 0
    %23 = vsyncpa [#allocation12], 0
    %24 = vsyncpa [#allocation15], 0
    %25 = vsyncpa [#allocation18], 0
    %26 = vsyncpa [#allocation21], 0
    %27 = vsyncpa [#allocation24], 0
    %28 = vsyncpa [#allocation4], 0
    // Predicated region
    $region2: #{tpu_custom_call.1} parent=1 // pred_check
      _
    $region3: #{tpu_custom_call.1} parent=1 // pred_check_branch
      %30 = sbr.rel (0) target = $region5
    $region4: #{tpu_custom_call.1} parent=1 // pred_region
      %s32 = ssub.s32 128, 128
      %33 = vsyncadd [#allocation3], %s32
      %s35 = sshll.u32 [#allocation2], 4
      %s36 = int_to_ptr.vmem [resolvable:$true] %s35
      %38 = dma.hbm_to_vmem [thread:$0]  %s0, 128, %s36, [#allocation3]
    $region5: #{tpu_custom_call.1} parent=1 // pred_fallthru
      _
    // Predicated region
    $region6: #{tpu_custom_call.1} parent=1 // pred_check
      _
    $region7: #{tpu_custom_call.1} parent=1 // pred_check_branch
      %40 = sbr.rel (0) target = $region9
    $region8: #{tpu_custom_call.1} parent=1 // pred_region
      %s42 = ssub.s32 128, 128
      %43 = vsyncadd [#allocation6], %s42
      %s44 = sshll.u32 [#allocation5], 4
      %s45 = int_to_ptr.vmem [resolvable:$true] %s44
      %50 = dma.hbm_to_vmem [thread:$0]  %s1, 128, %s45, [#allocation6], 64, 64, 4
    $region9: #{tpu_custom_call.1} parent=1 // pred_fallthru
      _
    // Predicated region
    $region10: #{tpu_custom_call.1} parent=1 // pred_check
      _
    $region11: #{tpu_custom_call.1} parent=1 // pred_check_branch
      %52 = sbr.rel (0) target = $region13
    $region12: #{tpu_custom_call.1} parent=1 // pred_region
      %s54 = ssub.s32 16, 16
      %55 = vsyncadd [#allocation6], %s54
      %s57 = sshll.u32 [#allocation7], 4
      %s58 = int_to_ptr.vmem [resolvable:$true] %s57
      %60 = dma.hbm_to_vmem [thread:$0]  %s2, 16, %s58, [#allocation6]
    $region13: #{tpu_custom_call.1} parent=1 // pred_fallthru
      _
    // Predicated region
    $region14: #{tpu_custom_call.1} parent=1 // pred_check
      _
    $region15: #{tpu_custom_call.1} parent=1 // pred_check_branch
      %62 = sbr.rel (0) target = $region17
    $region16: #{tpu_custom_call.1} parent=1 // pred_region
      %s64 = ssub.s32 512, 512
      %65 = vsyncadd [#allocation9], %s64
      %s66 = sshll.u32 [#allocation8], 4
      %s67 = int_to_ptr.vmem [resolvable:$true] %s66
      %72 = dma.hbm_to_vmem [thread:$0]  %s3, 512, %s67, [#allocation9], 64, 64, 4
    $region17: #{tpu_custom_call.1} parent=1 // pred_fallthru
      _
    // Predicated region
    $region18: #{tpu_custom_call.1} parent=1 // pred_check
      _
    $region19: #{tpu_custom_call.1} parent=1 // pred_check_branch
      %74 = sbr.rel (0) target = $region21
    $region20: #{tpu_custom_call.1} parent=1 // pred_region
      %s76 = ssub.s32 16, 16
      %77 = vsyncadd [#allocation9], %s76
      %s79 = sshll.u32 [#allocation10], 4
      %s80 = int_to_ptr.vmem [resolvable:$true] %s79
      %82 = dma.hbm_to_vmem [thread:$0]  %s4, 16, %s80, [#allocation9]
    $region21: #{tpu_custom_call.1} parent=1 // pred_fallthru
      _
    // Predicated region
    $region22: #{tpu_custom_call.1} parent=1 // pred_check
      _
    $region23: #{tpu_custom_call.1} parent=1 // pred_check_branch
      %84 = sbr.rel (0) target = $region25
    $region24: #{tpu_custom_call.1} parent=1 // pred_region
      %s86 = ssub.s32 2048, 2048
      %87 = vsyncadd [#allocation12], %s86
      %s88 = sshll.u32 [#allocation11], 4
      %s89 = int_to_ptr.vmem [resolvable:$true] %s88
      %94 = dma.hbm_to_vmem [thread:$0]  %s5, 2048, %s89, [#allocation12], 128, 128, 8
    $region25: #{tpu_custom_call.1} parent=1 // pred_fallthru
      _
    // Predicated region
    $region26: #{tpu_custom_call.1} parent=1 // pred_check
      _
    $region27: #{tpu_custom_call.1} parent=1 // pred_check_branch
      %96 = sbr.rel (0) target = $region29
    $region28: #{tpu_custom_call.1} parent=1 // pred_region
      %s98 = ssub.s32 32, 32
      %99 = vsyncadd [#allocation12], %s98
      %s101 = sshll.u32 [#allocation13], 4
      %s102 = int_to_ptr.vmem [resolvable:$true] %s101
      %104 = dma.hbm_to_vmem [thread:$0]  %s6, 32, %s102, [#allocation12]
    $region29: #{tpu_custom_call.1} parent=1 // pred_fallthru
      _
    // Predicated region
    $region30: #{tpu_custom_call.1} parent=1 // pred_check
      _
    $region31: #{tpu_custom_call.1} parent=1 // pred_check_branch
      %106 = sbr.rel (0) target = $region33
    $region32: #{tpu_custom_call.1} parent=1 // pred_region
      %s108 = ssub.s32 8192, 8192
      %109 = vsyncadd [#allocation15], %s108
      %s110 = sshll.u32 [#allocation14], 4
      %s111 = int_to_ptr.vmem [resolvable:$true] %s110
      %116 = dma.hbm_to_vmem [thread:$0]  %s7, 8192, %s111, [#allocation15], 256, 256, 16
    $region33: #{tpu_custom_call.1} parent=1 // pred_fallthru
      _
    // Predicated region
    $region34: #{tpu_custom_call.1} parent=1 // pred_check
      _
    $region35: #{tpu_custom_call.1} parent=1 // pred_check_branch
      %118 = sbr.rel (0) target = $region37
    $region36: #{tpu_custom_call.1} parent=1 // pred_region
      %s120 = ssub.s32 64, 64
      %121 = vsyncadd [#allocation15], %s120
      %s123 = sshll.u32 [#allocation16], 4
      %s124 = int_to_ptr.vmem [resolvable:$true] %s123
      %126 = dma.hbm_to_vmem [thread:$0]  %s8, 64, %s124, [#allocation15]
    $region37: #{tpu_custom_call.1} parent=1 // pred_fallthru
      _
    // Predicated region
    $region38: #{tpu_custom_call.1} parent=1 // pred_check
      _
    $region39: #{tpu_custom_call.1} parent=1 // pred_check_branch
      %128 = sbr.rel (0) target = $region41
    $region40: #{tpu_custom_call.1} parent=1 // pred_region
      %s130 = ssub.s32 32768, 32768
      %131 = vsyncadd [#allocation18], %s130
      %s132 = sshll.u32 [#allocation17], 4
      %s133 = int_to_ptr.vmem [resolvable:$true] %s132
      %138 = dma.hbm_to_vmem [thread:$0]  %s9, 32768, %s133, [#allocation18], 512, 512, 32
    $region41: #{tpu_custom_call.1} parent=1 // pred_fallthru
      _
    // Predicated region
    $region42: #{tpu_custom_call.1} parent=1 // pred_check
      _
    $region43: #{tpu_custom_call.1} parent=1 // pred_check_branch
      %140 = sbr.rel (0) target = $region45
    $region44: #{tpu_custom_call.1} parent=1 // pred_region
      %s142 = ssub.s32 128, 128
      %143 = vsyncadd [#allocation18], %s142
      %s145 = sshll.u32 [#allocation19], 4
      %s146 = int_to_ptr.vmem [resolvable:$true] %s145
      %148 = dma.hbm_to_vmem [thread:$0]  %s10, 128, %s146, [#allocation18]
    $region45: #{tpu_custom_call.1} parent=1 // pred_fallthru
      _
    // Predicated region
    $region46: #{tpu_custom_call.1} parent=1 // pred_check
      _
    $region47: #{tpu_custom_call.1} parent=1 // pred_check_branch
      %150 = sbr.rel (0) target = $region49
    $region48: #{tpu_custom_call.1} parent=1 // pred_region
      %s152 = ssub.s32 131072, 131072
      %153 = vsyncadd [#allocation21], %s152
      %s154 = sshll.u32 [#allocation20], 4
      %s155 = int_to_ptr.vmem [resolvable:$true] %s154
      %160 = dma.hbm_to_vmem [thread:$0]  %s11, 131072, %s155, [#allocation21], 1024, 1024, 64
    $region49: #{tpu_custom_call.1} parent=1 // pred_fallthru
      _
    // Predicated region
    $region50: #{tpu_custom_call.1} parent=1 // pred_check
      _
    $region51: #{tpu_custom_call.1} parent=1 // pred_check_branch
      %162 = sbr.rel (0) target = $region53
    $region52: #{tpu_custom_call.1} parent=1 // pred_region
      %s164 = ssub.s32 256, 256
      %165 = vsyncadd [#allocation21], %s164
      %s167 = sshll.u32 [#allocation22], 4
      %s168 = int_to_ptr.vmem [resolvable:$true] %s167
      %170 = dma.hbm_to_vmem [thread:$0]  %s12, 256, %s168, [#allocation21]
    $region53: #{tpu_custom_call.1} parent=1 // pred_fallthru
      _
    // Predicated region
    $region54: #{tpu_custom_call.1} parent=1 // pred_check
      _
    $region55: #{tpu_custom_call.1} parent=1 // pred_check_branch
      %172 = sbr.rel (0) target = $region57
    $region56: #{tpu_custom_call.1} parent=1 // pred_region
      %s174 = ssub.s32 16384, 16384
      %175 = vsyncadd [#allocation24], %s174
      %s176 = sshll.u32 [#allocation23], 4
      %s177 = int_to_ptr.vmem [resolvable:$true] %s176
      %182 = dma.hbm_to_vmem [thread:$0]  %s13, 16384, %s177, [#allocation24], 64, 64, 4
    $region57: #{tpu_custom_call.1} parent=1 // pred_fallthru
      _
    // Predicated region
    $region58: #{tpu_custom_call.1} parent=1 // pred_check
      _
    $region59: #{tpu_custom_call.1} parent=1 // pred_check_branch
      %184 = sbr.rel (0) target = $region61
    $region60: #{tpu_custom_call.1} parent=1 // pred_region
      %s186 = ssub.s32 16, 16
      %187 = vsyncadd [#allocation24], %s186
      %s189 = sshll.u32 [#allocation25], 4
      %s190 = int_to_ptr.vmem [resolvable:$true] %s189
      %192 = dma.hbm_to_vmem [thread:$0]  %s14, 16, %s190, [#allocation24]
    $region61: #{tpu_custom_call.1} parent=1 // pred_fallthru
      _
    // Predicated region
    $region62: #{tpu_custom_call.1} parent=1 // pred_check
      _
    $region63: #{tpu_custom_call.1} parent=1 // pred_check_branch
      %194 = sbr.rel (0) target = $region65
    $region64: #{tpu_custom_call.1} parent=1 // pred_region
      %195 = dma.done [#allocation3], 128
    $region65: #{tpu_custom_call.1} parent=1 // pred_fallthru
      _
    // Predicated region
    $region66: #{tpu_custom_call.1} parent=1 // pred_check
      _
    $region67: #{tpu_custom_call.1} parent=1 // pred_check_branch
      %197 = sbr.rel (0) target = $region69
    $region68: #{tpu_custom_call.1} parent=1 // pred_region
      %198 = dma.done [#allocation6], 128
    $region69: #{tpu_custom_call.1} parent=1 // pred_fallthru
      _
    // Predicated region
    $region70: #{tpu_custom_call.1} parent=1 // pred_check
      _
    $region71: #{tpu_custom_call.1} parent=1 // pred_check_branch
      %200 = sbr.rel (0) target = $region73
    $region72: #{tpu_custom_call.1} parent=1 // pred_region
      %201 = dma.done [#allocation6], 16
    $region73: #{tpu_custom_call.1} parent=1 // pred_fallthru
      _
    // Predicated region
    $region74: #{tpu_custom_call.1} parent=1 // pred_check
      _
    $region75: #{tpu_custom_call.1} parent=1 // pred_check_branch
      %203 = sbr.rel (0) target = $region77
    $region76: #{tpu_custom_call.1} parent=1 // pred_region
      %204 = dma.done [#allocation9], 512
    $region77: #{tpu_custom_call.1} parent=1 // pred_fallthru
      _
    // Predicated region
    $region78: #{tpu_custom_call.1} parent=1 // pred_check
      _
    $region79: #{tpu_custom_call.1} parent=1 // pred_check_branch
      %206 = sbr.rel (0) target = $region81
    $region80: #{tpu_custom_call.1} parent=1 // pred_region
      %207 = dma.done [#allocation9], 16
    $region81: #{tpu_custom_call.1} parent=1 // pred_fallthru
      _
    // Predicated region
    $region82: #{tpu_custom_call.1} parent=1 // pred_check
      _
    $region83: #{tpu_custom_call.1} parent=1 // pred_check_branch
      %209 = sbr.rel (0) target = $region85
    $region84: #{tpu_custom_call.1} parent=1 // pred_region
      %210 = dma.done [#allocation12], 2048
    $region85: #{tpu_custom_call.1} parent=1 // pred_fallthru
      _
    // Predicated region
    $region86: #{tpu_custom_call.1} parent=1 // pred_check
      _
    $region87: #{tpu_custom_call.1} parent=1 // pred_check_branch
      %212 = sbr.rel (0) target = $region89
    $region88: #{tpu_custom_call.1} parent=1 // pred_region
      %213 = dma.done [#allocation12], 32
    $region89: #{tpu_custom_call.1} parent=1 // pred_fallthru
      _
    // Predicated region
    $region90: #{tpu_custom_call.1} parent=1 // pred_check
      _
    $region91: #{tpu_custom_call.1} parent=1 // pred_check_branch
      %215 = sbr.rel (0) target = $region93
    $region92: #{tpu_custom_call.1} parent=1 // pred_region
      %216 = dma.done [#allocation15], 8192
    $region93: #{tpu_custom_call.1} parent=1 // pred_fallthru
      _
    // Predicated region
    $region94: #{tpu_custom_call.1} parent=1 // pred_check
      _
    $region95: #{tpu_custom_call.1} parent=1 // pred_check_branch
      %218 = sbr.rel (0) target = $region97
    $region96: #{tpu_custom_call.1} parent=1 // pred_region
      %219 = dma.done [#allocation15], 64
    $region97: #{tpu_custom_call.1} parent=1 // pred_fallthru
      _
    // Predicated region
    $region98: #{tpu_custom_call.1} parent=1 // pred_check
      _
    $region99: #{tpu_custom_call.1} parent=1 // pred_check_branch
      %221 = sbr.rel (0) target = $region101
    $region100: #{tpu_custom_call.1} parent=1 // pred_region
      %222 = dma.done [#allocation18], 32768
    $region101: #{tpu_custom_call.1} parent=1 // pred_fallthru
      _
    // Predicated region
    $region102: #{tpu_custom_call.1} parent=1 // pred_check
      _
    $region103: #{tpu_custom_call.1} parent=1 // pred_check_branch
      %224 = sbr.rel (0) target = $region105
    $region104: #{tpu_custom_call.1} parent=1 // pred_region
      %225 = dma.done [#allocation18], 128
    $region105: #{tpu_custom_call.1} parent=1 // pred_fallthru
      _
    // Predicated region
    $region106: #{tpu_custom_call.1} parent=1 // pred_check
      _
    $region107: #{tpu_custom_call.1} parent=1 // pred_check_branch
      %227 = sbr.rel (0) target = $region109
    $region108: #{tpu_custom_call.1} parent=1 // pred_region
      %228 = dma.done [#allocation21], 131072
    $region109: #{tpu_custom_call.1} parent=1 // pred_fallthru
      _
    // Predicated region
    $region110: #{tpu_custom_call.1} parent=1 // pred_check
      _
    $region111: #{tpu_custom_call.1} parent=1 // pred_check_branch
      %230 = sbr.rel (0) target = $region113
    $region112: #{tpu_custom_call.1} parent=1 // pred_region
      %231 = dma.done [#allocation21], 256
    $region113: #{tpu_custom_call.1} parent=1 // pred_fallthru
      _
    // Predicated region
    $region114: #{tpu_custom_call.1} parent=1 // pred_check
      _
    $region115: #{tpu_custom_call.1} parent=1 // pred_check_branch
      %233 = sbr.rel (0) target = $region117
    $region116: #{tpu_custom_call.1} parent=1 // pred_region
      %234 = dma.done [#allocation24], 16384
    $region117: #{tpu_custom_call.1} parent=1 // pred_fallthru
      _
    // Predicated region
    $region118: #{tpu_custom_call.1} parent=1 // pred_check
      _
    $region119: #{tpu_custom_call.1} parent=1 // pred_check_branch
      %236 = sbr.rel (0) target = $region121
    $region120: #{tpu_custom_call.1} parent=1 // pred_region
      %237 = dma.done [#allocation24], 16
    $region121: #{tpu_custom_call.1} parent=1 // pred_fallthru
      _
    %v239 = vld [vmem:[#allocation2] sm:$0xff]
    %v240 = vpack.c.bf16 %v239, %v239
    %v241 = vld [vmem:[#allocation5] sm:$0xf]
    %v242 = vld [vmem:[#allocation5 + $0x4] sm:$0xf]
    %v243 = vld [vmem:[#allocation7] sm:$0x1]
    %v245 = vlaneseq
    %v246 = vshrl.u32 %v245, 7
    %v247 = vsub.s32 0, %v246
    %v248 = vrot.slane %v243, %v247
    %v252 = vunpack.c.l.b16 %v241
    %v253 = vunpack.c.l.b16 %v242
    %v254 = vpack.c.b16 %v253, %v252
    %vm256 = vcmask 130048
    %v258 = vsel %vm256, %v240, 0
    %260 = vmatprep.subr.bf16.mxu0 0
    %261 = vmatpush1.bf16.msra.mxu0 %v254
    %262 = vmatprep.subr.bf16.mxu0 0
    %263 = vmatpush1.bf16.msra.mxu0 0
    %264 = vmatprep.subr.bf16.mxu0 0
    %265 = vmatpush1.bf16.msra.mxu0 0
    %266 = vmatprep.subr.bf16.mxu0 0
    %267 = vmatpush1.bf16.msra.mxu0 0
    %268 = vmatprep.subr.bf16.mxu0 0
    %269 = vmatpush1.bf16.msra.mxu0 0
    %270 = vmatprep.subr.bf16.mxu0 0
    %271 = vmatpush1.bf16.msra.mxu0 0
    %272 = vmatprep.subr.bf16.mxu0 0
    %273 = vmatpush1.bf16.msra.mxu0 0
    %274 = vmatprep.subr.bf16.mxu0 0
    %275 = vmatpush1.bf16.msra.mxu0 0
    %276 = vmatprep.subr.bf16.mxu0 0
    %277 = vmatpush1.bf16.msra.mxu0 0
    %278 = vmatprep.subr.bf16.mxu0 0
    %279 = vmatpush1.bf16.msra.mxu0 0
    %280 = vmatprep.subr.bf16.mxu0 0
    %281 = vmatpush1.bf16.msra.mxu0 0
    %282 = vmatprep.subr.bf16.mxu0 0
    %283 = vmatpush1.bf16.msra.mxu0 0
    %284 = vmatprep.subr.bf16.mxu0 0
    %285 = vmatpush1.bf16.msra.mxu0 0
    %286 = vmatprep.subr.bf16.mxu0 0
    %287 = vmatpush1.bf16.msra.mxu0 0
    %288 = vmatprep.subr.bf16.mxu0 0
    %289 = vmatpush1.bf16.msra.mxu0 0
    %290 = vmatprep.subr.bf16.mxu0 0
    %291 = vmatpush1.bf16.msra.mxu0 0
    %292 = vmatprep.mubr.bf16.mxu0 0
    %293 = vmatmul.mubr.bf16.gmra.mrb[0].mxu0 %v258
    %v294 = vpop.f32.mrb[0].mxu0
    %v295 = vadd.f32 %v248, %v294
    %v296 = vpop.f32.mrb[0].mxu0
    %v297 = vpop.f32.mrb[0].mxu0
    %v298 = vpop.f32.mrb[0].mxu0
    %299 = vdwg.mxu0
    %v300 = vtanh.pop %v295
    %v301 = vpack.c.bf16 %v300, %v300
    %v302 = vld [vmem:[#allocation8] sm:$0xf]
    %v303 = vld [vmem:[#allocation8 + $0x4] sm:$0xf]
    %v304 = vld [vmem:[#allocation8 + $0x8] sm:$0xf]
    %v305 = vld [vmem:[#allocation8 + $0xc] sm:$0xf]
    %v306 = vld [vmem:[#allocation8 + $0x10] sm:$0xf]
    %v307 = vld [vmem:[#allocation8 + $0x14] sm:$0xf]
    %v308 = vld [vmem:[#allocation8 + $0x18] sm:$0xf]
    %v309 = vld [vmem:[#allocation8 + $0x1c] sm:$0xf]
    %v310 = vld [vmem:[#allocation10] sm:$0x1]
    %v312 = vlaneseq
    %v313 = vshrl.u32 %v312, 7
    %v314 = vsub.s32 0, %v313
    %v315 = vrot.slane %v310, %v314
    %v325 = vunpack.c.l.b16 %v302
    %v326 = vunpack.c.l.b16 %v303
    %v327 = vunpack.c.l.b16 %v304
    %v328 = vunpack.c.l.b16 %v305
    %v329 = vunpack.c.l.b16 %v306
    %v330 = vunpack.c.l.b16 %v307
    %v331 = vunpack.c.l.b16 %v308
    %v332 = vunpack.c.l.b16 %v309
    %v333 = vpack.c.b16 %v326, %v325
    %v334 = vpack.c.b16 %v328, %v327
    %v335 = vpack.c.b16 %v330, %v329
    %v336 = vpack.c.b16 %v332, %v331
    %vm341 = vcmask 523264
    %v343 = vsel %vm341, %v301, 0
    %345 = vmatprep.subr.bf16.mxu0 0
    %346 = vmatpush1.bf16.msra.mxu0 %v333
    %347 = vmatprep.subr.bf16.mxu0 0
    %348 = vmatpush1.bf16.msra.mxu0 %v334
    %349 = vmatprep.subr.bf16.mxu0 0
    %350 = vmatpush1.bf16.msra.mxu0 %v335
    %351 = vmatprep.subr.bf16.mxu0 0
    %352 = vmatpush1.bf16.msra.mxu0 %v336
    %353 = vmatprep.subr.bf16.mxu0 0
    %354 = vmatpush1.bf16.msra.mxu0 0
    %355 = vmatprep.subr.bf16.mxu0 0
    %356 = vmatpush1.bf16.msra.mxu0 0
    %357 = vmatprep.subr.bf16.mxu0 0
    %358 = vmatpush1.bf16.msra.mxu0 0
    %359 = vmatprep.subr.bf16.mxu0 0
    %360 = vmatpush1.bf16.msra.mxu0 0
    %361 = vmatprep.subr.bf16.mxu0 0
    %362 = vmatpush1.bf16.msra.mxu0 0
    %363 = vmatprep.subr.bf16.mxu0 0
    %364 = vmatpush1.bf16.msra.mxu0 0
    %365 = vmatprep.subr.bf16.mxu0 0
    %366 = vmatpush1.bf16.msra.mxu0 0
    %367 = vmatprep.subr.bf16.mxu0 0
    %368 = vmatpush1.bf16.msra.mxu0 0
    %369 = vmatprep.subr.bf16.mxu0 0
    %370 = vmatpush1.bf16.msra.mxu0 0
    %371 = vmatprep.subr.bf16.mxu0 0
    %372 = vmatpush1.bf16.msra.mxu0 0
    %373 = vmatprep.subr.bf16.mxu0 0
    %374 = vmatpush1.bf16.msra.mxu0 0
    %375 = vmatprep.subr.bf16.mxu0 0
    %376 = vmatpush1.bf16.msra.mxu0 0
    %377 = vmatprep.mubr.bf16.mxu0 0
    %378 = vmatmul.mubr.bf16.gmra.mrb[0].mxu0 %v343
    %v379 = vpop.f32.mrb[0].mxu0
    %v380 = vadd.f32 %v315, %v379
    %v381 = vpop.f32.mrb[0].mxu0
    %v382 = vpop.f32.mrb[0].mxu0
    %v383 = vpop.f32.mrb[0].mxu0
    %384 = vdwg.mxu0
    %v385 = vtanh.pop %v380
    %v386 = vpack.c.bf16 %v385, %v385
    %v387 = vld [vmem:[#allocation11] sm:$0xff]
    %v388 = vld [vmem:[#allocation11 + $0x8] sm:$0xff]
    %v389 = vld [vmem:[#allocation11 + $0x10] sm:$0xff]
    %v390 = vld [vmem:[#allocation11 + $0x18] sm:$0xff]
    %v391 = vld [vmem:[#allocation11 + $0x20] sm:$0xff]
    %v392 = vld [vmem:[#allocation11 + $0x28] sm:$0xff]
    %v393 = vld [vmem:[#allocation11 + $0x30] sm:$0xff]
    %v394 = vld [vmem:[#allocation11 + $0x38] sm:$0xff]
    %v395 = vld [vmem:[#allocation11 + $0x40] sm:$0xff]
    %v396 = vld [vmem:[#allocation11 + $0x48] sm:$0xff]
    %v397 = vld [vmem:[#allocation11 + $0x50] sm:$0xff]
    %v398 = vld [vmem:[#allocation11 + $0x58] sm:$0xff]
    %v399 = vld [vmem:[#allocation11 + $0x60] sm:$0xff]
    %v400 = vld [vmem:[#allocation11 + $0x68] sm:$0xff]
    %v401 = vld [vmem:[#allocation11 + $0x70] sm:$0xff]
    %v402 = vld [vmem:[#allocation11 + $0x78] sm:$0xff]
    %v403 = vld [vmem:[#allocation13] sm:$0x3]
    %v405 = vlaneseq
    %v406 = vshrl.u32 %v405, 7
    %v407 = vsub.s32 0, %v406
    %v408 = vrot.slane %v403, %v407
    %v409 = vlaneseq
    %v410 = vshrl.u32 %v409, 7
    %v411 = vsub.s32 1, %v410
    %v412 = vrot.slane %v403, %v411
    %v431 = vunpack.c.l.b16 %v387
    %v432 = vunpack.c.h.b16 %v387
    %v433 = vunpack.c.l.b16 %v388
    %v434 = vunpack.c.h.b16 %v388
    %v435 = vunpack.c.l.b16 %v389
    %v436 = vunpack.c.h.b16 %v389
    %v437 = vunpack.c.l.b16 %v390
    %v438 = vunpack.c.h.b16 %v390
    %v439 = vunpack.c.l.b16 %v391
    %v440 = vunpack.c.h.b16 %v391
    %v441 = vunpack.c.l.b16 %v392
    %v442 = vunpack.c.h.b16 %v392
    %v443 = vunpack.c.l.b16 %v393
    %v444 = vunpack.c.h.b16 %v393
    %v445 = vunpack.c.l.b16 %v394
    %v446 = vunpack.c.h.b16 %v394
    %v447 = vunpack.c.l.b16 %v395
    %v448 = vunpack.c.h.b16 %v395
    %v449 = vunpack.c.l.b16 %v396
    %v450 = vunpack.c.h.b16 %v396
    %v451 = vunpack.c.l.b16 %v397
    %v452 = vunpack.c.h.b16 %v397
    %v453 = vunpack.c.l.b16 %v398
    %v454 = vunpack.c.h.b16 %v398
    %v455 = vunpack.c.l.b16 %v399
    %v456 = vunpack.c.h.b16 %v399
    %v457 = vunpack.c.l.b16 %v400
    %v458 = vunpack.c.h.b16 %v400
    %v459 = vunpack.c.l.b16 %v401
    %v460 = vunpack.c.h.b16 %v401
    %v461 = vunpack.c.l.b16 %v402
    %v462 = vunpack.c.h.b16 %v402
    %v463 = vpack.c.b16 %v433, %v431
    %v464 = vpack.c.b16 %v434, %v432
    %v465 = vpack.c.b16 %v437, %v435
    %v466 = vpack.c.b16 %v438, %v436
    %v467 = vpack.c.b16 %v441, %v439
    %v468 = vpack.c.b16 %v442, %v440
    %v469 = vpack.c.b16 %v445, %v443
    %v470 = vpack.c.b16 %v446, %v444
    %v471 = vpack.c.b16 %v449, %v447
    %v472 = vpack.c.b16 %v450, %v448
    %v473 = vpack.c.b16 %v453, %v451
    %v474 = vpack.c.b16 %v454, %v452
    %v475 = vpack.c.b16 %v457, %v455
    %v476 = vpack.c.b16 %v458, %v456
    %v477 = vpack.c.b16 %v461, %v459
    %v478 = vpack.c.b16 %v462, %v460
    %495 = vmatprep.subr.bf16.mxu0 %v464
    %496 = vmatpush1.bf16.msra.mxu0 %v463
    %497 = vmatprep.subr.bf16.mxu0 %v466
    %498 = vmatpush1.bf16.msra.mxu0 %v465
    %499 = vmatprep.subr.bf16.mxu0 %v468
    %500 = vmatpush1.bf16.msra.mxu0 %v467
    %501 = vmatprep.subr.bf16.mxu0 %v470
    %502 = vmatpush1.bf16.msra.mxu0 %v469
    %503 = vmatprep.subr.bf16.mxu0 %v472
    %504 = vmatpush1.bf16.msra.mxu0 %v471
    %505 = vmatprep.subr.bf16.mxu0 %v474
    %506 = vmatpush1.bf16.msra.mxu0 %v473
    %507 = vmatprep.subr.bf16.mxu0 %v476
    %508 = vmatpush1.bf16.msra.mxu0 %v475
    %509 = vmatprep.subr.bf16.mxu0 %v478
    %510 = vmatpush1.bf16.msra.mxu0 %v477
    %511 = vmatprep.subr.bf16.mxu0 0
    %512 = vmatpush1.bf16.msra.mxu0 0
    %513 = vmatprep.subr.bf16.mxu0 0
    %514 = vmatpush1.bf16.msra.mxu0 0
    %515 = vmatprep.subr.bf16.mxu0 0
    %516 = vmatpush1.bf16.msra.mxu0 0
    %517 = vmatprep.subr.bf16.mxu0 0
    %518 = vmatpush1.bf16.msra.mxu0 0
    %519 = vmatprep.subr.bf16.mxu0 0
    %520 = vmatpush1.bf16.msra.mxu0 0
    %521 = vmatprep.subr.bf16.mxu0 0
    %522 = vmatpush1.bf16.msra.mxu0 0
    %523 = vmatprep.subr.bf16.mxu0 0
    %524 = vmatpush1.bf16.msra.mxu0 0
    %525 = vmatprep.subr.bf16.mxu0 0
    %526 = vmatpush1.bf16.msra.mxu0 0
    %527 = vmatprep.mubr.bf16.mxu0 0
    %528 = vmatmul.mubr.bf16.gmra.mrb[0].mxu0 %v386
    %v529 = vpop.f32.mrb[0].mxu0
    %v530 = vadd.f32 %v408, %v529
    %v531 = vpop.f32.mrb[0].mxu0
    %v532 = vadd.f32 %v412, %v531
    %v533 = vpop.f32.mrb[0].mxu0
    %v534 = vpop.f32.mrb[0].mxu0
    %535 = vdwg.mxu0
    %v536 = vtanh.pop %v530
    %v537 = vtanh.pop %v532
    %v538 = vpack.c.bf16 %v536, %v536
    %v539 = vpack.c.bf16 %v537, %v537
    %v540 = vld [vmem:[#allocation14] sm:$0xff]
    %v541 = vld [vmem:[#allocation14 + $0x8] sm:$0xff]
    %v542 = vld [vmem:[#allocation14 + $0x10] sm:$0xff]
    %v543 = vld [vmem:[#allocation14 + $0x18] sm:$0xff]
    %v544 = vld [vmem:[#allocation14 + $0x20] sm:$0xff]
    %v545 = vld [vmem:[#allocation14 + $0x28] sm:$0xff]
    %v546 = vld [vmem:[#allocation14 + $0x30] sm:$0xff]
    %v547 = vld [vmem:[#allocation14 + $0x38] sm:$0xff]
    %v548 = vld [vmem:[#allocation14 + $0x40] sm:$0xff]
    %v549 = vld [vmem:[#allocation14 + $0x48] sm:$0xff]
    %v550 = vld [vmem:[#allocation14 + $0x50] sm:$0xff]
    %v551 = vld [vmem:[#allocation14 + $0x58] sm:$0xff]
    %v552 = vld [vmem:[#allocation14 + $0x60] sm:$0xff]
    %v553 = vld [vmem:[#allocation14 + $0x68] sm:$0xff]
    %v554 = vld [vmem:[#allocation14 + $0x70] sm:$0xff]
    %v555 = vld [vmem:[#allocation14 + $0x78] sm:$0xff]
    %v556 = vld [vmem:[#allocation14 + $0x80] sm:$0xff]
    %v557 = vld [vmem:[#allocation14 + $0x88] sm:$0xff]
    %v558 = vld [vmem:[#allocation14 + $0x90] sm:$0xff]
    %v559 = vld [vmem:[#allocation14 + $0x98] sm:$0xff]
    %v560 = vld [vmem:[#allocation14 + $0xa0] sm:$0xff]
    %v561 = vld [vmem:[#allocation14 + $0xa8] sm:$0xff]
    %v562 = vld [vmem:[#allocation14 + $0xb0] sm:$0xff]
    %v563 = vld [vmem:[#allocation14 + $0xb8] sm:$0xff]
    %v564 = vld [vmem:[#allocation14 + $0xc0] sm:$0xff]
    %v565 = vld [vmem:[#allocation14 + $0xc8] sm:$0xff]
    %v566 = vld [vmem:[#allocation14 + $0xd0] sm:$0xff]
    %v567 = vld [vmem:[#allocation14 + $0xd8] sm:$0xff]
    %v568 = vld [vmem:[#allocation14 + $0xe0] sm:$0xff]
    %v569 = vld [vmem:[#allocation14 + $0xe8] sm:$0xff]
    %v570 = vld [vmem:[#allocation14 + $0xf0] sm:$0xff]
    %v571 = vld [vmem:[#allocation14 + $0xf8] sm:$0xff]
    %v572 = vld [vmem:[#allocation14 + $0x100] sm:$0xff]
    %v573 = vld [vmem:[#allocation14 + $0x108] sm:$0xff]
    %v574 = vld [vmem:[#allocation14 + $0x110] sm:$0xff]
    %v575 = vld [vmem:[#allocation14 + $0x118] sm:$0xff]
    %v576 = vld [vmem:[#allocation14 + $0x120] sm:$0xff]
    %v577 = vld [vmem:[#allocation14 + $0x128] sm:$0xff]
    %v578 = vld [vmem:[#allocation14 + $0x130] sm:$0xff]
    %v579 = vld [vmem:[#allocation14 + $0x138] sm:$0xff]
    %v580 = vld [vmem:[#allocation14 + $0x140] sm:$0xff]
    %v581 = vld [vmem:[#allocation14 + $0x148] sm:$0xff]
    %v582 = vld [vmem:[#allocation14 + $0x150] sm:$0xff]
    %v583 = vld [vmem:[#allocation14 + $0x158] sm:$0xff]
    %v584 = vld [vmem:[#allocation14 + $0x160] sm:$0xff]
    %v585 = vld [vmem:[#allocation14 + $0x168] sm:$0xff]
    %v586 = vld [vmem:[#allocation14 + $0x170] sm:$0xff]
    %v587 = vld [vmem:[#allocation14 + $0x178] sm:$0xff]
    %v588 = vld [vmem:[#allocation14 + $0x180] sm:$0xff]
    %v589 = vld [vmem:[#allocation14 + $0x188] sm:$0xff]
    %v590 = vld [vmem:[#allocation14 + $0x190] sm:$0xff]
    %v591 = vld [vmem:[#allocation14 + $0x198] sm:$0xff]
    %v592 = vld [vmem:[#allocation14 + $0x1a0] sm:$0xff]
    %v593 = vld [vmem:[#allocation14 + $0x1a8] sm:$0xff]
    %v594 = vld [vmem:[#allocation14 + $0x1b0] sm:$0xff]
    %v595 = vld [vmem:[#allocation14 + $0x1b8] sm:$0xff]
    %v596 = vld [vmem:[#allocation14 + $0x1c0] sm:$0xff]
    %v597 = vld [vmem:[#allocation14 + $0x1c8] sm:$0xff]
    %v598 = vld [vmem:[#allocation14 + $0x1d0] sm:$0xff]
    %v599 = vld [vmem:[#allocation14 + $0x1d8] sm:$0xff]
    %v600 = vld [vmem:[#allocation14 + $0x1e0] sm:$0xff]
    %v601 = vld [vmem:[#allocation14 + $0x1e8] sm:$0xff]
    %v602 = vld [vmem:[#allocation14 + $0x1f0] sm:$0xff]
    %v603 = vld [vmem:[#allocation14 + $0x1f8] sm:$0xff]
    %v604 = vld [vmem:[#allocation16] sm:$0xf]
    %v606 = vlaneseq
    %v607 = vshrl.u32 %v606, 7
    %v608 = vsub.s32 0, %v607
    %v609 = vrot.slane %v604, %v608
    %v610 = vlaneseq
    %v611 = vshrl.u32 %v610, 7
    %v612 = vsub.s32 1, %v611
    %v613 = vrot.slane %v604, %v612
    %v614 = vlaneseq
    %v615 = vshrl.u32 %v614, 7
    %v616 = vsub.s32 2, %v615
    %v617 = vrot.slane %v604, %v616
    %v618 = vlaneseq
    %v619 = vshrl.u32 %v618, 7
    %v620 = vsub.s32 3, %v619
    %v621 = vrot.slane %v604, %v620
    %v690 = vunpack.c.l.b16 %v540
    %v691 = vunpack.c.h.b16 %v540
    %v692 = vunpack.c.l.b16 %v541
    %v693 = vunpack.c.h.b16 %v541
    %v694 = vunpack.c.l.b16 %v542
    %v695 = vunpack.c.h.b16 %v542
    %v696 = vunpack.c.l.b16 %v543
    %v697 = vunpack.c.h.b16 %v543
    %v698 = vunpack.c.l.b16 %v544
    %v699 = vunpack.c.h.b16 %v544
    %v700 = vunpack.c.l.b16 %v545
    %v701 = vunpack.c.h.b16 %v545
    %v702 = vunpack.c.l.b16 %v546
    %v703 = vunpack.c.h.b16 %v546
    %v704 = vunpack.c.l.b16 %v547
    %v705 = vunpack.c.h.b16 %v547
    %v706 = vunpack.c.l.b16 %v548
    %v707 = vunpack.c.h.b16 %v548
    %v708 = vunpack.c.l.b16 %v549
    %v709 = vunpack.c.h.b16 %v549
    %v710 = vunpack.c.l.b16 %v550
    %v711 = vunpack.c.h.b16 %v550
    %v712 = vunpack.c.l.b16 %v551
    %v713 = vunpack.c.h.b16 %v551
    %v714 = vunpack.c.l.b16 %v552
    %v715 = vunpack.c.h.b16 %v552
    %v716 = vunpack.c.l.b16 %v553
    %v717 = vunpack.c.h.b16 %v553
    %v718 = vunpack.c.l.b16 %v554
    %v719 = vunpack.c.h.b16 %v554
    %v720 = vunpack.c.l.b16 %v555
    %v721 = vunpack.c.h.b16 %v555
    %v722 = vunpack.c.l.b16 %v556
    %v723 = vunpack.c.h.b16 %v556
    %v724 = vunpack.c.l.b16 %v557
    %v725 = vunpack.c.h.b16 %v557
    %v726 = vunpack.c.l.b16 %v558
    %v727 = vunpack.c.h.b16 %v558
    %v728 = vunpack.c.l.b16 %v559
    %v729 = vunpack.c.h.b16 %v559
    %v730 = vunpack.c.l.b16 %v560
    %v731 = vunpack.c.h.b16 %v560
    %v732 = vunpack.c.l.b16 %v561
    %v733 = vunpack.c.h.b16 %v561
    %v734 = vunpack.c.l.b16 %v562
    %v735 = vunpack.c.h.b16 %v562
    %v736 = vunpack.c.l.b16 %v563
    %v737 = vunpack.c.h.b16 %v563
    %v738 = vunpack.c.l.b16 %v564
    %v739 = vunpack.c.h.b16 %v564
    %v740 = vunpack.c.l.b16 %v565
    %v741 = vunpack.c.h.b16 %v565
    %v742 = vunpack.c.l.b16 %v566
    %v743 = vunpack.c.h.b16 %v566
    %v744 = vunpack.c.l.b16 %v567
    %v745 = vunpack.c.h.b16 %v567
    %v746 = vunpack.c.l.b16 %v568
    %v747 = vunpack.c.h.b16 %v568
    %v748 = vunpack.c.l.b16 %v569
    %v749 = vunpack.c.h.b16 %v569
    %v750 = vunpack.c.l.b16 %v570
    %v751 = vunpack.c.h.b16 %v570
    %v752 = vunpack.c.l.b16 %v571
    %v753 = vunpack.c.h.b16 %v571
    %v754 = vunpack.c.l.b16 %v572
    %v755 = vunpack.c.h.b16 %v572
    %v756 = vunpack.c.l.b16 %v573
    %v757 = vunpack.c.h.b16 %v573
    %v758 = vunpack.c.l.b16 %v574
    %v759 = vunpack.c.h.b16 %v574
    %v760 = vunpack.c.l.b16 %v575
    %v761 = vunpack.c.h.b16 %v575
    %v762 = vunpack.c.l.b16 %v576
    %v763 = vunpack.c.h.b16 %v576
    %v764 = vunpack.c.l.b16 %v577
    %v765 = vunpack.c.h.b16 %v577
    %v766 = vunpack.c.l.b16 %v578
    %v767 = vunpack.c.h.b16 %v578
    %v768 = vunpack.c.l.b16 %v579
    %v769 = vunpack.c.h.b16 %v579
    %v770 = vunpack.c.l.b16 %v580
    %v771 = vunpack.c.h.b16 %v580
    %v772 = vunpack.c.l.b16 %v581
    %v773 = vunpack.c.h.b16 %v581
    %v774 = vunpack.c.l.b16 %v582
    %v775 = vunpack.c.h.b16 %v582
    %v776 = vunpack.c.l.b16 %v583
    %v777 = vunpack.c.h.b16 %v583
    %v778 = vunpack.c.l.b16 %v584
    %v779 = vunpack.c.h.b16 %v584
    %v780 = vunpack.c.l.b16 %v585
    %v781 = vunpack.c.h.b16 %v585
    %v782 = vunpack.c.l.b16 %v586
    %v783 = vunpack.c.h.b16 %v586
    %v784 = vunpack.c.l.b16 %v587
    %v785 = vunpack.c.h.b16 %v587
    %v786 = vunpack.c.l.b16 %v588
    %v787 = vunpack.c.h.b16 %v588
    %v788 = vunpack.c.l.b16 %v589
    %v789 = vunpack.c.h.b16 %v589
    %v790 = vunpack.c.l.b16 %v590
    %v791 = vunpack.c.h.b16 %v590
    %v792 = vunpack.c.l.b16 %v591
    %v793 = vunpack.c.h.b16 %v591
    %v794 = vunpack.c.l.b16 %v592
    %v795 = vunpack.c.h.b16 %v592
    %v796 = vunpack.c.l.b16 %v593
    %v797 = vunpack.c.h.b16 %v593
    %v798 = vunpack.c.l.b16 %v594
    %v799 = vunpack.c.h.b16 %v594
    %v800 = vunpack.c.l.b16 %v595
    %v801 = vunpack.c.h.b16 %v595
    %v802 = vunpack.c.l.b16 %v596
    %v803 = vunpack.c.h.b16 %v596
    %v804 = vunpack.c.l.b16 %v597
    %v805 = vunpack.c.h.b16 %v597
    %v806 = vunpack.c.l.b16 %v598
    %v807 = vunpack.c.h.b16 %v598
    %v808 = vunpack.c.l.b16 %v599
    %v809 = vunpack.c.h.b16 %v599
    %v810 = vunpack.c.l.b16 %v600
    %v811 = vunpack.c.h.b16 %v600
    %v812 = vunpack.c.l.b16 %v601
    %v813 = vunpack.c.h.b16 %v601
    %v814 = vunpack.c.l.b16 %v602
    %v815 = vunpack.c.h.b16 %v602
    %v816 = vunpack.c.l.b16 %v603
    %v817 = vunpack.c.h.b16 %v603
    %v818 = vpack.c.b16 %v694, %v690
    %v819 = vpack.c.b16 %v695, %v691
    %v820 = vpack.c.b16 %v696, %v692
    %v821 = vpack.c.b16 %v697, %v693
    %v822 = vpack.c.b16 %v702, %v698
    %v823 = vpack.c.b16 %v703, %v699
    %v824 = vpack.c.b16 %v704, %v700
    %v825 = vpack.c.b16 %v705, %v701
    %v826 = vpack.c.b16 %v710, %v706
    %v827 = vpack.c.b16 %v711, %v707
    %v828 = vpack.c.b16 %v712, %v708
    %v829 = vpack.c.b16 %v713, %v709
    %v830 = vpack.c.b16 %v718, %v714
    %v831 = vpack.c.b16 %v719, %v715
    %v832 = vpack.c.b16 %v720, %v716
    %v833 = vpack.c.b16 %v721, %v717
    %v834 = vpack.c.b16 %v726, %v722
    %v835 = vpack.c.b16 %v727, %v723
    %v836 = vpack.c.b16 %v728, %v724
    %v837 = vpack.c.b16 %v729, %v725
    %v838 = vpack.c.b16 %v734, %v730
    %v839 = vpack.c.b16 %v735, %v731
    %v840 = vpack.c.b16 %v736, %v732
    %v841 = vpack.c.b16 %v737, %v733
    %v842 = vpack.c.b16 %v742, %v738
    %v843 = vpack.c.b16 %v743, %v739
    %v844 = vpack.c.b16 %v744, %v740
    %v845 = vpack.c.b16 %v745, %v741
    %v846 = vpack.c.b16 %v750, %v746
    %v847 = vpack.c.b16 %v751, %v747
    %v848 = vpack.c.b16 %v752, %v748
    %v849 = vpack.c.b16 %v753, %v749
    %v850 = vpack.c.b16 %v758, %v754
    %v851 = vpack.c.b16 %v759, %v755
    %v852 = vpack.c.b16 %v760, %v756
    %v853 = vpack.c.b16 %v761, %v757
    %v854 = vpack.c.b16 %v766, %v762
    %v855 = vpack.c.b16 %v767, %v763
    %v856 = vpack.c.b16 %v768, %v764
    %v857 = vpack.c.b16 %v769, %v765
    %v858 = vpack.c.b16 %v774, %v770
    %v859 = vpack.c.b16 %v775, %v771
    %v860 = vpack.c.b16 %v776, %v772
    %v861 = vpack.c.b16 %v777, %v773
    %v862 = vpack.c.b16 %v782, %v778
    %v863 = vpack.c.b16 %v783, %v779
    %v864 = vpack.c.b16 %v784, %v780
    %v865 = vpack.c.b16 %v785, %v781
    %v866 = vpack.c.b16 %v790, %v786
    %v867 = vpack.c.b16 %v791, %v787
    %v868 = vpack.c.b16 %v792, %v788
    %v869 = vpack.c.b16 %v793, %v789
    %v870 = vpack.c.b16 %v798, %v794
    %v871 = vpack.c.b16 %v799, %v795
    %v872 = vpack.c.b16 %v800, %v796
    %v873 = vpack.c.b16 %v801, %v797
    %v874 = vpack.c.b16 %v806, %v802
    %v875 = vpack.c.b16 %v807, %v803
    %v876 = vpack.c.b16 %v808, %v804
    %v877 = vpack.c.b16 %v809, %v805
    %v878 = vpack.c.b16 %v814, %v810
    %v879 = vpack.c.b16 %v815, %v811
    %v880 = vpack.c.b16 %v816, %v812
    %v881 = vpack.c.b16 %v817, %v813
    %946 = vmatprep.subr.bf16.mxu0 %v819
    %947 = vmatpush1.bf16.msra.mxu0 %v818
    %948 = vmatprep.subr.bf16.mxu0 %v823
    %949 = vmatpush1.bf16.msra.mxu0 %v822
    %950 = vmatprep.subr.bf16.mxu0 %v827
    %951 = vmatpush1.bf16.msra.mxu0 %v826
    %952 = vmatprep.subr.bf16.mxu0 %v831
    %953 = vmatpush1.bf16.msra.mxu0 %v830
    %954 = vmatprep.subr.bf16.mxu0 %v835
    %955 = vmatpush1.bf16.msra.mxu0 %v834
    %956 = vmatprep.subr.bf16.mxu0 %v839
    %957 = vmatpush1.bf16.msra.mxu0 %v838
    %958 = vmatprep.subr.bf16.mxu0 %v843
    %959 = vmatpush1.bf16.msra.mxu0 %v842
    %960 = vmatprep.subr.bf16.mxu0 %v847
    %961 = vmatpush1.bf16.msra.mxu0 %v846
    %962 = vmatprep.subr.bf16.mxu0 %v851
    %963 = vmatpush1.bf16.msra.mxu0 %v850
    %964 = vmatprep.subr.bf16.mxu0 %v855
    %965 = vmatpush1.bf16.msra.mxu0 %v854
    %966 = vmatprep.subr.bf16.mxu0 %v859
    %967 = vmatpush1.bf16.msra.mxu0 %v858
    %968 = vmatprep.subr.bf16.mxu0 %v863
    %969 = vmatpush1.bf16.msra.mxu0 %v862
    %970 = vmatprep.subr.bf16.mxu0 %v867
    %971 = vmatpush1.bf16.msra.mxu0 %v866
    %972 = vmatprep.subr.bf16.mxu0 %v871
    %973 = vmatpush1.bf16.msra.mxu0 %v870
    %974 = vmatprep.subr.bf16.mxu0 %v875
    %975 = vmatpush1.bf16.msra.mxu0 %v874
    %976 = vmatprep.subr.bf16.mxu0 %v879
    %977 = vmatpush1.bf16.msra.mxu0 %v878
    %978 = vmatprep.mubr.bf16.mxu0 %v539
    %979 = vmatmul.mubr.bf16.gmra.mrb[0].mxu0 %v538
    %v980 = vpop.f32.mrb[0].mxu0
    %v981 = vadd.f32 %v609, %v980
    %v982 = vpop.f32.mrb[0].mxu0
    %v983 = vadd.f32 %v613, %v982
    %v984 = vpop.f32.mrb[0].mxu0
    %v985 = vpop.f32.mrb[0].mxu0
    %986 = vdwg.mxu0
    %987 = vmatprep.subr.bf16.mxu0 %v821
    %988 = vmatpush1.bf16.msra.mxu0 %v820
    %989 = vmatprep.subr.bf16.mxu0 %v825
    %990 = vmatpush1.bf16.msra.mxu0 %v824
    %991 = vmatprep.subr.bf16.mxu0 %v829
    %992 = vmatpush1.bf16.msra.mxu0 %v828
    %993 = vmatprep.subr.bf16.mxu0 %v833
    %994 = vmatpush1.bf16.msra.mxu0 %v832
    %995 = vmatprep.subr.bf16.mxu0 %v837
    %996 = vmatpush1.bf16.msra.mxu0 %v836
    %997 = vmatprep.subr.bf16.mxu0 %v841
    %998 = vmatpush1.bf16.msra.mxu0 %v840
    %999 = vmatprep.subr.bf16.mxu0 %v845
    %1000 = vmatpush1.bf16.msra.mxu0 %v844
    %1001 = vmatprep.subr.bf16.mxu0 %v849
    %1002 = vmatpush1.bf16.msra.mxu0 %v848
    %1003 = vmatprep.subr.bf16.mxu0 %v853
    %1004 = vmatpush1.bf16.msra.mxu0 %v852
    %1005 = vmatprep.subr.bf16.mxu0 %v857
    %1006 = vmatpush1.bf16.msra.mxu0 %v856
    %1007 = vmatprep.subr.bf16.mxu0 %v861
    %1008 = vmatpush1.bf16.msra.mxu0 %v860
    %1009 = vmatprep.subr.bf16.mxu0 %v865
    %1010 = vmatpush1.bf16.msra.mxu0 %v864
    %1011 = vmatprep.subr.bf16.mxu0 %v869
    %1012 = vmatpush1.bf16.msra.mxu0 %v868
    %1013 = vmatprep.subr.bf16.mxu0 %v873
    %1014 = vmatpush1.bf16.msra.mxu0 %v872
    %1015 = vmatprep.subr.bf16.mxu0 %v877
    %1016 = vmatpush1.bf16.msra.mxu0 %v876
    %1017 = vmatprep.subr.bf16.mxu0 %v881
    %1018 = vmatpush1.bf16.msra.mxu0 %v880
    %1019 = vmatprep.mubr.bf16.mxu0 %v539
    %1020 = vmatmul.mubr.bf16.gmra.mrb[0].mxu0 %v538
    %v1021 = vpop.f32.mrb[0].mxu0
    %v1022 = vadd.f32 %v617, %v1021
    %v1023 = vpop.f32.mrb[0].mxu0
    %v1024 = vadd.f32 %v621, %v1023
    %v1025 = vpop.f32.mrb[0].mxu0
    %v1026 = vpop.f32.mrb[0].mxu0
    %1027 = vdwg.mxu0
    %v1028 = vtanh.pop %v981
    %v1029 = vtanh.pop %v983
    %v1030 = vtanh.pop %v1022
    %v1031 = vtanh.pop %v1024
    %v1032 = vpack.c.bf16 %v1028, %v1028
    %v1033 = vpack.c.bf16 %v1029, %v1029
    %v1034 = vpack.c.bf16 %v1030, %v1030
    %v1035 = vpack.c.bf16 %v1031, %v1031
    %v1036 = vld [vmem:[#allocation17] sm:$0xff]
    %v1037 = vld [vmem:[#allocation17 + $0x8] sm:$0xff]
    %v1038 = vld [vmem:[#allocation17 + $0x10] sm:$0xff]
    %v1039 = vld [vmem:[#allocation17 + $0x18] sm:$0xff]
    %v1040 = vld [vmem:[#allocation17 + $0x20] sm:$0xff]
    %v1041 = vld [vmem:[#allocation17 + $0x28] sm:$0xff]
    %v1042 = vld [vmem:[#allocation17 + $0x30] sm:$0xff]
    %v1043 = vld [vmem:[#allocation17 + $0x38] sm:$0xff]
    %v1044 = vld [vmem:[#allocation17 + $0x40] sm:$0xff]
    %v1045 = vld [vmem:[#allocation17 + $0x48] sm:$0xff]
    %v1046 = vld [vmem:[#allocation17 + $0x50] sm:$0xff]
    %v1047 = vld [vmem:[#allocation17 + $0x58] sm:$0xff]
    %v1048 = vld [vmem:[#allocation17 + $0x60] sm:$0xff]
    %v1049 = vld [vmem:[#allocation17 + $0x68] sm:$0xff]
    %v1050 = vld [vmem:[#allocation17 + $0x70] sm:$0xff]
    %v1051 = vld [vmem:[#allocation17 + $0x78] sm:$0xff]
    %v1052 = vld [vmem:[#allocation17 + $0x80] sm:$0xff]
    %v1053 = vld [vmem:[#allocation17 + $0x88] sm:$0xff]
    %v1054 = vld [vmem:[#allocation17 + $0x90] sm:$0xff]
    %v1055 = vld [vmem:[#allocation17 + $0x98] sm:$0xff]
    %v1056 = vld [vmem:[#allocation17 + $0xa0] sm:$0xff]
    %v1057 = vld [vmem:[#allocation17 + $0xa8] sm:$0xff]
    %v1058 = vld [vmem:[#allocation17 + $0xb0] sm:$0xff]
    %v1059 = vld [vmem:[#allocation17 + $0xb8] sm:$0xff]
    %v1060 = vld [vmem:[#allocation17 + $0xc0] sm:$0xff]
    %v1061 = vld [vmem:[#allocation17 + $0xc8] sm:$0xff]
    %v1062 = vld [vmem:[#allocation17 + $0xd0] sm:$0xff]
    %v1063 = vld [vmem:[#allocation17 + $0xd8] sm:$0xff]
    %v1064 = vld [vmem:[#allocation17 + $0xe0] sm:$0xff]
    %v1065 = vld [vmem:[#allocation17 + $0xe8] sm:$0xff]
    %v1066 = vld [vmem:[#allocation17 + $0xf0] sm:$0xff]
    %v1067 = vld [vmem:[#allocation17 + $0xf8] sm:$0xff]
    %v1068 = vld [vmem:[#allocation17 + $0x100] sm:$0xff]
    %v1069 = vld [vmem:[#allocation17 + $0x108] sm:$0xff]
    %v1070 = vld [vmem:[#allocation17 + $0x110] sm:$0xff]
    %v1071 = vld [vmem:[#allocation17 + $0x118] sm:$0xff]
    %v1072 = vld [vmem:[#allocation17 + $0x120] sm:$0xff]
    %v1073 = vld [vmem:[#allocation17 + $0x128] sm:$0xff]
    %v1074 = vld [vmem:[#allocation17 + $0x130] sm:$0xff]
    %v1075 = vld [vmem:[#allocation17 + $0x138] sm:$0xff]
    %v1076 = vld [vmem:[#allocation17 + $0x140] sm:$0xff]
    %v1077 = vld [vmem:[#allocation17 + $0x148] sm:$0xff]
    %v1078 = vld [vmem:[#allocation17 + $0x150] sm:$0xff]
    %v1079 = vld [vmem:[#allocation17 + $0x158] sm:$0xff]
    %v1080 = vld [vmem:[#allocation17 + $0x160] sm:$0xff]
    %v1081 = vld [vmem:[#allocation17 + $0x168] sm:$0xff]
    %v1082 = vld [vmem:[#allocation17 + $0x170] sm:$0xff]
    %v1083 = vld [vmem:[#allocation17 + $0x178] sm:$0xff]
    %v1084 = vld [vmem:[#allocation17 + $0x180] sm:$0xff]
    %v1085 = vld [vmem:[#allocation17 + $0x188] sm:$0xff]
    %v1086 = vld [vmem:[#allocation17 + $0x190] sm:$0xff]
    %v1087 = vld [vmem:[#allocation17 + $0x198] sm:$0xff]
    %v1088 = vld [vmem:[#allocation17 + $0x1a0] sm:$0xff]
    %v1089 = vld [vmem:[#allocation17 + $0x1a8] sm:$0xff]
    %v1090 = vld [vmem:[#allocation17 + $0x1b0] sm:$0xff]
    %v1091 = vld [vmem:[#allocation17 + $0x1b8] sm:$0xff]
    %v1092 = vld [vmem:[#allocation17 + $0x1c0] sm:$0xff]
    %v1093 = vld [vmem:[#allocation17 + $0x1c8] sm:$0xff]
    %v1094 = vld [vmem:[#allocation17 + $0x1d0] sm:$0xff]
    %v1095 = vld [vmem:[#allocation17 + $0x1d8] sm:$0xff]
    %v1096 = vld [vmem:[#allocation17 + $0x1e0] sm:$0xff]
    %v1097 = vld [vmem:[#allocation17 + $0x1e8] sm:$0xff]
    %v1098 = vld [vmem:[#allocation17 + $0x1f0] sm:$0xff]
    %v1099 = vld [vmem:[#allocation17 + $0x1f8] sm:$0xff]
    %v1100 = vld [vmem:[#allocation17 + $0x200] sm:$0xff]
    %v1101 = vld [vmem:[#allocation17 + $0x208] sm:$0xff]
    %v1102 = vld [vmem:[#allocation17 + $0x210] sm:$0xff]
    %v1103 = vld [vmem:[#allocation17 + $0x218] sm:$0xff]
    %v1104 = vld [vmem:[#allocation17 + $0x220] sm:$0xff]
    %v1105 = vld [vmem:[#allocation17 + $0x228] sm:$0xff]
    %v1106 = vld [vmem:[#allocation17 + $0x230] sm:$0xff]
    %v1107 = vld [vmem:[#allocation17 + $0x238] sm:$0xff]
    %v1108 = vld [vmem:[#allocation17 + $0x240] sm:$0xff]
    %v1109 = vld [vmem:[#allocation17 + $0x248] sm:$0xff]
    %v1110 = vld [vmem:[#allocation17 + $0x250] sm:$0xff]
    %v1111 = vld [vmem:[#allocation17 + $0x258] sm:$0xff]
    %v1112 = vld [vmem:[#allocation17 + $0x260] sm:$0xff]
    %v1113 = vld [vmem:[#allocation17 + $0x268] sm:$0xff]
    %v1114 = vld [vmem:[#allocation17 + $0x270] sm:$0xff]
    %v1115 = vld [vmem:[#allocation17 + $0x278] sm:$0xff]
    %v1116 = vld [vmem:[#allocation17 + $0x280] sm:$0xff]
    %v1117 = vld [vmem:[#allocation17 + $0x288] sm:$0xff]
    %v1118 = vld [vmem:[#allocation17 + $0x290] sm:$0xff]
    %v1119 = vld [vmem:[#allocation17 + $0x298] sm:$0xff]
    %v1120 = vld [vmem:[#allocation17 + $0x2a0] sm:$0xff]
    %v1121 = vld [vmem:[#allocation17 + $0x2a8] sm:$0xff]
    %v1122 = vld [vmem:[#allocation17 + $0x2b0] sm:$0xff]
    %v1123 = vld [vmem:[#allocation17 + $0x2b8] sm:$0xff]
    %v1124 = vld [vmem:[#allocation17 + $0x2c0] sm:$0xff]
    %v1125 = vld [vmem:[#allocation17 + $0x2c8] sm:$0xff]
    %v1126 = vld [vmem:[#allocation17 + $0x2d0] sm:$0xff]
    %v1127 = vld [vmem:[#allocation17 + $0x2d8] sm:$0xff]
    %v1128 = vld [vmem:[#allocation17 + $0x2e0] sm:$0xff]
    %v1129 = vld [vmem:[#allocation17 + $0x2e8] sm:$0xff]
    %v1130 = vld [vmem:[#allocation17 + $0x2f0] sm:$0xff]
    %v1131 = vld [vmem:[#allocation17 + $0x2f8] sm:$0xff]
    %v1132 = vld [vmem:[#allocation17 + $0x300] sm:$0xff]
    %v1133 = vld [vmem:[#allocation17 + $0x308] sm:$0xff]
    %v1134 = vld [vmem:[#allocation17 + $0x310] sm:$0xff]
    %v1135 = vld [vmem:[#allocation17 + $0x318] sm:$0xff]
    %v1136 = vld [vmem:[#allocation17 + $0x320] sm:$0xff]
    %v1137 = vld [vmem:[#allocation17 + $0x328] sm:$0xff]
    %v1138 = vld [vmem:[#allocation17 + $0x330] sm:$0xff]
    %v1139 = vld [vmem:[#allocation17 + $0x338] sm:$0xff]
    %v1140 = vld [vmem:[#allocation17 + $0x340] sm:$0xff]
    %v1141 = vld [vmem:[#allocation17 + $0x348] sm:$0xff]
    %v1142 = vld [vmem:[#allocation17 + $0x350] sm:$0xff]
    %v1143 = vld [vmem:[#allocation17 + $0x358] sm:$0xff]
    %v1144 = vld [vmem:[#allocation17 + $0x360] sm:$0xff]
    %v1145 = vld [vmem:[#allocation17 + $0x368] sm:$0xff]
    %v1146 = vld [vmem:[#allocation17 + $0x370] sm:$0xff]
    %v1147 = vld [vmem:[#allocation17 + $0x378] sm:$0xff]
    %v1148 = vld [vmem:[#allocation17 + $0x380] sm:$0xff]
    %v1149 = vld [vmem:[#allocation17 + $0x388] sm:$0xff]
    %v1150 = vld [vmem:[#allocation17 + $0x390] sm:$0xff]
    %v1151 = vld [vmem:[#allocation17 + $0x398] sm:$0xff]
    %v1152 = vld [vmem:[#allocation17 + $0x3a0] sm:$0xff]
    %v1153 = vld [vmem:[#allocation17 + $0x3a8] sm:$0xff]
    %v1154 = vld [vmem:[#allocation17 + $0x3b0] sm:$0xff]
    %v1155 = vld [vmem:[#allocation17 + $0x3b8] sm:$0xff]
    %v1156 = vld [vmem:[#allocation17 + $0x3c0] sm:$0xff]
    %v1157 = vld [vmem:[#allocation17 + $0x3c8] sm:$0xff]
    %v1158 = vld [vmem:[#allocation17 + $0x3d0] sm:$0xff]
    %v1159 = vld [vmem:[#allocation17 + $0x3d8] sm:$0xff]
    %v1160 = vld [vmem:[#allocation17 + $0x3e0] sm:$0xff]
    %v1161 = vld [vmem:[#allocation17 + $0x3e8] sm:$0xff]
    %v1162 = vld [vmem:[#allocation17 + $0x3f0] sm:$0xff]
    %v1163 = vld [vmem:[#allocation17 + $0x3f8] sm:$0xff]
    %v1164 = vld [vmem:[#allocation17 + $0x400] sm:$0xff]
    %v1165 = vld [vmem:[#allocation17 + $0x408] sm:$0xff]
    %v1166 = vld [vmem:[#allocation17 + $0x410] sm:$0xff]
    %v1167 = vld [vmem:[#allocation17 + $0x418] sm:$0xff]
    %v1168 = vld [vmem:[#allocation17 + $0x420] sm:$0xff]
    %v1169 = vld [vmem:[#allocation17 + $0x428] sm:$0xff]
    %v1170 = vld [vmem:[#allocation17 + $0x430] sm:$0xff]
    %v1171 = vld [vmem:[#allocation17 + $0x438] sm:$0xff]
    %v1172 = vld [vmem:[#allocation17 + $0x440] sm:$0xff]
    %v1173 = vld [vmem:[#allocation17 + $0x448] sm:$0xff]
    %v1174 = vld [vmem:[#allocation17 + $0x450] sm:$0xff]
    %v1175 = vld [vmem:[#allocation17 + $0x458] sm:$0xff]
    %v1176 = vld [vmem:[#allocation17 + $0x460] sm:$0xff]
    %v1177 = vld [vmem:[#allocation17 + $0x468] sm:$0xff]
    %v1178 = vld [vmem:[#allocation17 + $0x470] sm:$0xff]
    %v1179 = vld [vmem:[#allocation17 + $0x478] sm:$0xff]
    %v1180 = vld [vmem:[#allocation17 + $0x480] sm:$0xff]
    %v1181 = vld [vmem:[#allocation17 + $0x488] sm:$0xff]
    %v1182 = vld [vmem:[#allocation17 + $0x490] sm:$0xff]
    %v1183 = vld [vmem:[#allocation17 + $0x498] sm:$0xff]
    %v1184 = vld [vmem:[#allocation17 + $0x4a0] sm:$0xff]
    %v1185 = vld [vmem:[#allocation17 + $0x4a8] sm:$0xff]
    %v1186 = vld [vmem:[#allocation17 + $0x4b0] sm:$0xff]
    %v1187 = vld [vmem:[#allocation17 + $0x4b8] sm:$0xff]
    %v1188 = vld [vmem:[#allocation17 + $0x4c0] sm:$0xff]
    %v1189 = vld [vmem:[#allocation17 + $0x4c8] sm:$0xff]
    %v1190 = vld [vmem:[#allocation17 + $0x4d0] sm:$0xff]
    %v1191 = vld [vmem:[#allocation17 + $0x4d8] sm:$0xff]
    %v1192 = vld [vmem:[#allocation17 + $0x4e0] sm:$0xff]
    %v1193 = vld [vmem:[#allocation17 + $0x4e8] sm:$0xff]
    %v1194 = vld [vmem:[#allocation17 + $0x4f0] sm:$0xff]
    %v1195 = vld [vmem:[#allocation17 + $0x4f8] sm:$0xff]
    %v1196 = vld [vmem:[#allocation17 + $0x500] sm:$0xff]
    %v1197 = vld [vmem:[#allocation17 + $0x508] sm:$0xff]
    %v1198 = vld [vmem:[#allocation17 + $0x510] sm:$0xff]
    %v1199 = vld [vmem:[#allocation17 + $0x518] sm:$0xff]
    %v1200 = vld [vmem:[#allocation17 + $0x520] sm:$0xff]
    %v1201 = vld [vmem:[#allocation17 + $0x528] sm:$0xff]
    %v1202 = vld [vmem:[#allocation17 + $0x530] sm:$0xff]
    %v1203 = vld [vmem:[#allocation17 + $0x538] sm:$0xff]
    %v1204 = vld [vmem:[#allocation17 + $0x540] sm:$0xff]
    %v1205 = vld [vmem:[#allocation17 + $0x548] sm:$0xff]
    %v1206 = vld [vmem:[#allocation17 + $0x550] sm:$0xff]
    %v1207 = vld [vmem:[#allocation17 + $0x558] sm:$0xff]
    %v1208 = vld [vmem:[#allocation17 + $0x560] sm:$0xff]
    %v1209 = vld [vmem:[#allocation17 + $0x568] sm:$0xff]
    %v1210 = vld [vmem:[#allocation17 + $0x570] sm:$0xff]
    %v1211 = vld [vmem:[#allocation17 + $0x578] sm:$0xff]
    %v1212 = vld [vmem:[#allocation17 + $0x580] sm:$0xff]
    %v1213 = vld [vmem:[#allocation17 + $0x588] sm:$0xff]
    %v1214 = vld [vmem:[#allocation17 + $0x590] sm:$0xff]
    %v1215 = vld [vmem:[#allocation17 + $0x598] sm:$0xff]
    %v1216 = vld [vmem:[#allocation17 + $0x5a0] sm:$0xff]
    %v1217 = vld [vmem:[#allocation17 + $0x5a8] sm:$0xff]
    %v1218 = vld [vmem:[#allocation17 + $0x5b0] sm:$0xff]
    %v1219 = vld [vmem:[#allocation17 + $0x5b8] sm:$0xff]
    %v1220 = vld [vmem:[#allocation17 + $0x5c0] sm:$0xff]
    %v1221 = vld [vmem:[#allocation17 + $0x5c8] sm:$0xff]
    %v1222 = vld [vmem:[#allocation17 + $0x5d0] sm:$0xff]
    %v1223 = vld [vmem:[#allocation17 + $0x5d8] sm:$0xff]
    %v1224 = vld [vmem:[#allocation17 + $0x5e0] sm:$0xff]
    %v1225 = vld [vmem:[#allocation17 + $0x5e8] sm:$0xff]
    %v1226 = vld [vmem:[#allocation17 + $0x5f0] sm:$0xff]
    %v1227 = vld [vmem:[#allocation17 + $0x5f8] sm:$0xff]
    %v1228 = vld [vmem:[#allocation17 + $0x600] sm:$0xff]
    %v1229 = vld [vmem:[#allocation17 + $0x608] sm:$0xff]
    %v1230 = vld [vmem:[#allocation17 + $0x610] sm:$0xff]
    %v1231 = vld [vmem:[#allocation17 + $0x618] sm:$0xff]
    %v1232 = vld [vmem:[#allocation17 + $0x620] sm:$0xff]
    %v1233 = vld [vmem:[#allocation17 + $0x628] sm:$0xff]
    %v1234 = vld [vmem:[#allocation17 + $0x630] sm:$0xff]
    %v1235 = vld [vmem:[#allocation17 + $0x638] sm:$0xff]
    %v1236 = vld [vmem:[#allocation17 + $0x640] sm:$0xff]
    %v1237 = vld [vmem:[#allocation17 + $0x648] sm:$0xff]
    %v1238 = vld [vmem:[#allocation17 + $0x650] sm:$0xff]
    %v1239 = vld [vmem:[#allocation17 + $0x658] sm:$0xff]
    %v1240 = vld [vmem:[#allocation17 + $0x660] sm:$0xff]
    %v1241 = vld [vmem:[#allocation17 + $0x668] sm:$0xff]
    %v1242 = vld [vmem:[#allocation17 + $0x670] sm:$0xff]
    %v1243 = vld [vmem:[#allocation17 + $0x678] sm:$0xff]
    %v1244 = vld [vmem:[#allocation17 + $0x680] sm:$0xff]
    %v1245 = vld [vmem:[#allocation17 + $0x688] sm:$0xff]
    %v1246 = vld [vmem:[#allocation17 + $0x690] sm:$0xff]
    %v1247 = vld [vmem:[#allocation17 + $0x698] sm:$0xff]
    %v1248 = vld [vmem:[#allocation17 + $0x6a0] sm:$0xff]
    %v1249 = vld [vmem:[#allocation17 + $0x6a8] sm:$0xff]
    %v1250 = vld [vmem:[#allocation17 + $0x6b0] sm:$0xff]
    %v1251 = vld [vmem:[#allocation17 + $0x6b8] sm:$0xff]
    %v1252 = vld [vmem:[#allocation17 + $0x6c0] sm:$0xff]
    %v1253 = vld [vmem:[#allocation17 + $0x6c8] sm:$0xff]
    %v1254 = vld [vmem:[#allocation17 + $0x6d0] sm:$0xff]
    %v1255 = vld [vmem:[#allocation17 + $0x6d8] sm:$0xff]
    %v1256 = vld [vmem:[#allocation17 + $0x6e0] sm:$0xff]
    %v1257 = vld [vmem:[#allocation17 + $0x6e8] sm:$0xff]
    %v1258 = vld [vmem:[#allocation17 + $0x6f0] sm:$0xff]
    %v1259 = vld [vmem:[#allocation17 + $0x6f8] sm:$0xff]
    %v1260 = vld [vmem:[#allocation17 + $0x700] sm:$0xff]
    %v1261 = vld [vmem:[#allocation17 + $0x708] sm:$0xff]
    %v1262 = vld [vmem:[#allocation17 + $0x710] sm:$0xff]
    %v1263 = vld [vmem:[#allocation17 + $0x718] sm:$0xff]
    %v1264 = vld [vmem:[#allocation17 + $0x720] sm:$0xff]
    %v1265 = vld [vmem:[#allocation17 + $0x728] sm:$0xff]
    %v1266 = vld [vmem:[#allocation17 + $0x730] sm:$0xff]
    %v1267 = vld [vmem:[#allocation17 + $0x738] sm:$0xff]
    %v1268 = vld [vmem:[#allocation17 + $0x740] sm:$0xff]
    %v1269 = vld [vmem:[#allocation17 + $0x748] sm:$0xff]
    %v1270 = vld [vmem:[#allocation17 + $0x750] sm:$0xff]
    %v1271 = vld [vmem:[#allocation17 + $0x758] sm:$0xff]
    %v1272 = vld [vmem:[#allocation17 + $0x760] sm:$0xff]
    %v1273 = vld [vmem:[#allocation17 + $0x768] sm:$0xff]
    %v1274 = vld [vmem:[#allocation17 + $0x770] sm:$0xff]
    %v1275 = vld [vmem:[#allocation17 + $0x778] sm:$0xff]
    %v1276 = vld [vmem:[#allocation17 + $0x780] sm:$0xff]
    %v1277 = vld [vmem:[#allocation17 + $0x788] sm:$0xff]
    %v1278 = vld [vmem:[#allocation17 + $0x790] sm:$0xff]
    %v1279 = vld [vmem:[#allocation17 + $0x798] sm:$0xff]
    %v1280 = vld [vmem:[#allocation17 + $0x7a0] sm:$0xff]
    %v1281 = vld [vmem:[#allocation17 + $0x7a8] sm:$0xff]
    %v1282 = vld [vmem:[#allocation17 + $0x7b0] sm:$0xff]
    %v1283 = vld [vmem:[#allocation17 + $0x7b8] sm:$0xff]
    %v1284 = vld [vmem:[#allocation17 + $0x7c0] sm:$0xff]
    %v1285 = vld [vmem:[#allocation17 + $0x7c8] sm:$0xff]
    %v1286 = vld [vmem:[#allocation17 + $0x7d0] sm:$0xff]
    %v1287 = vld [vmem:[#allocation17 + $0x7d8] sm:$0xff]
    %v1288 = vld [vmem:[#allocation17 + $0x7e0] sm:$0xff]
    %v1289 = vld [vmem:[#allocation17 + $0x7e8] sm:$0xff]
    %v1290 = vld [vmem:[#allocation17 + $0x7f0] sm:$0xff]
    %v1291 = vld [vmem:[#allocation17 + $0x7f8] sm:$0xff]
    %v1292 = vld [vmem:[#allocation19] sm:$0xff]
    %v1294 = vlaneseq
    %v1295 = vshrl.u32 %v1294, 7
    %v1296 = vsub.s32 0, %v1295
    %v1297 = vrot.slane %v1292, %v1296
    %v1298 = vlaneseq
    %v1299 = vshrl.u32 %v1298, 7
    %v1300 = vsub.s32 1, %v1299
    %v1301 = vrot.slane %v1292, %v1300
    %v1302 = vlaneseq
    %v1303 = vshrl.u32 %v1302, 7
    %v1304 = vsub.s32 2, %v1303
    %v1305 = vrot.slane %v1292, %v1304
    %v1306 = vlaneseq
    %v1307 = vshrl.u32 %v1306, 7
    %v1308 = vsub.s32 3, %v1307
    %v1309 = vrot.slane %v1292, %v1308
    %v1310 = vlaneseq
    %v1311 = vshrl.u32 %v1310, 7
    %v1312 = vsub.s32 4, %v1311
    %v1313 = vrot.slane %v1292, %v1312
    %v1314 = vlaneseq
    %v1315 = vshrl.u32 %v1314, 7
    %v1316 = vsub.s32 5, %v1315
    %v1317 = vrot.slane %v1292, %v1316
    %v1318 = vlaneseq
    %v1319 = vshrl.u32 %v1318, 7
    %v1320 = vsub.s32 6, %v1319
    %v1321 = vrot.slane %v1292, %v1320
    %v1322 = vlaneseq
    %v1323 = vshrl.u32 %v1322, 7
    %v1324 = vsub.s32 7, %v1323
    %v1325 = vrot.slane %v1292, %v1324
    %v1590 = vunpack.c.l.b16 %v1036
    %v1591 = vunpack.c.h.b16 %v1036
    %v1592 = vunpack.c.l.b16 %v1037
    %v1593 = vunpack.c.h.b16 %v1037
    %v1594 = vunpack.c.l.b16 %v1038
    %v1595 = vunpack.c.h.b16 %v1038
    %v1596 = vunpack.c.l.b16 %v1039
    %v1597 = vunpack.c.h.b16 %v1039
    %v1598 = vunpack.c.l.b16 %v1040
    %v1599 = vunpack.c.h.b16 %v1040
    %v1600 = vunpack.c.l.b16 %v1041
    %v1601 = vunpack.c.h.b16 %v1041
    %v1602 = vunpack.c.l.b16 %v1042
    %v1603 = vunpack.c.h.b16 %v1042
    %v1604 = vunpack.c.l.b16 %v1043
    %v1605 = vunpack.c.h.b16 %v1043
    %v1606 = vunpack.c.l.b16 %v1044
    %v1607 = vunpack.c.h.b16 %v1044
    %v1608 = vunpack.c.l.b16 %v1045
    %v1609 = vunpack.c.h.b16 %v1045
    %v1610 = vunpack.c.l.b16 %v1046
    %v1611 = vunpack.c.h.b16 %v1046
    %v1612 = vunpack.c.l.b16 %v1047
    %v1613 = vunpack.c.h.b16 %v1047
    %v1614 = vunpack.c.l.b16 %v1048
    %v1615 = vunpack.c.h.b16 %v1048
    %v1616 = vunpack.c.l.b16 %v1049
    %v1617 = vunpack.c.h.b16 %v1049
    %v1618 = vunpack.c.l.b16 %v1050
    %v1619 = vunpack.c.h.b16 %v1050
    %v1620 = vunpack.c.l.b16 %v1051
    %v1621 = vunpack.c.h.b16 %v1051
    %v1622 = vunpack.c.l.b16 %v1052
    %v1623 = vunpack.c.h.b16 %v1052
    %v1624 = vunpack.c.l.b16 %v1053
    %v1625 = vunpack.c.h.b16 %v1053
    %v1626 = vunpack.c.l.b16 %v1054
    %v1627 = vunpack.c.h.b16 %v1054
    %v1628 = vunpack.c.l.b16 %v1055
    %v1629 = vunpack.c.h.b16 %v1055
    %v1630 = vunpack.c.l.b16 %v1056
    %v1631 = vunpack.c.h.b16 %v1056
    %v1632 = vunpack.c.l.b16 %v1057
    %v1633 = vunpack.c.h.b16 %v1057
    %v1634 = vunpack.c.l.b16 %v1058
    %v1635 = vunpack.c.h.b16 %v1058
    %v1636 = vunpack.c.l.b16 %v1059
    %v1637 = vunpack.c.h.b16 %v1059
    %v1638 = vunpack.c.l.b16 %v1060
    %v1639 = vunpack.c.h.b16 %v1060
    %v1640 = vunpack.c.l.b16 %v1061
    %v1641 = vunpack.c.h.b16 %v1061
    %v1642 = vunpack.c.l.b16 %v1062
    %v1643 = vunpack.c.h.b16 %v1062
    %v1644 = vunpack.c.l.b16 %v1063
    %v1645 = vunpack.c.h.b16 %v1063
    %v1646 = vunpack.c.l.b16 %v1064
    %v1647 = vunpack.c.h.b16 %v1064
    %v1648 = vunpack.c.l.b16 %v1065
    %v1649 = vunpack.c.h.b16 %v1065
    %v1650 = vunpack.c.l.b16 %v1066
    %v1651 = vunpack.c.h.b16 %v1066
    %v1652 = vunpack.c.l.b16 %v1067
    %v1653 = vunpack.c.h.b16 %v1067
    %v1654 = vunpack.c.l.b16 %v1068
    %v1655 = vunpack.c.h.b16 %v1068
    %v1656 = vunpack.c.l.b16 %v1069
    %v1657 = vunpack.c.h.b16 %v1069
    %v1658 = vunpack.c.l.b16 %v1070
    %v1659 = vunpack.c.h.b16 %v1070
    %v1660 = vunpack.c.l.b16 %v1071
    %v1661 = vunpack.c.h.b16 %v1071
    %v1662 = vunpack.c.l.b16 %v1072
    %v1663 = vunpack.c.h.b16 %v1072
    %v1664 = vunpack.c.l.b16 %v1073
    %v1665 = vunpack.c.h.b16 %v1073
    %v1666 = vunpack.c.l.b16 %v1074
    %v1667 = vunpack.c.h.b16 %v1074
    %v1668 = vunpack.c.l.b16 %v1075
    %v1669 = vunpack.c.h.b16 %v1075
    %v1670 = vunpack.c.l.b16 %v1076
    %v1671 = vunpack.c.h.b16 %v1076
    %v1672 = vunpack.c.l.b16 %v1077
    %v1673 = vunpack.c.h.b16 %v1077
    %v1674 = vunpack.c.l.b16 %v1078
    %v1675 = vunpack.c.h.b16 %v1078
    %v1676 = vunpack.c.l.b16 %v1079
    %v1677 = vunpack.c.h.b16 %v1079
    %v1678 = vunpack.c.l.b16 %v1080
    %v1679 = vunpack.c.h.b16 %v1080
    %v1680 = vunpack.c.l.b16 %v1081
    %v1681 = vunpack.c.h.b16 %v1081
    %v1682 = vunpack.c.l.b16 %v1082
    %v1683 = vunpack.c.h.b16 %v1082
    %v1684 = vunpack.c.l.b16 %v1083
    %v1685 = vunpack.c.h.b16 %v1083
    %v1686 = vunpack.c.l.b16 %v1084
    %v1687 = vunpack.c.h.b16 %v1084
    %v1688 = vunpack.c.l.b16 %v1085
    %v1689 = vunpack.c.h.b16 %v1085
    %v1690 = vunpack.c.l.b16 %v1086
    %v1691 = vunpack.c.h.b16 %v1086
    %v1692 = vunpack.c.l.b16 %v1087
    %v1693 = vunpack.c.h.b16 %v1087
    %v1694 = vunpack.c.l.b16 %v1088
    %v1695 = vunpack.c.h.b16 %v1088
    %v1696 = vunpack.c.l.b16 %v1089
    %v1697 = vunpack.c.h.b16 %v1089
    %v1698 = vunpack.c.l.b16 %v1090
    %v1699 = vunpack.c.h.b16 %v1090
    %v1700 = vunpack.c.l.b16 %v1091
    %v1701 = vunpack.c.h.b16 %v1091
    %v1702 = vunpack.c.l.b16 %v1092
    %v1703 = vunpack.c.h.b16 %v1092
    %v1704 = vunpack.c.l.b16 %v1093
    %v1705 = vunpack.c.h.b16 %v1093
    %v1706 = vunpack.c.l.b16 %v1094
    %v1707 = vunpack.c.h.b16 %v1094
    %v1708 = vunpack.c.l.b16 %v1095
    %v1709 = vunpack.c.h.b16 %v1095
    %v1710 = vunpack.c.l.b16 %v1096
    %v1711 = vunpack.c.h.b16 %v1096
    %v1712 = vunpack.c.l.b16 %v1097
    %v1713 = vunpack.c.h.b16 %v1097
    %v1714 = vunpack.c.l.b16 %v1098
    %v1715 = vunpack.c.h.b16 %v1098
    %v1716 = vunpack.c.l.b16 %v1099
    %v1717 = vunpack.c.h.b16 %v1099
    %v1718 = vunpack.c.l.b16 %v1100
    %v1719 = vunpack.c.h.b16 %v1100
    %v1720 = vunpack.c.l.b16 %v1101
    %v1721 = vunpack.c.h.b16 %v1101
    %v1722 = vunpack.c.l.b16 %v1102
    %v1723 = vunpack.c.h.b16 %v1102
    %v1724 = vunpack.c.l.b16 %v1103
    %v1725 = vunpack.c.h.b16 %v1103
    %v1726 = vunpack.c.l.b16 %v1104
    %v1727 = vunpack.c.h.b16 %v1104
    %v1728 = vunpack.c.l.b16 %v1105
    %v1729 = vunpack.c.h.b16 %v1105
    %v1730 = vunpack.c.l.b16 %v1106
    %v1731 = vunpack.c.h.b16 %v1106
    %v1732 = vunpack.c.l.b16 %v1107
    %v1733 = vunpack.c.h.b16 %v1107
    %v1734 = vunpack.c.l.b16 %v1108
    %v1735 = vunpack.c.h.b16 %v1108
    %v1736 = vunpack.c.l.b16 %v1109
    %v1737 = vunpack.c.h.b16 %v1109
    %v1738 = vunpack.c.l.b16 %v1110
    %v1739 = vunpack.c.h.b16 %v1110
    %v1740 = vunpack.c.l.b16 %v1111
    %v1741 = vunpack.c.h.b16 %v1111
    %v1742 = vunpack.c.l.b16 %v1112
    %v1743 = vunpack.c.h.b16 %v1112
    %v1744 = vunpack.c.l.b16 %v1113
    %v1745 = vunpack.c.h.b16 %v1113
    %v1746 = vunpack.c.l.b16 %v1114
    %v1747 = vunpack.c.h.b16 %v1114
    %v1748 = vunpack.c.l.b16 %v1115
    %v1749 = vunpack.c.h.b16 %v1115
    %v1750 = vunpack.c.l.b16 %v1116
    %v1751 = vunpack.c.h.b16 %v1116
    %v1752 = vunpack.c.l.b16 %v1117
    %v1753 = vunpack.c.h.b16 %v1117
    %v1754 = vunpack.c.l.b16 %v1118
    %v1755 = vunpack.c.h.b16 %v1118
    %v1756 = vunpack.c.l.b16 %v1119
    %v1757 = vunpack.c.h.b16 %v1119
    %v1758 = vunpack.c.l.b16 %v1120
    %v1759 = vunpack.c.h.b16 %v1120
    %v1760 = vunpack.c.l.b16 %v1121
    %v1761 = vunpack.c.h.b16 %v1121
    %v1762 = vunpack.c.l.b16 %v1122
    %v1763 = vunpack.c.h.b16 %v1122
    %v1764 = vunpack.c.l.b16 %v1123
    %v1765 = vunpack.c.h.b16 %v1123
    %v1766 = vunpack.c.l.b16 %v1124
    %v1767 = vunpack.c.h.b16 %v1124
    %v1768 = vunpack.c.l.b16 %v1125
    %v1769 = vunpack.c.h.b16 %v1125
    %v1770 = vunpack.c.l.b16 %v1126
    %v1771 = vunpack.c.h.b16 %v1126
    %v1772 = vunpack.c.l.b16 %v1127
    %v1773 = vunpack.c.h.b16 %v1127
    %v1774 = vunpack.c.l.b16 %v1128
    %v1775 = vunpack.c.h.b16 %v1128
    %v1776 = vunpack.c.l.b16 %v1129
    %v1777 = vunpack.c.h.b16 %v1129
    %v1778 = vunpack.c.l.b16 %v1130
    %v1779 = vunpack.c.h.b16 %v1130
    %v1780 = vunpack.c.l.b16 %v1131
    %v1781 = vunpack.c.h.b16 %v1131
    %v1782 = vunpack.c.l.b16 %v1132
    %v1783 = vunpack.c.h.b16 %v1132
    %v1784 = vunpack.c.l.b16 %v1133
    %v1785 = vunpack.c.h.b16 %v1133
    %v1786 = vunpack.c.l.b16 %v1134
    %v1787 = vunpack.c.h.b16 %v1134
    %v1788 = vunpack.c.l.b16 %v1135
    %v1789 = vunpack.c.h.b16 %v1135
    %v1790 = vunpack.c.l.b16 %v1136
    %v1791 = vunpack.c.h.b16 %v1136
    %v1792 = vunpack.c.l.b16 %v1137
    %v1793 = vunpack.c.h.b16 %v1137
    %v1794 = vunpack.c.l.b16 %v1138
    %v1795 = vunpack.c.h.b16 %v1138
    %v1796 = vunpack.c.l.b16 %v1139
    %v1797 = vunpack.c.h.b16 %v1139
    %v1798 = vunpack.c.l.b16 %v1140
    %v1799 = vunpack.c.h.b16 %v1140
    %v1800 = vunpack.c.l.b16 %v1141
    %v1801 = vunpack.c.h.b16 %v1141
    %v1802 = vunpack.c.l.b16 %v1142
    %v1803 = vunpack.c.h.b16 %v1142
    %v1804 = vunpack.c.l.b16 %v1143
    %v1805 = vunpack.c.h.b16 %v1143
    %v1806 = vunpack.c.l.b16 %v1144
    %v1807 = vunpack.c.h.b16 %v1144
    %v1808 = vunpack.c.l.b16 %v1145
    %v1809 = vunpack.c.h.b16 %v1145
    %v1810 = vunpack.c.l.b16 %v1146
    %v1811 = vunpack.c.h.b16 %v1146
    %v1812 = vunpack.c.l.b16 %v1147
    %v1813 = vunpack.c.h.b16 %v1147
    %v1814 = vunpack.c.l.b16 %v1148
    %v1815 = vunpack.c.h.b16 %v1148
    %v1816 = vunpack.c.l.b16 %v1149
    %v1817 = vunpack.c.h.b16 %v1149
    %v1818 = vunpack.c.l.b16 %v1150
    %v1819 = vunpack.c.h.b16 %v1150
    %v1820 = vunpack.c.l.b16 %v1151
    %v1821 = vunpack.c.h.b16 %v1151
    %v1822 = vunpack.c.l.b16 %v1152
    %v1823 = vunpack.c.h.b16 %v1152
    %v1824 = vunpack.c.l.b16 %v1153
    %v1825 = vunpack.c.h.b16 %v1153
    %v1826 = vunpack.c.l.b16 %v1154
    %v1827 = vunpack.c.h.b16 %v1154
    %v1828 = vunpack.c.l.b16 %v1155
    %v1829 = vunpack.c.h.b16 %v1155
    %v1830 = vunpack.c.l.b16 %v1156
    %v1831 = vunpack.c.h.b16 %v1156
    %v1832 = vunpack.c.l.b16 %v1157
    %v1833 = vunpack.c.h.b16 %v1157
    %v1834 = vunpack.c.l.b16 %v1158
    %v1835 = vunpack.c.h.b16 %v1158
    %v1836 = vunpack.c.l.b16 %v1159
    %v1837 = vunpack.c.h.b16 %v1159
    %v1838 = vunpack.c.l.b16 %v1160
    %v1839 = vunpack.c.h.b16 %v1160
    %v1840 = vunpack.c.l.b16 %v1161
    %v1841 = vunpack.c.h.b16 %v1161
    %v1842 = vunpack.c.l.b16 %v1162
    %v1843 = vunpack.c.h.b16 %v1162
    %v1844 = vunpack.c.l.b16 %v1163
    %v1845 = vunpack.c.h.b16 %v1163
    %v1846 = vunpack.c.l.b16 %v1164
    %v1847 = vunpack.c.h.b16 %v1164
    %v1848 = vunpack.c.l.b16 %v1165
    %v1849 = vunpack.c.h.b16 %v1165
    %v1850 = vunpack.c.l.b16 %v1166
    %v1851 = vunpack.c.h.b16 %v1166
    %v1852 = vunpack.c.l.b16 %v1167
    %v1853 = vunpack.c.h.b16 %v1167
    %v1854 = vunpack.c.l.b16 %v1168
    %v1855 = vunpack.c.h.b16 %v1168
    %v1856 = vunpack.c.l.b16 %v1169
    %v1857 = vunpack.c.h.b16 %v1169
    %v1858 = vunpack.c.l.b16 %v1170
    %v1859 = vunpack.c.h.b16 %v1170
    %v1860 = vunpack.c.l.b16 %v1171
    %v1861 = vunpack.c.h.b16 %v1171
    %v1862 = vunpack.c.l.b16 %v1172
    %v1863 = vunpack.c.h.b16 %v1172
    %v1864 = vunpack.c.l.b16 %v1173
    %v1865 = vunpack.c.h.b16 %v1173
    %v1866 = vunpack.c.l.b16 %v1174
    %v1867 = vunpack.c.h.b16 %v1174
    %v1868 = vunpack.c.l.b16 %v1175
    %v1869 = vunpack.c.h.b16 %v1175
    %v1870 = vunpack.c.l.b16 %v1176
    %v1871 = vunpack.c.h.b16 %v1176
    %v1872 = vunpack.c.l.b16 %v1177
    %v1873 = vunpack.c.h.b16 %v1177
    %v1874 = vunpack.c.l.b16 %v1178
    %v1875 = vunpack.c.h.b16 %v1178
    %v1876 = vunpack.c.l.b16 %v1179
    %v1877 = vunpack.c.h.b16 %v1179
    %v1878 = vunpack.c.l.b16 %v1180
    %v1879 = vunpack.c.h.b16 %v1180
    %v1880 = vunpack.c.l.b16 %v1181
    %v1881 = vunpack.c.h.b16 %v1181
    %v1882 = vunpack.c.l.b16 %v1182
    %v1883 = vunpack.c.h.b16 %v1182
    %v1884 = vunpack.c.l.b16 %v1183
    %v1885 = vunpack.c.h.b16 %v1183
    %v1886 = vunpack.c.l.b16 %v1184
    %v1887 = vunpack.c.h.b16 %v1184
    %v1888 = vunpack.c.l.b16 %v1185
    %v1889 = vunpack.c.h.b16 %v1185
    %v1890 = vunpack.c.l.b16 %v1186
    %v1891 = vunpack.c.h.b16 %v1186
    %v1892 = vunpack.c.l.b16 %v1187
    %v1893 = vunpack.c.h.b16 %v1187
    %v1894 = vunpack.c.l.b16 %v1188
    %v1895 = vunpack.c.h.b16 %v1188
    %v1896 = vunpack.c.l.b16 %v1189
    %v1897 = vunpack.c.h.b16 %v1189
    %v1898 = vunpack.c.l.b16 %v1190
    %v1899 = vunpack.c.h.b16 %v1190
    %v1900 = vunpack.c.l.b16 %v1191
    %v1901 = vunpack.c.h.b16 %v1191
    %v1902 = vunpack.c.l.b16 %v1192
    %v1903 = vunpack.c.h.b16 %v1192
    %v1904 = vunpack.c.l.b16 %v1193
    %v1905 = vunpack.c.h.b16 %v1193
    %v1906 = vunpack.c.l.b16 %v1194
    %v1907 = vunpack.c.h.b16 %v1194
    %v1908 = vunpack.c.l.b16 %v1195
    %v1909 = vunpack.c.h.b16 %v1195
    %v1910 = vunpack.c.l.b16 %v1196
    %v1911 = vunpack.c.h.b16 %v1196
    %v1912 = vunpack.c.l.b16 %v1197
    %v1913 = vunpack.c.h.b16 %v1197
    %v1914 = vunpack.c.l.b16 %v1198
    %v1915 = vunpack.c.h.b16 %v1198
    %v1916 = vunpack.c.l.b16 %v1199
    %v1917 = vunpack.c.h.b16 %v1199
    %v1918 = vunpack.c.l.b16 %v1200
    %v1919 = vunpack.c.h.b16 %v1200
    %v1920 = vunpack.c.l.b16 %v1201
    %v1921 = vunpack.c.h.b16 %v1201
    %v1922 = vunpack.c.l.b16 %v1202
    %v1923 = vunpack.c.h.b16 %v1202
    %v1924 = vunpack.c.l.b16 %v1203
    %v1925 = vunpack.c.h.b16 %v1203
    %v1926 = vunpack.c.l.b16 %v1204
    %v1927 = vunpack.c.h.b16 %v1204
    %v1928 = vunpack.c.l.b16 %v1205
    %v1929 = vunpack.c.h.b16 %v1205
    %v1930 = vunpack.c.l.b16 %v1206
    %v1931 = vunpack.c.h.b16 %v1206
    %v1932 = vunpack.c.l.b16 %v1207
    %v1933 = vunpack.c.h.b16 %v1207
    %v1934 = vunpack.c.l.b16 %v1208
    %v1935 = vunpack.c.h.b16 %v1208
    %v1936 = vunpack.c.l.b16 %v1209
    %v1937 = vunpack.c.h.b16 %v1209
    %v1938 = vunpack.c.l.b16 %v1210
    %v1939 = vunpack.c.h.b16 %v1210
    %v1940 = vunpack.c.l.b16 %v1211
    %v1941 = vunpack.c.h.b16 %v1211
    %v1942 = vunpack.c.l.b16 %v1212
    %v1943 = vunpack.c.h.b16 %v1212
    %v1944 = vunpack.c.l.b16 %v1213
    %v1945 = vunpack.c.h.b16 %v1213
    %v1946 = vunpack.c.l.b16 %v1214
    %v1947 = vunpack.c.h.b16 %v1214
    %v1948 = vunpack.c.l.b16 %v1215
    %v1949 = vunpack.c.h.b16 %v1215
    %v1950 = vunpack.c.l.b16 %v1216
    %v1951 = vunpack.c.h.b16 %v1216
    %v1952 = vunpack.c.l.b16 %v1217
    %v1953 = vunpack.c.h.b16 %v1217
    %v1954 = vunpack.c.l.b16 %v1218
    %v1955 = vunpack.c.h.b16 %v1218
    %v1956 = vunpack.c.l.b16 %v1219
    %v1957 = vunpack.c.h.b16 %v1219
    %v1958 = vunpack.c.l.b16 %v1220
    %v1959 = vunpack.c.h.b16 %v1220
    %v1960 = vunpack.c.l.b16 %v1221
    %v1961 = vunpack.c.h.b16 %v1221
    %v1962 = vunpack.c.l.b16 %v1222
    %v1963 = vunpack.c.h.b16 %v1222
    %v1964 = vunpack.c.l.b16 %v1223
    %v1965 = vunpack.c.h.b16 %v1223
    %v1966 = vunpack.c.l.b16 %v1224
    %v1967 = vunpack.c.h.b16 %v1224
    %v1968 = vunpack.c.l.b16 %v1225
    %v1969 = vunpack.c.h.b16 %v1225
    %v1970 = vunpack.c.l.b16 %v1226
    %v1971 = vunpack.c.h.b16 %v1226
    %v1972 = vunpack.c.l.b16 %v1227
    %v1973 = vunpack.c.h.b16 %v1227
    %v1974 = vunpack.c.l.b16 %v1228
    %v1975 = vunpack.c.h.b16 %v1228
    %v1976 = vunpack.c.l.b16 %v1229
    %v1977 = vunpack.c.h.b16 %v1229
    %v1978 = vunpack.c.l.b16 %v1230
    %v1979 = vunpack.c.h.b16 %v1230
    %v1980 = vunpack.c.l.b16 %v1231
    %v1981 = vunpack.c.h.b16 %v1231
    %v1982 = vunpack.c.l.b16 %v1232
    %v1983 = vunpack.c.h.b16 %v1232
    %v1984 = vunpack.c.l.b16 %v1233
    %v1985 = vunpack.c.h.b16 %v1233
    %v1986 = vunpack.c.l.b16 %v1234
    %v1987 = vunpack.c.h.b16 %v1234
    %v1988 = vunpack.c.l.b16 %v1235
    %v1989 = vunpack.c.h.b16 %v1235
    %v1990 = vunpack.c.l.b16 %v1236
    %v1991 = vunpack.c.h.b16 %v1236
    %v1992 = vunpack.c.l.b16 %v1237
    %v1993 = vunpack.c.h.b16 %v1237
    %v1994 = vunpack.c.l.b16 %v1238
    %v1995 = vunpack.c.h.b16 %v1238
    %v1996 = vunpack.c.l.b16 %v1239
    %v1997 = vunpack.c.h.b16 %v1239
    %v1998 = vunpack.c.l.b16 %v1240
    %v1999 = vunpack.c.h.b16 %v1240
    %v2000 = vunpack.c.l.b16 %v1241
    %v2001 = vunpack.c.h.b16 %v1241
    %v2002 = vunpack.c.l.b16 %v1242
    %v2003 = vunpack.c.h.b16 %v1242
    %v2004 = vunpack.c.l.b16 %v1243
    %v2005 = vunpack.c.h.b16 %v1243
    %v2006 = vunpack.c.l.b16 %v1244
    %v2007 = vunpack.c.h.b16 %v1244
    %v2008 = vunpack.c.l.b16 %v1245
    %v2009 = vunpack.c.h.b16 %v1245
    %v2010 = vunpack.c.l.b16 %v1246
    %v2011 = vunpack.c.h.b16 %v1246
    %v2012 = vunpack.c.l.b16 %v1247
    %v2013 = vunpack.c.h.b16 %v1247
    %v2014 = vunpack.c.l.b16 %v1248
    %v2015 = vunpack.c.h.b16 %v1248
    %v2016 = vunpack.c.l.b16 %v1249
    %v2017 = vunpack.c.h.b16 %v1249
    %v2018 = vunpack.c.l.b16 %v1250
    %v2019 = vunpack.c.h.b16 %v1250
    %v2020 = vunpack.c.l.b16 %v1251
    %v2021 = vunpack.c.h.b16 %v1251
    %v2022 = vunpack.c.l.b16 %v1252
    %v2023 = vunpack.c.h.b16 %v1252
    %v2024 = vunpack.c.l.b16 %v1253
    %v2025 = vunpack.c.h.b16 %v1253
    %v2026 = vunpack.c.l.b16 %v1254
    %v2027 = vunpack.c.h.b16 %v1254
    %v2028 = vunpack.c.l.b16 %v1255
    %v2029 = vunpack.c.h.b16 %v1255
    %v2030 = vunpack.c.l.b16 %v1256
    %v2031 = vunpack.c.h.b16 %v1256
    %v2032 = vunpack.c.l.b16 %v1257
    %v2033 = vunpack.c.h.b16 %v1257
    %v2034 = vunpack.c.l.b16 %v1258
    %v2035 = vunpack.c.h.b16 %v1258
    %v2036 = vunpack.c.l.b16 %v1259
    %v2037 = vunpack.c.h.b16 %v1259
    %v2038 = vunpack.c.l.b16 %v1260
    %v2039 = vunpack.c.h.b16 %v1260
    %v2040 = vunpack.c.l.b16 %v1261
    %v2041 = vunpack.c.h.b16 %v1261
    %v2042 = vunpack.c.l.b16 %v1262
    %v2043 = vunpack.c.h.b16 %v1262
    %v2044 = vunpack.c.l.b16 %v1263
    %v2045 = vunpack.c.h.b16 %v1263
    %v2046 = vunpack.c.l.b16 %v1264
    %v2047 = vunpack.c.h.b16 %v1264
    %v2048 = vunpack.c.l.b16 %v1265
    %v2049 = vunpack.c.h.b16 %v1265
    %v2050 = vunpack.c.l.b16 %v1266
    %v2051 = vunpack.c.h.b16 %v1266
    %v2052 = vunpack.c.l.b16 %v1267
    %v2053 = vunpack.c.h.b16 %v1267
    %v2054 = vunpack.c.l.b16 %v1268
    %v2055 = vunpack.c.h.b16 %v1268
    %v2056 = vunpack.c.l.b16 %v1269
    %v2057 = vunpack.c.h.b16 %v1269
    %v2058 = vunpack.c.l.b16 %v1270
    %v2059 = vunpack.c.h.b16 %v1270
    %v2060 = vunpack.c.l.b16 %v1271
    %v2061 = vunpack.c.h.b16 %v1271
    %v2062 = vunpack.c.l.b16 %v1272
    %v2063 = vunpack.c.h.b16 %v1272
    %v2064 = vunpack.c.l.b16 %v1273
    %v2065 = vunpack.c.h.b16 %v1273
    %v2066 = vunpack.c.l.b16 %v1274
    %v2067 = vunpack.c.h.b16 %v1274
    %v2068 = vunpack.c.l.b16 %v1275
    %v2069 = vunpack.c.h.b16 %v1275
    %v2070 = vunpack.c.l.b16 %v1276
    %v2071 = vunpack.c.h.b16 %v1276
    %v2072 = vunpack.c.l.b16 %v1277
    %v2073 = vunpack.c.h.b16 %v1277
    %v2074 = vunpack.c.l.b16 %v1278
    %v2075 = vunpack.c.h.b16 %v1278
    %v2076 = vunpack.c.l.b16 %v1279
    %v2077 = vunpack.c.h.b16 %v1279
    %v2078 = vunpack.c.l.b16 %v1280
    %v2079 = vunpack.c.h.b16 %v1280
    %v2080 = vunpack.c.l.b16 %v1281
    %v2081 = vunpack.c.h.b16 %v1281
    %v2082 = vunpack.c.l.b16 %v1282
    %v2083 = vunpack.c.h.b16 %v1282
    %v2084 = vunpack.c.l.b16 %v1283
    %v2085 = vunpack.c.h.b16 %v1283
    %v2086 = vunpack.c.l.b16 %v1284
    %v2087 = vunpack.c.h.b16 %v1284
    %v2088 = vunpack.c.l.b16 %v1285
    %v2089 = vunpack.c.h.b16 %v1285
    %v2090 = vunpack.c.l.b16 %v1286
    %v2091 = vunpack.c.h.b16 %v1286
    %v2092 = vunpack.c.l.b16 %v1287
    %v2093 = vunpack.c.h.b16 %v1287
    %v2094 = vunpack.c.l.b16 %v1288
    %v2095 = vunpack.c.h.b16 %v1288
    %v2096 = vunpack.c.l.b16 %v1289
    %v2097 = vunpack.c.h.b16 %v1289
    %v2098 = vunpack.c.l.b16 %v1290
    %v2099 = vunpack.c.h.b16 %v1290
    %v2100 = vunpack.c.l.b16 %v1291
    %v2101 = vunpack.c.h.b16 %v1291
    %v2102 = vpack.c.b16 %v1598, %v1590
    %v2103 = vpack.c.b16 %v1599, %v1591
    %v2104 = vpack.c.b16 %v1600, %v1592
    %v2105 = vpack.c.b16 %v1601, %v1593
    %v2106 = vpack.c.b16 %v1602, %v1594
    %v2107 = vpack.c.b16 %v1603, %v1595
    %v2108 = vpack.c.b16 %v1604, %v1596
    %v2109 = vpack.c.b16 %v1605, %v1597
    %v2110 = vpack.c.b16 %v1614, %v1606
    %v2111 = vpack.c.b16 %v1615, %v1607
    %v2112 = vpack.c.b16 %v1616, %v1608
    %v2113 = vpack.c.b16 %v1617, %v1609
    %v2114 = vpack.c.b16 %v1618, %v1610
    %v2115 = vpack.c.b16 %v1619, %v1611
    %v2116 = vpack.c.b16 %v1620, %v1612
    %v2117 = vpack.c.b16 %v1621, %v1613
    %v2118 = vpack.c.b16 %v1630, %v1622
    %v2119 = vpack.c.b16 %v1631, %v1623
    %v2120 = vpack.c.b16 %v1632, %v1624
    %v2121 = vpack.c.b16 %v1633, %v1625
    %v2122 = vpack.c.b16 %v1634, %v1626
    %v2123 = vpack.c.b16 %v1635, %v1627
    %v2124 = vpack.c.b16 %v1636, %v1628
    %v2125 = vpack.c.b16 %v1637, %v1629
    %v2126 = vpack.c.b16 %v1646, %v1638
    %v2127 = vpack.c.b16 %v1647, %v1639
    %v2128 = vpack.c.b16 %v1648, %v1640
    %v2129 = vpack.c.b16 %v1649, %v1641
    %v2130 = vpack.c.b16 %v1650, %v1642
    %v2131 = vpack.c.b16 %v1651, %v1643
    %v2132 = vpack.c.b16 %v1652, %v1644
    %v2133 = vpack.c.b16 %v1653, %v1645
    %v2134 = vpack.c.b16 %v1662, %v1654
    %v2135 = vpack.c.b16 %v1663, %v1655
    %v2136 = vpack.c.b16 %v1664, %v1656
    %v2137 = vpack.c.b16 %v1665, %v1657
    %v2138 = vpack.c.b16 %v1666, %v1658
    %v2139 = vpack.c.b16 %v1667, %v1659
    %v2140 = vpack.c.b16 %v1668, %v1660
    %v2141 = vpack.c.b16 %v1669, %v1661
    %v2142 = vpack.c.b16 %v1678, %v1670
    %v2143 = vpack.c.b16 %v1679, %v1671
    %v2144 = vpack.c.b16 %v1680, %v1672
    %v2145 = vpack.c.b16 %v1681, %v1673
    %v2146 = vpack.c.b16 %v1682, %v1674
    %v2147 = vpack.c.b16 %v1683, %v1675
    %v2148 = vpack.c.b16 %v1684, %v1676
    %v2149 = vpack.c.b16 %v1685, %v1677
    %v2150 = vpack.c.b16 %v1694, %v1686
    %v2151 = vpack.c.b16 %v1695, %v1687
    %v2152 = vpack.c.b16 %v1696, %v1688
    %v2153 = vpack.c.b16 %v1697, %v1689
    %v2154 = vpack.c.b16 %v1698, %v1690
    %v2155 = vpack.c.b16 %v1699, %v1691
    %v2156 = vpack.c.b16 %v1700, %v1692
    %v2157 = vpack.c.b16 %v1701, %v1693
    %v2158 = vpack.c.b16 %v1710, %v1702
    %v2159 = vpack.c.b16 %v1711, %v1703
    %v2160 = vpack.c.b16 %v1712, %v1704
    %v2161 = vpack.c.b16 %v1713, %v1705
    %v2162 = vpack.c.b16 %v1714, %v1706
    %v2163 = vpack.c.b16 %v1715, %v1707
    %v2164 = vpack.c.b16 %v1716, %v1708
    %v2165 = vpack.c.b16 %v1717, %v1709
    %v2166 = vpack.c.b16 %v1726, %v1718
    %v2167 = vpack.c.b16 %v1727, %v1719
    %v2168 = vpack.c.b16 %v1728, %v1720
    %v2169 = vpack.c.b16 %v1729, %v1721
    %v2170 = vpack.c.b16 %v1730, %v1722
    %v2171 = vpack.c.b16 %v1731, %v1723
    %v2172 = vpack.c.b16 %v1732, %v1724
    %v2173 = vpack.c.b16 %v1733, %v1725
    %v2174 = vpack.c.b16 %v1742, %v1734
    %v2175 = vpack.c.b16 %v1743, %v1735
    %v2176 = vpack.c.b16 %v1744, %v1736
    %v2177 = vpack.c.b16 %v1745, %v1737
    %v2178 = vpack.c.b16 %v1746, %v1738
    %v2179 = vpack.c.b16 %v1747, %v1739
    %v2180 = vpack.c.b16 %v1748, %v1740
    %v2181 = vpack.c.b16 %v1749, %v1741
    %v2182 = vpack.c.b16 %v1758, %v1750
    %v2183 = vpack.c.b16 %v1759, %v1751
    %v2184 = vpack.c.b16 %v1760, %v1752
    %v2185 = vpack.c.b16 %v1761, %v1753
    %v2186 = vpack.c.b16 %v1762, %v1754
    %v2187 = vpack.c.b16 %v1763, %v1755
    %v2188 = vpack.c.b16 %v1764, %v1756
    %v2189 = vpack.c.b16 %v1765, %v1757
    %v2190 = vpack.c.b16 %v1774, %v1766
    %v2191 = vpack.c.b16 %v1775, %v1767
    %v2192 = vpack.c.b16 %v1776, %v1768
    %v2193 = vpack.c.b16 %v1777, %v1769
    %v2194 = vpack.c.b16 %v1778, %v1770
    %v2195 = vpack.c.b16 %v1779, %v1771
    %v2196 = vpack.c.b16 %v1780, %v1772
    %v2197 = vpack.c.b16 %v1781, %v1773
    %v2198 = vpack.c.b16 %v1790, %v1782
    %v2199 = vpack.c.b16 %v1791, %v1783
    %v2200 = vpack.c.b16 %v1792, %v1784
    %v2201 = vpack.c.b16 %v1793, %v1785
    %v2202 = vpack.c.b16 %v1794, %v1786
    %v2203 = vpack.c.b16 %v1795, %v1787
    %v2204 = vpack.c.b16 %v1796, %v1788
    %v2205 = vpack.c.b16 %v1797, %v1789
    %v2206 = vpack.c.b16 %v1806, %v1798
    %v2207 = vpack.c.b16 %v1807, %v1799
    %v2208 = vpack.c.b16 %v1808, %v1800
    %v2209 = vpack.c.b16 %v1809, %v1801
    %v2210 = vpack.c.b16 %v1810, %v1802
    %v2211 = vpack.c.b16 %v1811, %v1803
    %v2212 = vpack.c.b16 %v1812, %v1804
    %v2213 = vpack.c.b16 %v1813, %v1805
    %v2214 = vpack.c.b16 %v1822, %v1814
    %v2215 = vpack.c.b16 %v1823, %v1815
    %v2216 = vpack.c.b16 %v1824, %v1816
    %v2217 = vpack.c.b16 %v1825, %v1817
    %v2218 = vpack.c.b16 %v1826, %v1818
    %v2219 = vpack.c.b16 %v1827, %v1819
    %v2220 = vpack.c.b16 %v1828, %v1820
    %v2221 = vpack.c.b16 %v1829, %v1821
    %v2222 = vpack.c.b16 %v1838, %v1830
    %v2223 = vpack.c.b16 %v1839, %v1831
    %v2224 = vpack.c.b16 %v1840, %v1832
    %v2225 = vpack.c.b16 %v1841, %v1833
    %v2226 = vpack.c.b16 %v1842, %v1834
    %v2227 = vpack.c.b16 %v1843, %v1835
    %v2228 = vpack.c.b16 %v1844, %v1836
    %v2229 = vpack.c.b16 %v1845, %v1837
    %v2230 = vpack.c.b16 %v1854, %v1846
    %v2231 = vpack.c.b16 %v1855, %v1847
    %v2232 = vpack.c.b16 %v1856, %v1848
    %v2233 = vpack.c.b16 %v1857, %v1849
    %v2234 = vpack.c.b16 %v1858, %v1850
    %v2235 = vpack.c.b16 %v1859, %v1851
    %v2236 = vpack.c.b16 %v1860, %v1852
    %v2237 = vpack.c.b16 %v1861, %v1853
    %v2238 = vpack.c.b16 %v1870, %v1862
    %v2239 = vpack.c.b16 %v1871, %v1863
    %v2240 = vpack.c.b16 %v1872, %v1864
    %v2241 = vpack.c.b16 %v1873, %v1865
    %v2242 = vpack.c.b16 %v1874, %v1866
    %v2243 = vpack.c.b16 %v1875, %v1867
    %v2244 = vpack.c.b16 %v1876, %v1868
    %v2245 = vpack.c.b16 %v1877, %v1869
    %v2246 = vpack.c.b16 %v1886, %v1878
    %v2247 = vpack.c.b16 %v1887, %v1879
    %v2248 = vpack.c.b16 %v1888, %v1880
    %v2249 = vpack.c.b16 %v1889, %v1881
    %v2250 = vpack.c.b16 %v1890, %v1882
    %v2251 = vpack.c.b16 %v1891, %v1883
    %v2252 = vpack.c.b16 %v1892, %v1884
    %v2253 = vpack.c.b16 %v1893, %v1885
    %v2254 = vpack.c.b16 %v1902, %v1894
    %v2255 = vpack.c.b16 %v1903, %v1895
    %v2256 = vpack.c.b16 %v1904, %v1896
    %v2257 = vpack.c.b16 %v1905, %v1897
    %v2258 = vpack.c.b16 %v1906, %v1898
    %v2259 = vpack.c.b16 %v1907, %v1899
    %v2260 = vpack.c.b16 %v1908, %v1900
    %v2261 = vpack.c.b16 %v1909, %v1901
    %v2262 = vpack.c.b16 %v1918, %v1910
    %v2263 = vpack.c.b16 %v1919, %v1911
    %v2264 = vpack.c.b16 %v1920, %v1912
    %v2265 = vpack.c.b16 %v1921, %v1913
    %v2266 = vpack.c.b16 %v1922, %v1914
    %v2267 = vpack.c.b16 %v1923, %v1915
    %v2268 = vpack.c.b16 %v1924, %v1916
    %v2269 = vpack.c.b16 %v1925, %v1917
    %v2270 = vpack.c.b16 %v1934, %v1926
    %v2271 = vpack.c.b16 %v1935, %v1927
    %v2272 = vpack.c.b16 %v1936, %v1928
    %v2273 = vpack.c.b16 %v1937, %v1929
    %v2274 = vpack.c.b16 %v1938, %v1930
    %v2275 = vpack.c.b16 %v1939, %v1931
    %v2276 = vpack.c.b16 %v1940, %v1932
    %v2277 = vpack.c.b16 %v1941, %v1933
    %v2278 = vpack.c.b16 %v1950, %v1942
    %v2279 = vpack.c.b16 %v1951, %v1943
    %v2280 = vpack.c.b16 %v1952, %v1944
    %v2281 = vpack.c.b16 %v1953, %v1945
    %v2282 = vpack.c.b16 %v1954, %v1946
    %v2283 = vpack.c.b16 %v1955, %v1947
    %v2284 = vpack.c.b16 %v1956, %v1948
    %v2285 = vpack.c.b16 %v1957, %v1949
    %v2286 = vpack.c.b16 %v1966, %v1958
    %v2287 = vpack.c.b16 %v1967, %v1959
    %v2288 = vpack.c.b16 %v1968, %v1960
    %v2289 = vpack.c.b16 %v1969, %v1961
    %v2290 = vpack.c.b16 %v1970, %v1962
    %v2291 = vpack.c.b16 %v1971, %v1963
    %v2292 = vpack.c.b16 %v1972, %v1964
    %v2293 = vpack.c.b16 %v1973, %v1965
    %v2294 = vpack.c.b16 %v1982, %v1974
    %v2295 = vpack.c.b16 %v1983, %v1975
    %v2296 = vpack.c.b16 %v1984, %v1976
    %v2297 = vpack.c.b16 %v1985, %v1977
    %v2298 = vpack.c.b16 %v1986, %v1978
    %v2299 = vpack.c.b16 %v1987, %v1979
    %v2300 = vpack.c.b16 %v1988, %v1980
    %v2301 = vpack.c.b16 %v1989, %v1981
    %v2302 = vpack.c.b16 %v1998, %v1990
    %v2303 = vpack.c.b16 %v1999, %v1991
    %v2304 = vpack.c.b16 %v2000, %v1992
    %v2305 = vpack.c.b16 %v2001, %v1993
    %v2306 = vpack.c.b16 %v2002, %v1994
    %v2307 = vpack.c.b16 %v2003, %v1995
    %v2308 = vpack.c.b16 %v2004, %v1996
    %v2309 = vpack.c.b16 %v2005, %v1997
    %v2310 = vpack.c.b16 %v2014, %v2006
    %v2311 = vpack.c.b16 %v2015, %v2007
    %v2312 = vpack.c.b16 %v2016, %v2008
    %v2313 = vpack.c.b16 %v2017, %v2009
    %v2314 = vpack.c.b16 %v2018, %v2010
    %v2315 = vpack.c.b16 %v2019, %v2011
    %v2316 = vpack.c.b16 %v2020, %v2012
    %v2317 = vpack.c.b16 %v2021, %v2013
    %v2318 = vpack.c.b16 %v2030, %v2022
    %v2319 = vpack.c.b16 %v2031, %v2023
    %v2320 = vpack.c.b16 %v2032, %v2024
    %v2321 = vpack.c.b16 %v2033, %v2025
    %v2322 = vpack.c.b16 %v2034, %v2026
    %v2323 = vpack.c.b16 %v2035, %v2027
    %v2324 = vpack.c.b16 %v2036, %v2028
    %v2325 = vpack.c.b16 %v2037, %v2029
    %v2326 = vpack.c.b16 %v2046, %v2038
    %v2327 = vpack.c.b16 %v2047, %v2039
    %v2328 = vpack.c.b16 %v2048, %v2040
    %v2329 = vpack.c.b16 %v2049, %v2041
    %v2330 = vpack.c.b16 %v2050, %v2042
    %v2331 = vpack.c.b16 %v2051, %v2043
    %v2332 = vpack.c.b16 %v2052, %v2044
    %v2333 = vpack.c.b16 %v2053, %v2045
    %v2334 = vpack.c.b16 %v2062, %v2054
    %v2335 = vpack.c.b16 %v2063, %v2055
    %v2336 = vpack.c.b16 %v2064, %v2056
    %v2337 = vpack.c.b16 %v2065, %v2057
    %v2338 = vpack.c.b16 %v2066, %v2058
    %v2339 = vpack.c.b16 %v2067, %v2059
    %v2340 = vpack.c.b16 %v2068, %v2060
    %v2341 = vpack.c.b16 %v2069, %v2061
    %v2342 = vpack.c.b16 %v2078, %v2070
    %v2343 = vpack.c.b16 %v2079, %v2071
    %v2344 = vpack.c.b16 %v2080, %v2072
    %v2345 = vpack.c.b16 %v2081, %v2073
    %v2346 = vpack.c.b16 %v2082, %v2074
    %v2347 = vpack.c.b16 %v2083, %v2075
    %v2348 = vpack.c.b16 %v2084, %v2076
    %v2349 = vpack.c.b16 %v2085, %v2077
    %v2350 = vpack.c.b16 %v2094, %v2086
    %v2351 = vpack.c.b16 %v2095, %v2087
    %v2352 = vpack.c.b16 %v2096, %v2088
    %v2353 = vpack.c.b16 %v2097, %v2089
    %v2354 = vpack.c.b16 %v2098, %v2090
    %v2355 = vpack.c.b16 %v2099, %v2091
    %v2356 = vpack.c.b16 %v2100, %v2092
    %v2357 = vpack.c.b16 %v2101, %v2093
    %2614 = vmatprep.subr.bf16.mxu0 %v2103
    %2615 = vmatpush1.bf16.msra.mxu0 %v2102
    %2616 = vmatprep.subr.bf16.mxu0 %v2111
    %2617 = vmatpush1.bf16.msra.mxu0 %v2110
    %2618 = vmatprep.subr.bf16.mxu0 %v2119
    %2619 = vmatpush1.bf16.msra.mxu0 %v2118
    %2620 = vmatprep.subr.bf16.mxu0 %v2127
    %2621 = vmatpush1.bf16.msra.mxu0 %v2126
    %2622 = vmatprep.subr.bf16.mxu0 %v2135
    %2623 = vmatpush1.bf16.msra.mxu0 %v2134
    %2624 = vmatprep.subr.bf16.mxu0 %v2143
    %2625 = vmatpush1.bf16.msra.mxu0 %v2142
    %2626 = vmatprep.subr.bf16.mxu0 %v2151
    %2627 = vmatpush1.bf16.msra.mxu0 %v2150
    %2628 = vmatprep.subr.bf16.mxu0 %v2159
    %2629 = vmatpush1.bf16.msra.mxu0 %v2158
    %2630 = vmatprep.subr.bf16.mxu0 %v2167
    %2631 = vmatpush1.bf16.msra.mxu0 %v2166
    %2632 = vmatprep.subr.bf16.mxu0 %v2175
    %2633 = vmatpush1.bf16.msra.mxu0 %v2174
    %2634 = vmatprep.subr.bf16.mxu0 %v2183
    %2635 = vmatpush1.bf16.msra.mxu0 %v2182
    %2636 = vmatprep.subr.bf16.mxu0 %v2191
    %2637 = vmatpush1.bf16.msra.mxu0 %v2190
    %2638 = vmatprep.subr.bf16.mxu0 %v2199
    %2639 = vmatpush1.bf16.msra.mxu0 %v2198
    %2640 = vmatprep.subr.bf16.mxu0 %v2207
    %2641 = vmatpush1.bf16.msra.mxu0 %v2206
    %2642 = vmatprep.subr.bf16.mxu0 %v2215
    %2643 = vmatpush1.bf16.msra.mxu0 %v2214
    %2644 = vmatprep.subr.bf16.mxu0 %v2223
    %2645 = vmatpush1.bf16.msra.mxu0 %v2222
    %2646 = vmatprep.mubr.bf16.mxu0 %v1033
    %2647 = vmatmul.mubr.bf16.gmra.mrb[0].mxu0 %v1032
    %v2648 = vpop.f32.mrb[0].mxu0
    %v2649 = vadd.f32 %v1297, %v2648
    %v2650 = vpop.f32.mrb[0].mxu0
    %v2651 = vadd.f32 %v1301, %v2650
    %v2652 = vpop.f32.mrb[0].mxu0
    %v2653 = vpop.f32.mrb[0].mxu0
    %2654 = vdwg.mxu0
    %2655 = vmatprep.subr.bf16.mxu0 %v2231
    %2656 = vmatpush1.bf16.msra.mxu0 %v2230
    %2657 = vmatprep.subr.bf16.mxu0 %v2239
    %2658 = vmatpush1.bf16.msra.mxu0 %v2238
    %2659 = vmatprep.subr.bf16.mxu0 %v2247
    %2660 = vmatpush1.bf16.msra.mxu0 %v2246
    %2661 = vmatprep.subr.bf16.mxu0 %v2255
    %2662 = vmatpush1.bf16.msra.mxu0 %v2254
    %2663 = vmatprep.subr.bf16.mxu0 %v2263
    %2664 = vmatpush1.bf16.msra.mxu0 %v2262
    %2665 = vmatprep.subr.bf16.mxu0 %v2271
    %2666 = vmatpush1.bf16.msra.mxu0 %v2270
    %2667 = vmatprep.subr.bf16.mxu0 %v2279
    %2668 = vmatpush1.bf16.msra.mxu0 %v2278
    %2669 = vmatprep.subr.bf16.mxu0 %v2287
    %2670 = vmatpush1.bf16.msra.mxu0 %v2286
    %2671 = vmatprep.subr.bf16.mxu0 %v2295
    %2672 = vmatpush1.bf16.msra.mxu0 %v2294
    %2673 = vmatprep.subr.bf16.mxu0 %v2303
    %2674 = vmatpush1.bf16.msra.mxu0 %v2302
    %2675 = vmatprep.subr.bf16.mxu0 %v2311
    %2676 = vmatpush1.bf16.msra.mxu0 %v2310
    %2677 = vmatprep.subr.bf16.mxu0 %v2319
    %2678 = vmatpush1.bf16.msra.mxu0 %v2318
    %2679 = vmatprep.subr.bf16.mxu0 %v2327
    %2680 = vmatpush1.bf16.msra.mxu0 %v2326
    %2681 = vmatprep.subr.bf16.mxu0 %v2335
    %2682 = vmatpush1.bf16.msra.mxu0 %v2334
    %2683 = vmatprep.subr.bf16.mxu0 %v2343
    %2684 = vmatpush1.bf16.msra.mxu0 %v2342
    %2685 = vmatprep.subr.bf16.mxu0 %v2351
    %2686 = vmatpush1.bf16.msra.mxu0 %v2350
    %2687 = vmatprep.mubr.bf16.mxu0 %v1035
    %2688 = vmatmul.mubr.bf16.gmra.mrb[0].mxu0 %v1034
    %v2689 = vpop.f32.mrb[0].mxu0
    %v2690 = vadd.f32 %v2649, %v2689
    %v2691 = vpop.f32.mrb[0].mxu0
    %v2692 = vadd.f32 %v2651, %v2691
    %v2693 = vpop.f32.mrb[0].mxu0
    %v2694 = vpop.f32.mrb[0].mxu0
    %2695 = vdwg.mxu0
    %2696 = vmatprep.subr.bf16.mxu0 %v2105
    %2697 = vmatpush1.bf16.msra.mxu0 %v2104
    %2698 = vmatprep.subr.bf16.mxu0 %v2113
    %2699 = vmatpush1.bf16.msra.mxu0 %v2112
    %2700 = vmatprep.subr.bf16.mxu0 %v2121
    %2701 = vmatpush1.bf16.msra.mxu0 %v2120
    %2702 = vmatprep.subr.bf16.mxu0 %v2129
    %2703 = vmatpush1.bf16.msra.mxu0 %v2128
    %2704 = vmatprep.subr.bf16.mxu0 %v2137
    %2705 = vmatpush1.bf16.msra.mxu0 %v2136
    %2706 = vmatprep.subr.bf16.mxu0 %v2145
    %2707 = vmatpush1.bf16.msra.mxu0 %v2144
    %2708 = vmatprep.subr.bf16.mxu0 %v2153
    %2709 = vmatpush1.bf16.msra.mxu0 %v2152
    %2710 = vmatprep.subr.bf16.mxu0 %v2161
    %2711 = vmatpush1.bf16.msra.mxu0 %v2160
    %2712 = vmatprep.subr.bf16.mxu0 %v2169
    %2713 = vmatpush1.bf16.msra.mxu0 %v2168
    %2714 = vmatprep.subr.bf16.mxu0 %v2177
    %2715 = vmatpush1.bf16.msra.mxu0 %v2176
    %2716 = vmatprep.subr.bf16.mxu0 %v2185
    %2717 = vmatpush1.bf16.msra.mxu0 %v2184
    %2718 = vmatprep.subr.bf16.mxu0 %v2193
    %2719 = vmatpush1.bf16.msra.mxu0 %v2192
    %2720 = vmatprep.subr.bf16.mxu0 %v2201
    %2721 = vmatpush1.bf16.msra.mxu0 %v2200
    %2722 = vmatprep.subr.bf16.mxu0 %v2209
    %2723 = vmatpush1.bf16.msra.mxu0 %v2208
    %2724 = vmatprep.subr.bf16.mxu0 %v2217
    %2725 = vmatpush1.bf16.msra.mxu0 %v2216
    %2726 = vmatprep.subr.bf16.mxu0 %v2225
    %2727 = vmatpush1.bf16.msra.mxu0 %v2224
    %2728 = vmatprep.mubr.bf16.mxu0 %v1033
    %2729 = vmatmul.mubr.bf16.gmra.mrb[0].mxu0 %v1032
    %v2730 = vpop.f32.mrb[0].mxu0
    %v2731 = vadd.f32 %v1305, %v2730
    %v2732 = vpop.f32.mrb[0].mxu0
    %v2733 = vadd.f32 %v1309, %v2732
    %v2734 = vpop.f32.mrb[0].mxu0
    %v2735 = vpop.f32.mrb[0].mxu0
    %2736 = vdwg.mxu0
    %2737 = vmatprep.subr.bf16.mxu0 %v2233
    %2738 = vmatpush1.bf16.msra.mxu0 %v2232
    %2739 = vmatprep.subr.bf16.mxu0 %v2241
    %2740 = vmatpush1.bf16.msra.mxu0 %v2240
    %2741 = vmatprep.subr.bf16.mxu0 %v2249
    %2742 = vmatpush1.bf16.msra.mxu0 %v2248
    %2743 = vmatprep.subr.bf16.mxu0 %v2257
    %2744 = vmatpush1.bf16.msra.mxu0 %v2256
    %2745 = vmatprep.subr.bf16.mxu0 %v2265
    %2746 = vmatpush1.bf16.msra.mxu0 %v2264
    %2747 = vmatprep.subr.bf16.mxu0 %v2273
    %2748 = vmatpush1.bf16.msra.mxu0 %v2272
    %2749 = vmatprep.subr.bf16.mxu0 %v2281
    %2750 = vmatpush1.bf16.msra.mxu0 %v2280
    %2751 = vmatprep.subr.bf16.mxu0 %v2289
    %2752 = vmatpush1.bf16.msra.mxu0 %v2288
    %2753 = vmatprep.subr.bf16.mxu0 %v2297
    %2754 = vmatpush1.bf16.msra.mxu0 %v2296
    %2755 = vmatprep.subr.bf16.mxu0 %v2305
    %2756 = vmatpush1.bf16.msra.mxu0 %v2304
    %2757 = vmatprep.subr.bf16.mxu0 %v2313
    %2758 = vmatpush1.bf16.msra.mxu0 %v2312
    %2759 = vmatprep.subr.bf16.mxu0 %v2321
    %2760 = vmatpush1.bf16.msra.mxu0 %v2320
    %2761 = vmatprep.subr.bf16.mxu0 %v2329
    %2762 = vmatpush1.bf16.msra.mxu0 %v2328
    %2763 = vmatprep.subr.bf16.mxu0 %v2337
    %2764 = vmatpush1.bf16.msra.mxu0 %v2336
    %2765 = vmatprep.subr.bf16.mxu0 %v2345
    %2766 = vmatpush1.bf16.msra.mxu0 %v2344
    %2767 = vmatprep.subr.bf16.mxu0 %v2353
    %2768 = vmatpush1.bf16.msra.mxu0 %v2352
    %2769 = vmatprep.mubr.bf16.mxu0 %v1035
    %2770 = vmatmul.mubr.bf16.gmra.mrb[0].mxu0 %v1034
    %v2771 = vpop.f32.mrb[0].mxu0
    %v2772 = vadd.f32 %v2731, %v2771
    %v2773 = vpop.f32.mrb[0].mxu0
    %v2774 = vadd.f32 %v2733, %v2773
    %v2775 = vpop.f32.mrb[0].mxu0
    %v2776 = vpop.f32.mrb[0].mxu0
    %2777 = vdwg.mxu0
    %2778 = vmatprep.subr.bf16.mxu0 %v2107
    %2779 = vmatpush1.bf16.msra.mxu0 %v2106
    %2780 = vmatprep.subr.bf16.mxu0 %v2115
    %2781 = vmatpush1.bf16.msra.mxu0 %v2114
    %2782 = vmatprep.subr.bf16.mxu0 %v2123
    %2783 = vmatpush1.bf16.msra.mxu0 %v2122
    %2784 = vmatprep.subr.bf16.mxu0 %v2131
    %2785 = vmatpush1.bf16.msra.mxu0 %v2130
    %2786 = vmatprep.subr.bf16.mxu0 %v2139
    %2787 = vmatpush1.bf16.msra.mxu0 %v2138
    %2788 = vmatprep.subr.bf16.mxu0 %v2147
    %2789 = vmatpush1.bf16.msra.mxu0 %v2146
    %2790 = vmatprep.subr.bf16.mxu0 %v2155
    %2791 = vmatpush1.bf16.msra.mxu0 %v2154
    %2792 = vmatprep.subr.bf16.mxu0 %v2163
    %2793 = vmatpush1.bf16.msra.mxu0 %v2162
    %2794 = vmatprep.subr.bf16.mxu0 %v2171
    %2795 = vmatpush1.bf16.msra.mxu0 %v2170
    %2796 = vmatprep.subr.bf16.mxu0 %v2179
    %2797 = vmatpush1.bf16.msra.mxu0 %v2178
    %2798 = vmatprep.subr.bf16.mxu0 %v2187
    %2799 = vmatpush1.bf16.msra.mxu0 %v2186
    %2800 = vmatprep.subr.bf16.mxu0 %v2195
    %2801 = vmatpush1.bf16.msra.mxu0 %v2194
    %2802 = vmatprep.subr.bf16.mxu0 %v2203
    %2803 = vmatpush1.bf16.msra.mxu0 %v2202
    %2804 = vmatprep.subr.bf16.mxu0 %v2211
    %2805 = vmatpush1.bf16.msra.mxu0 %v2210
    %2806 = vmatprep.subr.bf16.mxu0 %v2219
    %2807 = vmatpush1.bf16.msra.mxu0 %v2218
    %2808 = vmatprep.subr.bf16.mxu0 %v2227
    %2809 = vmatpush1.bf16.msra.mxu0 %v2226
    %2810 = vmatprep.mubr.bf16.mxu0 %v1033
    %2811 = vmatmul.mubr.bf16.gmra.mrb[0].mxu0 %v1032
    %v2812 = vpop.f32.mrb[0].mxu0
    %v2813 = vadd.f32 %v1313, %v2812
    %v2814 = vpop.f32.mrb[0].mxu0
    %v2815 = vadd.f32 %v1317, %v2814
    %v2816 = vpop.f32.mrb[0].mxu0
    %v2817 = vpop.f32.mrb[0].mxu0
    %2818 = vdwg.mxu0
    %2819 = vmatprep.subr.bf16.mxu0 %v2235
    %2820 = vmatpush1.bf16.msra.mxu0 %v2234
    %2821 = vmatprep.subr.bf16.mxu0 %v2243
    %2822 = vmatpush1.bf16.msra.mxu0 %v2242
    %2823 = vmatprep.subr.bf16.mxu0 %v2251
    %2824 = vmatpush1.bf16.msra.mxu0 %v2250
    %2825 = vmatprep.subr.bf16.mxu0 %v2259
    %2826 = vmatpush1.bf16.msra.mxu0 %v2258
    %2827 = vmatprep.subr.bf16.mxu0 %v2267
    %2828 = vmatpush1.bf16.msra.mxu0 %v2266
    %2829 = vmatprep.subr.bf16.mxu0 %v2275
    %2830 = vmatpush1.bf16.msra.mxu0 %v2274
    %2831 = vmatprep.subr.bf16.mxu0 %v2283
    %2832 = vmatpush1.bf16.msra.mxu0 %v2282
    %2833 = vmatprep.subr.bf16.mxu0 %v2291
    %2834 = vmatpush1.bf16.msra.mxu0 %v2290
    %2835 = vmatprep.subr.bf16.mxu0 %v2299
    %2836 = vmatpush1.bf16.msra.mxu0 %v2298
    %2837 = vmatprep.subr.bf16.mxu0 %v2307
    %2838 = vmatpush1.bf16.msra.mxu0 %v2306
    %2839 = vmatprep.subr.bf16.mxu0 %v2315
    %2840 = vmatpush1.bf16.msra.mxu0 %v2314
    %2841 = vmatprep.subr.bf16.mxu0 %v2323
    %2842 = vmatpush1.bf16.msra.mxu0 %v2322
    %2843 = vmatprep.subr.bf16.mxu0 %v2331
    %2844 = vmatpush1.bf16.msra.mxu0 %v2330
    %2845 = vmatprep.subr.bf16.mxu0 %v2339
    %2846 = vmatpush1.bf16.msra.mxu0 %v2338
    %2847 = vmatprep.subr.bf16.mxu0 %v2347
    %2848 = vmatpush1.bf16.msra.mxu0 %v2346
    %2849 = vmatprep.subr.bf16.mxu0 %v2355
    %2850 = vmatpush1.bf16.msra.mxu0 %v2354
    %2851 = vmatprep.mubr.bf16.mxu0 %v1035
    %2852 = vmatmul.mubr.bf16.gmra.mrb[0].mxu0 %v1034
    %v2853 = vpop.f32.mrb[0].mxu0
    %v2854 = vadd.f32 %v2813, %v2853
    %v2855 = vpop.f32.mrb[0].mxu0
    %v2856 = vadd.f32 %v2815, %v2855
    %v2857 = vpop.f32.mrb[0].mxu0
    %v2858 = vpop.f32.mrb[0].mxu0
    %2859 = vdwg.mxu0
    %2860 = vmatprep.subr.bf16.mxu0 %v2109
    %2861 = vmatpush1.bf16.msra.mxu0 %v2108
    %2862 = vmatprep.subr.bf16.mxu0 %v2117
    %2863 = vmatpush1.bf16.msra.mxu0 %v2116
    %2864 = vmatprep.subr.bf16.mxu0 %v2125
    %2865 = vmatpush1.bf16.msra.mxu0 %v2124
    %2866 = vmatprep.subr.bf16.mxu0 %v2133
    %2867 = vmatpush1.bf16.msra.mxu0 %v2132
    %2868 = vmatprep.subr.bf16.mxu0 %v2141
    %2869 = vmatpush1.bf16.msra.mxu0 %v2140
    %2870 = vmatprep.subr.bf16.mxu0 %v2149
    %2871 = vmatpush1.bf16.msra.mxu0 %v2148
    %2872 = vmatprep.subr.bf16.mxu0 %v2157
    %2873 = vmatpush1.bf16.msra.mxu0 %v2156
    %2874 = vmatprep.subr.bf16.mxu0 %v2165
    %2875 = vmatpush1.bf16.msra.mxu0 %v2164
    %2876 = vmatprep.subr.bf16.mxu0 %v2173
    %2877 = vmatpush1.bf16.msra.mxu0 %v2172
    %2878 = vmatprep.subr.bf16.mxu0 %v2181
    %2879 = vmatpush1.bf16.msra.mxu0 %v2180
    %2880 = vmatprep.subr.bf16.mxu0 %v2189
    %2881 = vmatpush1.bf16.msra.mxu0 %v2188
    %2882 = vmatprep.subr.bf16.mxu0 %v2197
    %2883 = vmatpush1.bf16.msra.mxu0 %v2196
    %2884 = vmatprep.subr.bf16.mxu0 %v2205
    %2885 = vmatpush1.bf16.msra.mxu0 %v2204
    %2886 = vmatprep.subr.bf16.mxu0 %v2213
    %2887 = vmatpush1.bf16.msra.mxu0 %v2212
    %2888 = vmatprep.subr.bf16.mxu0 %v2221
    %2889 = vmatpush1.bf16.msra.mxu0 %v2220
    %2890 = vmatprep.subr.bf16.mxu0 %v2229
    %2891 = vmatpush1.bf16.msra.mxu0 %v2228
    %2892 = vmatprep.mubr.bf16.mxu0 %v1033
    %2893 = vmatmul.mubr.bf16.gmra.mrb[0].mxu0 %v1032
    %v2894 = vpop.f32.mrb[0].mxu0
    %v2895 = vadd.f32 %v1321, %v2894
    %v2896 = vpop.f32.mrb[0].mxu0
    %v2897 = vadd.f32 %v1325, %v2896
    %v2898 = vpop.f32.mrb[0].mxu0
    %v2899 = vpop.f32.mrb[0].mxu0
    %2900 = vdwg.mxu0
    %2901 = vmatprep.subr.bf16.mxu0 %v2237
    %2902 = vmatpush1.bf16.msra.mxu0 %v2236
    %2903 = vmatprep.subr.bf16.mxu0 %v2245
    %2904 = vmatpush1.bf16.msra.mxu0 %v2244
    %2905 = vmatprep.subr.bf16.mxu0 %v2253
    %2906 = vmatpush1.bf16.msra.mxu0 %v2252
    %2907 = vmatprep.subr.bf16.mxu0 %v2261
    %2908 = vmatpush1.bf16.msra.mxu0 %v2260
    %2909 = vmatprep.subr.bf16.mxu0 %v2269
    %2910 = vmatpush1.bf16.msra.mxu0 %v2268
    %2911 = vmatprep.subr.bf16.mxu0 %v2277
    %2912 = vmatpush1.bf16.msra.mxu0 %v2276
    %2913 = vmatprep.subr.bf16.mxu0 %v2285
    %2914 = vmatpush1.bf16.msra.mxu0 %v2284
    %2915 = vmatprep.subr.bf16.mxu0 %v2293
    %2916 = vmatpush1.bf16.msra.mxu0 %v2292
    %2917 = vmatprep.subr.bf16.mxu0 %v2301
    %2918 = vmatpush1.bf16.msra.mxu0 %v2300
    %2919 = vmatprep.subr.bf16.mxu0 %v2309
    %2920 = vmatpush1.bf16.msra.mxu0 %v2308
    %2921 = vmatprep.subr.bf16.mxu0 %v2317
    %2922 = vmatpush1.bf16.msra.mxu0 %v2316
    %2923 = vmatprep.subr.bf16.mxu0 %v2325
    %2924 = vmatpush1.bf16.msra.mxu0 %v2324
    %2925 = vmatprep.subr.bf16.mxu0 %v2333
    %2926 = vmatpush1.bf16.msra.mxu0 %v2332
    %2927 = vmatprep.subr.bf16.mxu0 %v2341
    %2928 = vmatpush1.bf16.msra.mxu0 %v2340
    %2929 = vmatprep.subr.bf16.mxu0 %v2349
    %2930 = vmatpush1.bf16.msra.mxu0 %v2348
    %2931 = vmatprep.subr.bf16.mxu0 %v2357
    %2932 = vmatpush1.bf16.msra.mxu0 %v2356
    %2933 = vmatprep.mubr.bf16.mxu0 %v1035
    %2934 = vmatmul.mubr.bf16.gmra.mrb[0].mxu0 %v1034
    %v2935 = vpop.f32.mrb[0].mxu0
    %v2936 = vadd.f32 %v2895, %v2935
    %v2937 = vpop.f32.mrb[0].mxu0
    %v2938 = vadd.f32 %v2897, %v2937
    %v2939 = vpop.f32.mrb[0].mxu0
    %v2940 = vpop.f32.mrb[0].mxu0
    %2941 = vdwg.mxu0
    %v2942 = vtanh.pop %v2690
    %v2943 = vtanh.pop %v2692
    %v2944 = vtanh.pop %v2772
    %v2945 = vtanh.pop %v2774
    %v2946 = vtanh.pop %v2854
    %v2947 = vtanh.pop %v2856
    %v2948 = vtanh.pop %v2936
    %v2949 = vtanh.pop %v2938
    %v2950 = vpack.c.bf16 %v2942, %v2942
    %v2951 = vpack.c.bf16 %v2943, %v2943
    %v2952 = vpack.c.bf16 %v2944, %v2944
    %v2953 = vpack.c.bf16 %v2945, %v2945
    %v2954 = vpack.c.bf16 %v2946, %v2946
    %v2955 = vpack.c.bf16 %v2947, %v2947
    %v2956 = vpack.c.bf16 %v2948, %v2948
    %v2957 = vpack.c.bf16 %v2949, %v2949
    %v2958 = vld [vmem:[#allocation20] sm:$0xff]
    %v2959 = vld [vmem:[#allocation20 + $0x8] sm:$0xff]
    %v2960 = vld [vmem:[#allocation20 + $0x10] sm:$0xff]
    %v2961 = vld [vmem:[#allocation20 + $0x18] sm:$0xff]
    %v2962 = vld [vmem:[#allocation20 + $0x20] sm:$0xff]
    %v2963 = vld [vmem:[#allocation20 + $0x28] sm:$0xff]
    %v2964 = vld [vmem:[#allocation20 + $0x30] sm:$0xff]
    %v2965 = vld [vmem:[#allocation20 + $0x38] sm:$0xff]
    %v2966 = vld [vmem:[#allocation20 + $0x40] sm:$0xff]
    %v2967 = vld [vmem:[#allocation20 + $0x48] sm:$0xff]
    %v2968 = vld [vmem:[#allocation20 + $0x50] sm:$0xff]
    %v2969 = vld [vmem:[#allocation20 + $0x58] sm:$0xff]
    %v2970 = vld [vmem:[#allocation20 + $0x60] sm:$0xff]
    %v2971 = vld [vmem:[#allocation20 + $0x68] sm:$0xff]
    %v2972 = vld [vmem:[#allocation20 + $0x70] sm:$0xff]
    %v2973 = vld [vmem:[#allocation20 + $0x78] sm:$0xff]
    %v2974 = vld [vmem:[#allocation20 + $0x80] sm:$0xff]
    %v2975 = vld [vmem:[#allocation20 + $0x88] sm:$0xff]
    %v2976 = vld [vmem:[#allocation20 + $0x90] sm:$0xff]
    %v2977 = vld [vmem:[#allocation20 + $0x98] sm:$0xff]
    %v2978 = vld [vmem:[#allocation20 + $0xa0] sm:$0xff]
    %v2979 = vld [vmem:[#allocation20 + $0xa8] sm:$0xff]
    %v2980 = vld [vmem:[#allocation20 + $0xb0] sm:$0xff]
    %v2981 = vld [vmem:[#allocation20 + $0xb8] sm:$0xff]
    %v2982 = vld [vmem:[#allocation20 + $0xc0] sm:$0xff]
    %v2983 = vld [vmem:[#allocation20 + $0xc8] sm:$0xff]
    %v2984 = vld [vmem:[#allocation20 + $0xd0] sm:$0xff]
    %v2985 = vld [vmem:[#allocation20 + $0xd8] sm:$0xff]
    %v2986 = vld [vmem:[#allocation20 + $0xe0] sm:$0xff]
    %v2987 = vld [vmem:[#allocation20 + $0xe8] sm:$0xff]
    %v2988 = vld [vmem:[#allocation20 + $0xf0] sm:$0xff]
    %v2989 = vld [vmem:[#allocation20 + $0xf8] sm:$0xff]
    %v2990 = vld [vmem:[#allocation20 + $0x100] sm:$0xff]
    %v2991 = vld [vmem:[#allocation20 + $0x108] sm:$0xff]
    %v2992 = vld [vmem:[#allocation20 + $0x110] sm:$0xff]
    %v2993 = vld [vmem:[#allocation20 + $0x118] sm:$0xff]
    %v2994 = vld [vmem:[#allocation20 + $0x120] sm:$0xff]
    %v2995 = vld [vmem:[#allocation20 + $0x128] sm:$0xff]
    %v2996 = vld [vmem:[#allocation20 + $0x130] sm:$0xff]
    %v2997 = vld [vmem:[#allocation20 + $0x138] sm:$0xff]
    %v2998 = vld [vmem:[#allocation20 + $0x140] sm:$0xff]
    %v2999 = vld [vmem:[#allocation20 + $0x148] sm:$0xff]
    %v3000 = vld [vmem:[#allocation20 + $0x150] sm:$0xff]
    %v3001 = vld [vmem:[#allocation20 + $0x158] sm:$0xff]
    %v3002 = vld [vmem:[#allocation20 + $0x160] sm:$0xff]
    %v3003 = vld [vmem:[#allocation20 + $0x168] sm:$0xff]
    %v3004 = vld [vmem:[#allocation20 + $0x170] sm:$0xff]
    %v3005 = vld [vmem:[#allocation20 + $0x178] sm:$0xff]
    %v3006 = vld [vmem:[#allocation20 + $0x180] sm:$0xff]
    %v3007 = vld [vmem:[#allocation20 + $0x188] sm:$0xff]
    %v3008 = vld [vmem:[#allocation20 + $0x190] sm:$0xff]
    %v3009 = vld [vmem:[#allocation20 + $0x198] sm:$0xff]
    %v3010 = vld [vmem:[#allocation20 + $0x1a0] sm:$0xff]
    %v3011 = vld [vmem:[#allocation20 + $0x1a8] sm:$0xff]
    %v3012 = vld [vmem:[#allocation20 + $0x1b0] sm:$0xff]
    %v3013 = vld [vmem:[#allocation20 + $0x1b8] sm:$0xff]
    %v3014 = vld [vmem:[#allocation20 + $0x1c0] sm:$0xff]
    %v3015 = vld [vmem:[#allocation20 + $0x1c8] sm:$0xff]
    %v3016 = vld [vmem:[#allocation20 + $0x1d0] sm:$0xff]
    %v3017 = vld [vmem:[#allocation20 + $0x1d8] sm:$0xff]
    %v3018 = vld [vmem:[#allocation20 + $0x1e0] sm:$0xff]
    %v3019 = vld [vmem:[#allocation20 + $0x1e8] sm:$0xff]
    %v3020 = vld [vmem:[#allocation20 + $0x1f0] sm:$0xff]
    %v3021 = vld [vmem:[#allocation20 + $0x1f8] sm:$0xff]
    %v3022 = vld [vmem:[#allocation20 + $0x200] sm:$0xff]
    %v3023 = vld [vmem:[#allocation20 + $0x208] sm:$0xff]
    %v3024 = vld [vmem:[#allocation20 + $0x210] sm:$0xff]
    %v3025 = vld [vmem:[#allocation20 + $0x218] sm:$0xff]
    %v3026 = vld [vmem:[#allocation20 + $0x220] sm:$0xff]
    %v3027 = vld [vmem:[#allocation20 + $0x228] sm:$0xff]
    %v3028 = vld [vmem:[#allocation20 + $0x230] sm:$0xff]
    %v3029 = vld [vmem:[#allocation20 + $0x238] sm:$0xff]
    %v3030 = vld [vmem:[#allocation20 + $0x240] sm:$0xff]
    %v3031 = vld [vmem:[#allocation20 + $0x248] sm:$0xff]
    %v3032 = vld [vmem:[#allocation20 + $0x250] sm:$0xff]
    %v3033 = vld [vmem:[#allocation20 + $0x258] sm:$0xff]
    %v3034 = vld [vmem:[#allocation20 + $0x260] sm:$0xff]
    %v3035 = vld [vmem:[#allocation20 + $0x268] sm:$0xff]
    %v3036 = vld [vmem:[#allocation20 + $0x270] sm:$0xff]
    %v3037 = vld [vmem:[#allocation20 + $0x278] sm:$0xff]
    %v3038 = vld [vmem:[#allocation20 + $0x280] sm:$0xff]
    %v3039 = vld [vmem:[#allocation20 + $0x288] sm:$0xff]
    %v3040 = vld [vmem:[#allocation20 + $0x290] sm:$0xff]
    %v3041 = vld [vmem:[#allocation20 + $0x298] sm:$0xff]
    %v3042 = vld [vmem:[#allocation20 + $0x2a0] sm:$0xff]
    %v3043 = vld [vmem:[#allocation20 + $0x2a8] sm:$0xff]
    %v3044 = vld [vmem:[#allocation20 + $0x2b0] sm:$0xff]
    %v3045 = vld [vmem:[#allocation20 + $0x2b8] sm:$0xff]
    %v3046 = vld [vmem:[#allocation20 + $0x2c0] sm:$0xff]
    %v3047 = vld [vmem:[#allocation20 + $0x2c8] sm:$0xff]
    %v3048 = vld [vmem:[#allocation20 + $0x2d0] sm:$0xff]
    %v3049 = vld [vmem:[#allocation20 + $0x2d8] sm:$0xff]
    %v3050 = vld [vmem:[#allocation20 + $0x2e0] sm:$0xff]
    %v3051 = vld [vmem:[#allocation20 + $0x2e8] sm:$0xff]
    %v3052 = vld [vmem:[#allocation20 + $0x2f0] sm:$0xff]
    %v3053 = vld [vmem:[#allocation20 + $0x2f8] sm:$0xff]
    %v3054 = vld [vmem:[#allocation20 + $0x300] sm:$0xff]
    %v3055 = vld [vmem:[#allocation20 + $0x308] sm:$0xff]
    %v3056 = vld [vmem:[#allocation20 + $0x310] sm:$0xff]
    %v3057 = vld [vmem:[#allocation20 + $0x318] sm:$0xff]
    %v3058 = vld [vmem:[#allocation20 + $0x320] sm:$0xff]
    %v3059 = vld [vmem:[#allocation20 + $0x328] sm:$0xff]
    %v3060 = vld [vmem:[#allocation20 + $0x330] sm:$0xff]
    %v3061 = vld [vmem:[#allocation20 + $0x338] sm:$0xff]
    %v3062 = vld [vmem:[#allocation20 + $0x340] sm:$0xff]
    %v3063 = vld [vmem:[#allocation20 + $0x348] sm:$0xff]
    %v3064 = vld [vmem:[#allocation20 + $0x350] sm:$0xff]
    %v3065 = vld [vmem:[#allocation20 + $0x358] sm:$0xff]
    %v3066 = vld [vmem:[#allocation20 + $0x360] sm:$0xff]
    %v3067 = vld [vmem:[#allocation20 + $0x368] sm:$0xff]
    %v3068 = vld [vmem:[#allocation20 + $0x370] sm:$0xff]
    %v3069 = vld [vmem:[#allocation20 + $0x378] sm:$0xff]
    %v3070 = vld [vmem:[#allocation20 + $0x380] sm:$0xff]
    %v3071 = vld [vmem:[#allocation20 + $0x388] sm:$0xff]
    %v3072 = vld [vmem:[#allocation20 + $0x390] sm:$0xff]
    %v3073 = vld [vmem:[#allocation20 + $0x398] sm:$0xff]
    %v3074 = vld [vmem:[#allocation20 + $0x3a0] sm:$0xff]
    %v3075 = vld [vmem:[#allocation20 + $0x3a8] sm:$0xff]
    %v3076 = vld [vmem:[#allocation20 + $0x3b0] sm:$0xff]
    %v3077 = vld [vmem:[#allocation20 + $0x3b8] sm:$0xff]
    %v3078 = vld [vmem:[#allocation20 + $0x3c0] sm:$0xff]
    %v3079 = vld [vmem:[#allocation20 + $0x3c8] sm:$0xff]
    %v3080 = vld [vmem:[#allocation20 + $0x3d0] sm:$0xff]
    %v3081 = vld [vmem:[#allocation20 + $0x3d8] sm:$0xff]
    %v3082 = vld [vmem:[#allocation20 + $0x3e0] sm:$0xff]
    %v3083 = vld [vmem:[#allocation20 + $0x3e8] sm:$0xff]
    %v3084 = vld [vmem:[#allocation20 + $0x3f0] sm:$0xff]
    %v3085 = vld [vmem:[#allocation20 + $0x3f8] sm:$0xff]
    %v3086 = vld [vmem:[#allocation20 + $0x400] sm:$0xff]
    %v3087 = vld [vmem:[#allocation20 + $0x408] sm:$0xff]
    %v3088 = vld [vmem:[#allocation20 + $0x410] sm:$0xff]
    %v3089 = vld [vmem:[#allocation20 + $0x418] sm:$0xff]
    %v3090 = vld [vmem:[#allocation20 + $0x420] sm:$0xff]
    %v3091 = vld [vmem:[#allocation20 + $0x428] sm:$0xff]
    %v3092 = vld [vmem:[#allocation20 + $0x430] sm:$0xff]
    %v3093 = vld [vmem:[#allocation20 + $0x438] sm:$0xff]
    %v3094 = vld [vmem:[#allocation20 + $0x440] sm:$0xff]
    %v3095 = vld [vmem:[#allocation20 + $0x448] sm:$0xff]
    %v3096 = vld [vmem:[#allocation20 + $0x450] sm:$0xff]
    %v3097 = vld [vmem:[#allocation20 + $0x458] sm:$0xff]
    %v3098 = vld [vmem:[#allocation20 + $0x460] sm:$0xff]
    %v3099 = vld [vmem:[#allocation20 + $0x468] sm:$0xff]
    %v3100 = vld [vmem:[#allocation20 + $0x470] sm:$0xff]
    %v3101 = vld [vmem:[#allocation20 + $0x478] sm:$0xff]
    %v3102 = vld [vmem:[#allocation20 + $0x480] sm:$0xff]
    %v3103 = vld [vmem:[#allocation20 + $0x488] sm:$0xff]
    %v3104 = vld [vmem:[#allocation20 + $0x490] sm:$0xff]
    %v3105 = vld [vmem:[#allocation20 + $0x498] sm:$0xff]
    %v3106 = vld [vmem:[#allocation20 + $0x4a0] sm:$0xff]
    %v3107 = vld [vmem:[#allocation20 + $0x4a8] sm:$0xff]
    %v3108 = vld [vmem:[#allocation20 + $0x4b0] sm:$0xff]
    %v3109 = vld [vmem:[#allocation20 + $0x4b8] sm:$0xff]
    %v3110 = vld [vmem:[#allocation20 + $0x4c0] sm:$0xff]
    %v3111 = vld [vmem:[#allocation20 + $0x4c8] sm:$0xff]
    %v3112 = vld [vmem:[#allocation20 + $0x4d0] sm:$0xff]
    %v3113 = vld [vmem:[#allocation20 + $0x4d8] sm:$0xff]
    %v3114 = vld [vmem:[#allocation20 + $0x4e0] sm:$0xff]
    %v3115 = vld [vmem:[#allocation20 + $0x4e8] sm:$0xff]
    %v3116 = vld [vmem:[#allocation20 + $0x4f0] sm:$0xff]
    %v3117 = vld [vmem:[#allocation20 + $0x4f8] sm:$0xff]
    %v3118 = vld [vmem:[#allocation20 + $0x500] sm:$0xff]
    %v3119 = vld [vmem:[#allocation20 + $0x508] sm:$0xff]
    %v3120 = vld [vmem:[#allocation20 + $0x510] sm:$0xff]
    %v3121 = vld [vmem:[#allocation20 + $0x518] sm:$0xff]
    %v3122 = vld [vmem:[#allocation20 + $0x520] sm:$0xff]
    %v3123 = vld [vmem:[#allocation20 + $0x528] sm:$0xff]
    %v3124 = vld [vmem:[#allocation20 + $0x530] sm:$0xff]
    %v3125 = vld [vmem:[#allocation20 + $0x538] sm:$0xff]
    %v3126 = vld [vmem:[#allocation20 + $0x540] sm:$0xff]
    %v3127 = vld [vmem:[#allocation20 + $0x548] sm:$0xff]
    %v3128 = vld [vmem:[#allocation20 + $0x550] sm:$0xff]
    %v3129 = vld [vmem:[#allocation20 + $0x558] sm:$0xff]
    %v3130 = vld [vmem:[#allocation20 + $0x560] sm:$0xff]
    %v3131 = vld [vmem:[#allocation20 + $0x568] sm:$0xff]
    %v3132 = vld [vmem:[#allocation20 + $0x570] sm:$0xff]
    %v3133 = vld [vmem:[#allocation20 + $0x578] sm:$0xff]
    %v3134 = vld [vmem:[#allocation20 + $0x580] sm:$0xff]
    %v3135 = vld [vmem:[#allocation20 + $0x588] sm:$0xff]
    %v3136 = vld [vmem:[#allocation20 + $0x590] sm:$0xff]
    %v3137 = vld [vmem:[#allocation20 + $0x598] sm:$0xff]
    %v3138 = vld [vmem:[#allocation20 + $0x5a0] sm:$0xff]
    %v3139 = vld [vmem:[#allocation20 + $0x5a8] sm:$0xff]
    %v3140 = vld [vmem:[#allocation20 + $0x5b0] sm:$0xff]
    %v3141 = vld [vmem:[#allocation20 + $0x5b8] sm:$0xff]
    %v3142 = vld [vmem:[#allocation20 + $0x5c0] sm:$0xff]
    %v3143 = vld [vmem:[#allocation20 + $0x5c8] sm:$0xff]
    %v3144 = vld [vmem:[#allocation20 + $0x5d0] sm:$0xff]
    %v3145 = vld [vmem:[#allocation20 + $0x5d8] sm:$0xff]
    %v3146 = vld [vmem:[#allocation20 + $0x5e0] sm:$0xff]
    %v3147 = vld [vmem:[#allocation20 + $0x5e8] sm:$0xff]
    %v3148 = vld [vmem:[#allocation20 + $0x5f0] sm:$0xff]
    %v3149 = vld [vmem:[#allocation20 + $0x5f8] sm:$0xff]
    %v3150 = vld [vmem:[#allocation20 + $0x600] sm:$0xff]
    %v3151 = vld [vmem:[#allocation20 + $0x608] sm:$0xff]
    %v3152 = vld [vmem:[#allocation20 + $0x610] sm:$0xff]
    %v3153 = vld [vmem:[#allocation20 + $0x618] sm:$0xff]
    %v3154 = vld [vmem:[#allocation20 + $0x620] sm:$0xff]
    %v3155 = vld [vmem:[#allocation20 + $0x628] sm:$0xff]
    %v3156 = vld [vmem:[#allocation20 + $0x630] sm:$0xff]
    %v3157 = vld [vmem:[#allocation20 + $0x638] sm:$0xff]
    %v3158 = vld [vmem:[#allocation20 + $0x640] sm:$0xff]
    %v3159 = vld [vmem:[#allocation20 + $0x648] sm:$0xff]
    %v3160 = vld [vmem:[#allocation20 + $0x650] sm:$0xff]
    %v3161 = vld [vmem:[#allocation20 + $0x658] sm:$0xff]
    %v3162 = vld [vmem:[#allocation20 + $0x660] sm:$0xff]
    %v3163 = vld [vmem:[#allocation20 + $0x668] sm:$0xff]
    %v3164 = vld [vmem:[#allocation20 + $0x670] sm:$0xff]
    %v3165 = vld [vmem:[#allocation20 + $0x678] sm:$0xff]
    %v3166 = vld [vmem:[#allocation20 + $0x680] sm:$0xff]
    %v3167 = vld [vmem:[#allocation20 + $0x688] sm:$0xff]
    %v3168 = vld [vmem:[#allocation20 + $0x690] sm:$0xff]
    %v3169 = vld [vmem:[#allocation20 + $0x698] sm:$0xff]
    %v3170 = vld [vmem:[#allocation20 + $0x6a0] sm:$0xff]
    %v3171 = vld [vmem:[#allocation20 + $0x6a8] sm:$0xff]
    %v3172 = vld [vmem:[#allocation20 + $0x6b0] sm:$0xff]
    %v3173 = vld [vmem:[#allocation20 + $0x6b8] sm:$0xff]
    %v3174 = vld [vmem:[#allocation20 + $0x6c0] sm:$0xff]
    %v3175 = vld [vmem:[#allocation20 + $0x6c8] sm:$0xff]
    %v3176 = vld [vmem:[#allocation20 + $0x6d0] sm:$0xff]
    %v3177 = vld [vmem:[#allocation20 + $0x6d8] sm:$0xff]
    %v3178 = vld [vmem:[#allocation20 + $0x6e0] sm:$0xff]
    %v3179 = vld [vmem:[#allocation20 + $0x6e8] sm:$0xff]
    %v3180 = vld [vmem:[#allocation20 + $0x6f0] sm:$0xff]
    %v3181 = vld [vmem:[#allocation20 + $0x6f8] sm:$0xff]
    %v3182 = vld [vmem:[#allocation20 + $0x700] sm:$0xff]
    %v3183 = vld [vmem:[#allocation20 + $0x708] sm:$0xff]
    %v3184 = vld [vmem:[#allocation20 + $0x710] sm:$0xff]
    %v3185 = vld [vmem:[#allocation20 + $0x718] sm:$0xff]
    %v3186 = vld [vmem:[#allocation20 + $0x720] sm:$0xff]
    %v3187 = vld [vmem:[#allocation20 + $0x728] sm:$0xff]
    %v3188 = vld [vmem:[#allocation20 + $0x730] sm:$0xff]
    %v3189 = vld [vmem:[#allocation20 + $0x738] sm:$0xff]
    %v3190 = vld [vmem:[#allocation20 + $0x740] sm:$0xff]
    %v3191 = vld [vmem:[#allocation20 + $0x748] sm:$0xff]
    %v3192 = vld [vmem:[#allocation20 + $0x750] sm:$0xff]
    %v3193 = vld [vmem:[#allocation20 + $0x758] sm:$0xff]
    %v3194 = vld [vmem:[#allocation20 + $0x760] sm:$0xff]
    %v3195 = vld [vmem:[#allocation20 + $0x768] sm:$0xff]
    %v3196 = vld [vmem:[#allocation20 + $0x770] sm:$0xff]
    %v3197 = vld [vmem:[#allocation20 + $0x778] sm:$0xff]
    %v3198 = vld [vmem:[#allocation20 + $0x780] sm:$0xff]
    %v3199 = vld [vmem:[#allocation20 + $0x788] sm:$0xff]
    %v3200 = vld [vmem:[#allocation20 + $0x790] sm:$0xff]
    %v3201 = vld [vmem:[#allocation20 + $0x798] sm:$0xff]
    %v3202 = vld [vmem:[#allocation20 + $0x7a0] sm:$0xff]
    %v3203 = vld [vmem:[#allocation20 + $0x7a8] sm:$0xff]
    %v3204 = vld [vmem:[#allocation20 + $0x7b0] sm:$0xff]
    %v3205 = vld [vmem:[#allocation20 + $0x7b8] sm:$0xff]
    %v3206 = vld [vmem:[#allocation20 + $0x7c0] sm:$0xff]
    %v3207 = vld [vmem:[#allocation20 + $0x7c8] sm:$0xff]
    %v3208 = vld [vmem:[#allocation20 + $0x7d0] sm:$0xff]
    %v3209 = vld [vmem:[#allocation20 + $0x7d8] sm:$0xff]
    %v3210 = vld [vmem:[#allocation20 + $0x7e0] sm:$0xff]
    %v3211 = vld [vmem:[#allocation20 + $0x7e8] sm:$0xff]
    %v3212 = vld [vmem:[#allocation20 + $0x7f0] sm:$0xff]
    %v3213 = vld [vmem:[#allocation20 + $0x7f8] sm:$0xff]
    %v3214 = vld [vmem:[#allocation20 + $0x800] sm:$0xff]
    %v3215 = vld [vmem:[#allocation20 + $0x808] sm:$0xff]
    %v3216 = vld [vmem:[#allocation20 + $0x810] sm:$0xff]
    %v3217 = vld [vmem:[#allocation20 + $0x818] sm:$0xff]
    %v3218 = vld [vmem:[#allocation20 + $0x820] sm:$0xff]
    %v3219 = vld [vmem:[#allocation20 + $0x828] sm:$0xff]
    %v3220 = vld [vmem:[#allocation20 + $0x830] sm:$0xff]
    %v3221 = vld [vmem:[#allocation20 + $0x838] sm:$0xff]
    %v3222 = vld [vmem:[#allocation20 + $0x840] sm:$0xff]
    %v3223 = vld [vmem:[#allocation20 + $0x848] sm:$0xff]
    %v3224 = vld [vmem:[#allocation20 + $0x850] sm:$0xff]
    %v3225 = vld [vmem:[#allocation20 + $0x858] sm:$0xff]
    %v3226 = vld [vmem:[#allocation20 + $0x860] sm:$0xff]
    %v3227 = vld [vmem:[#allocation20 + $0x868] sm:$0xff]
    %v3228 = vld [vmem:[#allocation20 + $0x870] sm:$0xff]
    %v3229 = vld [vmem:[#allocation20 + $0x878] sm:$0xff]
    %v3230 = vld [vmem:[#allocation20 + $0x880] sm:$0xff]
    %v3231 = vld [vmem:[#allocation20 + $0x888] sm:$0xff]
    %v3232 = vld [vmem:[#allocation20 + $0x890] sm:$0xff]
    %v3233 = vld [vmem:[#allocation20 + $0x898] sm:$0xff]
    %v3234 = vld [vmem:[#allocation20 + $0x8a0] sm:$0xff]
    %v3235 = vld [vmem:[#allocation20 + $0x8a8] sm:$0xff]
    %v3236 = vld [vmem:[#allocation20 + $0x8b0] sm:$0xff]
    %v3237 = vld [vmem:[#allocation20 + $0x8b8] sm:$0xff]
    %v3238 = vld [vmem:[#allocation20 + $0x8c0] sm:$0xff]
    %v3239 = vld [vmem:[#allocation20 + $0x8c8] sm:$0xff]
    %v3240 = vld [vmem:[#allocation20 + $0x8d0] sm:$0xff]
    %v3241 = vld [vmem:[#allocation20 + $0x8d8] sm:$0xff]
    %v3242 = vld [vmem:[#allocation20 + $0x8e0] sm:$0xff]
    %v3243 = vld [vmem:[#allocation20 + $0x8e8] sm:$0xff]
    %v3244 = vld [vmem:[#allocation20 + $0x8f0] sm:$0xff]
    %v3245 = vld [vmem:[#allocation20 + $0x8f8] sm:$0xff]
    %v3246 = vld [vmem:[#allocation20 + $0x900] sm:$0xff]
    %v3247 = vld [vmem:[#allocation20 + $0x908] sm:$0xff]
    %v3248 = vld [vmem:[#allocation20 + $0x910] sm:$0xff]
    %v3249 = vld [vmem:[#allocation20 + $0x918] sm:$0xff]
    %v3250 = vld [vmem:[#allocation20 + $0x920] sm:$0xff]
    %v3251 = vld [vmem:[#allocation20 + $0x928] sm:$0xff]
    %v3252 = vld [vmem:[#allocation20 + $0x930] sm:$0xff]
    %v3253 = vld [vmem:[#allocation20 + $0x938] sm:$0xff]
    %v3254 = vld [vmem:[#allocation20 + $0x940] sm:$0xff]
    %v3255 = vld [vmem:[#allocation20 + $0x948] sm:$0xff]
    %v3256 = vld [vmem:[#allocation20 + $0x950] sm:$0xff]
    %v3257 = vld [vmem:[#allocation20 + $0x958] sm:$0xff]
    %v3258 = vld [vmem:[#allocation20 + $0x960] sm:$0xff]
    %v3259 = vld [vmem:[#allocation20 + $0x968] sm:$0xff]
    %v3260 = vld [vmem:[#allocation20 + $0x970] sm:$0xff]
    %v3261 = vld [vmem:[#allocation20 + $0x978] sm:$0xff]
    %v3262 = vld [vmem:[#allocation20 + $0x980] sm:$0xff]
    %v3263 = vld [vmem:[#allocation20 + $0x988] sm:$0xff]
    %v3264 = vld [vmem:[#allocation20 + $0x990] sm:$0xff]
    %v3265 = vld [vmem:[#allocation20 + $0x998] sm:$0xff]
    %v3266 = vld [vmem:[#allocation20 + $0x9a0] sm:$0xff]
    %v3267 = vld [vmem:[#allocation20 + $0x9a8] sm:$0xff]
    %v3268 = vld [vmem:[#allocation20 + $0x9b0] sm:$0xff]
    %v3269 = vld [vmem:[#allocation20 + $0x9b8] sm:$0xff]
    %v3270 = vld [vmem:[#allocation20 + $0x9c0] sm:$0xff]
    %v3271 = vld [vmem:[#allocation20 + $0x9c8] sm:$0xff]
    %v3272 = vld [vmem:[#allocation20 + $0x9d0] sm:$0xff]
    %v3273 = vld [vmem:[#allocation20 + $0x9d8] sm:$0xff]
    %v3274 = vld [vmem:[#allocation20 + $0x9e0] sm:$0xff]
    %v3275 = vld [vmem:[#allocation20 + $0x9e8] sm:$0xff]
    %v3276 = vld [vmem:[#allocation20 + $0x9f0] sm:$0xff]
    %v3277 = vld [vmem:[#allocation20 + $0x9f8] sm:$0xff]
    %v3278 = vld [vmem:[#allocation20 + $0xa00] sm:$0xff]
    %v3279 = vld [vmem:[#allocation20 + $0xa08] sm:$0xff]
    %v3280 = vld [vmem:[#allocation20 + $0xa10] sm:$0xff]
    %v3281 = vld [vmem:[#allocation20 + $0xa18] sm:$0xff]
    %v3282 = vld [vmem:[#allocation20 + $0xa20] sm:$0xff]
    %v3283 = vld [vmem:[#allocation20 + $0xa28] sm:$0xff]
    %v3284 = vld [vmem:[#allocation20 + $0xa30] sm:$0xff]
    %v3285 = vld [vmem:[#allocation20 + $0xa38] sm:$0xff]
    %v3286 = vld [vmem:[#allocation20 + $0xa40] sm:$0xff]
    %v3287 = vld [vmem:[#allocation20 + $0xa48] sm:$0xff]
    %v3288 = vld [vmem:[#allocation20 + $0xa50] sm:$0xff]
    %v3289 = vld [vmem:[#allocation20 + $0xa58] sm:$0xff]
    %v3290 = vld [vmem:[#allocation20 + $0xa60] sm:$0xff]
    %v3291 = vld [vmem:[#allocation20 + $0xa68] sm:$0xff]
    %v3292 = vld [vmem:[#allocation20 + $0xa70] sm:$0xff]
    %v3293 = vld [vmem:[#allocation20 + $0xa78] sm:$0xff]
    %v3294 = vld [vmem:[#allocation20 + $0xa80] sm:$0xff]
    %v3295 = vld [vmem:[#allocation20 + $0xa88] sm:$0xff]
    %v3296 = vld [vmem:[#allocation20 + $0xa90] sm:$0xff]
    %v3297 = vld [vmem:[#allocation20 + $0xa98] sm:$0xff]
    %v3298 = vld [vmem:[#allocation20 + $0xaa0] sm:$0xff]
    %v3299 = vld [vmem:[#allocation20 + $0xaa8] sm:$0xff]
    %v3300 = vld [vmem:[#allocation20 + $0xab0] sm:$0xff]
    %v3301 = vld [vmem:[#allocation20 + $0xab8] sm:$0xff]
    %v3302 = vld [vmem:[#allocation20 + $0xac0] sm:$0xff]
    %v3303 = vld [vmem:[#allocation20 + $0xac8] sm:$0xff]
    %v3304 = vld [vmem:[#allocation20 + $0xad0] sm:$0xff]
    %v3305 = vld [vmem:[#allocation20 + $0xad8] sm:$0xff]
    %v3306 = vld [vmem:[#allocation20 + $0xae0] sm:$0xff]
    %v3307 = vld [vmem:[#allocation20 + $0xae8] sm:$0xff]
    %v3308 = vld [vmem:[#allocation20 + $0xaf0] sm:$0xff]
    %v3309 = vld [vmem:[#allocation20 + $0xaf8] sm:$0xff]
    %v3310 = vld [vmem:[#allocation20 + $0xb00] sm:$0xff]
    %v3311 = vld [vmem:[#allocation20 + $0xb08] sm:$0xff]
    %v3312 = vld [vmem:[#allocation20 + $0xb10] sm:$0xff]
    %v3313 = vld [vmem:[#allocation20 + $0xb18] sm:$0xff]
    %v3314 = vld [vmem:[#allocation20 + $0xb20] sm:$0xff]
    %v3315 = vld [vmem:[#allocation20 + $0xb28] sm:$0xff]
    %v3316 = vld [vmem:[#allocation20 + $0xb30] sm:$0xff]
    %v3317 = vld [vmem:[#allocation20 + $0xb38] sm:$0xff]
    %v3318 = vld [vmem:[#allocation20 + $0xb40] sm:$0xff]
    %v3319 = vld [vmem:[#allocation20 + $0xb48] sm:$0xff]
    %v3320 = vld [vmem:[#allocation20 + $0xb50] sm:$0xff]
    %v3321 = vld [vmem:[#allocation20 + $0xb58] sm:$0xff]
    %v3322 = vld [vmem:[#allocation20 + $0xb60] sm:$0xff]
    %v3323 = vld [vmem:[#allocation20 + $0xb68] sm:$0xff]
    %v3324 = vld [vmem:[#allocation20 + $0xb70] sm:$0xff]
    %v3325 = vld [vmem:[#allocation20 + $0xb78] sm:$0xff]
    %v3326 = vld [vmem:[#allocation20 + $0xb80] sm:$0xff]
    %v3327 = vld [vmem:[#allocation20 + $0xb88] sm:$0xff]
    %v3328 = vld [vmem:[#allocation20 + $0xb90] sm:$0xff]
    %v3329 = vld [vmem:[#allocation20 + $0xb98] sm:$0xff]
    %v3330 = vld [vmem:[#allocation20 + $0xba0] sm:$0xff]
    %v3331 = vld [vmem:[#allocation20 + $0xba8] sm:$0xff]
    %v3332 = vld [vmem:[#allocation20 + $0xbb0] sm:$0xff]
    %v3333 = vld [vmem:[#allocation20 + $0xbb8] sm:$0xff]
    %v3334 = vld [vmem:[#allocation20 + $0xbc0] sm:$0xff]
    %v3335 = vld [vmem:[#allocation20 + $0xbc8] sm:$0xff]
    %v3336 = vld [vmem:[#allocation20 + $0xbd0] sm:$0xff]
    %v3337 = vld [vmem:[#allocation20 + $0xbd8] sm:$0xff]
    %v3338 = vld [vmem:[#allocation20 + $0xbe0] sm:$0xff]
    %v3339 = vld [vmem:[#allocation20 + $0xbe8] sm:$0xff]
    %v3340 = vld [vmem:[#allocation20 + $0xbf0] sm:$0xff]
    %v3341 = vld [vmem:[#allocation20 + $0xbf8] sm:$0xff]
    %v3342 = vld [vmem:[#allocation20 + $0xc00] sm:$0xff]
    %v3343 = vld [vmem:[#allocation20 + $0xc08] sm:$0xff]
    %v3344 = vld [vmem:[#allocation20 + $0xc10] sm:$0xff]
    %v3345 = vld [vmem:[#allocation20 + $0xc18] sm:$0xff]
    %v3346 = vld [vmem:[#allocation20 + $0xc20] sm:$0xff]
    %v3347 = vld [vmem:[#allocation20 + $0xc28] sm:$0xff]
    %v3348 = vld [vmem:[#allocation20 + $0xc30] sm:$0xff]
    %v3349 = vld [vmem:[#allocation20 + $0xc38] sm:$0xff]
    %v3350 = vld [vmem:[#allocation20 + $0xc40] sm:$0xff]
    %v3351 = vld [vmem:[#allocation20 + $0xc48] sm:$0xff]
    %v3352 = vld [vmem:[#allocation20 + $0xc50] sm:$0xff]
    %v3353 = vld [vmem:[#allocation20 + $0xc58] sm:$0xff]
    %v3354 = vld [vmem:[#allocation20 + $0xc60] sm:$0xff]
    %v3355 = vld [vmem:[#allocation20 + $0xc68] sm:$0xff]
    %v3356 = vld [vmem:[#allocation20 + $0xc70] sm:$0xff]
    %v3357 = vld [vmem:[#allocation20 + $0xc78] sm:$0xff]
    %v3358 = vld [vmem:[#allocation20 + $0xc80] sm:$0xff]
    %v3359 = vld [vmem:[#allocation20 + $0xc88] sm:$0xff]
    %v3360 = vld [vmem:[#allocation20 + $0xc90] sm:$0xff]
    %v3361 = vld [vmem:[#allocation20 + $0xc98] sm:$0xff]
    %v3362 = vld [vmem:[#allocation20 + $0xca0] sm:$0xff]
    %v3363 = vld [vmem:[#allocation20 + $0xca8] sm:$0xff]
    %v3364 = vld [vmem:[#allocation20 + $0xcb0] sm:$0xff]
    %v3365 = vld [vmem:[#allocation20 + $0xcb8] sm:$0xff]
    %v3366 = vld [vmem:[#allocation20 + $0xcc0] sm:$0xff]
    %v3367 = vld [vmem:[#allocation20 + $0xcc8] sm:$0xff]
    %v3368 = vld [vmem:[#allocation20 + $0xcd0] sm:$0xff]
    %v3369 = vld [vmem:[#allocation20 + $0xcd8] sm:$0xff]
    %v3370 = vld [vmem:[#allocation20 + $0xce0] sm:$0xff]
    %v3371 = vld [vmem:[#allocation20 + $0xce8] sm:$0xff]
    %v3372 = vld [vmem:[#allocation20 + $0xcf0] sm:$0xff]
    %v3373 = vld [vmem:[#allocation20 + $0xcf8] sm:$0xff]
    %v3374 = vld [vmem:[#allocation20 + $0xd00] sm:$0xff]
    %v3375 = vld [vmem:[#allocation20 + $0xd08] sm:$0xff]
    %v3376 = vld [vmem:[#allocation20 + $0xd10] sm:$0xff]
    %v3377 = vld [vmem:[#allocation20 + $0xd18] sm:$0xff]
    %v3378 = vld [vmem:[#allocation20 + $0xd20] sm:$0xff]
    %v3379 = vld [vmem:[#allocation20 + $0xd28] sm:$0xff]
    %v3380 = vld [vmem:[#allocation20 + $0xd30] sm:$0xff]
    %v3381 = vld [vmem:[#allocation20 + $0xd38] sm:$0xff]
    %v3382 = vld [vmem:[#allocation20 + $0xd40] sm:$0xff]
    %v3383 = vld [vmem:[#allocation20 + $0xd48] sm:$0xff]
    %v3384 = vld [vmem:[#allocation20 + $0xd50] sm:$0xff]
    %v3385 = vld [vmem:[#allocation20 + $0xd58] sm:$0xff]
    %v3386 = vld [vmem:[#allocation20 + $0xd60] sm:$0xff]
    %v3387 = vld [vmem:[#allocation20 + $0xd68] sm:$0xff]
    %v3388 = vld [vmem:[#allocation20 + $0xd70] sm:$0xff]
    %v3389 = vld [vmem:[#allocation20 + $0xd78] sm:$0xff]
    %v3390 = vld [vmem:[#allocation20 + $0xd80] sm:$0xff]
    %v3391 = vld [vmem:[#allocation20 + $0xd88] sm:$0xff]
    %v3392 = vld [vmem:[#allocation20 + $0xd90] sm:$0xff]
    %v3393 = vld [vmem:[#allocation20 + $0xd98] sm:$0xff]
    %v3394 = vld [vmem:[#allocation20 + $0xda0] sm:$0xff]
    %v3395 = vld [vmem:[#allocation20 + $0xda8] sm:$0xff]
    %v3396 = vld [vmem:[#allocation20 + $0xdb0] sm:$0xff]
    %v3397 = vld [vmem:[#allocation20 + $0xdb8] sm:$0xff]
    %v3398 = vld [vmem:[#allocation20 + $0xdc0] sm:$0xff]
    %v3399 = vld [vmem:[#allocation20 + $0xdc8] sm:$0xff]
    %v3400 = vld [vmem:[#allocation20 + $0xdd0] sm:$0xff]
    %v3401 = vld [vmem:[#allocation20 + $0xdd8] sm:$0xff]
    %v3402 = vld [vmem:[#allocation20 + $0xde0] sm:$0xff]
    %v3403 = vld [vmem:[#allocation20 + $0xde8] sm:$0xff]
    %v3404 = vld [vmem:[#allocation20 + $0xdf0] sm:$0xff]
    %v3405 = vld [vmem:[#allocation20 + $0xdf8] sm:$0xff]
    %v3406 = vld [vmem:[#allocation20 + $0xe00] sm:$0xff]
    %v3407 = vld [vmem:[#allocation20 + $0xe08] sm:$0xff]
    %v3408 = vld [vmem:[#allocation20 + $0xe10] sm:$0xff]
    %v3409 = vld [vmem:[#allocation20 + $0xe18] sm:$0xff]
    %v3410 = vld [vmem:[#allocation20 + $0xe20] sm:$0xff]
    %v3411 = vld [vmem:[#allocation20 + $0xe28] sm:$0xff]
    %v3412 = vld [vmem:[#allocation20 + $0xe30] sm:$0xff]
    %v3413 = vld [vmem:[#allocation20 + $0xe38] sm:$0xff]
    %v3414 = vld [vmem:[#allocation20 + $0xe40] sm:$0xff]
    %v3415 = vld [vmem:[#allocation20 + $0xe48] sm:$0xff]
    %v3416 = vld [vmem:[#allocation20 + $0xe50] sm:$0xff]
    %v3417 = vld [vmem:[#allocation20 + $0xe58] sm:$0xff]
    %v3418 = vld [vmem:[#allocation20 + $0xe60] sm:$0xff]
    %v3419 = vld [vmem:[#allocation20 + $0xe68] sm:$0xff]
    %v3420 = vld [vmem:[#allocation20 + $0xe70] sm:$0xff]
    %v3421 = vld [vmem:[#allocation20 + $0xe78] sm:$0xff]
    %v3422 = vld [vmem:[#allocation20 + $0xe80] sm:$0xff]
    %v3423 = vld [vmem:[#allocation20 + $0xe88] sm:$0xff]
    %v3424 = vld [vmem:[#allocation20 + $0xe90] sm:$0xff]
    %v3425 = vld [vmem:[#allocation20 + $0xe98] sm:$0xff]
    %v3426 = vld [vmem:[#allocation20 + $0xea0] sm:$0xff]
    %v3427 = vld [vmem:[#allocation20 + $0xea8] sm:$0xff]
    %v3428 = vld [vmem:[#allocation20 + $0xeb0] sm:$0xff]
    %v3429 = vld [vmem:[#allocation20 + $0xeb8] sm:$0xff]
    %v3430 = vld [vmem:[#allocation20 + $0xec0] sm:$0xff]
    %v3431 = vld [vmem:[#allocation20 + $0xec8] sm:$0xff]
    %v3432 = vld [vmem:[#allocation20 + $0xed0] sm:$0xff]
    %v3433 = vld [vmem:[#allocation20 + $0xed8] sm:$0xff]
    %v3434 = vld [vmem:[#allocation20 + $0xee0] sm:$0xff]
    %v3435 = vld [vmem:[#allocation20 + $0xee8] sm:$0xff]
    %v3436 = vld [vmem:[#allocation20 + $0xef0] sm:$0xff]
    %v3437 = vld [vmem:[#allocation20 + $0xef8] sm:$0xff]
    %v3438 = vld [vmem:[#allocation20 + $0xf00] sm:$0xff]
    %v3439 = vld [vmem:[#allocation20 + $0xf08] sm:$0xff]
    %v3440 = vld [vmem:[#allocation20 + $0xf10] sm:$0xff]
    %v3441 = vld [vmem:[#allocation20 + $0xf18] sm:$0xff]
    %v3442 = vld [vmem:[#allocation20 + $0xf20] sm:$0xff]
    %v3443 = vld [vmem:[#allocation20 + $0xf28] sm:$0xff]
    %v3444 = vld [vmem:[#allocation20 + $0xf30] sm:$0xff]
    %v3445 = vld [vmem:[#allocation20 + $0xf38] sm:$0xff]
    %v3446 = vld [vmem:[#allocation20 + $0xf40] sm:$0xff]
    %v3447 = vld [vmem:[#allocation20 + $0xf48] sm:$0xff]
    %v3448 = vld [vmem:[#allocation20 + $0xf50] sm:$0xff]
    %v3449 = vld [vmem:[#allocation20 + $0xf58] sm:$0xff]
    %v3450 = vld [vmem:[#allocation20 + $0xf60] sm:$0xff]
    %v3451 = vld [vmem:[#allocation20 + $0xf68] sm:$0xff]
    %v3452 = vld [vmem:[#allocation20 + $0xf70] sm:$0xff]
    %v3453 = vld [vmem:[#allocation20 + $0xf78] sm:$0xff]
    %v3454 = vld [vmem:[#allocation20 + $0xf80] sm:$0xff]
    %v3455 = vld [vmem:[#allocation20 + $0xf88] sm:$0xff]
    %v3456 = vld [vmem:[#allocation20 + $0xf90] sm:$0xff]
    %v3457 = vld [vmem:[#allocation20 + $0xf98] sm:$0xff]
    %v3458 = vld [vmem:[#allocation20 + $0xfa0] sm:$0xff]
    %v3459 = vld [vmem:[#allocation20 + $0xfa8] sm:$0xff]
    %v3460 = vld [vmem:[#allocation20 + $0xfb0] sm:$0xff]
    %v3461 = vld [vmem:[#allocation20 + $0xfb8] sm:$0xff]
    %v3462 = vld [vmem:[#allocation20 + $0xfc0] sm:$0xff]
    %v3463 = vld [vmem:[#allocation20 + $0xfc8] sm:$0xff]
    %v3464 = vld [vmem:[#allocation20 + $0xfd0] sm:$0xff]
    %v3465 = vld [vmem:[#allocation20 + $0xfd8] sm:$0xff]
    %v3466 = vld [vmem:[#allocation20 + $0xfe0] sm:$0xff]
    %v3467 = vld [vmem:[#allocation20 + $0xfe8] sm:$0xff]
    %v3468 = vld [vmem:[#allocation20 + $0xff0] sm:$0xff]
    %v3469 = vld [vmem:[#allocation20 + $0xff8] sm:$0xff]
    %v3470 = vld [vmem:[#allocation20 + $0x1000] sm:$0xff]
    %v3471 = vld [vmem:[#allocation20 + $0x1008] sm:$0xff]
    %v3472 = vld [vmem:[#allocation20 + $0x1010] sm:$0xff]
    %v3473 = vld [vmem:[#allocation20 + $0x1018] sm:$0xff]
    %v3474 = vld [vmem:[#allocation20 + $0x1020] sm:$0xff]
    %v3475 = vld [vmem:[#allocation20 + $0x1028] sm:$0xff]
    %v3476 = vld [vmem:[#allocation20 + $0x1030] sm:$0xff]
    %v3477 = vld [vmem:[#allocation20 + $0x1038] sm:$0xff]
    %v3478 = vld [vmem:[#allocation20 + $0x1040] sm:$0xff]
    %v3479 = vld [vmem:[#allocation20 + $0x1048] sm:$0xff]
    %v3480 = vld [vmem:[#allocation20 + $0x1050] sm:$0xff]
    %v3481 = vld [vmem:[#allocation20 + $0x1058] sm:$0xff]
    %v3482 = vld [vmem:[#allocation20 + $0x1060] sm:$0xff]
    %v3483 = vld [vmem:[#allocation20 + $0x1068] sm:$0xff]
    %v3484 = vld [vmem:[#allocation20 + $0x1070] sm:$0xff]
    %v3485 = vld [vmem:[#allocation20 + $0x1078] sm:$0xff]
    %v3486 = vld [vmem:[#allocation20 + $0x1080] sm:$0xff]
    %v3487 = vld [vmem:[#allocation20 + $0x1088] sm:$0xff]
    %v3488 = vld [vmem:[#allocation20 + $0x1090] sm:$0xff]
    %v3489 = vld [vmem:[#allocation20 + $0x1098] sm:$0xff]
    %v3490 = vld [vmem:[#allocation20 + $0x10a0] sm:$0xff]
    %v3491 = vld [vmem:[#allocation20 + $0x10a8] sm:$0xff]
    %v3492 = vld [vmem:[#allocation20 + $0x10b0] sm:$0xff]
    %v3493 = vld [vmem:[#allocation20 + $0x10b8] sm:$0xff]
    %v3494 = vld [vmem:[#allocation20 + $0x10c0] sm:$0xff]
    %v3495 = vld [vmem:[#allocation20 + $0x10c8] sm:$0xff]
    %v3496 = vld [vmem:[#allocation20 + $0x10d0] sm:$0xff]
    %v3497 = vld [vmem:[#allocation20 + $0x10d8] sm:$0xff]
    %v3498 = vld [vmem:[#allocation20 + $0x10e0] sm:$0xff]
    %v3499 = vld [vmem:[#allocation20 + $0x10e8] sm:$0xff]
    %v3500 = vld [vmem:[#allocation20 + $0x10f0] sm:$0xff]
    %v3501 = vld [vmem:[#allocation20 + $0x10f8] sm:$0xff]
    %v3502 = vld [vmem:[#allocation20 + $0x1100] sm:$0xff]
    %v3503 = vld [vmem:[#allocation20 + $0x1108] sm:$0xff]
    %v3504 = vld [vmem:[#allocation20 + $0x1110] sm:$0xff]
    %v3505 = vld [vmem:[#allocation20 + $0x1118] sm:$0xff]
    %v3506 = vld [vmem:[#allocation20 + $0x1120] sm:$0xff]
    %v3507 = vld [vmem:[#allocation20 + $0x1128] sm:$0xff]
    %v3508 = vld [vmem:[#allocation20 + $0x1130] sm:$0xff]
    %v3509 = vld [vmem:[#allocation20 + $0x1138] sm:$0xff]
    %v3510 = vld [vmem:[#allocation20 + $0x1140] sm:$0xff]
    %v3511 = vld [vmem:[#allocation20 + $0x1148] sm:$0xff]
    %v3512 = vld [vmem:[#allocation20 + $0x1150] sm:$0xff]
    %v3513 = vld [vmem:[#allocation20 + $0x1158] sm:$0xff]
    %v3514 = vld [vmem:[#allocation20 + $0x1160] sm:$0xff]
    %v3515 = vld [vmem:[#allocation20 + $0x1168] sm:$0xff]
    %v3516 = vld [vmem:[#allocation20 + $0x1170] sm:$0xff]
    %v3517 = vld [vmem:[#allocation20 + $0x1178] sm:$0xff]
    %v3518 = vld [vmem:[#allocation20 + $0x1180] sm:$0xff]
    %v3519 = vld [vmem:[#allocation20 + $0x1188] sm:$0xff]
    %v3520 = vld [vmem:[#allocation20 + $0x1190] sm:$0xff]
    %v3521 = vld [vmem:[#allocation20 + $0x1198] sm:$0xff]
    %v3522 = vld [vmem:[#allocation20 + $0x11a0] sm:$0xff]
    %v3523 = vld [vmem:[#allocation20 + $0x11a8] sm:$0xff]
    %v3524 = vld [vmem:[#allocation20 + $0x11b0] sm:$0xff]
    %v3525 = vld [vmem:[#allocation20 + $0x11b8] sm:$0xff]
    %v3526 = vld [vmem:[#allocation20 + $0x11c0] sm:$0xff]
    %v3527 = vld [vmem:[#allocation20 + $0x11c8] sm:$0xff]
    %v3528 = vld [vmem:[#allocation20 + $0x11d0] sm:$0xff]
    %v3529 = vld [vmem:[#allocation20 + $0x11d8] sm:$0xff]
    %v3530 = vld [vmem:[#allocation20 + $0x11e0] sm:$0xff]
    %v3531 = vld [vmem:[#allocation20 + $0x11e8] sm:$0xff]
    %v3532 = vld [vmem:[#allocation20 + $0x11f0] sm:$0xff]
    %v3533 = vld [vmem:[#allocation20 + $0x11f8] sm:$0xff]
    %v3534 = vld [vmem:[#allocation20 + $0x1200] sm:$0xff]
    %v3535 = vld [vmem:[#allocation20 + $0x1208] sm:$0xff]
    %v3536 = vld [vmem:[#allocation20 + $0x1210] sm:$0xff]
    %v3537 = vld [vmem:[#allocation20 + $0x1218] sm:$0xff]
    %v3538 = vld [vmem:[#allocation20 + $0x1220] sm:$0xff]
    %v3539 = vld [vmem:[#allocation20 + $0x1228] sm:$0xff]
    %v3540 = vld [vmem:[#allocation20 + $0x1230] sm:$0xff]
    %v3541 = vld [vmem:[#allocation20 + $0x1238] sm:$0xff]
    %v3542 = vld [vmem:[#allocation20 + $0x1240] sm:$0xff]
    %v3543 = vld [vmem:[#allocation20 + $0x1248] sm:$0xff]
    %v3544 = vld [vmem:[#allocation20 + $0x1250] sm:$0xff]
    %v3545 = vld [vmem:[#allocation20 + $0x1258] sm:$0xff]
    %v3546 = vld [vmem:[#allocation20 + $0x1260] sm:$0xff]
    %v3547 = vld [vmem:[#allocation20 + $0x1268] sm:$0xff]
    %v3548 = vld [vmem:[#allocation20 + $0x1270] sm:$0xff]
    %v3549 = vld [vmem:[#allocation20 + $0x1278] sm:$0xff]
    %v3550 = vld [vmem:[#allocation20 + $0x1280] sm:$0xff]
    %v3551 = vld [vmem:[#allocation20 + $0x1288] sm:$0xff]
    %v3552 = vld [vmem:[#allocation20 + $0x1290] sm:$0xff]
    %v3553 = vld [vmem:[#allocation20 + $0x1298] sm:$0xff]
    %v3554 = vld [vmem:[#allocation20 + $0x12a0] sm:$0xff]
    %v3555 = vld [vmem:[#allocation20 + $0x12a8] sm:$0xff]
    %v3556 = vld [vmem:[#allocation20 + $0x12b0] sm:$0xff]
    %v3557 = vld [vmem:[#allocation20 + $0x12b8] sm:$0xff]
    %v3558 = vld [vmem:[#allocation20 + $0x12c0] sm:$0xff]
    %v3559 = vld [vmem:[#allocation20 + $0x12c8] sm:$0xff]
    %v3560 = vld [vmem:[#allocation20 + $0x12d0] sm:$0xff]
    %v3561 = vld [vmem:[#allocation20 + $0x12d8] sm:$0xff]
    %v3562 = vld [vmem:[#allocation20 + $0x12e0] sm:$0xff]
    %v3563 = vld [vmem:[#allocation20 + $0x12e8] sm:$0xff]
    %v3564 = vld [vmem:[#allocation20 + $0x12f0] sm:$0xff]
    %v3565 = vld [vmem:[#allocation20 + $0x12f8] sm:$0xff]
    %v3566 = vld [vmem:[#allocation20 + $0x1300] sm:$0xff]
    %v3567 = vld [vmem:[#allocation20 + $0x1308] sm:$0xff]
    %v3568 = vld [vmem:[#allocation20 + $0x1310] sm:$0xff]
    %v3569 = vld [vmem:[#allocation20 + $0x1318] sm:$0xff]
    %v3570 = vld [vmem:[#allocation20 + $0x1320] sm:$0xff]
    %v3571 = vld [vmem:[#allocation20 + $0x1328] sm:$0xff]
    %v3572 = vld [vmem:[#allocation20 + $0x1330] sm:$0xff]
    %v3573 = vld [vmem:[#allocation20 + $0x1338] sm:$0xff]
    %v3574 = vld [vmem:[#allocation20 + $0x1340] sm:$0xff]
    %v3575 = vld [vmem:[#allocation20 + $0x1348] sm:$0xff]
    %v3576 = vld [vmem:[#allocation20 + $0x1350] sm:$0xff]
    %v3577 = vld [vmem:[#allocation20 + $0x1358] sm:$0xff]
    %v3578 = vld [vmem:[#allocation20 + $0x1360] sm:$0xff]
    %v3579 = vld [vmem:[#allocation20 + $0x1368] sm:$0xff]
    %v3580 = vld [vmem:[#allocation20 + $0x1370] sm:$0xff]
    %v3581 = vld [vmem:[#allocation20 + $0x1378] sm:$0xff]
    %v3582 = vld [vmem:[#allocation20 + $0x1380] sm:$0xff]
    %v3583 = vld [vmem:[#allocation20 + $0x1388] sm:$0xff]
    %v3584 = vld [vmem:[#allocation20 + $0x1390] sm:$0xff]
    %v3585 = vld [vmem:[#allocation20 + $0x1398] sm:$0xff]
    %v3586 = vld [vmem:[#allocation20 + $0x13a0] sm:$0xff]
    %v3587 = vld [vmem:[#allocation20 + $0x13a8] sm:$0xff]
    %v3588 = vld [vmem:[#allocation20 + $0x13b0] sm:$0xff]
    %v3589 = vld [vmem:[#allocation20 + $0x13b8] sm:$0xff]
    %v3590 = vld [vmem:[#allocation20 + $0x13c0] sm:$0xff]
    %v3591 = vld [vmem:[#allocation20 + $0x13c8] sm:$0xff]
    %v3592 = vld [vmem:[#allocation20 + $0x13d0] sm:$0xff]
    %v3593 = vld [vmem:[#allocation20 + $0x13d8] sm:$0xff]
    %v3594 = vld [vmem:[#allocation20 + $0x13e0] sm:$0xff]
    %v3595 = vld [vmem:[#allocation20 + $0x13e8] sm:$0xff]
    %v3596 = vld [vmem:[#allocation20 + $0x13f0] sm:$0xff]
    %v3597 = vld [vmem:[#allocation20 + $0x13f8] sm:$0xff]
    %v3598 = vld [vmem:[#allocation20 + $0x1400] sm:$0xff]
    %v3599 = vld [vmem:[#allocation20 + $0x1408] sm:$0xff]
    %v3600 = vld [vmem:[#allocation20 + $0x1410] sm:$0xff]
    %v3601 = vld [vmem:[#allocation20 + $0x1418] sm:$0xff]
    %v3602 = vld [vmem:[#allocation20 + $0x1420] sm:$0xff]
    %v3603 = vld [vmem:[#allocation20 + $0x1428] sm:$0xff]
    %v3604 = vld [vmem:[#allocation20 + $0x1430] sm:$0xff]
    %v3605 = vld [vmem:[#allocation20 + $0x1438] sm:$0xff]
    %v3606 = vld [vmem:[#allocation20 + $0x1440] sm:$0xff]
    %v3607 = vld [vmem:[#allocation20 + $0x1448] sm:$0xff]
    %v3608 = vld [vmem:[#allocation20 + $0x1450] sm:$0xff]
    %v3609 = vld [vmem:[#allocation20 + $0x1458] sm:$0xff]
    %v3610 = vld [vmem:[#allocation20 + $0x1460] sm:$0xff]
    %v3611 = vld [vmem:[#allocation20 + $0x1468] sm:$0xff]
    %v3612 = vld [vmem:[#allocation20 + $0x1470] sm:$0xff]
    %v3613 = vld [vmem:[#allocation20 + $0x1478] sm:$0xff]
    %v3614 = vld [vmem:[#allocation20 + $0x1480] sm:$0xff]
    %v3615 = vld [vmem:[#allocation20 + $0x1488] sm:$0xff]
    %v3616 = vld [vmem:[#allocation20 + $0x1490] sm:$0xff]
    %v3617 = vld [vmem:[#allocation20 + $0x1498] sm:$0xff]
    %v3618 = vld [vmem:[#allocation20 + $0x14a0] sm:$0xff]
    %v3619 = vld [vmem:[#allocation20 + $0x14a8] sm:$0xff]
    %v3620 = vld [vmem:[#allocation20 + $0x14b0] sm:$0xff]
    %v3621 = vld [vmem:[#allocation20 + $0x14b8] sm:$0xff]
    %v3622 = vld [vmem:[#allocation20 + $0x14c0] sm:$0xff]
    %v3623 = vld [vmem:[#allocation20 + $0x14c8] sm:$0xff]
    %v3624 = vld [vmem:[#allocation20 + $0x14d0] sm:$0xff]
    %v3625 = vld [vmem:[#allocation20 + $0x14d8] sm:$0xff]
    %v3626 = vld [vmem:[#allocation20 + $0x14e0] sm:$0xff]
    %v3627 = vld [vmem:[#allocation20 + $0x14e8] sm:$0xff]
    %v3628 = vld [vmem:[#allocation20 + $0x14f0] sm:$0xff]
    %v3629 = vld [vmem:[#allocation20 + $0x14f8] sm:$0xff]
    %v3630 = vld [vmem:[#allocation20 + $0x1500] sm:$0xff]
    %v3631 = vld [vmem:[#allocation20 + $0x1508] sm:$0xff]
    %v3632 = vld [vmem:[#allocation20 + $0x1510] sm:$0xff]
    %v3633 = vld [vmem:[#allocation20 + $0x1518] sm:$0xff]
    %v3634 = vld [vmem:[#allocation20 + $0x1520] sm:$0xff]
    %v3635 = vld [vmem:[#allocation20 + $0x1528] sm:$0xff]
    %v3636 = vld [vmem:[#allocation20 + $0x1530] sm:$0xff]
    %v3637 = vld [vmem:[#allocation20 + $0x1538] sm:$0xff]
    %v3638 = vld [vmem:[#allocation20 + $0x1540] sm:$0xff]
    %v3639 = vld [vmem:[#allocation20 + $0x1548] sm:$0xff]
    %v3640 = vld [vmem:[#allocation20 + $0x1550] sm:$0xff]
    %v3641 = vld [vmem:[#allocation20 + $0x1558] sm:$0xff]
    %v3642 = vld [vmem:[#allocation20 + $0x1560] sm:$0xff]
    %v3643 = vld [vmem:[#allocation20 + $0x1568] sm:$0xff]
    %v3644 = vld [vmem:[#allocation20 + $0x1570] sm:$0xff]
    %v3645 = vld [vmem:[#allocation20 + $0x1578] sm:$0xff]
    %v3646 = vld [vmem:[#allocation20 + $0x1580] sm:$0xff]
    %v3647 = vld [vmem:[#allocation20 + $0x1588] sm:$0xff]
    %v3648 = vld [vmem:[#allocation20 + $0x1590] sm:$0xff]
    %v3649 = vld [vmem:[#allocation20 + $0x1598] sm:$0xff]
    %v3650 = vld [vmem:[#allocation20 + $0x15a0] sm:$0xff]
    %v3651 = vld [vmem:[#allocation20 + $0x15a8] sm:$0xff]
    %v3652 = vld [vmem:[#allocation20 + $0x15b0] sm:$0xff]
    %v3653 = vld [vmem:[#allocation20 + $0x15b8] sm:$0xff]
    %v3654 = vld [vmem:[#allocation20 + $0x15c0] sm:$0xff]
    %v3655 = vld [vmem:[#allocation20 + $0x15c8] sm:$0xff]
    %v3656 = vld [vmem:[#allocation20 + $0x15d0] sm:$0xff]
    %v3657 = vld [vmem:[#allocation20 + $0x15d8] sm:$0xff]
    %v3658 = vld [vmem:[#allocation20 + $0x15e0] sm:$0xff]
    %v3659 = vld [vmem:[#allocation20 + $0x15e8] sm:$0xff]
    %v3660 = vld [vmem:[#allocation20 + $0x15f0] sm:$0xff]
    %v3661 = vld [vmem:[#allocation20 + $0x15f8] sm:$0xff]
    %v3662 = vld [vmem:[#allocation20 + $0x1600] sm:$0xff]
    %v3663 = vld [vmem:[#allocation20 + $0x1608] sm:$0xff]
    %v3664 = vld [vmem:[#allocation20 + $0x1610] sm:$0xff]
    %v3665 = vld [vmem:[#allocation20 + $0x1618] sm:$0xff]
    %v3666 = vld [vmem:[#allocation20 + $0x1620] sm:$0xff]
    %v3667 = vld [vmem:[#allocation20 + $0x1628] sm:$0xff]
    %v3668 = vld [vmem:[#allocation20 + $0x1630] sm:$0xff]
    %v3669 = vld [vmem:[#allocation20 + $0x1638] sm:$0xff]
    %v3670 = vld [vmem:[#allocation20 + $0x1640] sm:$0xff]
    %v3671 = vld [vmem:[#allocation20 + $0x1648] sm:$0xff]
    %v3672 = vld [vmem:[#allocation20 + $0x1650] sm:$0xff]
    %v3673 = vld [vmem:[#allocation20 + $0x1658] sm:$0xff]
    %v3674 = vld [vmem:[#allocation20 + $0x1660] sm:$0xff]
    %v3675 = vld [vmem:[#allocation20 + $0x1668] sm:$0xff]
    %v3676 = vld [vmem:[#allocation20 + $0x1670] sm:$0xff]
    %v3677 = vld [vmem:[#allocation20 + $0x1678] sm:$0xff]
    %v3678 = vld [vmem:[#allocation20 + $0x1680] sm:$0xff]
    %v3679 = vld [vmem:[#allocation20 + $0x1688] sm:$0xff]
    %v3680 = vld [vmem:[#allocation20 + $0x1690] sm:$0xff]
    %v3681 = vld [vmem:[#allocation20 + $0x1698] sm:$0xff]
    %v3682 = vld [vmem:[#allocation20 + $0x16a0] sm:$0xff]
    %v3683 = vld [vmem:[#allocation20 + $0x16a8] sm:$0xff]
    %v3684 = vld [vmem:[#allocation20 + $0x16b0] sm:$0xff]
    %v3685 = vld [vmem:[#allocation20 + $0x16b8] sm:$0xff]
    %v3686 = vld [vmem:[#allocation20 + $0x16c0] sm:$0xff]
    %v3687 = vld [vmem:[#allocation20 + $0x16c8] sm:$0xff]
    %v3688 = vld [vmem:[#allocation20 + $0x16d0] sm:$0xff]
    %v3689 = vld [vmem:[#allocation20 + $0x16d8] sm:$0xff]
    %v3690 = vld [vmem:[#allocation20 + $0x16e0] sm:$0xff]
    %v3691 = vld [vmem:[#allocation20 + $0x16e8] sm:$0xff]
    %v3692 = vld [vmem:[#allocation20 + $0x16f0] sm:$0xff]
    %v3693 = vld [vmem:[#allocation20 + $0x16f8] sm:$0xff]
    %v3694 = vld [vmem:[#allocation20 + $0x1700] sm:$0xff]
    %v3695 = vld [vmem:[#allocation20 + $0x1708] sm:$0xff]
    %v3696 = vld [vmem:[#allocation20 + $0x1710] sm:$0xff]
    %v3697 = vld [vmem:[#allocation20 + $0x1718] sm:$0xff]
    %v3698 = vld [vmem:[#allocation20 + $0x1720] sm:$0xff]
    %v3699 = vld [vmem:[#allocation20 + $0x1728] sm:$0xff]
    %v3700 = vld [vmem:[#allocation20 + $0x1730] sm:$0xff]
    %v3701 = vld [vmem:[#allocation20 + $0x1738] sm:$0xff]
    %v3702 = vld [vmem:[#allocation20 + $0x1740] sm:$0xff]
    %v3703 = vld [vmem:[#allocation20 + $0x1748] sm:$0xff]
    %v3704 = vld [vmem:[#allocation20 + $0x1750] sm:$0xff]
    %v3705 = vld [vmem:[#allocation20 + $0x1758] sm:$0xff]
    %v3706 = vld [vmem:[#allocation20 + $0x1760] sm:$0xff]
    %v3707 = vld [vmem:[#allocation20 + $0x1768] sm:$0xff]
    %v3708 = vld [vmem:[#allocation20 + $0x1770] sm:$0xff]
    %v3709 = vld [vmem:[#allocation20 + $0x1778] sm:$0xff]
    %v3710 = vld [vmem:[#allocation20 + $0x1780] sm:$0xff]
    %v3711 = vld [vmem:[#allocation20 + $0x1788] sm:$0xff]
    %v3712 = vld [vmem:[#allocation20 + $0x1790] sm:$0xff]
    %v3713 = vld [vmem:[#allocation20 + $0x1798] sm:$0xff]
    %v3714 = vld [vmem:[#allocation20 + $0x17a0] sm:$0xff]
    %v3715 = vld [vmem:[#allocation20 + $0x17a8] sm:$0xff]
    %v3716 = vld [vmem:[#allocation20 + $0x17b0] sm:$0xff]
    %v3717 = vld [vmem:[#allocation20 + $0x17b8] sm:$0xff]
    %v3718 = vld [vmem:[#allocation20 + $0x17c0] sm:$0xff]
    %v3719 = vld [vmem:[#allocation20 + $0x17c8] sm:$0xff]
    %v3720 = vld [vmem:[#allocation20 + $0x17d0] sm:$0xff]
    %v3721 = vld [vmem:[#allocation20 + $0x17d8] sm:$0xff]
    %v3722 = vld [vmem:[#allocation20 + $0x17e0] sm:$0xff]
    %v3723 = vld [vmem:[#allocation20 + $0x17e8] sm:$0xff]
    %v3724 = vld [vmem:[#allocation20 + $0x17f0] sm:$0xff]
    %v3725 = vld [vmem:[#allocation20 + $0x17f8] sm:$0xff]
    %v3726 = vld [vmem:[#allocation20 + $0x1800] sm:$0xff]
    %v3727 = vld [vmem:[#allocation20 + $0x1808] sm:$0xff]
    %v3728 = vld [vmem:[#allocation20 + $0x1810] sm:$0xff]
    %v3729 = vld [vmem:[#allocation20 + $0x1818] sm:$0xff]
    %v3730 = vld [vmem:[#allocation20 + $0x1820] sm:$0xff]
    %v3731 = vld [vmem:[#allocation20 + $0x1828] sm:$0xff]
    %v3732 = vld [vmem:[#allocation20 + $0x1830] sm:$0xff]
    %v3733 = vld [vmem:[#allocation20 + $0x1838] sm:$0xff]
    %v3734 = vld [vmem:[#allocation20 + $0x1840] sm:$0xff]
    %v3735 = vld [vmem:[#allocation20 + $0x1848] sm:$0xff]
    %v3736 = vld [vmem:[#allocation20 + $0x1850] sm:$0xff]
    %v3737 = vld [vmem:[#allocation20 + $0x1858] sm:$0xff]
    %v3738 = vld [vmem:[#allocation20 + $0x1860] sm:$0xff]
    %v3739 = vld [vmem:[#allocation20 + $0x1868] sm:$0xff]
    %v3740 = vld [vmem:[#allocation20 + $0x1870] sm:$0xff]
    %v3741 = vld [vmem:[#allocation20 + $0x1878] sm:$0xff]
    %v3742 = vld [vmem:[#allocation20 + $0x1880] sm:$0xff]
    %v3743 = vld [vmem:[#allocation20 + $0x1888] sm:$0xff]
    %v3744 = vld [vmem:[#allocation20 + $0x1890] sm:$0xff]
    %v3745 = vld [vmem:[#allocation20 + $0x1898] sm:$0xff]
    %v3746 = vld [vmem:[#allocation20 + $0x18a0] sm:$0xff]
    %v3747 = vld [vmem:[#allocation20 + $0x18a8] sm:$0xff]
    %v3748 = vld [vmem:[#allocation20 + $0x18b0] sm:$0xff]
    %v3749 = vld [vmem:[#allocation20 + $0x18b8] sm:$0xff]
    %v3750 = vld [vmem:[#allocation20 + $0x18c0] sm:$0xff]
    %v3751 = vld [vmem:[#allocation20 + $0x18c8] sm:$0xff]
    %v3752 = vld [vmem:[#allocation20 + $0x18d0] sm:$0xff]
    %v3753 = vld [vmem:[#allocation20 + $0x18d8] sm:$0xff]
    %v3754 = vld [vmem:[#allocation20 + $0x18e0] sm:$0xff]
    %v3755 = vld [vmem:[#allocation20 + $0x18e8] sm:$0xff]
    %v3756 = vld [vmem:[#allocation20 + $0x18f0] sm:$0xff]
    %v3757 = vld [vmem:[#allocation20 + $0x18f8] sm:$0xff]
    %v3758 = vld [vmem:[#allocation20 + $0x1900] sm:$0xff]
    %v3759 = vld [vmem:[#allocation20 + $0x1908] sm:$0xff]
    %v3760 = vld [vmem:[#allocation20 + $0x1910] sm:$0xff]
    %v3761 = vld [vmem:[#allocation20 + $0x1918] sm:$0xff]
    %v3762 = vld [vmem:[#allocation20 + $0x1920] sm:$0xff]
    %v3763 = vld [vmem:[#allocation20 + $0x1928] sm:$0xff]
    %v3764 = vld [vmem:[#allocation20 + $0x1930] sm:$0xff]
    %v3765 = vld [vmem:[#allocation20 + $0x1938] sm:$0xff]
    %v3766 = vld [vmem:[#allocation20 + $0x1940] sm:$0xff]
    %v3767 = vld [vmem:[#allocation20 + $0x1948] sm:$0xff]
    %v3768 = vld [vmem:[#allocation20 + $0x1950] sm:$0xff]
    %v3769 = vld [vmem:[#allocation20 + $0x1958] sm:$0xff]
    %v3770 = vld [vmem:[#allocation20 + $0x1960] sm:$0xff]
    %v3771 = vld [vmem:[#allocation20 + $0x1968] sm:$0xff]
    %v3772 = vld [vmem:[#allocation20 + $0x1970] sm:$0xff]
    %v3773 = vld [vmem:[#allocation20 + $0x1978] sm:$0xff]
    %v3774 = vld [vmem:[#allocation20 + $0x1980] sm:$0xff]
    %v3775 = vld [vmem:[#allocation20 + $0x1988] sm:$0xff]
    %v3776 = vld [vmem:[#allocation20 + $0x1990] sm:$0xff]
    %v3777 = vld [vmem:[#allocation20 + $0x1998] sm:$0xff]
    %v3778 = vld [vmem:[#allocation20 + $0x19a0] sm:$0xff]
    %v3779 = vld [vmem:[#allocation20 + $0x19a8] sm:$0xff]
    %v3780 = vld [vmem:[#allocation20 + $0x19b0] sm:$0xff]
    %v3781 = vld [vmem:[#allocation20 + $0x19b8] sm:$0xff]
    %v3782 = vld [vmem:[#allocation20 + $0x19c0] sm:$0xff]
    %v3783 = vld [vmem:[#allocation20 + $0x19c8] sm:$0xff]
    %v3784 = vld [vmem:[#allocation20 + $0x19d0] sm:$0xff]
    %v3785 = vld [vmem:[#allocation20 + $0x19d8] sm:$0xff]
    %v3786 = vld [vmem:[#allocation20 + $0x19e0] sm:$0xff]
    %v3787 = vld [vmem:[#allocation20 + $0x19e8] sm:$0xff]
    %v3788 = vld [vmem:[#allocation20 + $0x19f0] sm:$0xff]
    %v3789 = vld [vmem:[#allocation20 + $0x19f8] sm:$0xff]
    %v3790 = vld [vmem:[#allocation20 + $0x1a00] sm:$0xff]
    %v3791 = vld [vmem:[#allocation20 + $0x1a08] sm:$0xff]
    %v3792 = vld [vmem:[#allocation20 + $0x1a10] sm:$0xff]
    %v3793 = vld [vmem:[#allocation20 + $0x1a18] sm:$0xff]
    %v3794 = vld [vmem:[#allocation20 + $0x1a20] sm:$0xff]
    %v3795 = vld [vmem:[#allocation20 + $0x1a28] sm:$0xff]
    %v3796 = vld [vmem:[#allocation20 + $0x1a30] sm:$0xff]
    %v3797 = vld [vmem:[#allocation20 + $0x1a38] sm:$0xff]
    %v3798 = vld [vmem:[#allocation20 + $0x1a40] sm:$0xff]
    %v3799 = vld [vmem:[#allocation20 + $0x1a48] sm:$0xff]
    %v3800 = vld [vmem:[#allocation20 + $0x1a50] sm:$0xff]
    %v3801 = vld [vmem:[#allocation20 + $0x1a58] sm:$0xff]
    %v3802 = vld [vmem:[#allocation20 + $0x1a60] sm:$0xff]
    %v3803 = vld [vmem:[#allocation20 + $0x1a68] sm:$0xff]
    %v3804 = vld [vmem:[#allocation20 + $0x1a70] sm:$0xff]
    %v3805 = vld [vmem:[#allocation20 + $0x1a78] sm:$0xff]
    %v3806 = vld [vmem:[#allocation20 + $0x1a80] sm:$0xff]
    %v3807 = vld [vmem:[#allocation20 + $0x1a88] sm:$0xff]
    %v3808 = vld [vmem:[#allocation20 + $0x1a90] sm:$0xff]
    %v3809 = vld [vmem:[#allocation20 + $0x1a98] sm:$0xff]
    %v3810 = vld [vmem:[#allocation20 + $0x1aa0] sm:$0xff]
    %v3811 = vld [vmem:[#allocation20 + $0x1aa8] sm:$0xff]
    %v3812 = vld [vmem:[#allocation20 + $0x1ab0] sm:$0xff]
    %v3813 = vld [vmem:[#allocation20 + $0x1ab8] sm:$0xff]
    %v3814 = vld [vmem:[#allocation20 + $0x1ac0] sm:$0xff]
    %v3815 = vld [vmem:[#allocation20 + $0x1ac8] sm:$0xff]
    %v3816 = vld [vmem:[#allocation20 + $0x1ad0] sm:$0xff]
    %v3817 = vld [vmem:[#allocation20 + $0x1ad8] sm:$0xff]
    %v3818 = vld [vmem:[#allocation20 + $0x1ae0] sm:$0xff]
    %v3819 = vld [vmem:[#allocation20 + $0x1ae8] sm:$0xff]
    %v3820 = vld [vmem:[#allocation20 + $0x1af0] sm:$0xff]
    %v3821 = vld [vmem:[#allocation20 + $0x1af8] sm:$0xff]
    %v3822 = vld [vmem:[#allocation20 + $0x1b00] sm:$0xff]
    %v3823 = vld [vmem:[#allocation20 + $0x1b08] sm:$0xff]
    %v3824 = vld [vmem:[#allocation20 + $0x1b10] sm:$0xff]
    %v3825 = vld [vmem:[#allocation20 + $0x1b18] sm:$0xff]
    %v3826 = vld [vmem:[#allocation20 + $0x1b20] sm:$0xff]
    %v3827 = vld [vmem:[#allocation20 + $0x1b28] sm:$0xff]
    %v3828 = vld [vmem:[#allocation20 + $0x1b30] sm:$0xff]
    %v3829 = vld [vmem:[#allocation20 + $0x1b38] sm:$0xff]
    %v3830 = vld [vmem:[#allocation20 + $0x1b40] sm:$0xff]
    %v3831 = vld [vmem:[#allocation20 + $0x1b48] sm:$0xff]
    %v3832 = vld [vmem:[#allocation20 + $0x1b50] sm:$0xff]
    %v3833 = vld [vmem:[#allocation20 + $0x1b58] sm:$0xff]
    %v3834 = vld [vmem:[#allocation20 + $0x1b60] sm:$0xff]
    %v3835 = vld [vmem:[#allocation20 + $0x1b68] sm:$0xff]
    %v3836 = vld [vmem:[#allocation20 + $0x1b70] sm:$0xff]
    %v3837 = vld [vmem:[#allocation20 + $0x1b78] sm:$0xff]
    %v3838 = vld [vmem:[#allocation20 + $0x1b80] sm:$0xff]
    %v3839 = vld [vmem:[#allocation20 + $0x1b88] sm:$0xff]
    %v3840 = vld [vmem:[#allocation20 + $0x1b90] sm:$0xff]
    %v3841 = vld [vmem:[#allocation20 + $0x1b98] sm:$0xff]
    %v3842 = vld [vmem:[#allocation20 + $0x1ba0] sm:$0xff]
    %v3843 = vld [vmem:[#allocation20 + $0x1ba8] sm:$0xff]
    %v3844 = vld [vmem:[#allocation20 + $0x1bb0] sm:$0xff]
    %v3845 = vld [vmem:[#allocation20 + $0x1bb8] sm:$0xff]
    %v3846 = vld [vmem:[#allocation20 + $0x1bc0] sm:$0xff]
    %v3847 = vld [vmem:[#allocation20 + $0x1bc8] sm:$0xff]
    %v3848 = vld [vmem:[#allocation20 + $0x1bd0] sm:$0xff]
    %v3849 = vld [vmem:[#allocation20 + $0x1bd8] sm:$0xff]
    %v3850 = vld [vmem:[#allocation20 + $0x1be0] sm:$0xff]
    %v3851 = vld [vmem:[#allocation20 + $0x1be8] sm:$0xff]
    %v3852 = vld [vmem:[#allocation20 + $0x1bf0] sm:$0xff]
    %v3853 = vld [vmem:[#allocation20 + $0x1bf8] sm:$0xff]
    %v3854 = vld [vmem:[#allocation20 + $0x1c00] sm:$0xff]
    %v3855 = vld [vmem:[#allocation20 + $0x1c08] sm:$0xff]
    %v3856 = vld [vmem:[#allocation20 + $0x1c10] sm:$0xff]
    %v3857 = vld [vmem:[#allocation20 + $0x1c18] sm:$0xff]
    %v3858 = vld [vmem:[#allocation20 + $0x1c20] sm:$0xff]
    %v3859 = vld [vmem:[#allocation20 + $0x1c28] sm:$0xff]
    %v3860 = vld [vmem:[#allocation20 + $0x1c30] sm:$0xff]
    %v3861 = vld [vmem:[#allocation20 + $0x1c38] sm:$0xff]
    %v3862 = vld [vmem:[#allocation20 + $0x1c40] sm:$0xff]
    %v3863 = vld [vmem:[#allocation20 + $0x1c48] sm:$0xff]
    %v3864 = vld [vmem:[#allocation20 + $0x1c50] sm:$0xff]
    %v3865 = vld [vmem:[#allocation20 + $0x1c58] sm:$0xff]
    %v3866 = vld [vmem:[#allocation20 + $0x1c60] sm:$0xff]
    %v3867 = vld [vmem:[#allocation20 + $0x1c68] sm:$0xff]
    %v3868 = vld [vmem:[#allocation20 + $0x1c70] sm:$0xff]
    %v3869 = vld [vmem:[#allocation20 + $0x1c78] sm:$0xff]
    %v3870 = vld [vmem:[#allocation20 + $0x1c80] sm:$0xff]
    %v3871 = vld [vmem:[#allocation20 + $0x1c88] sm:$0xff]
    %v3872 = vld [vmem:[#allocation20 + $0x1c90] sm:$0xff]
    %v3873 = vld [vmem:[#allocation20 + $0x1c98] sm:$0xff]
    %v3874 = vld [vmem:[#allocation20 + $0x1ca0] sm:$0xff]
    %v3875 = vld [vmem:[#allocation20 + $0x1ca8] sm:$0xff]
    %v3876 = vld [vmem:[#allocation20 + $0x1cb0] sm:$0xff]
    %v3877 = vld [vmem:[#allocation20 + $0x1cb8] sm:$0xff]
    %v3878 = vld [vmem:[#allocation20 + $0x1cc0] sm:$0xff]
    %v3879 = vld [vmem:[#allocation20 + $0x1cc8] sm:$0xff]
    %v3880 = vld [vmem:[#allocation20 + $0x1cd0] sm:$0xff]
    %v3881 = vld [vmem:[#allocation20 + $0x1cd8] sm:$0xff]
    %v3882 = vld [vmem:[#allocation20 + $0x1ce0] sm:$0xff]
    %v3883 = vld [vmem:[#allocation20 + $0x1ce8] sm:$0xff]
    %v3884 = vld [vmem:[#allocation20 + $0x1cf0] sm:$0xff]
    %v3885 = vld [vmem:[#allocation20 + $0x1cf8] sm:$0xff]
    %v3886 = vld [vmem:[#allocation20 + $0x1d00] sm:$0xff]
    %v3887 = vld [vmem:[#allocation20 + $0x1d08] sm:$0xff]
    %v3888 = vld [vmem:[#allocation20 + $0x1d10] sm:$0xff]
    %v3889 = vld [vmem:[#allocation20 + $0x1d18] sm:$0xff]
    %v3890 = vld [vmem:[#allocation20 + $0x1d20] sm:$0xff]
    %v3891 = vld [vmem:[#allocation20 + $0x1d28] sm:$0xff]
    %v3892 = vld [vmem:[#allocation20 + $0x1d30] sm:$0xff]
    %v3893 = vld [vmem:[#allocation20 + $0x1d38] sm:$0xff]
    %v3894 = vld [vmem:[#allocation20 + $0x1d40] sm:$0xff]
    %v3895 = vld [vmem:[#allocation20 + $0x1d48] sm:$0xff]
    %v3896 = vld [vmem:[#allocation20 + $0x1d50] sm:$0xff]
    %v3897 = vld [vmem:[#allocation20 + $0x1d58] sm:$0xff]
    %v3898 = vld [vmem:[#allocation20 + $0x1d60] sm:$0xff]
    %v3899 = vld [vmem:[#allocation20 + $0x1d68] sm:$0xff]
    %v3900 = vld [vmem:[#allocation20 + $0x1d70] sm:$0xff]
    %v3901 = vld [vmem:[#allocation20 + $0x1d78] sm:$0xff]
    %v3902 = vld [vmem:[#allocation20 + $0x1d80] sm:$0xff]
    %v3903 = vld [vmem:[#allocation20 + $0x1d88] sm:$0xff]
    %v3904 = vld [vmem:[#allocation20 + $0x1d90] sm:$0xff]
    %v3905 = vld [vmem:[#allocation20 + $0x1d98] sm:$0xff]
    %v3906 = vld [vmem:[#allocation20 + $0x1da0] sm:$0xff]
    %v3907 = vld [vmem:[#allocation20 + $0x1da8] sm:$0xff]
    %v3908 = vld [vmem:[#allocation20 + $0x1db0] sm:$0xff]
    %v3909 = vld [vmem:[#allocation20 + $0x1db8] sm:$0xff]
    %v3910 = vld [vmem:[#allocation20 + $0x1dc0] sm:$0xff]
    %v3911 = vld [vmem:[#allocation20 + $0x1dc8] sm:$0xff]
    %v3912 = vld [vmem:[#allocation20 + $0x1dd0] sm:$0xff]
    %v3913 = vld [vmem:[#allocation20 + $0x1dd8] sm:$0xff]
    %v3914 = vld [vmem:[#allocation20 + $0x1de0] sm:$0xff]
    %v3915 = vld [vmem:[#allocation20 + $0x1de8] sm:$0xff]
    %v3916 = vld [vmem:[#allocation20 + $0x1df0] sm:$0xff]
    %v3917 = vld [vmem:[#allocation20 + $0x1df8] sm:$0xff]
    %v3918 = vld [vmem:[#allocation20 + $0x1e00] sm:$0xff]
    %v3919 = vld [vmem:[#allocation20 + $0x1e08] sm:$0xff]
    %v3920 = vld [vmem:[#allocation20 + $0x1e10] sm:$0xff]
    %v3921 = vld [vmem:[#allocation20 + $0x1e18] sm:$0xff]
    %v3922 = vld [vmem:[#allocation20 + $0x1e20] sm:$0xff]
    %v3923 = vld [vmem:[#allocation20 + $0x1e28] sm:$0xff]
    %v3924 = vld [vmem:[#allocation20 + $0x1e30] sm:$0xff]
    %v3925 = vld [vmem:[#allocation20 + $0x1e38] sm:$0xff]
    %v3926 = vld [vmem:[#allocation20 + $0x1e40] sm:$0xff]
    %v3927 = vld [vmem:[#allocation20 + $0x1e48] sm:$0xff]
    %v3928 = vld [vmem:[#allocation20 + $0x1e50] sm:$0xff]
    %v3929 = vld [vmem:[#allocation20 + $0x1e58] sm:$0xff]
    %v3930 = vld [vmem:[#allocation20 + $0x1e60] sm:$0xff]
    %v3931 = vld [vmem:[#allocation20 + $0x1e68] sm:$0xff]
    %v3932 = vld [vmem:[#allocation20 + $0x1e70] sm:$0xff]
    %v3933 = vld [vmem:[#allocation20 + $0x1e78] sm:$0xff]
    %v3934 = vld [vmem:[#allocation20 + $0x1e80] sm:$0xff]
    %v3935 = vld [vmem:[#allocation20 + $0x1e88] sm:$0xff]
    %v3936 = vld [vmem:[#allocation20 + $0x1e90] sm:$0xff]
    %v3937 = vld [vmem:[#allocation20 + $0x1e98] sm:$0xff]
    %v3938 = vld [vmem:[#allocation20 + $0x1ea0] sm:$0xff]
    %v3939 = vld [vmem:[#allocation20 + $0x1ea8] sm:$0xff]
    %v3940 = vld [vmem:[#allocation20 + $0x1eb0] sm:$0xff]
    %v3941 = vld [vmem:[#allocation20 + $0x1eb8] sm:$0xff]
    %v3942 = vld [vmem:[#allocation20 + $0x1ec0] sm:$0xff]
    %v3943 = vld [vmem:[#allocation20 + $0x1ec8] sm:$0xff]
    %v3944 = vld [vmem:[#allocation20 + $0x1ed0] sm:$0xff]
    %v3945 = vld [vmem:[#allocation20 + $0x1ed8] sm:$0xff]
    %v3946 = vld [vmem:[#allocation20 + $0x1ee0] sm:$0xff]
    %v3947 = vld [vmem:[#allocation20 + $0x1ee8] sm:$0xff]
    %v3948 = vld [vmem:[#allocation20 + $0x1ef0] sm:$0xff]
    %v3949 = vld [vmem:[#allocation20 + $0x1ef8] sm:$0xff]
    %v3950 = vld [vmem:[#allocation20 + $0x1f00] sm:$0xff]
    %v3951 = vld [vmem:[#allocation20 + $0x1f08] sm:$0xff]
    %v3952 = vld [vmem:[#allocation20 + $0x1f10] sm:$0xff]
    %v3953 = vld [vmem:[#allocation20 + $0x1f18] sm:$0xff]
    %v3954 = vld [vmem:[#allocation20 + $0x1f20] sm:$0xff]
    %v3955 = vld [vmem:[#allocation20 + $0x1f28] sm:$0xff]
    %v3956 = vld [vmem:[#allocation20 + $0x1f30] sm:$0xff]
    %v3957 = vld [vmem:[#allocation20 + $0x1f38] sm:$0xff]
    %v3958 = vld [vmem:[#allocation20 + $0x1f40] sm:$0xff]
    %v3959 = vld [vmem:[#allocation20 + $0x1f48] sm:$0xff]
    %v3960 = vld [vmem:[#allocation20 + $0x1f50] sm:$0xff]
    %v3961 = vld [vmem:[#allocation20 + $0x1f58] sm:$0xff]
    %v3962 = vld [vmem:[#allocation20 + $0x1f60] sm:$0xff]
    %v3963 = vld [vmem:[#allocation20 + $0x1f68] sm:$0xff]
    %v3964 = vld [vmem:[#allocation20 + $0x1f70] sm:$0xff]
    %v3965 = vld [vmem:[#allocation20 + $0x1f78] sm:$0xff]
    %v3966 = vld [vmem:[#allocation20 + $0x1f80] sm:$0xff]
    %v3967 = vld [vmem:[#allocation20 + $0x1f88] sm:$0xff]
    %v3968 = vld [vmem:[#allocation20 + $0x1f90] sm:$0xff]
    %v3969 = vld [vmem:[#allocation20 + $0x1f98] sm:$0xff]
    %v3970 = vld [vmem:[#allocation20 + $0x1fa0] sm:$0xff]
    %v3971 = vld [vmem:[#allocation20 + $0x1fa8] sm:$0xff]
    %v3972 = vld [vmem:[#allocation20 + $0x1fb0] sm:$0xff]
    %v3973 = vld [vmem:[#allocation20 + $0x1fb8] sm:$0xff]
    %v3974 = vld [vmem:[#allocation20 + $0x1fc0] sm:$0xff]
    %v3975 = vld [vmem:[#allocation20 + $0x1fc8] sm:$0xff]
    %v3976 = vld [vmem:[#allocation20 + $0x1fd0] sm:$0xff]
    %v3977 = vld [vmem:[#allocation20 + $0x1fd8] sm:$0xff]
    %v3978 = vld [vmem:[#allocation20 + $0x1fe0] sm:$0xff]
    %v3979 = vld [vmem:[#allocation20 + $0x1fe8] sm:$0xff]
    %v3980 = vld [vmem:[#allocation20 + $0x1ff0] sm:$0xff]
    %v3981 = vld [vmem:[#allocation20 + $0x1ff8] sm:$0xff]
    %v3982 = vld [vmem:[#allocation22] sm:$0xff]
    %v3983 = vld [vmem:[#allocation22 + $0x8] sm:$0xff]
    %v3986 = vlaneseq
    %v3987 = vshrl.u32 %v3986, 7
    %v3988 = vsub.s32 0, %v3987
    %v3989 = vrot.slane %v3982, %v3988
    %v3990 = vlaneseq
    %v3991 = vshrl.u32 %v3990, 7
    %v3992 = vsub.s32 1, %v3991
    %v3993 = vrot.slane %v3982, %v3992
    %v3994 = vlaneseq
    %v3995 = vshrl.u32 %v3994, 7
    %v3996 = vsub.s32 2, %v3995
    %v3997 = vrot.slane %v3982, %v3996
    %v3998 = vlaneseq
    %v3999 = vshrl.u32 %v3998, 7
    %v4000 = vsub.s32 3, %v3999
    %v4001 = vrot.slane %v3982, %v4000
    %v4002 = vlaneseq
    %v4003 = vshrl.u32 %v4002, 7
    %v4004 = vsub.s32 4, %v4003
    %v4005 = vrot.slane %v3982, %v4004
    %v4006 = vlaneseq
    %v4007 = vshrl.u32 %v4006, 7
    %v4008 = vsub.s32 5, %v4007
    %v4009 = vrot.slane %v3982, %v4008
    %v4010 = vlaneseq
    %v4011 = vshrl.u32 %v4010, 7
    %v4012 = vsub.s32 6, %v4011
    %v4013 = vrot.slane %v3982, %v4012
    %v4014 = vlaneseq
    %v4015 = vshrl.u32 %v4014, 7
    %v4016 = vsub.s32 7, %v4015
    %v4017 = vrot.slane %v3982, %v4016
    %v4018 = vlaneseq
    %v4019 = vshrl.u32 %v4018, 7
    %v4020 = vsub.s32 0, %v4019
    %v4021 = vrot.slane %v3983, %v4020
    %v4022 = vlaneseq
    %v4023 = vshrl.u32 %v4022, 7
    %v4024 = vsub.s32 1, %v4023
    %v4025 = vrot.slane %v3983, %v4024
    %v4026 = vlaneseq
    %v4027 = vshrl.u32 %v4026, 7
    %v4028 = vsub.s32 2, %v4027
    %v4029 = vrot.slane %v3983, %v4028
    %v4030 = vlaneseq
    %v4031 = vshrl.u32 %v4030, 7
    %v4032 = vsub.s32 3, %v4031
    %v4033 = vrot.slane %v3983, %v4032
    %v4034 = vlaneseq
    %v4035 = vshrl.u32 %v4034, 7
    %v4036 = vsub.s32 4, %v4035
    %v4037 = vrot.slane %v3983, %v4036
    %v4038 = vlaneseq
    %v4039 = vshrl.u32 %v4038, 7
    %v4040 = vsub.s32 5, %v4039
    %v4041 = vrot.slane %v3983, %v4040
    %v4042 = vlaneseq
    %v4043 = vshrl.u32 %v4042, 7
    %v4044 = vsub.s32 6, %v4043
    %v4045 = vrot.slane %v3983, %v4044
    %v4046 = vlaneseq
    %v4047 = vshrl.u32 %v4046, 7
    %v4048 = vsub.s32 7, %v4047
    %v4049 = vrot.slane %v3983, %v4048
    %v5090 = vunpack.c.l.b16 %v2958
    %v5091 = vunpack.c.h.b16 %v2958
    %v5092 = vunpack.c.l.b16 %v2959
    %v5093 = vunpack.c.h.b16 %v2959
    %v5094 = vunpack.c.l.b16 %v2960
    %v5095 = vunpack.c.h.b16 %v2960
    %v5096 = vunpack.c.l.b16 %v2961
    %v5097 = vunpack.c.h.b16 %v2961
    %v5098 = vunpack.c.l.b16 %v2962
    %v5099 = vunpack.c.h.b16 %v2962
    %v5100 = vunpack.c.l.b16 %v2963
    %v5101 = vunpack.c.h.b16 %v2963
    %v5102 = vunpack.c.l.b16 %v2964
    %v5103 = vunpack.c.h.b16 %v2964
    %v5104 = vunpack.c.l.b16 %v2965
    %v5105 = vunpack.c.h.b16 %v2965
    %v5106 = vunpack.c.l.b16 %v2966
    %v5107 = vunpack.c.h.b16 %v2966
    %v5108 = vunpack.c.l.b16 %v2967
    %v5109 = vunpack.c.h.b16 %v2967
    %v5110 = vunpack.c.l.b16 %v2968
    %v5111 = vunpack.c.h.b16 %v2968
    %v5112 = vunpack.c.l.b16 %v2969
    %v5113 = vunpack.c.h.b16 %v2969
    %v5114 = vunpack.c.l.b16 %v2970
    %v5115 = vunpack.c.h.b16 %v2970
    %v5116 = vunpack.c.l.b16 %v2971
    %v5117 = vunpack.c.h.b16 %v2971
    %v5118 = vunpack.c.l.b16 %v2972
    %v5119 = vunpack.c.h.b16 %v2972
    %v5120 = vunpack.c.l.b16 %v2973
    %v5121 = vunpack.c.h.b16 %v2973
    %v5122 = vunpack.c.l.b16 %v2974
    %v5123 = vunpack.c.h.b16 %v2974
    %v5124 = vunpack.c.l.b16 %v2975
    %v5125 = vunpack.c.h.b16 %v2975
    %v5126 = vunpack.c.l.b16 %v2976
    %v5127 = vunpack.c.h.b16 %v2976
    %v5128 = vunpack.c.l.b16 %v2977
    %v5129 = vunpack.c.h.b16 %v2977
    %v5130 = vunpack.c.l.b16 %v2978
    %v5131 = vunpack.c.h.b16 %v2978
    %v5132 = vunpack.c.l.b16 %v2979
    %v5133 = vunpack.c.h.b16 %v2979
    %v5134 = vunpack.c.l.b16 %v2980
    %v5135 = vunpack.c.h.b16 %v2980
    %v5136 = vunpack.c.l.b16 %v2981
    %v5137 = vunpack.c.h.b16 %v2981
    %v5138 = vunpack.c.l.b16 %v2982
    %v5139 = vunpack.c.h.b16 %v2982
    %v5140 = vunpack.c.l.b16 %v2983
    %v5141 = vunpack.c.h.b16 %v2983
    %v5142 = vunpack.c.l.b16 %v2984
    %v5143 = vunpack.c.h.b16 %v2984
    %v5144 = vunpack.c.l.b16 %v2985
    %v5145 = vunpack.c.h.b16 %v2985
    %v5146 = vunpack.c.l.b16 %v2986
    %v5147 = vunpack.c.h.b16 %v2986
    %v5148 = vunpack.c.l.b16 %v2987
    %v5149 = vunpack.c.h.b16 %v2987
    %v5150 = vunpack.c.l.b16 %v2988
    %v5151 = vunpack.c.h.b16 %v2988
    %v5152 = vunpack.c.l.b16 %v2989
    %v5153 = vunpack.c.h.b16 %v2989
    %v5154 = vunpack.c.l.b16 %v2990
    %v5155 = vunpack.c.h.b16 %v2990
    %v5156 = vunpack.c.l.b16 %v2991
    %v5157 = vunpack.c.h.b16 %v2991
    %v5158 = vunpack.c.l.b16 %v2992
    %v5159 = vunpack.c.h.b16 %v2992
    %v5160 = vunpack.c.l.b16 %v2993
    %v5161 = vunpack.c.h.b16 %v2993
    %v5162 = vunpack.c.l.b16 %v2994
    %v5163 = vunpack.c.h.b16 %v2994
    %v5164 = vunpack.c.l.b16 %v2995
    %v5165 = vunpack.c.h.b16 %v2995
    %v5166 = vunpack.c.l.b16 %v2996
    %v5167 = vunpack.c.h.b16 %v2996
    %v5168 = vunpack.c.l.b16 %v2997
    %v5169 = vunpack.c.h.b16 %v2997
    %v5170 = vunpack.c.l.b16 %v2998
    %v5171 = vunpack.c.h.b16 %v2998
    %v5172 = vunpack.c.l.b16 %v2999
    %v5173 = vunpack.c.h.b16 %v2999
    %v5174 = vunpack.c.l.b16 %v3000
    %v5175 = vunpack.c.h.b16 %v3000
    %v5176 = vunpack.c.l.b16 %v3001
    %v5177 = vunpack.c.h.b16 %v3001
    %v5178 = vunpack.c.l.b16 %v3002
    %v5179 = vunpack.c.h.b16 %v3002
    %v5180 = vunpack.c.l.b16 %v3003
    %v5181 = vunpack.c.h.b16 %v3003
    %v5182 = vunpack.c.l.b16 %v3004
    %v5183 = vunpack.c.h.b16 %v3004
    %v5184 = vunpack.c.l.b16 %v3005
    %v5185 = vunpack.c.h.b16 %v3005
    %v5186 = vunpack.c.l.b16 %v3006
    %v5187 = vunpack.c.h.b16 %v3006
    %v5188 = vunpack.c.l.b16 %v3007
    %v5189 = vunpack.c.h.b16 %v3007
    %v5190 = vunpack.c.l.b16 %v3008
    %v5191 = vunpack.c.h.b16 %v3008
    %v5192 = vunpack.c.l.b16 %v3009
    %v5193 = vunpack.c.h.b16 %v3009
    %v5194 = vunpack.c.l.b16 %v3010
    %v5195 = vunpack.c.h.b16 %v3010
    %v5196 = vunpack.c.l.b16 %v3011
    %v5197 = vunpack.c.h.b16 %v3011
    %v5198 = vunpack.c.l.b16 %v3012
    %v5199 = vunpack.c.h.b16 %v3012
    %v5200 = vunpack.c.l.b16 %v3013
    %v5201 = vunpack.c.h.b16 %v3013
    %v5202 = vunpack.c.l.b16 %v3014
    %v5203 = vunpack.c.h.b16 %v3014
    %v5204 = vunpack.c.l.b16 %v3015
    %v5205 = vunpack.c.h.b16 %v3015
    %v5206 = vunpack.c.l.b16 %v3016
    %v5207 = vunpack.c.h.b16 %v3016
    %v5208 = vunpack.c.l.b16 %v3017
    %v5209 = vunpack.c.h.b16 %v3017
    %v5210 = vunpack.c.l.b16 %v3018
    %v5211 = vunpack.c.h.b16 %v3018
    %v5212 = vunpack.c.l.b16 %v3019
    %v5213 = vunpack.c.h.b16 %v3019
    %v5214 = vunpack.c.l.b16 %v3020
    %v5215 = vunpack.c.h.b16 %v3020
    %v5216 = vunpack.c.l.b16 %v3021
    %v5217 = vunpack.c.h.b16 %v3021
    %v5218 = vunpack.c.l.b16 %v3022
    %v5219 = vunpack.c.h.b16 %v3022
    %v5220 = vunpack.c.l.b16 %v3023
    %v5221 = vunpack.c.h.b16 %v3023
    %v5222 = vunpack.c.l.b16 %v3024
    %v5223 = vunpack.c.h.b16 %v3024
    %v5224 = vunpack.c.l.b16 %v3025
    %v5225 = vunpack.c.h.b16 %v3025
    %v5226 = vunpack.c.l.b16 %v3026
    %v5227 = vunpack.c.h.b16 %v3026
    %v5228 = vunpack.c.l.b16 %v3027
    %v5229 = vunpack.c.h.b16 %v3027
    %v5230 = vunpack.c.l.b16 %v3028
    %v5231 = vunpack.c.h.b16 %v3028
    %v5232 = vunpack.c.l.b16 %v3029
    %v5233 = vunpack.c.h.b16 %v3029
    %v5234 = vunpack.c.l.b16 %v3030
    %v5235 = vunpack.c.h.b16 %v3030
    %v5236 = vunpack.c.l.b16 %v3031
    %v5237 = vunpack.c.h.b16 %v3031
    %v5238 = vunpack.c.l.b16 %v3032
    %v5239 = vunpack.c.h.b16 %v3032
    %v5240 = vunpack.c.l.b16 %v3033
    %v5241 = vunpack.c.h.b16 %v3033
    %v5242 = vunpack.c.l.b16 %v3034
    %v5243 = vunpack.c.h.b16 %v3034
    %v5244 = vunpack.c.l.b16 %v3035
    %v5245 = vunpack.c.h.b16 %v3035
    %v5246 = vunpack.c.l.b16 %v3036
    %v5247 = vunpack.c.h.b16 %v3036
    %v5248 = vunpack.c.l.b16 %v3037
    %v5249 = vunpack.c.h.b16 %v3037
    %v5250 = vunpack.c.l.b16 %v3038
    %v5251 = vunpack.c.h.b16 %v3038
    %v5252 = vunpack.c.l.b16 %v3039
    %v5253 = vunpack.c.h.b16 %v3039
    %v5254 = vunpack.c.l.b16 %v3040
    %v5255 = vunpack.c.h.b16 %v3040
    %v5256 = vunpack.c.l.b16 %v3041
    %v5257 = vunpack.c.h.b16 %v3041
    %v5258 = vunpack.c.l.b16 %v3042
    %v5259 = vunpack.c.h.b16 %v3042
    %v5260 = vunpack.c.l.b16 %v3043
    %v5261 = vunpack.c.h.b16 %v3043
    %v5262 = vunpack.c.l.b16 %v3044
    %v5263 = vunpack.c.h.b16 %v3044
    %v5264 = vunpack.c.l.b16 %v3045
    %v5265 = vunpack.c.h.b16 %v3045
    %v5266 = vunpack.c.l.b16 %v3046
    %v5267 = vunpack.c.h.b16 %v3046
    %v5268 = vunpack.c.l.b16 %v3047
    %v5269 = vunpack.c.h.b16 %v3047
    %v5270 = vunpack.c.l.b16 %v3048
    %v5271 = vunpack.c.h.b16 %v3048
    %v5272 = vunpack.c.l.b16 %v3049
    %v5273 = vunpack.c.h.b16 %v3049
    %v5274 = vunpack.c.l.b16 %v3050
    %v5275 = vunpack.c.h.b16 %v3050
    %v5276 = vunpack.c.l.b16 %v3051
    %v5277 = vunpack.c.h.b16 %v3051
    %v5278 = vunpack.c.l.b16 %v3052
    %v5279 = vunpack.c.h.b16 %v3052
    %v5280 = vunpack.c.l.b16 %v3053
    %v5281 = vunpack.c.h.b16 %v3053
    %v5282 = vunpack.c.l.b16 %v3054
    %v5283 = vunpack.c.h.b16 %v3054
    %v5284 = vunpack.c.l.b16 %v3055
    %v5285 = vunpack.c.h.b16 %v3055
    %v5286 = vunpack.c.l.b16 %v3056
    %v5287 = vunpack.c.h.b16 %v3056
    %v5288 = vunpack.c.l.b16 %v3057
    %v5289 = vunpack.c.h.b16 %v3057
    %v5290 = vunpack.c.l.b16 %v3058
    %v5291 = vunpack.c.h.b16 %v3058
    %v5292 = vunpack.c.l.b16 %v3059
    %v5293 = vunpack.c.h.b16 %v3059
    %v5294 = vunpack.c.l.b16 %v3060
    %v5295 = vunpack.c.h.b16 %v3060
    %v5296 = vunpack.c.l.b16 %v3061
    %v5297 = vunpack.c.h.b16 %v3061
    %v5298 = vunpack.c.l.b16 %v3062
    %v5299 = vunpack.c.h.b16 %v3062
    %v5300 = vunpack.c.l.b16 %v3063
    %v5301 = vunpack.c.h.b16 %v3063
    %v5302 = vunpack.c.l.b16 %v3064
    %v5303 = vunpack.c.h.b16 %v3064
    %v5304 = vunpack.c.l.b16 %v3065
    %v5305 = vunpack.c.h.b16 %v3065
    %v5306 = vunpack.c.l.b16 %v3066
    %v5307 = vunpack.c.h.b16 %v3066
    %v5308 = vunpack.c.l.b16 %v3067
    %v5309 = vunpack.c.h.b16 %v3067
    %v5310 = vunpack.c.l.b16 %v3068
    %v5311 = vunpack.c.h.b16 %v3068
    %v5312 = vunpack.c.l.b16 %v3069
    %v5313 = vunpack.c.h.b16 %v3069
    %v5314 = vunpack.c.l.b16 %v3070
    %v5315 = vunpack.c.h.b16 %v3070
    %v5316 = vunpack.c.l.b16 %v3071
    %v5317 = vunpack.c.h.b16 %v3071
    %v5318 = vunpack.c.l.b16 %v3072
    %v5319 = vunpack.c.h.b16 %v3072
    %v5320 = vunpack.c.l.b16 %v3073
    %v5321 = vunpack.c.h.b16 %v3073
    %v5322 = vunpack.c.l.b16 %v3074
    %v5323 = vunpack.c.h.b16 %v3074
    %v5324 = vunpack.c.l.b16 %v3075
    %v5325 = vunpack.c.h.b16 %v3075
    %v5326 = vunpack.c.l.b16 %v3076
    %v5327 = vunpack.c.h.b16 %v3076
    %v5328 = vunpack.c.l.b16 %v3077
    %v5329 = vunpack.c.h.b16 %v3077
    %v5330 = vunpack.c.l.b16 %v3078
    %v5331 = vunpack.c.h.b16 %v3078
    %v5332 = vunpack.c.l.b16 %v3079
    %v5333 = vunpack.c.h.b16 %v3079
    %v5334 = vunpack.c.l.b16 %v3080
    %v5335 = vunpack.c.h.b16 %v3080
    %v5336 = vunpack.c.l.b16 %v3081
    %v5337 = vunpack.c.h.b16 %v3081
    %v5338 = vunpack.c.l.b16 %v3082
    %v5339 = vunpack.c.h.b16 %v3082
    %v5340 = vunpack.c.l.b16 %v3083
    %v5341 = vunpack.c.h.b16 %v3083
    %v5342 = vunpack.c.l.b16 %v3084
    %v5343 = vunpack.c.h.b16 %v3084
    %v5344 = vunpack.c.l.b16 %v3085
    %v5345 = vunpack.c.h.b16 %v3085
    %v5346 = vunpack.c.l.b16 %v3086
    %v5347 = vunpack.c.h.b16 %v3086
    %v5348 = vunpack.c.l.b16 %v3087
    %v5349 = vunpack.c.h.b16 %v3087
    %v5350 = vunpack.c.l.b16 %v3088
    %v5351 = vunpack.c.h.b16 %v3088
    %v5352 = vunpack.c.l.b16 %v3089
    %v5353 = vunpack.c.h.b16 %v3089
    %v5354 = vunpack.c.l.b16 %v3090
    %v5355 = vunpack.c.h.b16 %v3090
    %v5356 = vunpack.c.l.b16 %v3091
    %v5357 = vunpack.c.h.b16 %v3091
    %v5358 = vunpack.c.l.b16 %v3092
    %v5359 = vunpack.c.h.b16 %v3092
    %v5360 = vunpack.c.l.b16 %v3093
    %v5361 = vunpack.c.h.b16 %v3093
    %v5362 = vunpack.c.l.b16 %v3094
    %v5363 = vunpack.c.h.b16 %v3094
    %v5364 = vunpack.c.l.b16 %v3095
    %v5365 = vunpack.c.h.b16 %v3095
    %v5366 = vunpack.c.l.b16 %v3096
    %v5367 = vunpack.c.h.b16 %v3096
    %v5368 = vunpack.c.l.b16 %v3097
    %v5369 = vunpack.c.h.b16 %v3097
    %v5370 = vunpack.c.l.b16 %v3098
    %v5371 = vunpack.c.h.b16 %v3098
    %v5372 = vunpack.c.l.b16 %v3099
    %v5373 = vunpack.c.h.b16 %v3099
    %v5374 = vunpack.c.l.b16 %v3100
    %v5375 = vunpack.c.h.b16 %v3100
    %v5376 = vunpack.c.l.b16 %v3101
    %v5377 = vunpack.c.h.b16 %v3101
    %v5378 = vunpack.c.l.b16 %v3102
    %v5379 = vunpack.c.h.b16 %v3102
    %v5380 = vunpack.c.l.b16 %v3103
    %v5381 = vunpack.c.h.b16 %v3103
    %v5382 = vunpack.c.l.b16 %v3104
    %v5383 = vunpack.c.h.b16 %v3104
    %v5384 = vunpack.c.l.b16 %v3105
    %v5385 = vunpack.c.h.b16 %v3105
    %v5386 = vunpack.c.l.b16 %v3106
    %v5387 = vunpack.c.h.b16 %v3106
    %v5388 = vunpack.c.l.b16 %v3107
    %v5389 = vunpack.c.h.b16 %v3107
    %v5390 = vunpack.c.l.b16 %v3108
    %v5391 = vunpack.c.h.b16 %v3108
    %v5392 = vunpack.c.l.b16 %v3109
    %v5393 = vunpack.c.h.b16 %v3109
    %v5394 = vunpack.c.l.b16 %v3110
    %v5395 = vunpack.c.h.b16 %v3110
    %v5396 = vunpack.c.l.b16 %v3111
    %v5397 = vunpack.c.h.b16 %v3111
    %v5398 = vunpack.c.l.b16 %v3112
    %v5399 = vunpack.c.h.b16 %v3112
    %v5400 = vunpack.c.l.b16 %v3113
    %v5401 = vunpack.c.h.b16 %v3113
    %v5402 = vunpack.c.l.b16 %v3114
    %v5403 = vunpack.c.h.b16 %v3114
    %v5404 = vunpack.c.l.b16 %v3115
    %v5405 = vunpack.c.h.b16 %v3115
    %v5406 = vunpack.c.l.b16 %v3116
    %v5407 = vunpack.c.h.b16 %v3116
    %v5408 = vunpack.c.l.b16 %v3117
    %v5409 = vunpack.c.h.b16 %v3117
    %v5410 = vunpack.c.l.b16 %v3118
    %v5411 = vunpack.c.h.b16 %v3118
    %v5412 = vunpack.c.l.b16 %v3119
    %v5413 = vunpack.c.h.b16 %v3119
    %v5414 = vunpack.c.l.b16 %v3120
    %v5415 = vunpack.c.h.b16 %v3120
    %v5416 = vunpack.c.l.b16 %v3121
    %v5417 = vunpack.c.h.b16 %v3121
    %v5418 = vunpack.c.l.b16 %v3122
    %v5419 = vunpack.c.h.b16 %v3122
    %v5420 = vunpack.c.l.b16 %v3123
    %v5421 = vunpack.c.h.b16 %v3123
    %v5422 = vunpack.c.l.b16 %v3124
    %v5423 = vunpack.c.h.b16 %v3124
    %v5424 = vunpack.c.l.b16 %v3125
    %v5425 = vunpack.c.h.b16 %v3125
    %v5426 = vunpack.c.l.b16 %v3126
    %v5427 = vunpack.c.h.b16 %v3126
    %v5428 = vunpack.c.l.b16 %v3127
    %v5429 = vunpack.c.h.b16 %v3127
    %v5430 = vunpack.c.l.b16 %v3128
    %v5431 = vunpack.c.h.b16 %v3128
    %v5432 = vunpack.c.l.b16 %v3129
    %v5433 = vunpack.c.h.b16 %v3129
    %v5434 = vunpack.c.l.b16 %v3130
    %v5435 = vunpack.c.h.b16 %v3130
    %v5436 = vunpack.c.l.b16 %v3131
    %v5437 = vunpack.c.h.b16 %v3131
    %v5438 = vunpack.c.l.b16 %v3132
    %v5439 = vunpack.c.h.b16 %v3132
    %v5440 = vunpack.c.l.b16 %v3133
    %v5441 = vunpack.c.h.b16 %v3133
    %v5442 = vunpack.c.l.b16 %v3134
    %v5443 = vunpack.c.h.b16 %v3134
    %v5444 = vunpack.c.l.b16 %v3135
    %v5445 = vunpack.c.h.b16 %v3135
    %v5446 = vunpack.c.l.b16 %v3136
    %v5447 = vunpack.c.h.b16 %v3136
    %v5448 = vunpack.c.l.b16 %v3137
    %v5449 = vunpack.c.h.b16 %v3137
    %v5450 = vunpack.c.l.b16 %v3138
    %v5451 = vunpack.c.h.b16 %v3138
    %v5452 = vunpack.c.l.b16 %v3139
    %v5453 = vunpack.c.h.b16 %v3139
    %v5454 = vunpack.c.l.b16 %v3140
    %v5455 = vunpack.c.h.b16 %v3140
    %v5456 = vunpack.c.l.b16 %v3141
    %v5457 = vunpack.c.h.b16 %v3141
    %v5458 = vunpack.c.l.b16 %v3142
    %v5459 = vunpack.c.h.b16 %v3142
    %v5460 = vunpack.c.l.b16 %v3143
    %v5461 = vunpack.c.h.b16 %v3143
    %v5462 = vunpack.c.l.b16 %v3144
    %v5463 = vunpack.c.h.b16 %v3144
    %v5464 = vunpack.c.l.b16 %v3145
    %v5465 = vunpack.c.h.b16 %v3145
    %v5466 = vunpack.c.l.b16 %v3146
    %v5467 = vunpack.c.h.b16 %v3146
    %v5468 = vunpack.c.l.b16 %v3147
    %v5469 = vunpack.c.h.b16 %v3147
    %v5470 = vunpack.c.l.b16 %v3148
    %v5471 = vunpack.c.h.b16 %v3148
    %v5472 = vunpack.c.l.b16 %v3149
    %v5473 = vunpack.c.h.b16 %v3149
    %v5474 = vunpack.c.l.b16 %v3150
    %v5475 = vunpack.c.h.b16 %v3150
    %v5476 = vunpack.c.l.b16 %v3151
    %v5477 = vunpack.c.h.b16 %v3151
    %v5478 = vunpack.c.l.b16 %v3152
    %v5479 = vunpack.c.h.b16 %v3152
    %v5480 = vunpack.c.l.b16 %v3153
    %v5481 = vunpack.c.h.b16 %v3153
    %v5482 = vunpack.c.l.b16 %v3154
    %v5483 = vunpack.c.h.b16 %v3154
    %v5484 = vunpack.c.l.b16 %v3155
    %v5485 = vunpack.c.h.b16 %v3155
    %v5486 = vunpack.c.l.b16 %v3156
    %v5487 = vunpack.c.h.b16 %v3156
    %v5488 = vunpack.c.l.b16 %v3157
    %v5489 = vunpack.c.h.b16 %v3157
    %v5490 = vunpack.c.l.b16 %v3158
    %v5491 = vunpack.c.h.b16 %v3158
    %v5492 = vunpack.c.l.b16 %v3159
    %v5493 = vunpack.c.h.b16 %v3159
    %v5494 = vunpack.c.l.b16 %v3160
    %v5495 = vunpack.c.h.b16 %v3160
    %v5496 = vunpack.c.l.b16 %v3161
    %v5497 = vunpack.c.h.b16 %v3161
    %v5498 = vunpack.c.l.b16 %v3162
    %v5499 = vunpack.c.h.b16 %v3162
    %v5500 = vunpack.c.l.b16 %v3163
    %v5501 = vunpack.c.h.b16 %v3163
    %v5502 = vunpack.c.l.b16 %v3164
    %v5503 = vunpack.c.h.b16 %v3164
    %v5504 = vunpack.c.l.b16 %v3165
    %v5505 = vunpack.c.h.b16 %v3165
    %v5506 = vunpack.c.l.b16 %v3166
    %v5507 = vunpack.c.h.b16 %v3166
    %v5508 = vunpack.c.l.b16 %v3167
    %v5509 = vunpack.c.h.b16 %v3167
    %v5510 = vunpack.c.l.b16 %v3168
    %v5511 = vunpack.c.h.b16 %v3168
    %v5512 = vunpack.c.l.b16 %v3169
    %v5513 = vunpack.c.h.b16 %v3169
    %v5514 = vunpack.c.l.b16 %v3170
    %v5515 = vunpack.c.h.b16 %v3170
    %v5516 = vunpack.c.l.b16 %v3171
    %v5517 = vunpack.c.h.b16 %v3171
    %v5518 = vunpack.c.l.b16 %v3172
    %v5519 = vunpack.c.h.b16 %v3172
    %v5520 = vunpack.c.l.b16 %v3173
    %v5521 = vunpack.c.h.b16 %v3173
    %v5522 = vunpack.c.l.b16 %v3174
    %v5523 = vunpack.c.h.b16 %v3174
    %v5524 = vunpack.c.l.b16 %v3175
    %v5525 = vunpack.c.h.b16 %v3175
    %v5526 = vunpack.c.l.b16 %v3176
    %v5527 = vunpack.c.h.b16 %v3176
    %v5528 = vunpack.c.l.b16 %v3177
    %v5529 = vunpack.c.h.b16 %v3177
    %v5530 = vunpack.c.l.b16 %v3178
    %v5531 = vunpack.c.h.b16 %v3178
    %v5532 = vunpack.c.l.b16 %v3179
    %v5533 = vunpack.c.h.b16 %v3179
    %v5534 = vunpack.c.l.b16 %v3180
    %v5535 = vunpack.c.h.b16 %v3180
    %v5536 = vunpack.c.l.b16 %v3181
    %v5537 = vunpack.c.h.b16 %v3181
    %v5538 = vunpack.c.l.b16 %v3182
    %v5539 = vunpack.c.h.b16 %v3182
    %v5540 = vunpack.c.l.b16 %v3183
    %v5541 = vunpack.c.h.b16 %v3183
    %v5542 = vunpack.c.l.b16 %v3184
    %v5543 = vunpack.c.h.b16 %v3184
    %v5544 = vunpack.c.l.b16 %v3185
    %v5545 = vunpack.c.h.b16 %v3185
    %v5546 = vunpack.c.l.b16 %v3186
    %v5547 = vunpack.c.h.b16 %v3186
    %v5548 = vunpack.c.l.b16 %v3187
    %v5549 = vunpack.c.h.b16 %v3187
    %v5550 = vunpack.c.l.b16 %v3188
    %v5551 = vunpack.c.h.b16 %v3188
    %v5552 = vunpack.c.l.b16 %v3189
    %v5553 = vunpack.c.h.b16 %v3189
    %v5554 = vunpack.c.l.b16 %v3190
    %v5555 = vunpack.c.h.b16 %v3190
    %v5556 = vunpack.c.l.b16 %v3191
    %v5557 = vunpack.c.h.b16 %v3191
    %v5558 = vunpack.c.l.b16 %v3192
    %v5559 = vunpack.c.h.b16 %v3192
    %v5560 = vunpack.c.l.b16 %v3193
    %v5561 = vunpack.c.h.b16 %v3193
    %v5562 = vunpack.c.l.b16 %v3194
    %v5563 = vunpack.c.h.b16 %v3194
    %v5564 = vunpack.c.l.b16 %v3195
    %v5565 = vunpack.c.h.b16 %v3195
    %v5566 = vunpack.c.l.b16 %v3196
    %v5567 = vunpack.c.h.b16 %v3196
    %v5568 = vunpack.c.l.b16 %v3197
    %v5569 = vunpack.c.h.b16 %v3197
    %v5570 = vunpack.c.l.b16 %v3198
    %v5571 = vunpack.c.h.b16 %v3198
    %v5572 = vunpack.c.l.b16 %v3199
    %v5573 = vunpack.c.h.b16 %v3199
    %v5574 = vunpack.c.l.b16 %v3200
    %v5575 = vunpack.c.h.b16 %v3200
    %v5576 = vunpack.c.l.b16 %v3201
    %v5577 = vunpack.c.h.b16 %v3201
    %v5578 = vunpack.c.l.b16 %v3202
    %v5579 = vunpack.c.h.b16 %v3202
    %v5580 = vunpack.c.l.b16 %v3203
    %v5581 = vunpack.c.h.b16 %v3203
    %v5582 = vunpack.c.l.b16 %v3204
    %v5583 = vunpack.c.h.b16 %v3204
    %v5584 = vunpack.c.l.b16 %v3205
    %v5585 = vunpack.c.h.b16 %v3205
    %v5586 = vunpack.c.l.b16 %v3206
    %v5587 = vunpack.c.h.b16 %v3206
    %v5588 = vunpack.c.l.b16 %v3207
    %v5589 = vunpack.c.h.b16 %v3207
    %v5590 = vunpack.c.l.b16 %v3208
    %v5591 = vunpack.c.h.b16 %v3208
    %v5592 = vunpack.c.l.b16 %v3209
    %v5593 = vunpack.c.h.b16 %v3209
    %v5594 = vunpack.c.l.b16 %v3210
    %v5595 = vunpack.c.h.b16 %v3210
    %v5596 = vunpack.c.l.b16 %v3211
    %v5597 = vunpack.c.h.b16 %v3211
    %v5598 = vunpack.c.l.b16 %v3212
    %v5599 = vunpack.c.h.b16 %v3212
    %v5600 = vunpack.c.l.b16 %v3213
    %v5601 = vunpack.c.h.b16 %v3213
    %v5602 = vunpack.c.l.b16 %v3214
    %v5603 = vunpack.c.h.b16 %v3214
    %v5604 = vunpack.c.l.b16 %v3215
    %v5605 = vunpack.c.h.b16 %v3215
    %v5606 = vunpack.c.l.b16 %v3216
    %v5607 = vunpack.c.h.b16 %v3216
    %v5608 = vunpack.c.l.b16 %v3217
    %v5609 = vunpack.c.h.b16 %v3217
    %v5610 = vunpack.c.l.b16 %v3218
    %v5611 = vunpack.c.h.b16 %v3218
    %v5612 = vunpack.c.l.b16 %v3219
    %v5613 = vunpack.c.h.b16 %v3219
    %v5614 = vunpack.c.l.b16 %v3220
    %v5615 = vunpack.c.h.b16 %v3220
    %v5616 = vunpack.c.l.b16 %v3221
    %v5617 = vunpack.c.h.b16 %v3221
    %v5618 = vunpack.c.l.b16 %v3222
    %v5619 = vunpack.c.h.b16 %v3222
    %v5620 = vunpack.c.l.b16 %v3223
    %v5621 = vunpack.c.h.b16 %v3223
    %v5622 = vunpack.c.l.b16 %v3224
    %v5623 = vunpack.c.h.b16 %v3224
    %v5624 = vunpack.c.l.b16 %v3225
    %v5625 = vunpack.c.h.b16 %v3225
    %v5626 = vunpack.c.l.b16 %v3226
    %v5627 = vunpack.c.h.b16 %v3226
    %v5628 = vunpack.c.l.b16 %v3227
    %v5629 = vunpack.c.h.b16 %v3227
    %v5630 = vunpack.c.l.b16 %v3228
    %v5631 = vunpack.c.h.b16 %v3228
    %v5632 = vunpack.c.l.b16 %v3229
    %v5633 = vunpack.c.h.b16 %v3229
    %v5634 = vunpack.c.l.b16 %v3230
    %v5635 = vunpack.c.h.b16 %v3230
    %v5636 = vunpack.c.l.b16 %v3231
    %v5637 = vunpack.c.h.b16 %v3231
    %v5638 = vunpack.c.l.b16 %v3232
    %v5639 = vunpack.c.h.b16 %v3232
    %v5640 = vunpack.c.l.b16 %v3233
    %v5641 = vunpack.c.h.b16 %v3233
    %v5642 = vunpack.c.l.b16 %v3234
    %v5643 = vunpack.c.h.b16 %v3234
    %v5644 = vunpack.c.l.b16 %v3235
    %v5645 = vunpack.c.h.b16 %v3235
    %v5646 = vunpack.c.l.b16 %v3236
    %v5647 = vunpack.c.h.b16 %v3236
    %v5648 = vunpack.c.l.b16 %v3237
    %v5649 = vunpack.c.h.b16 %v3237
    %v5650 = vunpack.c.l.b16 %v3238
    %v5651 = vunpack.c.h.b16 %v3238
    %v5652 = vunpack.c.l.b16 %v3239
    %v5653 = vunpack.c.h.b16 %v3239
    %v5654 = vunpack.c.l.b16 %v3240
    %v5655 = vunpack.c.h.b16 %v3240
    %v5656 = vunpack.c.l.b16 %v3241
    %v5657 = vunpack.c.h.b16 %v3241
    %v5658 = vunpack.c.l.b16 %v3242
    %v5659 = vunpack.c.h.b16 %v3242
    %v5660 = vunpack.c.l.b16 %v3243
    %v5661 = vunpack.c.h.b16 %v3243
    %v5662 = vunpack.c.l.b16 %v3244
    %v5663 = vunpack.c.h.b16 %v3244
    %v5664 = vunpack.c.l.b16 %v3245
    %v5665 = vunpack.c.h.b16 %v3245
    %v5666 = vunpack.c.l.b16 %v3246
    %v5667 = vunpack.c.h.b16 %v3246
    %v5668 = vunpack.c.l.b16 %v3247
    %v5669 = vunpack.c.h.b16 %v3247
    %v5670 = vunpack.c.l.b16 %v3248
    %v5671 = vunpack.c.h.b16 %v3248
    %v5672 = vunpack.c.l.b16 %v3249
    %v5673 = vunpack.c.h.b16 %v3249
    %v5674 = vunpack.c.l.b16 %v3250
    %v5675 = vunpack.c.h.b16 %v3250
    %v5676 = vunpack.c.l.b16 %v3251
    %v5677 = vunpack.c.h.b16 %v3251
    %v5678 = vunpack.c.l.b16 %v3252
    %v5679 = vunpack.c.h.b16 %v3252
    %v5680 = vunpack.c.l.b16 %v3253
    %v5681 = vunpack.c.h.b16 %v3253
    %v5682 = vunpack.c.l.b16 %v3254
    %v5683 = vunpack.c.h.b16 %v3254
    %v5684 = vunpack.c.l.b16 %v3255
    %v5685 = vunpack.c.h.b16 %v3255
    %v5686 = vunpack.c.l.b16 %v3256
    %v5687 = vunpack.c.h.b16 %v3256
    %v5688 = vunpack.c.l.b16 %v3257
    %v5689 = vunpack.c.h.b16 %v3257
    %v5690 = vunpack.c.l.b16 %v3258
    %v5691 = vunpack.c.h.b16 %v3258
    %v5692 = vunpack.c.l.b16 %v3259
    %v5693 = vunpack.c.h.b16 %v3259
    %v5694 = vunpack.c.l.b16 %v3260
    %v5695 = vunpack.c.h.b16 %v3260
    %v5696 = vunpack.c.l.b16 %v3261
    %v5697 = vunpack.c.h.b16 %v3261
    %v5698 = vunpack.c.l.b16 %v3262
    %v5699 = vunpack.c.h.b16 %v3262
    %v5700 = vunpack.c.l.b16 %v3263
    %v5701 = vunpack.c.h.b16 %v3263
    %v5702 = vunpack.c.l.b16 %v3264
    %v5703 = vunpack.c.h.b16 %v3264
    %v5704 = vunpack.c.l.b16 %v3265
    %v5705 = vunpack.c.h.b16 %v3265
    %v5706 = vunpack.c.l.b16 %v3266
    %v5707 = vunpack.c.h.b16 %v3266
    %v5708 = vunpack.c.l.b16 %v3267
    %v5709 = vunpack.c.h.b16 %v3267
    %v5710 = vunpack.c.l.b16 %v3268
    %v5711 = vunpack.c.h.b16 %v3268
    %v5712 = vunpack.c.l.b16 %v3269
    %v5713 = vunpack.c.h.b16 %v3269
    %v5714 = vunpack.c.l.b16 %v3270
    %v5715 = vunpack.c.h.b16 %v3270
    %v5716 = vunpack.c.l.b16 %v3271
    %v5717 = vunpack.c.h.b16 %v3271
    %v5718 = vunpack.c.l.b16 %v3272
    %v5719 = vunpack.c.h.b16 %v3272
    %v5720 = vunpack.c.l.b16 %v3273
    %v5721 = vunpack.c.h.b16 %v3273
    %v5722 = vunpack.c.l.b16 %v3274
    %v5723 = vunpack.c.h.b16 %v3274
    %v5724 = vunpack.c.l.b16 %v3275
    %v5725 = vunpack.c.h.b16 %v3275
    %v5726 = vunpack.c.l.b16 %v3276
    %v5727 = vunpack.c.h.b16 %v3276
    %v5728 = vunpack.c.l.b16 %v3277
    %v5729 = vunpack.c.h.b16 %v3277
    %v5730 = vunpack.c.l.b16 %v3278
    %v5731 = vunpack.c.h.b16 %v3278
    %v5732 = vunpack.c.l.b16 %v3279
    %v5733 = vunpack.c.h.b16 %v3279
    %v5734 = vunpack.c.l.b16 %v3280
    %v5735 = vunpack.c.h.b16 %v3280
    %v5736 = vunpack.c.l.b16 %v3281
    %v5737 = vunpack.c.h.b16 %v3281
    %v5738 = vunpack.c.l.b16 %v3282
    %v5739 = vunpack.c.h.b16 %v3282
    %v5740 = vunpack.c.l.b16 %v3283
    %v5741 = vunpack.c.h.b16 %v3283
    %v5742 = vunpack.c.l.b16 %v3284
    %v5743 = vunpack.c.h.b16 %v3284
    %v5744 = vunpack.c.l.b16 %v3285
    %v5745 = vunpack.c.h.b16 %v3285
    %v5746 = vunpack.c.l.b16 %v3286
    %v5747 = vunpack.c.h.b16 %v3286
    %v5748 = vunpack.c.l.b16 %v3287
    %v5749 = vunpack.c.h.b16 %v3287
    %v5750 = vunpack.c.l.b16 %v3288
    %v5751 = vunpack.c.h.b16 %v3288
    %v5752 = vunpack.c.l.b16 %v3289
    %v5753 = vunpack.c.h.b16 %v3289
    %v5754 = vunpack.c.l.b16 %v3290
    %v5755 = vunpack.c.h.b16 %v3290
    %v5756 = vunpack.c.l.b16 %v3291
    %v5757 = vunpack.c.h.b16 %v3291
    %v5758 = vunpack.c.l.b16 %v3292
    %v5759 = vunpack.c.h.b16 %v3292
    %v5760 = vunpack.c.l.b16 %v3293
    %v5761 = vunpack.c.h.b16 %v3293
    %v5762 = vunpack.c.l.b16 %v3294
    %v5763 = vunpack.c.h.b16 %v3294
    %v5764 = vunpack.c.l.b16 %v3295
    %v5765 = vunpack.c.h.b16 %v3295
    %v5766 = vunpack.c.l.b16 %v3296
    %v5767 = vunpack.c.h.b16 %v3296
    %v5768 = vunpack.c.l.b16 %v3297
    %v5769 = vunpack.c.h.b16 %v3297
    %v5770 = vunpack.c.l.b16 %v3298
    %v5771 = vunpack.c.h.b16 %v3298
    %v5772 = vunpack.c.l.b16 %v3299
    %v5773 = vunpack.c.h.b16 %v3299
    %v5774 = vunpack.c.l.b16 %v3300
    %v5775 = vunpack.c.h.b16 %v3300
    %v5776 = vunpack.c.l.b16 %v3301
    %v5777 = vunpack.c.h.b16 %v3301
    %v5778 = vunpack.c.l.b16 %v3302
    %v5779 = vunpack.c.h.b16 %v3302
    %v5780 = vunpack.c.l.b16 %v3303
    %v5781 = vunpack.c.h.b16 %v3303
    %v5782 = vunpack.c.l.b16 %v3304
    %v5783 = vunpack.c.h.b16 %v3304
    %v5784 = vunpack.c.l.b16 %v3305
    %v5785 = vunpack.c.h.b16 %v3305
    %v5786 = vunpack.c.l.b16 %v3306
    %v5787 = vunpack.c.h.b16 %v3306
    %v5788 = vunpack.c.l.b16 %v3307
    %v5789 = vunpack.c.h.b16 %v3307
    %v5790 = vunpack.c.l.b16 %v3308
    %v5791 = vunpack.c.h.b16 %v3308
    %v5792 = vunpack.c.l.b16 %v3309
    %v5793 = vunpack.c.h.b16 %v3309
    %v5794 = vunpack.c.l.b16 %v3310
    %v5795 = vunpack.c.h.b16 %v3310
    %v5796 = vunpack.c.l.b16 %v3311
    %v5797 = vunpack.c.h.b16 %v3311
    %v5798 = vunpack.c.l.b16 %v3312
    %v5799 = vunpack.c.h.b16 %v3312
    %v5800 = vunpack.c.l.b16 %v3313
    %v5801 = vunpack.c.h.b16 %v3313
    %v5802 = vunpack.c.l.b16 %v3314
    %v5803 = vunpack.c.h.b16 %v3314
    %v5804 = vunpack.c.l.b16 %v3315
    %v5805 = vunpack.c.h.b16 %v3315
    %v5806 = vunpack.c.l.b16 %v3316
    %v5807 = vunpack.c.h.b16 %v3316
    %v5808 = vunpack.c.l.b16 %v3317
    %v5809 = vunpack.c.h.b16 %v3317
    %v5810 = vunpack.c.l.b16 %v3318
    %v5811 = vunpack.c.h.b16 %v3318
    %v5812 = vunpack.c.l.b16 %v3319
    %v5813 = vunpack.c.h.b16 %v3319
    %v5814 = vunpack.c.l.b16 %v3320
    %v5815 = vunpack.c.h.b16 %v3320
    %v5816 = vunpack.c.l.b16 %v3321
    %v5817 = vunpack.c.h.b16 %v3321
    %v5818 = vunpack.c.l.b16 %v3322
    %v5819 = vunpack.c.h.b16 %v3322
    %v5820 = vunpack.c.l.b16 %v3323
    %v5821 = vunpack.c.h.b16 %v3323
    %v5822 = vunpack.c.l.b16 %v3324
    %v5823 = vunpack.c.h.b16 %v3324
    %v5824 = vunpack.c.l.b16 %v3325
    %v5825 = vunpack.c.h.b16 %v3325
    %v5826 = vunpack.c.l.b16 %v3326
    %v5827 = vunpack.c.h.b16 %v3326
    %v5828 = vunpack.c.l.b16 %v3327
    %v5829 = vunpack.c.h.b16 %v3327
    %v5830 = vunpack.c.l.b16 %v3328
    %v5831 = vunpack.c.h.b16 %v3328
    %v5832 = vunpack.c.l.b16 %v3329
    %v5833 = vunpack.c.h.b16 %v3329
    %v5834 = vunpack.c.l.b16 %v3330
    %v5835 = vunpack.c.h.b16 %v3330
    %v5836 = vunpack.c.l.b16 %v3331
    %v5837 = vunpack.c.h.b16 %v3331
    %v5838 = vunpack.c.l.b16 %v3332
    %v5839 = vunpack.c.h.b16 %v3332
    %v5840 = vunpack.c.l.b16 %v3333
    %v5841 = vunpack.c.h.b16 %v3333
    %v5842 = vunpack.c.l.b16 %v3334
    %v5843 = vunpack.c.h.b16 %v3334
    %v5844 = vunpack.c.l.b16 %v3335
    %v5845 = vunpack.c.h.b16 %v3335
    %v5846 = vunpack.c.l.b16 %v3336
    %v5847 = vunpack.c.h.b16 %v3336
    %v5848 = vunpack.c.l.b16 %v3337
    %v5849 = vunpack.c.h.b16 %v3337
    %v5850 = vunpack.c.l.b16 %v3338
    %v5851 = vunpack.c.h.b16 %v3338
    %v5852 = vunpack.c.l.b16 %v3339
    %v5853 = vunpack.c.h.b16 %v3339
    %v5854 = vunpack.c.l.b16 %v3340
    %v5855 = vunpack.c.h.b16 %v3340
    %v5856 = vunpack.c.l.b16 %v3341
    %v5857 = vunpack.c.h.b16 %v3341
    %v5858 = vunpack.c.l.b16 %v3342
    %v5859 = vunpack.c.h.b16 %v3342
    %v5860 = vunpack.c.l.b16 %v3343
    %v5861 = vunpack.c.h.b16 %v3343
    %v5862 = vunpack.c.l.b16 %v3344
    %v5863 = vunpack.c.h.b16 %v3344
    %v5864 = vunpack.c.l.b16 %v3345
    %v5865 = vunpack.c.h.b16 %v3345
    %v5866 = vunpack.c.l.b16 %v3346
    %v5867 = vunpack.c.h.b16 %v3346
    %v5868 = vunpack.c.l.b16 %v3347
    %v5869 = vunpack.c.h.b16 %v3347
    %v5870 = vunpack.c.l.b16 %v3348
    %v5871 = vunpack.c.h.b16 %v3348
    %v5872 = vunpack.c.l.b16 %v3349
    %v5873 = vunpack.c.h.b16 %v3349
    %v5874 = vunpack.c.l.b16 %v3350
    %v5875 = vunpack.c.h.b16 %v3350
    %v5876 = vunpack.c.l.b16 %v3351
    %v5877 = vunpack.c.h.b16 %v3351
    %v5878 = vunpack.c.l.b16 %v3352
    %v5879 = vunpack.c.h.b16 %v3352
    %v5880 = vunpack.c.l.b16 %v3353
    %v5881 = vunpack.c.h.b16 %v3353
    %v5882 = vunpack.c.l.b16 %v3354
    %v5883 = vunpack.c.h.b16 %v3354
    %v5884 = vunpack.c.l.b16 %v3355
    %v5885 = vunpack.c.h.b16 %v3355
    %v5886 = vunpack.c.l.b16 %v3356
    %v5887 = vunpack.c.h.b16 %v3356
    %v5888 = vunpack.c.l.b16 %v3357
    %v5889 = vunpack.c.h.b16 %v3357
    %v5890 = vunpack.c.l.b16 %v3358
    %v5891 = vunpack.c.h.b16 %v3358
    %v5892 = vunpack.c.l.b16 %v3359
    %v5893 = vunpack.c.h.b16 %v3359
    %v5894 = vunpack.c.l.b16 %v3360
    %v5895 = vunpack.c.h.b16 %v3360
    %v5896 = vunpack.c.l.b16 %v3361
    %v5897 = vunpack.c.h.b16 %v3361
    %v5898 = vunpack.c.l.b16 %v3362
    %v5899 = vunpack.c.h.b16 %v3362
    %v5900 = vunpack.c.l.b16 %v3363
    %v5901 = vunpack.c.h.b16 %v3363
    %v5902 = vunpack.c.l.b16 %v3364
    %v5903 = vunpack.c.h.b16 %v3364
    %v5904 = vunpack.c.l.b16 %v3365
    %v5905 = vunpack.c.h.b16 %v3365
    %v5906 = vunpack.c.l.b16 %v3366
    %v5907 = vunpack.c.h.b16 %v3366
    %v5908 = vunpack.c.l.b16 %v3367
    %v5909 = vunpack.c.h.b16 %v3367
    %v5910 = vunpack.c.l.b16 %v3368
    %v5911 = vunpack.c.h.b16 %v3368
    %v5912 = vunpack.c.l.b16 %v3369
    %v5913 = vunpack.c.h.b16 %v3369
    %v5914 = vunpack.c.l.b16 %v3370
    %v5915 = vunpack.c.h.b16 %v3370
    %v5916 = vunpack.c.l.b16 %v3371
    %v5917 = vunpack.c.h.b16 %v3371
    %v5918 = vunpack.c.l.b16 %v3372
    %v5919 = vunpack.c.h.b16 %v3372
    %v5920 = vunpack.c.l.b16 %v3373
    %v5921 = vunpack.c.h.b16 %v3373
    %v5922 = vunpack.c.l.b16 %v3374
    %v5923 = vunpack.c.h.b16 %v3374
    %v5924 = vunpack.c.l.b16 %v3375
    %v5925 = vunpack.c.h.b16 %v3375
    %v5926 = vunpack.c.l.b16 %v3376
    %v5927 = vunpack.c.h.b16 %v3376
    %v5928 = vunpack.c.l.b16 %v3377
    %v5929 = vunpack.c.h.b16 %v3377
    %v5930 = vunpack.c.l.b16 %v3378
    %v5931 = vunpack.c.h.b16 %v3378
    %v5932 = vunpack.c.l.b16 %v3379
    %v5933 = vunpack.c.h.b16 %v3379
    %v5934 = vunpack.c.l.b16 %v3380
    %v5935 = vunpack.c.h.b16 %v3380
    %v5936 = vunpack.c.l.b16 %v3381
    %v5937 = vunpack.c.h.b16 %v3381
    %v5938 = vunpack.c.l.b16 %v3382
    %v5939 = vunpack.c.h.b16 %v3382
    %v5940 = vunpack.c.l.b16 %v3383
    %v5941 = vunpack.c.h.b16 %v3383
    %v5942 = vunpack.c.l.b16 %v3384
    %v5943 = vunpack.c.h.b16 %v3384
    %v5944 = vunpack.c.l.b16 %v3385
    %v5945 = vunpack.c.h.b16 %v3385
    %v5946 = vunpack.c.l.b16 %v3386
    %v5947 = vunpack.c.h.b16 %v3386
    %v5948 = vunpack.c.l.b16 %v3387
    %v5949 = vunpack.c.h.b16 %v3387
    %v5950 = vunpack.c.l.b16 %v3388
    %v5951 = vunpack.c.h.b16 %v3388
    %v5952 = vunpack.c.l.b16 %v3389
    %v5953 = vunpack.c.h.b16 %v3389
    %v5954 = vunpack.c.l.b16 %v3390
    %v5955 = vunpack.c.h.b16 %v3390
    %v5956 = vunpack.c.l.b16 %v3391
    %v5957 = vunpack.c.h.b16 %v3391
    %v5958 = vunpack.c.l.b16 %v3392
    %v5959 = vunpack.c.h.b16 %v3392
    %v5960 = vunpack.c.l.b16 %v3393
    %v5961 = vunpack.c.h.b16 %v3393
    %v5962 = vunpack.c.l.b16 %v3394
    %v5963 = vunpack.c.h.b16 %v3394
    %v5964 = vunpack.c.l.b16 %v3395
    %v5965 = vunpack.c.h.b16 %v3395
    %v5966 = vunpack.c.l.b16 %v3396
    %v5967 = vunpack.c.h.b16 %v3396
    %v5968 = vunpack.c.l.b16 %v3397
    %v5969 = vunpack.c.h.b16 %v3397
    %v5970 = vunpack.c.l.b16 %v3398
    %v5971 = vunpack.c.h.b16 %v3398
    %v5972 = vunpack.c.l.b16 %v3399
    %v5973 = vunpack.c.h.b16 %v3399
    %v5974 = vunpack.c.l.b16 %v3400
    %v5975 = vunpack.c.h.b16 %v3400
    %v5976 = vunpack.c.l.b16 %v3401
    %v5977 = vunpack.c.h.b16 %v3401
    %v5978 = vunpack.c.l.b16 %v3402
    %v5979 = vunpack.c.h.b16 %v3402
    %v5980 = vunpack.c.l.b16 %v3403
    %v5981 = vunpack.c.h.b16 %v3403
    %v5982 = vunpack.c.l.b16 %v3404
    %v5983 = vunpack.c.h.b16 %v3404
    %v5984 = vunpack.c.l.b16 %v3405
    %v5985 = vunpack.c.h.b16 %v3405
    %v5986 = vunpack.c.l.b16 %v3406
    %v5987 = vunpack.c.h.b16 %v3406
    %v5988 = vunpack.c.l.b16 %v3407
    %v5989 = vunpack.c.h.b16 %v3407
    %v5990 = vunpack.c.l.b16 %v3408
    %v5991 = vunpack.c.h.b16 %v3408
    %v5992 = vunpack.c.l.b16 %v3409
    %v5993 = vunpack.c.h.b16 %v3409
    %v5994 = vunpack.c.l.b16 %v3410
    %v5995 = vunpack.c.h.b16 %v3410
    %v5996 = vunpack.c.l.b16 %v3411
    %v5997 = vunpack.c.h.b16 %v3411
    %v5998 = vunpack.c.l.b16 %v3412
    %v5999 = vunpack.c.h.b16 %v3412
    %v6000 = vunpack.c.l.b16 %v3413
    %v6001 = vunpack.c.h.b16 %v3413
    %v6002 = vunpack.c.l.b16 %v3414
    %v6003 = vunpack.c.h.b16 %v3414
    %v6004 = vunpack.c.l.b16 %v3415
    %v6005 = vunpack.c.h.b16 %v3415
    %v6006 = vunpack.c.l.b16 %v3416
    %v6007 = vunpack.c.h.b16 %v3416
    %v6008 = vunpack.c.l.b16 %v3417
    %v6009 = vunpack.c.h.b16 %v3417
    %v6010 = vunpack.c.l.b16 %v3418
    %v6011 = vunpack.c.h.b16 %v3418
    %v6012 = vunpack.c.l.b16 %v3419
    %v6013 = vunpack.c.h.b16 %v3419
    %v6014 = vunpack.c.l.b16 %v3420
    %v6015 = vunpack.c.h.b16 %v3420
    %v6016 = vunpack.c.l.b16 %v3421
    %v6017 = vunpack.c.h.b16 %v3421
    %v6018 = vunpack.c.l.b16 %v3422
    %v6019 = vunpack.c.h.b16 %v3422
    %v6020 = vunpack.c.l.b16 %v3423
    %v6021 = vunpack.c.h.b16 %v3423
    %v6022 = vunpack.c.l.b16 %v3424
    %v6023 = vunpack.c.h.b16 %v3424
    %v6024 = vunpack.c.l.b16 %v3425
    %v6025 = vunpack.c.h.b16 %v3425
    %v6026 = vunpack.c.l.b16 %v3426
    %v6027 = vunpack.c.h.b16 %v3426
    %v6028 = vunpack.c.l.b16 %v3427
    %v6029 = vunpack.c.h.b16 %v3427
    %v6030 = vunpack.c.l.b16 %v3428
    %v6031 = vunpack.c.h.b16 %v3428
    %v6032 = vunpack.c.l.b16 %v3429
    %v6033 = vunpack.c.h.b16 %v3429
    %v6034 = vunpack.c.l.b16 %v3430
    %v6035 = vunpack.c.h.b16 %v3430
    %v6036 = vunpack.c.l.b16 %v3431
    %v6037 = vunpack.c.h.b16 %v3431
    %v6038 = vunpack.c.l.b16 %v3432
    %v6039 = vunpack.c.h.b16 %v3432
    %v6040 = vunpack.c.l.b16 %v3433
    %v6041 = vunpack.c.h.b16 %v3433
    %v6042 = vunpack.c.l.b16 %v3434
    %v6043 = vunpack.c.h.b16 %v3434
    %v6044 = vunpack.c.l.b16 %v3435
    %v6045 = vunpack.c.h.b16 %v3435
    %v6046 = vunpack.c.l.b16 %v3436
    %v6047 = vunpack.c.h.b16 %v3436
    %v6048 = vunpack.c.l.b16 %v3437
    %v6049 = vunpack.c.h.b16 %v3437
    %v6050 = vunpack.c.l.b16 %v3438
    %v6051 = vunpack.c.h.b16 %v3438
    %v6052 = vunpack.c.l.b16 %v3439
    %v6053 = vunpack.c.h.b16 %v3439
    %v6054 = vunpack.c.l.b16 %v3440
    %v6055 = vunpack.c.h.b16 %v3440
    %v6056 = vunpack.c.l.b16 %v3441
    %v6057 = vunpack.c.h.b16 %v3441
    %v6058 = vunpack.c.l.b16 %v3442
    %v6059 = vunpack.c.h.b16 %v3442
    %v6060 = vunpack.c.l.b16 %v3443
    %v6061 = vunpack.c.h.b16 %v3443
    %v6062 = vunpack.c.l.b16 %v3444
    %v6063 = vunpack.c.h.b16 %v3444
    %v6064 = vunpack.c.l.b16 %v3445
    %v6065 = vunpack.c.h.b16 %v3445
    %v6066 = vunpack.c.l.b16 %v3446
    %v6067 = vunpack.c.h.b16 %v3446
    %v6068 = vunpack.c.l.b16 %v3447
    %v6069 = vunpack.c.h.b16 %v3447
    %v6070 = vunpack.c.l.b16 %v3448
    %v6071 = vunpack.c.h.b16 %v3448
    %v6072 = vunpack.c.l.b16 %v3449
    %v6073 = vunpack.c.h.b16 %v3449
    %v6074 = vunpack.c.l.b16 %v3450
    %v6075 = vunpack.c.h.b16 %v3450
    %v6076 = vunpack.c.l.b16 %v3451
    %v6077 = vunpack.c.h.b16 %v3451
    %v6078 = vunpack.c.l.b16 %v3452
    %v6079 = vunpack.c.h.b16 %v3452
    %v6080 = vunpack.c.l.b16 %v3453
    %v6081 = vunpack.c.h.b16 %v3453
    %v6082 = vunpack.c.l.b16 %v3454
    %v6083 = vunpack.c.h.b16 %v3454
    %v6084 = vunpack.c.l.b16 %v3455
    %v6085 = vunpack.c.h.b16 %v3455
    %v6086 = vunpack.c.l.b16 %v3456
    %v6087 = vunpack.c.h.b16 %v3456
    %v6088 = vunpack.c.l.b16 %v3457
    %v6089 = vunpack.c.h.b16 %v3457
    %v6090 = vunpack.c.l.b16 %v3458
    %v6091 = vunpack.c.h.b16 %v3458
    %v6092 = vunpack.c.l.b16 %v3459
    %v6093 = vunpack.c.h.b16 %v3459
    %v6094 = vunpack.c.l.b16 %v3460
    %v6095 = vunpack.c.h.b16 %v3460
    %v6096 = vunpack.c.l.b16 %v3461
    %v6097 = vunpack.c.h.b16 %v3461
    %v6098 = vunpack.c.l.b16 %v3462
    %v6099 = vunpack.c.h.b16 %v3462
    %v6100 = vunpack.c.l.b16 %v3463
    %v6101 = vunpack.c.h.b16 %v3463
    %v6102 = vunpack.c.l.b16 %v3464
    %v6103 = vunpack.c.h.b16 %v3464
    %v6104 = vunpack.c.l.b16 %v3465
    %v6105 = vunpack.c.h.b16 %v3465
    %v6106 = vunpack.c.l.b16 %v3466
    %v6107 = vunpack.c.h.b16 %v3466
    %v6108 = vunpack.c.l.b16 %v3467
    %v6109 = vunpack.c.h.b16 %v3467
    %v6110 = vunpack.c.l.b16 %v3468
    %v6111 = vunpack.c.h.b16 %v3468
    %v6112 = vunpack.c.l.b16 %v3469
    %v6113 = vunpack.c.h.b16 %v3469
    %v6114 = vunpack.c.l.b16 %v3470
    %v6115 = vunpack.c.h.b16 %v3470
    %v6116 = vunpack.c.l.b16 %v3471
    %v6117 = vunpack.c.h.b16 %v3471
    %v6118 = vunpack.c.l.b16 %v3472
    %v6119 = vunpack.c.h.b16 %v3472
    %v6120 = vunpack.c.l.b16 %v3473
    %v6121 = vunpack.c.h.b16 %v3473
    %v6122 = vunpack.c.l.b16 %v3474
    %v6123 = vunpack.c.h.b16 %v3474
    %v6124 = vunpack.c.l.b16 %v3475
    %v6125 = vunpack.c.h.b16 %v3475
    %v6126 = vunpack.c.l.b16 %v3476
    %v6127 = vunpack.c.h.b16 %v3476
    %v6128 = vunpack.c.l.b16 %v3477
    %v6129 = vunpack.c.h.b16 %v3477
    %v6130 = vunpack.c.l.b16 %v3478
    %v6131 = vunpack.c.h.b16 %v3478
    %v6132 = vunpack.c.l.b16 %v3479
    %v6133 = vunpack.c.h.b16 %v3479
    %v6134 = vunpack.c.l.b16 %v3480
    %v6135 = vunpack.c.h.b16 %v3480
    %v6136 = vunpack.c.l.b16 %v3481
    %v6137 = vunpack.c.h.b16 %v3481
    %v6138 = vunpack.c.l.b16 %v3482
    %v6139 = vunpack.c.h.b16 %v3482
    %v6140 = vunpack.c.l.b16 %v3483
    %v6141 = vunpack.c.h.b16 %v3483
    %v6142 = vunpack.c.l.b16 %v3484
    %v6143 = vunpack.c.h.b16 %v3484
    %v6144 = vunpack.c.l.b16 %v3485
    %v6145 = vunpack.c.h.b16 %v3485
    %v6146 = vunpack.c.l.b16 %v3486
    %v6147 = vunpack.c.h.b16 %v3486
    %v6148 = vunpack.c.l.b16 %v3487
    %v6149 = vunpack.c.h.b16 %v3487
    %v6150 = vunpack.c.l.b16 %v3488
    %v6151 = vunpack.c.h.b16 %v3488
    %v6152 = vunpack.c.l.b16 %v3489
    %v6153 = vunpack.c.h.b16 %v3489
    %v6154 = vunpack.c.l.b16 %v3490
    %v6155 = vunpack.c.h.b16 %v3490
    %v6156 = vunpack.c.l.b16 %v3491
    %v6157 = vunpack.c.h.b16 %v3491
    %v6158 = vunpack.c.l.b16 %v3492
    %v6159 = vunpack.c.h.b16 %v3492
    %v6160 = vunpack.c.l.b16 %v3493
    %v6161 = vunpack.c.h.b16 %v3493
    %v6162 = vunpack.c.l.b16 %v3494
    %v6163 = vunpack.c.h.b16 %v3494
    %v6164 = vunpack.c.l.b16 %v3495
    %v6165 = vunpack.c.h.b16 %v3495
    %v6166 = vunpack.c.l.b16 %v3496
    %v6167 = vunpack.c.h.b16 %v3496
    %v6168 = vunpack.c.l.b16 %v3497
    %v6169 = vunpack.c.h.b16 %v3497
    %v6170 = vunpack.c.l.b16 %v3498
    %v6171 = vunpack.c.h.b16 %v3498
    %v6172 = vunpack.c.l.b16 %v3499
    %v6173 = vunpack.c.h.b16 %v3499
    %v6174 = vunpack.c.l.b16 %v3500
    %v6175 = vunpack.c.h.b16 %v3500
    %v6176 = vunpack.c.l.b16 %v3501
    %v6177 = vunpack.c.h.b16 %v3501
    %v6178 = vunpack.c.l.b16 %v3502
    %v6179 = vunpack.c.h.b16 %v3502
    %v6180 = vunpack.c.l.b16 %v3503
    %v6181 = vunpack.c.h.b16 %v3503
    %v6182 = vunpack.c.l.b16 %v3504
    %v6183 = vunpack.c.h.b16 %v3504
    %v6184 = vunpack.c.l.b16 %v3505
    %v6185 = vunpack.c.h.b16 %v3505
    %v6186 = vunpack.c.l.b16 %v3506
    %v6187 = vunpack.c.h.b16 %v3506
    %v6188 = vunpack.c.l.b16 %v3507
    %v6189 = vunpack.c.h.b16 %v3507
    %v6190 = vunpack.c.l.b16 %v3508
    %v6191 = vunpack.c.h.b16 %v3508
    %v6192 = vunpack.c.l.b16 %v3509
    %v6193 = vunpack.c.h.b16 %v3509
    %v6194 = vunpack.c.l.b16 %v3510
    %v6195 = vunpack.c.h.b16 %v3510
    %v6196 = vunpack.c.l.b16 %v3511
    %v6197 = vunpack.c.h.b16 %v3511
    %v6198 = vunpack.c.l.b16 %v3512
    %v6199 = vunpack.c.h.b16 %v3512
    %v6200 = vunpack.c.l.b16 %v3513
    %v6201 = vunpack.c.h.b16 %v3513
    %v6202 = vunpack.c.l.b16 %v3514
    %v6203 = vunpack.c.h.b16 %v3514
    %v6204 = vunpack.c.l.b16 %v3515
    %v6205 = vunpack.c.h.b16 %v3515
    %v6206 = vunpack.c.l.b16 %v3516
    %v6207 = vunpack.c.h.b16 %v3516
    %v6208 = vunpack.c.l.b16 %v3517
    %v6209 = vunpack.c.h.b16 %v3517
    %v6210 = vunpack.c.l.b16 %v3518
    %v6211 = vunpack.c.h.b16 %v3518
    %v6212 = vunpack.c.l.b16 %v3519
    %v6213 = vunpack.c.h.b16 %v3519
    %v6214 = vunpack.c.l.b16 %v3520
    %v6215 = vunpack.c.h.b16 %v3520
    %v6216 = vunpack.c.l.b16 %v3521
    %v6217 = vunpack.c.h.b16 %v3521
    %v6218 = vunpack.c.l.b16 %v3522
    %v6219 = vunpack.c.h.b16 %v3522
    %v6220 = vunpack.c.l.b16 %v3523
    %v6221 = vunpack.c.h.b16 %v3523
    %v6222 = vunpack.c.l.b16 %v3524
    %v6223 = vunpack.c.h.b16 %v3524
    %v6224 = vunpack.c.l.b16 %v3525
    %v6225 = vunpack.c.h.b16 %v3525
    %v6226 = vunpack.c.l.b16 %v3526
    %v6227 = vunpack.c.h.b16 %v3526
    %v6228 = vunpack.c.l.b16 %v3527
    %v6229 = vunpack.c.h.b16 %v3527
    %v6230 = vunpack.c.l.b16 %v3528
    %v6231 = vunpack.c.h.b16 %v3528
    %v6232 = vunpack.c.l.b16 %v3529
    %v6233 = vunpack.c.h.b16 %v3529
    %v6234 = vunpack.c.l.b16 %v3530
    %v6235 = vunpack.c.h.b16 %v3530
    %v6236 = vunpack.c.l.b16 %v3531
    %v6237 = vunpack.c.h.b16 %v3531
    %v6238 = vunpack.c.l.b16 %v3532
    %v6239 = vunpack.c.h.b16 %v3532
    %v6240 = vunpack.c.l.b16 %v3533
    %v6241 = vunpack.c.h.b16 %v3533
    %v6242 = vunpack.c.l.b16 %v3534
    %v6243 = vunpack.c.h.b16 %v3534
    %v6244 = vunpack.c.l.b16 %v3535
    %v6245 = vunpack.c.h.b16 %v3535
    %v6246 = vunpack.c.l.b16 %v3536
    %v6247 = vunpack.c.h.b16 %v3536
    %v6248 = vunpack.c.l.b16 %v3537
    %v6249 = vunpack.c.h.b16 %v3537
    %v6250 = vunpack.c.l.b16 %v3538
    %v6251 = vunpack.c.h.b16 %v3538
    %v6252 = vunpack.c.l.b16 %v3539
    %v6253 = vunpack.c.h.b16 %v3539
    %v6254 = vunpack.c.l.b16 %v3540
    %v6255 = vunpack.c.h.b16 %v3540
    %v6256 = vunpack.c.l.b16 %v3541
    %v6257 = vunpack.c.h.b16 %v3541
    %v6258 = vunpack.c.l.b16 %v3542
    %v6259 = vunpack.c.h.b16 %v3542
    %v6260 = vunpack.c.l.b16 %v3543
    %v6261 = vunpack.c.h.b16 %v3543
    %v6262 = vunpack.c.l.b16 %v3544
    %v6263 = vunpack.c.h.b16 %v3544
    %v6264 = vunpack.c.l.b16 %v3545
    %v6265 = vunpack.c.h.b16 %v3545
    %v6266 = vunpack.c.l.b16 %v3546
    %v6267 = vunpack.c.h.b16 %v3546
    %v6268 = vunpack.c.l.b16 %v3547
    %v6269 = vunpack.c.h.b16 %v3547
    %v6270 = vunpack.c.l.b16 %v3548
    %v6271 = vunpack.c.h.b16 %v3548
    %v6272 = vunpack.c.l.b16 %v3549
    %v6273 = vunpack.c.h.b16 %v3549
    %v6274 = vunpack.c.l.b16 %v3550
    %v6275 = vunpack.c.h.b16 %v3550
    %v6276 = vunpack.c.l.b16 %v3551
    %v6277 = vunpack.c.h.b16 %v3551
    %v6278 = vunpack.c.l.b16 %v3552
    %v6279 = vunpack.c.h.b16 %v3552
    %v6280 = vunpack.c.l.b16 %v3553
    %v6281 = vunpack.c.h.b16 %v3553
    %v6282 = vunpack.c.l.b16 %v3554
    %v6283 = vunpack.c.h.b16 %v3554
    %v6284 = vunpack.c.l.b16 %v3555
    %v6285 = vunpack.c.h.b16 %v3555
    %v6286 = vunpack.c.l.b16 %v3556
    %v6287 = vunpack.c.h.b16 %v3556
    %v6288 = vunpack.c.l.b16 %v3557
    %v6289 = vunpack.c.h.b16 %v3557
    %v6290 = vunpack.c.l.b16 %v3558
    %v6291 = vunpack.c.h.b16 %v3558
    %v6292 = vunpack.c.l.b16 %v3559
    %v6293 = vunpack.c.h.b16 %v3559
    %v6294 = vunpack.c.l.b16 %v3560
    %v6295 = vunpack.c.h.b16 %v3560
    %v6296 = vunpack.c.l.b16 %v3561
    %v6297 = vunpack.c.h.b16 %v3561
    %v6298 = vunpack.c.l.b16 %v3562
    %v6299 = vunpack.c.h.b16 %v3562
    %v6300 = vunpack.c.l.b16 %v3563
    %v6301 = vunpack.c.h.b16 %v3563
    %v6302 = vunpack.c.l.b16 %v3564
    %v6303 = vunpack.c.h.b16 %v3564
    %v6304 = vunpack.c.l.b16 %v3565
    %v6305 = vunpack.c.h.b16 %v3565
    %v6306 = vunpack.c.l.b16 %v3566
    %v6307 = vunpack.c.h.b16 %v3566
    %v6308 = vunpack.c.l.b16 %v3567
    %v6309 = vunpack.c.h.b16 %v3567
    %v6310 = vunpack.c.l.b16 %v3568
    %v6311 = vunpack.c.h.b16 %v3568
    %v6312 = vunpack.c.l.b16 %v3569
    %v6313 = vunpack.c.h.b16 %v3569
    %v6314 = vunpack.c.l.b16 %v3570
    %v6315 = vunpack.c.h.b16 %v3570
    %v6316 = vunpack.c.l.b16 %v3571
    %v6317 = vunpack.c.h.b16 %v3571
    %v6318 = vunpack.c.l.b16 %v3572
    %v6319 = vunpack.c.h.b16 %v3572
    %v6320 = vunpack.c.l.b16 %v3573
    %v6321 = vunpack.c.h.b16 %v3573
    %v6322 = vunpack.c.l.b16 %v3574
    %v6323 = vunpack.c.h.b16 %v3574
    %v6324 = vunpack.c.l.b16 %v3575
    %v6325 = vunpack.c.h.b16 %v3575
    %v6326 = vunpack.c.l.b16 %v3576
    %v6327 = vunpack.c.h.b16 %v3576
    %v6328 = vunpack.c.l.b16 %v3577
    %v6329 = vunpack.c.h.b16 %v3577
    %v6330 = vunpack.c.l.b16 %v3578
    %v6331 = vunpack.c.h.b16 %v3578
    %v6332 = vunpack.c.l.b16 %v3579
    %v6333 = vunpack.c.h.b16 %v3579
    %v6334 = vunpack.c.l.b16 %v3580
    %v6335 = vunpack.c.h.b16 %v3580
    %v6336 = vunpack.c.l.b16 %v3581
    %v6337 = vunpack.c.h.b16 %v3581
    %v6338 = vunpack.c.l.b16 %v3582
    %v6339 = vunpack.c.h.b16 %v3582
    %v6340 = vunpack.c.l.b16 %v3583
    %v6341 = vunpack.c.h.b16 %v3583
    %v6342 = vunpack.c.l.b16 %v3584
    %v6343 = vunpack.c.h.b16 %v3584
    %v6344 = vunpack.c.l.b16 %v3585
    %v6345 = vunpack.c.h.b16 %v3585
    %v6346 = vunpack.c.l.b16 %v3586
    %v6347 = vunpack.c.h.b16 %v3586
    %v6348 = vunpack.c.l.b16 %v3587
    %v6349 = vunpack.c.h.b16 %v3587
    %v6350 = vunpack.c.l.b16 %v3588
    %v6351 = vunpack.c.h.b16 %v3588
    %v6352 = vunpack.c.l.b16 %v3589
    %v6353 = vunpack.c.h.b16 %v3589
    %v6354 = vunpack.c.l.b16 %v3590
    %v6355 = vunpack.c.h.b16 %v3590
    %v6356 = vunpack.c.l.b16 %v3591
    %v6357 = vunpack.c.h.b16 %v3591
    %v6358 = vunpack.c.l.b16 %v3592
    %v6359 = vunpack.c.h.b16 %v3592
    %v6360 = vunpack.c.l.b16 %v3593
    %v6361 = vunpack.c.h.b16 %v3593
    %v6362 = vunpack.c.l.b16 %v3594
    %v6363 = vunpack.c.h.b16 %v3594
    %v6364 = vunpack.c.l.b16 %v3595
    %v6365 = vunpack.c.h.b16 %v3595
    %v6366 = vunpack.c.l.b16 %v3596
    %v6367 = vunpack.c.h.b16 %v3596
    %v6368 = vunpack.c.l.b16 %v3597
    %v6369 = vunpack.c.h.b16 %v3597
    %v6370 = vunpack.c.l.b16 %v3598
    %v6371 = vunpack.c.h.b16 %v3598
    %v6372 = vunpack.c.l.b16 %v3599
    %v6373 = vunpack.c.h.b16 %v3599
    %v6374 = vunpack.c.l.b16 %v3600
    %v6375 = vunpack.c.h.b16 %v3600
    %v6376 = vunpack.c.l.b16 %v3601
    %v6377 = vunpack.c.h.b16 %v3601
    %v6378 = vunpack.c.l.b16 %v3602
    %v6379 = vunpack.c.h.b16 %v3602
    %v6380 = vunpack.c.l.b16 %v3603
    %v6381 = vunpack.c.h.b16 %v3603
    %v6382 = vunpack.c.l.b16 %v3604
    %v6383 = vunpack.c.h.b16 %v3604
    %v6384 = vunpack.c.l.b16 %v3605
    %v6385 = vunpack.c.h.b16 %v3605
    %v6386 = vunpack.c.l.b16 %v3606
    %v6387 = vunpack.c.h.b16 %v3606
    %v6388 = vunpack.c.l.b16 %v3607
    %v6389 = vunpack.c.h.b16 %v3607
    %v6390 = vunpack.c.l.b16 %v3608
    %v6391 = vunpack.c.h.b16 %v3608
    %v6392 = vunpack.c.l.b16 %v3609
    %v6393 = vunpack.c.h.b16 %v3609
    %v6394 = vunpack.c.l.b16 %v3610
    %v6395 = vunpack.c.h.b16 %v3610
    %v6396 = vunpack.c.l.b16 %v3611
    %v6397 = vunpack.c.h.b16 %v3611
    %v6398 = vunpack.c.l.b16 %v3612
    %v6399 = vunpack.c.h.b16 %v3612
    %v6400 = vunpack.c.l.b16 %v3613
    %v6401 = vunpack.c.h.b16 %v3613
    %v6402 = vunpack.c.l.b16 %v3614
    %v6403 = vunpack.c.h.b16 %v3614
    %v6404 = vunpack.c.l.b16 %v3615
    %v6405 = vunpack.c.h.b16 %v3615
    %v6406 = vunpack.c.l.b16 %v3616
    %v6407 = vunpack.c.h.b16 %v3616
    %v6408 = vunpack.c.l.b16 %v3617
    %v6409 = vunpack.c.h.b16 %v3617
    %v6410 = vunpack.c.l.b16 %v3618
    %v6411 = vunpack.c.h.b16 %v3618
    %v6412 = vunpack.c.l.b16 %v3619
    %v6413 = vunpack.c.h.b16 %v3619
    %v6414 = vunpack.c.l.b16 %v3620
    %v6415 = vunpack.c.h.b16 %v3620
    %v6416 = vunpack.c.l.b16 %v3621
    %v6417 = vunpack.c.h.b16 %v3621
    %v6418 = vunpack.c.l.b16 %v3622
    %v6419 = vunpack.c.h.b16 %v3622
    %v6420 = vunpack.c.l.b16 %v3623
    %v6421 = vunpack.c.h.b16 %v3623
    %v6422 = vunpack.c.l.b16 %v3624
    %v6423 = vunpack.c.h.b16 %v3624
    %v6424 = vunpack.c.l.b16 %v3625
    %v6425 = vunpack.c.h.b16 %v3625
    %v6426 = vunpack.c.l.b16 %v3626
    %v6427 = vunpack.c.h.b16 %v3626
    %v6428 = vunpack.c.l.b16 %v3627
    %v6429 = vunpack.c.h.b16 %v3627
    %v6430 = vunpack.c.l.b16 %v3628
    %v6431 = vunpack.c.h.b16 %v3628
    %v6432 = vunpack.c.l.b16 %v3629
    %v6433 = vunpack.c.h.b16 %v3629
    %v6434 = vunpack.c.l.b16 %v3630
    %v6435 = vunpack.c.h.b16 %v3630
    %v6436 = vunpack.c.l.b16 %v3631
    %v6437 = vunpack.c.h.b16 %v3631
    %v6438 = vunpack.c.l.b16 %v3632
    %v6439 = vunpack.c.h.b16 %v3632
    %v6440 = vunpack.c.l.b16 %v3633
    %v6441 = vunpack.c.h.b16 %v3633
    %v6442 = vunpack.c.l.b16 %v3634
    %v6443 = vunpack.c.h.b16 %v3634
    %v6444 = vunpack.c.l.b16 %v3635
    %v6445 = vunpack.c.h.b16 %v3635
    %v6446 = vunpack.c.l.b16 %v3636
    %v6447 = vunpack.c.h.b16 %v3636
    %v6448 = vunpack.c.l.b16 %v3637
    %v6449 = vunpack.c.h.b16 %v3637
    %v6450 = vunpack.c.l.b16 %v3638
    %v6451 = vunpack.c.h.b16 %v3638
    %v6452 = vunpack.c.l.b16 %v3639
    %v6453 = vunpack.c.h.b16 %v3639
    %v6454 = vunpack.c.l.b16 %v3640
    %v6455 = vunpack.c.h.b16 %v3640
    %v6456 = vunpack.c.l.b16 %v3641
    %v6457 = vunpack.c.h.b16 %v3641
    %v6458 = vunpack.c.l.b16 %v3642
    %v6459 = vunpack.c.h.b16 %v3642
    %v6460 = vunpack.c.l.b16 %v3643
    %v6461 = vunpack.c.h.b16 %v3643
    %v6462 = vunpack.c.l.b16 %v3644
    %v6463 = vunpack.c.h.b16 %v3644
    %v6464 = vunpack.c.l.b16 %v3645
    %v6465 = vunpack.c.h.b16 %v3645
    %v6466 = vunpack.c.l.b16 %v3646
    %v6467 = vunpack.c.h.b16 %v3646
    %v6468 = vunpack.c.l.b16 %v3647
    %v6469 = vunpack.c.h.b16 %v3647
    %v6470 = vunpack.c.l.b16 %v3648
    %v6471 = vunpack.c.h.b16 %v3648
    %v6472 = vunpack.c.l.b16 %v3649
    %v6473 = vunpack.c.h.b16 %v3649
    %v6474 = vunpack.c.l.b16 %v3650
    %v6475 = vunpack.c.h.b16 %v3650
    %v6476 = vunpack.c.l.b16 %v3651
    %v6477 = vunpack.c.h.b16 %v3651
    %v6478 = vunpack.c.l.b16 %v3652
    %v6479 = vunpack.c.h.b16 %v3652
    %v6480 = vunpack.c.l.b16 %v3653
    %v6481 = vunpack.c.h.b16 %v3653
    %v6482 = vunpack.c.l.b16 %v3654
    %v6483 = vunpack.c.h.b16 %v3654
    %v6484 = vunpack.c.l.b16 %v3655
    %v6485 = vunpack.c.h.b16 %v3655
    %v6486 = vunpack.c.l.b16 %v3656
    %v6487 = vunpack.c.h.b16 %v3656
    %v6488 = vunpack.c.l.b16 %v3657
    %v6489 = vunpack.c.h.b16 %v3657
    %v6490 = vunpack.c.l.b16 %v3658
    %v6491 = vunpack.c.h.b16 %v3658
    %v6492 = vunpack.c.l.b16 %v3659
    %v6493 = vunpack.c.h.b16 %v3659
    %v6494 = vunpack.c.l.b16 %v3660
    %v6495 = vunpack.c.h.b16 %v3660
    %v6496 = vunpack.c.l.b16 %v3661
    %v6497 = vunpack.c.h.b16 %v3661
    %v6498 = vunpack.c.l.b16 %v3662
    %v6499 = vunpack.c.h.b16 %v3662
    %v6500 = vunpack.c.l.b16 %v3663
    %v6501 = vunpack.c.h.b16 %v3663
    %v6502 = vunpack.c.l.b16 %v3664
    %v6503 = vunpack.c.h.b16 %v3664
    %v6504 = vunpack.c.l.b16 %v3665
    %v6505 = vunpack.c.h.b16 %v3665
    %v6506 = vunpack.c.l.b16 %v3666
    %v6507 = vunpack.c.h.b16 %v3666
    %v6508 = vunpack.c.l.b16 %v3667
    %v6509 = vunpack.c.h.b16 %v3667
    %v6510 = vunpack.c.l.b16 %v3668
    %v6511 = vunpack.c.h.b16 %v3668
    %v6512 = vunpack.c.l.b16 %v3669
    %v6513 = vunpack.c.h.b16 %v3669
    %v6514 = vunpack.c.l.b16 %v3670
    %v6515 = vunpack.c.h.b16 %v3670
    %v6516 = vunpack.c.l.b16 %v3671
    %v6517 = vunpack.c.h.b16 %v3671
    %v6518 = vunpack.c.l.b16 %v3672
    %v6519 = vunpack.c.h.b16 %v3672
    %v6520 = vunpack.c.l.b16 %v3673
    %v6521 = vunpack.c.h.b16 %v3673
    %v6522 = vunpack.c.l.b16 %v3674
    %v6523 = vunpack.c.h.b16 %v3674
    %v6524 = vunpack.c.l.b16 %v3675
    %v6525 = vunpack.c.h.b16 %v3675
    %v6526 = vunpack.c.l.b16 %v3676
    %v6527 = vunpack.c.h.b16 %v3676
    %v6528 = vunpack.c.l.b16 %v3677
    %v6529 = vunpack.c.h.b16 %v3677
    %v6530 = vunpack.c.l.b16 %v3678
    %v6531 = vunpack.c.h.b16 %v3678
    %v6532 = vunpack.c.l.b16 %v3679
    %v6533 = vunpack.c.h.b16 %v3679
    %v6534 = vunpack.c.l.b16 %v3680
    %v6535 = vunpack.c.h.b16 %v3680
    %v6536 = vunpack.c.l.b16 %v3681
    %v6537 = vunpack.c.h.b16 %v3681
    %v6538 = vunpack.c.l.b16 %v3682
    %v6539 = vunpack.c.h.b16 %v3682
    %v6540 = vunpack.c.l.b16 %v3683
    %v6541 = vunpack.c.h.b16 %v3683
    %v6542 = vunpack.c.l.b16 %v3684
    %v6543 = vunpack.c.h.b16 %v3684
    %v6544 = vunpack.c.l.b16 %v3685
    %v6545 = vunpack.c.h.b16 %v3685
    %v6546 = vunpack.c.l.b16 %v3686
    %v6547 = vunpack.c.h.b16 %v3686
    %v6548 = vunpack.c.l.b16 %v3687
    %v6549 = vunpack.c.h.b16 %v3687
    %v6550 = vunpack.c.l.b16 %v3688
    %v6551 = vunpack.c.h.b16 %v3688
    %v6552 = vunpack.c.l.b16 %v3689
    %v6553 = vunpack.c.h.b16 %v3689
    %v6554 = vunpack.c.l.b16 %v3690
    %v6555 = vunpack.c.h.b16 %v3690
    %v6556 = vunpack.c.l.b16 %v3691
    %v6557 = vunpack.c.h.b16 %v3691
    %v6558 = vunpack.c.l.b16 %v3692
    %v6559 = vunpack.c.h.b16 %v3692
    %v6560 = vunpack.c.l.b16 %v3693
    %v6561 = vunpack.c.h.b16 %v3693
    %v6562 = vunpack.c.l.b16 %v3694
    %v6563 = vunpack.c.h.b16 %v3694
    %v6564 = vunpack.c.l.b16 %v3695
    %v6565 = vunpack.c.h.b16 %v3695
    %v6566 = vunpack.c.l.b16 %v3696
    %v6567 = vunpack.c.h.b16 %v3696
    %v6568 = vunpack.c.l.b16 %v3697
    %v6569 = vunpack.c.h.b16 %v3697
    %v6570 = vunpack.c.l.b16 %v3698
    %v6571 = vunpack.c.h.b16 %v3698
    %v6572 = vunpack.c.l.b16 %v3699
    %v6573 = vunpack.c.h.b16 %v3699
    %v6574 = vunpack.c.l.b16 %v3700
    %v6575 = vunpack.c.h.b16 %v3700
    %v6576 = vunpack.c.l.b16 %v3701
    %v6577 = vunpack.c.h.b16 %v3701
    %v6578 = vunpack.c.l.b16 %v3702
    %v6579 = vunpack.c.h.b16 %v3702
    %v6580 = vunpack.c.l.b16 %v3703
    %v6581 = vunpack.c.h.b16 %v3703
    %v6582 = vunpack.c.l.b16 %v3704
    %v6583 = vunpack.c.h.b16 %v3704
    %v6584 = vunpack.c.l.b16 %v3705
    %v6585 = vunpack.c.h.b16 %v3705
    %v6586 = vunpack.c.l.b16 %v3706
    %v6587 = vunpack.c.h.b16 %v3706
    %v6588 = vunpack.c.l.b16 %v3707
    %v6589 = vunpack.c.h.b16 %v3707
    %v6590 = vunpack.c.l.b16 %v3708
    %v6591 = vunpack.c.h.b16 %v3708
    %v6592 = vunpack.c.l.b16 %v3709
    %v6593 = vunpack.c.h.b16 %v3709
    %v6594 = vunpack.c.l.b16 %v3710
    %v6595 = vunpack.c.h.b16 %v3710
    %v6596 = vunpack.c.l.b16 %v3711
    %v6597 = vunpack.c.h.b16 %v3711
    %v6598 = vunpack.c.l.b16 %v3712
    %v6599 = vunpack.c.h.b16 %v3712
    %v6600 = vunpack.c.l.b16 %v3713
    %v6601 = vunpack.c.h.b16 %v3713
    %v6602 = vunpack.c.l.b16 %v3714
    %v6603 = vunpack.c.h.b16 %v3714
    %v6604 = vunpack.c.l.b16 %v3715
    %v6605 = vunpack.c.h.b16 %v3715
    %v6606 = vunpack.c.l.b16 %v3716
    %v6607 = vunpack.c.h.b16 %v3716
    %v6608 = vunpack.c.l.b16 %v3717
    %v6609 = vunpack.c.h.b16 %v3717
    %v6610 = vunpack.c.l.b16 %v3718
    %v6611 = vunpack.c.h.b16 %v3718
    %v6612 = vunpack.c.l.b16 %v3719
    %v6613 = vunpack.c.h.b16 %v3719
    %v6614 = vunpack.c.l.b16 %v3720
    %v6615 = vunpack.c.h.b16 %v3720
    %v6616 = vunpack.c.l.b16 %v3721
    %v6617 = vunpack.c.h.b16 %v3721
    %v6618 = vunpack.c.l.b16 %v3722
    %v6619 = vunpack.c.h.b16 %v3722
    %v6620 = vunpack.c.l.b16 %v3723
    %v6621 = vunpack.c.h.b16 %v3723
    %v6622 = vunpack.c.l.b16 %v3724
    %v6623 = vunpack.c.h.b16 %v3724
    %v6624 = vunpack.c.l.b16 %v3725
    %v6625 = vunpack.c.h.b16 %v3725
    %v6626 = vunpack.c.l.b16 %v3726
    %v6627 = vunpack.c.h.b16 %v3726
    %v6628 = vunpack.c.l.b16 %v3727
    %v6629 = vunpack.c.h.b16 %v3727
    %v6630 = vunpack.c.l.b16 %v3728
    %v6631 = vunpack.c.h.b16 %v3728
    %v6632 = vunpack.c.l.b16 %v3729
    %v6633 = vunpack.c.h.b16 %v3729
    %v6634 = vunpack.c.l.b16 %v3730
    %v6635 = vunpack.c.h.b16 %v3730
    %v6636 = vunpack.c.l.b16 %v3731
    %v6637 = vunpack.c.h.b16 %v3731
    %v6638 = vunpack.c.l.b16 %v3732
    %v6639 = vunpack.c.h.b16 %v3732
    %v6640 = vunpack.c.l.b16 %v3733
    %v6641 = vunpack.c.h.b16 %v3733
    %v6642 = vunpack.c.l.b16 %v3734
    %v6643 = vunpack.c.h.b16 %v3734
    %v6644 = vunpack.c.l.b16 %v3735
    %v6645 = vunpack.c.h.b16 %v3735
    %v6646 = vunpack.c.l.b16 %v3736
    %v6647 = vunpack.c.h.b16 %v3736
    %v6648 = vunpack.c.l.b16 %v3737
    %v6649 = vunpack.c.h.b16 %v3737
    %v6650 = vunpack.c.l.b16 %v3738
    %v6651 = vunpack.c.h.b16 %v3738
    %v6652 = vunpack.c.l.b16 %v3739
    %v6653 = vunpack.c.h.b16 %v3739
    %v6654 = vunpack.c.l.b16 %v3740
    %v6655 = vunpack.c.h.b16 %v3740
    %v6656 = vunpack.c.l.b16 %v3741
    %v6657 = vunpack.c.h.b16 %v3741
    %v6658 = vunpack.c.l.b16 %v3742
    %v6659 = vunpack.c.h.b16 %v3742
    %v6660 = vunpack.c.l.b16 %v3743
    %v6661 = vunpack.c.h.b16 %v3743
    %v6662 = vunpack.c.l.b16 %v3744
    %v6663 = vunpack.c.h.b16 %v3744
    %v6664 = vunpack.c.l.b16 %v3745
    %v6665 = vunpack.c.h.b16 %v3745
    %v6666 = vunpack.c.l.b16 %v3746
    %v6667 = vunpack.c.h.b16 %v3746
    %v6668 = vunpack.c.l.b16 %v3747
    %v6669 = vunpack.c.h.b16 %v3747
    %v6670 = vunpack.c.l.b16 %v3748
    %v6671 = vunpack.c.h.b16 %v3748
    %v6672 = vunpack.c.l.b16 %v3749
    %v6673 = vunpack.c.h.b16 %v3749
    %v6674 = vunpack.c.l.b16 %v3750
    %v6675 = vunpack.c.h.b16 %v3750
    %v6676 = vunpack.c.l.b16 %v3751
    %v6677 = vunpack.c.h.b16 %v3751
    %v6678 = vunpack.c.l.b16 %v3752
    %v6679 = vunpack.c.h.b16 %v3752
    %v6680 = vunpack.c.l.b16 %v3753
    %v6681 = vunpack.c.h.b16 %v3753
    %v6682 = vunpack.c.l.b16 %v3754
    %v6683 = vunpack.c.h.b16 %v3754
    %v6684 = vunpack.c.l.b16 %v3755
    %v6685 = vunpack.c.h.b16 %v3755
    %v6686 = vunpack.c.l.b16 %v3756
    %v6687 = vunpack.c.h.b16 %v3756
    %v6688 = vunpack.c.l.b16 %v3757
    %v6689 = vunpack.c.h.b16 %v3757
    %v6690 = vunpack.c.l.b16 %v3758
    %v6691 = vunpack.c.h.b16 %v3758
    %v6692 = vunpack.c.l.b16 %v3759
    %v6693 = vunpack.c.h.b16 %v3759
    %v6694 = vunpack.c.l.b16 %v3760
    %v6695 = vunpack.c.h.b16 %v3760
    %v6696 = vunpack.c.l.b16 %v3761
    %v6697 = vunpack.c.h.b16 %v3761
    %v6698 = vunpack.c.l.b16 %v3762
    %v6699 = vunpack.c.h.b16 %v3762
    %v6700 = vunpack.c.l.b16 %v3763
    %v6701 = vunpack.c.h.b16 %v3763
    %v6702 = vunpack.c.l.b16 %v3764
    %v6703 = vunpack.c.h.b16 %v3764
    %v6704 = vunpack.c.l.b16 %v3765
    %v6705 = vunpack.c.h.b16 %v3765
    %v6706 = vunpack.c.l.b16 %v3766
    %v6707 = vunpack.c.h.b16 %v3766
    %v6708 = vunpack.c.l.b16 %v3767
    %v6709 = vunpack.c.h.b16 %v3767
    %v6710 = vunpack.c.l.b16 %v3768
    %v6711 = vunpack.c.h.b16 %v3768
    %v6712 = vunpack.c.l.b16 %v3769
    %v6713 = vunpack.c.h.b16 %v3769
    %v6714 = vunpack.c.l.b16 %v3770
    %v6715 = vunpack.c.h.b16 %v3770
    %v6716 = vunpack.c.l.b16 %v3771
    %v6717 = vunpack.c.h.b16 %v3771
    %v6718 = vunpack.c.l.b16 %v3772
    %v6719 = vunpack.c.h.b16 %v3772
    %v6720 = vunpack.c.l.b16 %v3773
    %v6721 = vunpack.c.h.b16 %v3773
    %v6722 = vunpack.c.l.b16 %v3774
    %v6723 = vunpack.c.h.b16 %v3774
    %v6724 = vunpack.c.l.b16 %v3775
    %v6725 = vunpack.c.h.b16 %v3775
    %v6726 = vunpack.c.l.b16 %v3776
    %v6727 = vunpack.c.h.b16 %v3776
    %v6728 = vunpack.c.l.b16 %v3777
    %v6729 = vunpack.c.h.b16 %v3777
    %v6730 = vunpack.c.l.b16 %v3778
    %v6731 = vunpack.c.h.b16 %v3778
    %v6732 = vunpack.c.l.b16 %v3779
    %v6733 = vunpack.c.h.b16 %v3779
    %v6734 = vunpack.c.l.b16 %v3780
    %v6735 = vunpack.c.h.b16 %v3780
    %v6736 = vunpack.c.l.b16 %v3781
    %v6737 = vunpack.c.h.b16 %v3781
    %v6738 = vunpack.c.l.b16 %v3782
    %v6739 = vunpack.c.h.b16 %v3782
    %v6740 = vunpack.c.l.b16 %v3783
    %v6741 = vunpack.c.h.b16 %v3783
    %v6742 = vunpack.c.l.b16 %v3784
    %v6743 = vunpack.c.h.b16 %v3784
    %v6744 = vunpack.c.l.b16 %v3785
    %v6745 = vunpack.c.h.b16 %v3785
    %v6746 = vunpack.c.l.b16 %v3786
    %v6747 = vunpack.c.h.b16 %v3786
    %v6748 = vunpack.c.l.b16 %v3787
    %v6749 = vunpack.c.h.b16 %v3787
    %v6750 = vunpack.c.l.b16 %v3788
    %v6751 = vunpack.c.h.b16 %v3788
    %v6752 = vunpack.c.l.b16 %v3789
    %v6753 = vunpack.c.h.b16 %v3789
    %v6754 = vunpack.c.l.b16 %v3790
    %v6755 = vunpack.c.h.b16 %v3790
    %v6756 = vunpack.c.l.b16 %v3791
    %v6757 = vunpack.c.h.b16 %v3791
    %v6758 = vunpack.c.l.b16 %v3792
    %v6759 = vunpack.c.h.b16 %v3792
    %v6760 = vunpack.c.l.b16 %v3793
    %v6761 = vunpack.c.h.b16 %v3793
    %v6762 = vunpack.c.l.b16 %v3794
    %v6763 = vunpack.c.h.b16 %v3794
    %v6764 = vunpack.c.l.b16 %v3795
    %v6765 = vunpack.c.h.b16 %v3795
    %v6766 = vunpack.c.l.b16 %v3796
    %v6767 = vunpack.c.h.b16 %v3796
    %v6768 = vunpack.c.l.b16 %v3797
    %v6769 = vunpack.c.h.b16 %v3797
    %v6770 = vunpack.c.l.b16 %v3798
    %v6771 = vunpack.c.h.b16 %v3798
    %v6772 = vunpack.c.l.b16 %v3799
    %v6773 = vunpack.c.h.b16 %v3799
    %v6774 = vunpack.c.l.b16 %v3800
    %v6775 = vunpack.c.h.b16 %v3800
    %v6776 = vunpack.c.l.b16 %v3801
    %v6777 = vunpack.c.h.b16 %v3801
    %v6778 = vunpack.c.l.b16 %v3802
    %v6779 = vunpack.c.h.b16 %v3802
    %v6780 = vunpack.c.l.b16 %v3803
    %v6781 = vunpack.c.h.b16 %v3803
    %v6782 = vunpack.c.l.b16 %v3804
    %v6783 = vunpack.c.h.b16 %v3804
    %v6784 = vunpack.c.l.b16 %v3805
    %v6785 = vunpack.c.h.b16 %v3805
    %v6786 = vunpack.c.l.b16 %v3806
    %v6787 = vunpack.c.h.b16 %v3806
    %v6788 = vunpack.c.l.b16 %v3807
    %v6789 = vunpack.c.h.b16 %v3807
    %v6790 = vunpack.c.l.b16 %v3808
    %v6791 = vunpack.c.h.b16 %v3808
    %v6792 = vunpack.c.l.b16 %v3809
    %v6793 = vunpack.c.h.b16 %v3809
    %v6794 = vunpack.c.l.b16 %v3810
    %v6795 = vunpack.c.h.b16 %v3810
    %v6796 = vunpack.c.l.b16 %v3811
    %v6797 = vunpack.c.h.b16 %v3811
    %v6798 = vunpack.c.l.b16 %v3812
    %v6799 = vunpack.c.h.b16 %v3812
    %v6800 = vunpack.c.l.b16 %v3813
    %v6801 = vunpack.c.h.b16 %v3813
    %v6802 = vunpack.c.l.b16 %v3814
    %v6803 = vunpack.c.h.b16 %v3814
    %v6804 = vunpack.c.l.b16 %v3815
    %v6805 = vunpack.c.h.b16 %v3815
    %v6806 = vunpack.c.l.b16 %v3816
    %v6807 = vunpack.c.h.b16 %v3816
    %v6808 = vunpack.c.l.b16 %v3817
    %v6809 = vunpack.c.h.b16 %v3817
    %v6810 = vunpack.c.l.b16 %v3818
    %v6811 = vunpack.c.h.b16 %v3818
    %v6812 = vunpack.c.l.b16 %v3819
    %v6813 = vunpack.c.h.b16 %v3819
    %v6814 = vunpack.c.l.b16 %v3820
    %v6815 = vunpack.c.h.b16 %v3820
    %v6816 = vunpack.c.l.b16 %v3821
    %v6817 = vunpack.c.h.b16 %v3821
    %v6818 = vunpack.c.l.b16 %v3822
    %v6819 = vunpack.c.h.b16 %v3822
    %v6820 = vunpack.c.l.b16 %v3823
    %v6821 = vunpack.c.h.b16 %v3823
    %v6822 = vunpack.c.l.b16 %v3824
    %v6823 = vunpack.c.h.b16 %v3824
    %v6824 = vunpack.c.l.b16 %v3825
    %v6825 = vunpack.c.h.b16 %v3825
    %v6826 = vunpack.c.l.b16 %v3826
    %v6827 = vunpack.c.h.b16 %v3826
    %v6828 = vunpack.c.l.b16 %v3827
    %v6829 = vunpack.c.h.b16 %v3827
    %v6830 = vunpack.c.l.b16 %v3828
    %v6831 = vunpack.c.h.b16 %v3828
    %v6832 = vunpack.c.l.b16 %v3829
    %v6833 = vunpack.c.h.b16 %v3829
    %v6834 = vunpack.c.l.b16 %v3830
    %v6835 = vunpack.c.h.b16 %v3830
    %v6836 = vunpack.c.l.b16 %v3831
    %v6837 = vunpack.c.h.b16 %v3831
    %v6838 = vunpack.c.l.b16 %v3832
    %v6839 = vunpack.c.h.b16 %v3832
    %v6840 = vunpack.c.l.b16 %v3833
    %v6841 = vunpack.c.h.b16 %v3833
    %v6842 = vunpack.c.l.b16 %v3834
    %v6843 = vunpack.c.h.b16 %v3834
    %v6844 = vunpack.c.l.b16 %v3835
    %v6845 = vunpack.c.h.b16 %v3835
    %v6846 = vunpack.c.l.b16 %v3836
    %v6847 = vunpack.c.h.b16 %v3836
    %v6848 = vunpack.c.l.b16 %v3837
    %v6849 = vunpack.c.h.b16 %v3837
    %v6850 = vunpack.c.l.b16 %v3838
    %v6851 = vunpack.c.h.b16 %v3838
    %v6852 = vunpack.c.l.b16 %v3839
    %v6853 = vunpack.c.h.b16 %v3839
    %v6854 = vunpack.c.l.b16 %v3840
    %v6855 = vunpack.c.h.b16 %v3840
    %v6856 = vunpack.c.l.b16 %v3841
    %v6857 = vunpack.c.h.b16 %v3841
    %v6858 = vunpack.c.l.b16 %v3842
    %v6859 = vunpack.c.h.b16 %v3842
    %v6860 = vunpack.c.l.b16 %v3843
    %v6861 = vunpack.c.h.b16 %v3843
    %v6862 = vunpack.c.l.b16 %v3844
    %v6863 = vunpack.c.h.b16 %v3844
    %v6864 = vunpack.c.l.b16 %v3845
    %v6865 = vunpack.c.h.b16 %v3845
    %v6866 = vunpack.c.l.b16 %v3846
    %v6867 = vunpack.c.h.b16 %v3846
    %v6868 = vunpack.c.l.b16 %v3847
    %v6869 = vunpack.c.h.b16 %v3847
    %v6870 = vunpack.c.l.b16 %v3848
    %v6871 = vunpack.c.h.b16 %v3848
    %v6872 = vunpack.c.l.b16 %v3849
    %v6873 = vunpack.c.h.b16 %v3849
    %v6874 = vunpack.c.l.b16 %v3850
    %v6875 = vunpack.c.h.b16 %v3850
    %v6876 = vunpack.c.l.b16 %v3851
    %v6877 = vunpack.c.h.b16 %v3851
    %v6878 = vunpack.c.l.b16 %v3852
    %v6879 = vunpack.c.h.b16 %v3852
    %v6880 = vunpack.c.l.b16 %v3853
    %v6881 = vunpack.c.h.b16 %v3853
    %v6882 = vunpack.c.l.b16 %v3854
    %v6883 = vunpack.c.h.b16 %v3854
    %v6884 = vunpack.c.l.b16 %v3855
    %v6885 = vunpack.c.h.b16 %v3855
    %v6886 = vunpack.c.l.b16 %v3856
    %v6887 = vunpack.c.h.b16 %v3856
    %v6888 = vunpack.c.l.b16 %v3857
    %v6889 = vunpack.c.h.b16 %v3857
    %v6890 = vunpack.c.l.b16 %v3858
    %v6891 = vunpack.c.h.b16 %v3858
    %v6892 = vunpack.c.l.b16 %v3859
    %v6893 = vunpack.c.h.b16 %v3859
    %v6894 = vunpack.c.l.b16 %v3860
    %v6895 = vunpack.c.h.b16 %v3860
    %v6896 = vunpack.c.l.b16 %v3861
    %v6897 = vunpack.c.h.b16 %v3861
    %v6898 = vunpack.c.l.b16 %v3862
    %v6899 = vunpack.c.h.b16 %v3862
    %v6900 = vunpack.c.l.b16 %v3863
    %v6901 = vunpack.c.h.b16 %v3863
    %v6902 = vunpack.c.l.b16 %v3864
    %v6903 = vunpack.c.h.b16 %v3864
    %v6904 = vunpack.c.l.b16 %v3865
    %v6905 = vunpack.c.h.b16 %v3865
    %v6906 = vunpack.c.l.b16 %v3866
    %v6907 = vunpack.c.h.b16 %v3866
    %v6908 = vunpack.c.l.b16 %v3867
    %v6909 = vunpack.c.h.b16 %v3867
    %v6910 = vunpack.c.l.b16 %v3868
    %v6911 = vunpack.c.h.b16 %v3868
    %v6912 = vunpack.c.l.b16 %v3869
    %v6913 = vunpack.c.h.b16 %v3869
    %v6914 = vunpack.c.l.b16 %v3870
    %v6915 = vunpack.c.h.b16 %v3870
    %v6916 = vunpack.c.l.b16 %v3871
    %v6917 = vunpack.c.h.b16 %v3871
    %v6918 = vunpack.c.l.b16 %v3872
    %v6919 = vunpack.c.h.b16 %v3872
    %v6920 = vunpack.c.l.b16 %v3873
    %v6921 = vunpack.c.h.b16 %v3873
    %v6922 = vunpack.c.l.b16 %v3874
    %v6923 = vunpack.c.h.b16 %v3874
    %v6924 = vunpack.c.l.b16 %v3875
    %v6925 = vunpack.c.h.b16 %v3875
    %v6926 = vunpack.c.l.b16 %v3876
    %v6927 = vunpack.c.h.b16 %v3876
    %v6928 = vunpack.c.l.b16 %v3877
    %v6929 = vunpack.c.h.b16 %v3877
    %v6930 = vunpack.c.l.b16 %v3878
    %v6931 = vunpack.c.h.b16 %v3878
    %v6932 = vunpack.c.l.b16 %v3879
    %v6933 = vunpack.c.h.b16 %v3879
    %v6934 = vunpack.c.l.b16 %v3880
    %v6935 = vunpack.c.h.b16 %v3880
    %v6936 = vunpack.c.l.b16 %v3881
    %v6937 = vunpack.c.h.b16 %v3881
    %v6938 = vunpack.c.l.b16 %v3882
    %v6939 = vunpack.c.h.b16 %v3882
    %v6940 = vunpack.c.l.b16 %v3883
    %v6941 = vunpack.c.h.b16 %v3883
    %v6942 = vunpack.c.l.b16 %v3884
    %v6943 = vunpack.c.h.b16 %v3884
    %v6944 = vunpack.c.l.b16 %v3885
    %v6945 = vunpack.c.h.b16 %v3885
    %v6946 = vunpack.c.l.b16 %v3886
    %v6947 = vunpack.c.h.b16 %v3886
    %v6948 = vunpack.c.l.b16 %v3887
    %v6949 = vunpack.c.h.b16 %v3887
    %v6950 = vunpack.c.l.b16 %v3888
    %v6951 = vunpack.c.h.b16 %v3888
    %v6952 = vunpack.c.l.b16 %v3889
    %v6953 = vunpack.c.h.b16 %v3889
    %v6954 = vunpack.c.l.b16 %v3890
    %v6955 = vunpack.c.h.b16 %v3890
    %v6956 = vunpack.c.l.b16 %v3891
    %v6957 = vunpack.c.h.b16 %v3891
    %v6958 = vunpack.c.l.b16 %v3892
    %v6959 = vunpack.c.h.b16 %v3892
    %v6960 = vunpack.c.l.b16 %v3893
    %v6961 = vunpack.c.h.b16 %v3893
    %v6962 = vunpack.c.l.b16 %v3894
    %v6963 = vunpack.c.h.b16 %v3894
    %v6964 = vunpack.c.l.b16 %v3895
    %v6965 = vunpack.c.h.b16 %v3895
    %v6966 = vunpack.c.l.b16 %v3896
    %v6967 = vunpack.c.h.b16 %v3896
    %v6968 = vunpack.c.l.b16 %v3897
    %v6969 = vunpack.c.h.b16 %v3897
    %v6970 = vunpack.c.l.b16 %v3898
    %v6971 = vunpack.c.h.b16 %v3898
    %v6972 = vunpack.c.l.b16 %v3899
    %v6973 = vunpack.c.h.b16 %v3899
    %v6974 = vunpack.c.l.b16 %v3900
    %v6975 = vunpack.c.h.b16 %v3900
    %v6976 = vunpack.c.l.b16 %v3901
    %v6977 = vunpack.c.h.b16 %v3901
    %v6978 = vunpack.c.l.b16 %v3902
    %v6979 = vunpack.c.h.b16 %v3902
    %v6980 = vunpack.c.l.b16 %v3903
    %v6981 = vunpack.c.h.b16 %v3903
    %v6982 = vunpack.c.l.b16 %v3904
    %v6983 = vunpack.c.h.b16 %v3904
    %v6984 = vunpack.c.l.b16 %v3905
    %v6985 = vunpack.c.h.b16 %v3905
    %v6986 = vunpack.c.l.b16 %v3906
    %v6987 = vunpack.c.h.b16 %v3906
    %v6988 = vunpack.c.l.b16 %v3907
    %v6989 = vunpack.c.h.b16 %v3907
    %v6990 = vunpack.c.l.b16 %v3908
    %v6991 = vunpack.c.h.b16 %v3908
    %v6992 = vunpack.c.l.b16 %v3909
    %v6993 = vunpack.c.h.b16 %v3909
    %v6994 = vunpack.c.l.b16 %v3910
    %v6995 = vunpack.c.h.b16 %v3910
    %v6996 = vunpack.c.l.b16 %v3911
    %v6997 = vunpack.c.h.b16 %v3911
    %v6998 = vunpack.c.l.b16 %v3912
    %v6999 = vunpack.c.h.b16 %v3912
    %v7000 = vunpack.c.l.b16 %v3913
    %v7001 = vunpack.c.h.b16 %v3913
    %v7002 = vunpack.c.l.b16 %v3914
    %v7003 = vunpack.c.h.b16 %v3914
    %v7004 = vunpack.c.l.b16 %v3915
    %v7005 = vunpack.c.h.b16 %v3915
    %v7006 = vunpack.c.l.b16 %v3916
    %v7007 = vunpack.c.h.b16 %v3916
    %v7008 = vunpack.c.l.b16 %v3917
    %v7009 = vunpack.c.h.b16 %v3917
    %v7010 = vunpack.c.l.b16 %v3918
    %v7011 = vunpack.c.h.b16 %v3918
    %v7012 = vunpack.c.l.b16 %v3919
    %v7013 = vunpack.c.h.b16 %v3919
    %v7014 = vunpack.c.l.b16 %v3920
    %v7015 = vunpack.c.h.b16 %v3920
    %v7016 = vunpack.c.l.b16 %v3921
    %v7017 = vunpack.c.h.b16 %v3921
    %v7018 = vunpack.c.l.b16 %v3922
    %v7019 = vunpack.c.h.b16 %v3922
    %v7020 = vunpack.c.l.b16 %v3923
    %v7021 = vunpack.c.h.b16 %v3923
    %v7022 = vunpack.c.l.b16 %v3924
    %v7023 = vunpack.c.h.b16 %v3924
    %v7024 = vunpack.c.l.b16 %v3925
    %v7025 = vunpack.c.h.b16 %v3925
    %v7026 = vunpack.c.l.b16 %v3926
    %v7027 = vunpack.c.h.b16 %v3926
    %v7028 = vunpack.c.l.b16 %v3927
    %v7029 = vunpack.c.h.b16 %v3927
    %v7030 = vunpack.c.l.b16 %v3928
    %v7031 = vunpack.c.h.b16 %v3928
    %v7032 = vunpack.c.l.b16 %v3929
    %v7033 = vunpack.c.h.b16 %v3929
    %v7034 = vunpack.c.l.b16 %v3930
    %v7035 = vunpack.c.h.b16 %v3930
    %v7036 = vunpack.c.l.b16 %v3931
    %v7037 = vunpack.c.h.b16 %v3931
    %v7038 = vunpack.c.l.b16 %v3932
    %v7039 = vunpack.c.h.b16 %v3932
    %v7040 = vunpack.c.l.b16 %v3933
    %v7041 = vunpack.c.h.b16 %v3933
    %v7042 = vunpack.c.l.b16 %v3934
    %v7043 = vunpack.c.h.b16 %v3934
    %v7044 = vunpack.c.l.b16 %v3935
    %v7045 = vunpack.c.h.b16 %v3935
    %v7046 = vunpack.c.l.b16 %v3936
    %v7047 = vunpack.c.h.b16 %v3936
    %v7048 = vunpack.c.l.b16 %v3937
    %v7049 = vunpack.c.h.b16 %v3937
    %v7050 = vunpack.c.l.b16 %v3938
    %v7051 = vunpack.c.h.b16 %v3938
    %v7052 = vunpack.c.l.b16 %v3939
    %v7053 = vunpack.c.h.b16 %v3939
    %v7054 = vunpack.c.l.b16 %v3940
    %v7055 = vunpack.c.h.b16 %v3940
    %v7056 = vunpack.c.l.b16 %v3941
    %v7057 = vunpack.c.h.b16 %v3941
    %v7058 = vunpack.c.l.b16 %v3942
    %v7059 = vunpack.c.h.b16 %v3942
    %v7060 = vunpack.c.l.b16 %v3943
    %v7061 = vunpack.c.h.b16 %v3943
    %v7062 = vunpack.c.l.b16 %v3944
    %v7063 = vunpack.c.h.b16 %v3944
    %v7064 = vunpack.c.l.b16 %v3945
    %v7065 = vunpack.c.h.b16 %v3945
    %v7066 = vunpack.c.l.b16 %v3946
    %v7067 = vunpack.c.h.b16 %v3946
    %v7068 = vunpack.c.l.b16 %v3947
    %v7069 = vunpack.c.h.b16 %v3947
    %v7070 = vunpack.c.l.b16 %v3948
    %v7071 = vunpack.c.h.b16 %v3948
    %v7072 = vunpack.c.l.b16 %v3949
    %v7073 = vunpack.c.h.b16 %v3949
    %v7074 = vunpack.c.l.b16 %v3950
    %v7075 = vunpack.c.h.b16 %v3950
    %v7076 = vunpack.c.l.b16 %v3951
    %v7077 = vunpack.c.h.b16 %v3951
    %v7078 = vunpack.c.l.b16 %v3952
    %v7079 = vunpack.c.h.b16 %v3952
    %v7080 = vunpack.c.l.b16 %v3953
    %v7081 = vunpack.c.h.b16 %v3953
    %v7082 = vunpack.c.l.b16 %v3954
    %v7083 = vunpack.c.h.b16 %v3954
    %v7084 = vunpack.c.l.b16 %v3955
    %v7085 = vunpack.c.h.b16 %v3955
    %v7086 = vunpack.c.l.b16 %v3956
    %v7087 = vunpack.c.h.b16 %v3956
    %v7088 = vunpack.c.l.b16 %v3957
    %v7089 = vunpack.c.h.b16 %v3957
    %v7090 = vunpack.c.l.b16 %v3958
    %v7091 = vunpack.c.h.b16 %v3958
    %v7092 = vunpack.c.l.b16 %v3959
    %v7093 = vunpack.c.h.b16 %v3959
    %v7094 = vunpack.c.l.b16 %v3960
    %v7095 = vunpack.c.h.b16 %v3960
    %v7096 = vunpack.c.l.b16 %v3961
    %v7097 = vunpack.c.h.b16 %v3961
    %v7098 = vunpack.c.l.b16 %v3962
    %v7099 = vunpack.c.h.b16 %v3962
    %v7100 = vunpack.c.l.b16 %v3963
    %v7101 = vunpack.c.h.b16 %v3963
    %v7102 = vunpack.c.l.b16 %v3964
    %v7103 = vunpack.c.h.b16 %v3964
    %v7104 = vunpack.c.l.b16 %v3965
    %v7105 = vunpack.c.h.b16 %v3965
    %v7106 = vunpack.c.l.b16 %v3966
    %v7107 = vunpack.c.h.b16 %v3966
    %v7108 = vunpack.c.l.b16 %v3967
    %v7109 = vunpack.c.h.b16 %v3967
    %v7110 = vunpack.c.l.b16 %v3968
    %v7111 = vunpack.c.h.b16 %v3968
    %v7112 = vunpack.c.l.b16 %v3969
    %v7113 = vunpack.c.h.b16 %v3969
    %v7114 = vunpack.c.l.b16 %v3970
    %v7115 = vunpack.c.h.b16 %v3970
    %v7116 = vunpack.c.l.b16 %v3971
    %v7117 = vunpack.c.h.b16 %v3971
    %v7118 = vunpack.c.l.b16 %v3972
    %v7119 = vunpack.c.h.b16 %v3972
    %v7120 = vunpack.c.l.b16 %v3973
    %v7121 = vunpack.c.h.b16 %v3973
    %v7122 = vunpack.c.l.b16 %v3974
    %v7123 = vunpack.c.h.b16 %v3974
    %v7124 = vunpack.c.l.b16 %v3975
    %v7125 = vunpack.c.h.b16 %v3975
    %v7126 = vunpack.c.l.b16 %v3976
    %v7127 = vunpack.c.h.b16 %v3976
    %v7128 = vunpack.c.l.b16 %v3977
    %v7129 = vunpack.c.h.b16 %v3977
    %v7130 = vunpack.c.l.b16 %v3978
    %v7131 = vunpack.c.h.b16 %v3978
    %v7132 = vunpack.c.l.b16 %v3979
    %v7133 = vunpack.c.h.b16 %v3979
    %v7134 = vunpack.c.l.b16 %v3980
    %v7135 = vunpack.c.h.b16 %v3980
    %v7136 = vunpack.c.l.b16 %v3981
    %v7137 = vunpack.c.h.b16 %v3981
    %v7138 = vpack.c.b16 %v5106, %v5090
    %v7139 = vpack.c.b16 %v5107, %v5091
    %v7140 = vpack.c.b16 %v5108, %v5092
    %v7141 = vpack.c.b16 %v5109, %v5093
    %v7142 = vpack.c.b16 %v5110, %v5094
    %v7143 = vpack.c.b16 %v5111, %v5095
    %v7144 = vpack.c.b16 %v5112, %v5096
    %v7145 = vpack.c.b16 %v5113, %v5097
    %v7146 = vpack.c.b16 %v5114, %v5098
    %v7147 = vpack.c.b16 %v5115, %v5099
    %v7148 = vpack.c.b16 %v5116, %v5100
    %v7149 = vpack.c.b16 %v5117, %v5101
    %v7150 = vpack.c.b16 %v5118, %v5102
    %v7151 = vpack.c.b16 %v5119, %v5103
    %v7152 = vpack.c.b16 %v5120, %v5104
    %v7153 = vpack.c.b16 %v5121, %v5105
    %v7154 = vpack.c.b16 %v5138, %v5122
    %v7155 = vpack.c.b16 %v5139, %v5123
    %v7156 = vpack.c.b16 %v5140, %v5124
    %v7157 = vpack.c.b16 %v5141, %v5125
    %v7158 = vpack.c.b16 %v5142, %v5126
    %v7159 = vpack.c.b16 %v5143, %v5127
    %v7160 = vpack.c.b16 %v5144, %v5128
    %v7161 = vpack.c.b16 %v5145, %v5129
    %v7162 = vpack.c.b16 %v5146, %v5130
    %v7163 = vpack.c.b16 %v5147, %v5131
    %v7164 = vpack.c.b16 %v5148, %v5132
    %v7165 = vpack.c.b16 %v5149, %v5133
    %v7166 = vpack.c.b16 %v5150, %v5134
    %v7167 = vpack.c.b16 %v5151, %v5135
    %v7168 = vpack.c.b16 %v5152, %v5136
    %v7169 = vpack.c.b16 %v5153, %v5137
    %v7170 = vpack.c.b16 %v5170, %v5154
    %v7171 = vpack.c.b16 %v5171, %v5155
    %v7172 = vpack.c.b16 %v5172, %v5156
    %v7173 = vpack.c.b16 %v5173, %v5157
    %v7174 = vpack.c.b16 %v5174, %v5158
    %v7175 = vpack.c.b16 %v5175, %v5159
    %v7176 = vpack.c.b16 %v5176, %v5160
    %v7177 = vpack.c.b16 %v5177, %v5161
    %v7178 = vpack.c.b16 %v5178, %v5162
    %v7179 = vpack.c.b16 %v5179, %v5163
    %v7180 = vpack.c.b16 %v5180, %v5164
    %v7181 = vpack.c.b16 %v5181, %v5165
    %v7182 = vpack.c.b16 %v5182, %v5166
    %v7183 = vpack.c.b16 %v5183, %v5167
    %v7184 = vpack.c.b16 %v5184, %v5168
    %v7185 = vpack.c.b16 %v5185, %v5169
    %v7186 = vpack.c.b16 %v5202, %v5186
    %v7187 = vpack.c.b16 %v5203, %v5187
    %v7188 = vpack.c.b16 %v5204, %v5188
    %v7189 = vpack.c.b16 %v5205, %v5189
    %v7190 = vpack.c.b16 %v5206, %v5190
    %v7191 = vpack.c.b16 %v5207, %v5191
    %v7192 = vpack.c.b16 %v5208, %v5192
    %v7193 = vpack.c.b16 %v5209, %v5193
    %v7194 = vpack.c.b16 %v5210, %v5194
    %v7195 = vpack.c.b16 %v5211, %v5195
    %v7196 = vpack.c.b16 %v5212, %v5196
    %v7197 = vpack.c.b16 %v5213, %v5197
    %v7198 = vpack.c.b16 %v5214, %v5198
    %v7199 = vpack.c.b16 %v5215, %v5199
    %v7200 = vpack.c.b16 %v5216, %v5200
    %v7201 = vpack.c.b16 %v5217, %v5201
    %v7202 = vpack.c.b16 %v5234, %v5218
    %v7203 = vpack.c.b16 %v5235, %v5219
    %v7204 = vpack.c.b16 %v5236, %v5220
    %v7205 = vpack.c.b16 %v5237, %v5221
    %v7206 = vpack.c.b16 %v5238, %v5222
    %v7207 = vpack.c.b16 %v5239, %v5223
    %v7208 = vpack.c.b16 %v5240, %v5224
    %v7209 = vpack.c.b16 %v5241, %v5225
    %v7210 = vpack.c.b16 %v5242, %v5226
    %v7211 = vpack.c.b16 %v5243, %v5227
    %v7212 = vpack.c.b16 %v5244, %v5228
    %v7213 = vpack.c.b16 %v5245, %v5229
    %v7214 = vpack.c.b16 %v5246, %v5230
    %v7215 = vpack.c.b16 %v5247, %v5231
    %v7216 = vpack.c.b16 %v5248, %v5232
    %v7217 = vpack.c.b16 %v5249, %v5233
    %v7218 = vpack.c.b16 %v5266, %v5250
    %v7219 = vpack.c.b16 %v5267, %v5251
    %v7220 = vpack.c.b16 %v5268, %v5252
    %v7221 = vpack.c.b16 %v5269, %v5253
    %v7222 = vpack.c.b16 %v5270, %v5254
    %v7223 = vpack.c.b16 %v5271, %v5255
    %v7224 = vpack.c.b16 %v5272, %v5256
    %v7225 = vpack.c.b16 %v5273, %v5257
    %v7226 = vpack.c.b16 %v5274, %v5258
    %v7227 = vpack.c.b16 %v5275, %v5259
    %v7228 = vpack.c.b16 %v5276, %v5260
    %v7229 = vpack.c.b16 %v5277, %v5261
    %v7230 = vpack.c.b16 %v5278, %v5262
    %v7231 = vpack.c.b16 %v5279, %v5263
    %v7232 = vpack.c.b16 %v5280, %v5264
    %v7233 = vpack.c.b16 %v5281, %v5265
    %v7234 = vpack.c.b16 %v5298, %v5282
    %v7235 = vpack.c.b16 %v5299, %v5283
    %v7236 = vpack.c.b16 %v5300, %v5284
    %v7237 = vpack.c.b16 %v5301, %v5285
    %v7238 = vpack.c.b16 %v5302, %v5286
    %v7239 = vpack.c.b16 %v5303, %v5287
    %v7240 = vpack.c.b16 %v5304, %v5288
    %v7241 = vpack.c.b16 %v5305, %v5289
    %v7242 = vpack.c.b16 %v5306, %v5290
    %v7243 = vpack.c.b16 %v5307, %v5291
    %v7244 = vpack.c.b16 %v5308, %v5292
    %v7245 = vpack.c.b16 %v5309, %v5293
    %v7246 = vpack.c.b16 %v5310, %v5294
    %v7247 = vpack.c.b16 %v5311, %v5295
    %v7248 = vpack.c.b16 %v5312, %v5296
    %v7249 = vpack.c.b16 %v5313, %v5297
    %v7250 = vpack.c.b16 %v5330, %v5314
    %v7251 = vpack.c.b16 %v5331, %v5315
    %v7252 = vpack.c.b16 %v5332, %v5316
    %v7253 = vpack.c.b16 %v5333, %v5317
    %v7254 = vpack.c.b16 %v5334, %v5318
    %v7255 = vpack.c.b16 %v5335, %v5319
    %v7256 = vpack.c.b16 %v5336, %v5320
    %v7257 = vpack.c.b16 %v5337, %v5321
    %v7258 = vpack.c.b16 %v5338, %v5322
    %v7259 = vpack.c.b16 %v5339, %v5323
    %v7260 = vpack.c.b16 %v5340, %v5324
    %v7261 = vpack.c.b16 %v5341, %v5325
    %v7262 = vpack.c.b16 %v5342, %v5326
    %v7263 = vpack.c.b16 %v5343, %v5327
    %v7264 = vpack.c.b16 %v5344, %v5328
    %v7265 = vpack.c.b16 %v5345, %v5329
    %v7266 = vpack.c.b16 %v5362, %v5346
    %v7267 = vpack.c.b16 %v5363, %v5347
    %v7268 = vpack.c.b16 %v5364, %v5348
    %v7269 = vpack.c.b16 %v5365, %v5349
    %v7270 = vpack.c.b16 %v5366, %v5350
    %v7271 = vpack.c.b16 %v5367, %v5351
    %v7272 = vpack.c.b16 %v5368, %v5352
    %v7273 = vpack.c.b16 %v5369, %v5353
    %v7274 = vpack.c.b16 %v5370, %v5354
    %v7275 = vpack.c.b16 %v5371, %v5355
    %v7276 = vpack.c.b16 %v5372, %v5356
    %v7277 = vpack.c.b16 %v5373, %v5357
    %v7278 = vpack.c.b16 %v5374, %v5358
    %v7279 = vpack.c.b16 %v5375, %v5359
    %v7280 = vpack.c.b16 %v5376, %v5360
    %v7281 = vpack.c.b16 %v5377, %v5361
    %v7282 = vpack.c.b16 %v5394, %v5378
    %v7283 = vpack.c.b16 %v5395, %v5379
    %v7284 = vpack.c.b16 %v5396, %v5380
    %v7285 = vpack.c.b16 %v5397, %v5381
    %v7286 = vpack.c.b16 %v5398, %v5382
    %v7287 = vpack.c.b16 %v5399, %v5383
    %v7288 = vpack.c.b16 %v5400, %v5384
    %v7289 = vpack.c.b16 %v5401, %v5385
    %v7290 = vpack.c.b16 %v5402, %v5386
    %v7291 = vpack.c.b16 %v5403, %v5387
    %v7292 = vpack.c.b16 %v5404, %v5388
    %v7293 = vpack.c.b16 %v5405, %v5389
    %v7294 = vpack.c.b16 %v5406, %v5390
    %v7295 = vpack.c.b16 %v5407, %v5391
    %v7296 = vpack.c.b16 %v5408, %v5392
    %v7297 = vpack.c.b16 %v5409, %v5393
    %v7298 = vpack.c.b16 %v5426, %v5410
    %v7299 = vpack.c.b16 %v5427, %v5411
    %v7300 = vpack.c.b16 %v5428, %v5412
    %v7301 = vpack.c.b16 %v5429, %v5413
    %v7302 = vpack.c.b16 %v5430, %v5414
    %v7303 = vpack.c.b16 %v5431, %v5415
    %v7304 = vpack.c.b16 %v5432, %v5416
    %v7305 = vpack.c.b16 %v5433, %v5417
    %v7306 = vpack.c.b16 %v5434, %v5418
    %v7307 = vpack.c.b16 %v5435, %v5419
    %v7308 = vpack.c.b16 %v5436, %v5420
    %v7309 = vpack.c.b16 %v5437, %v5421
    %v7310 = vpack.c.b16 %v5438, %v5422
    %v7311 = vpack.c.b16 %v5439, %v5423
    %v7312 = vpack.c.b16 %v5440, %v5424
    %v7313 = vpack.c.b16 %v5441, %v5425
    %v7314 = vpack.c.b16 %v5458, %v5442
    %v7315 = vpack.c.b16 %v5459, %v5443
    %v7316 = vpack.c.b16 %v5460, %v5444
    %v7317 = vpack.c.b16 %v5461, %v5445
    %v7318 = vpack.c.b16 %v5462, %v5446
    %v7319 = vpack.c.b16 %v5463, %v5447
    %v7320 = vpack.c.b16 %v5464, %v5448
    %v7321 = vpack.c.b16 %v5465, %v5449
    %v7322 = vpack.c.b16 %v5466, %v5450
    %v7323 = vpack.c.b16 %v5467, %v5451
    %v7324 = vpack.c.b16 %v5468, %v5452
    %v7325 = vpack.c.b16 %v5469, %v5453
    %v7326 = vpack.c.b16 %v5470, %v5454
    %v7327 = vpack.c.b16 %v5471, %v5455
    %v7328 = vpack.c.b16 %v5472, %v5456
    %v7329 = vpack.c.b16 %v5473, %v5457
    %v7330 = vpack.c.b16 %v5490, %v5474
    %v7331 = vpack.c.b16 %v5491, %v5475
    %v7332 = vpack.c.b16 %v5492, %v5476
    %v7333 = vpack.c.b16 %v5493, %v5477
    %v7334 = vpack.c.b16 %v5494, %v5478
    %v7335 = vpack.c.b16 %v5495, %v5479
    %v7336 = vpack.c.b16 %v5496, %v5480
    %v7337 = vpack.c.b16 %v5497, %v5481
    %v7338 = vpack.c.b16 %v5498, %v5482
    %v7339 = vpack.c.b16 %v5499, %v5483
    %v7340 = vpack.c.b16 %v5500, %v5484
    %v7341 = vpack.c.b16 %v5501, %v5485
    %v7342 = vpack.c.b16 %v5502, %v5486
    %v7343 = vpack.c.b16 %v5503, %v5487
    %v7344 = vpack.c.b16 %v5504, %v5488
    %v7345 = vpack.c.b16 %v5505, %v5489
    %v7346 = vpack.c.b16 %v5522, %v5506
    %v7347 = vpack.c.b16 %v5523, %v5507
    %v7348 = vpack.c.b16 %v5524, %v5508
    %v7349 = vpack.c.b16 %v5525, %v5509
    %v7350 = vpack.c.b16 %v5526, %v5510
    %v7351 = vpack.c.b16 %v5527, %v5511
    %v7352 = vpack.c.b16 %v5528, %v5512
    %v7353 = vpack.c.b16 %v5529, %v5513
    %v7354 = vpack.c.b16 %v5530, %v5514
    %v7355 = vpack.c.b16 %v5531, %v5515
    %v7356 = vpack.c.b16 %v5532, %v5516
    %v7357 = vpack.c.b16 %v5533, %v5517
    %v7358 = vpack.c.b16 %v5534, %v5518
    %v7359 = vpack.c.b16 %v5535, %v5519
    %v7360 = vpack.c.b16 %v5536, %v5520
    %v7361 = vpack.c.b16 %v5537, %v5521
    %v7362 = vpack.c.b16 %v5554, %v5538
    %v7363 = vpack.c.b16 %v5555, %v5539
    %v7364 = vpack.c.b16 %v5556, %v5540
    %v7365 = vpack.c.b16 %v5557, %v5541
    %v7366 = vpack.c.b16 %v5558, %v5542
    %v7367 = vpack.c.b16 %v5559, %v5543
    %v7368 = vpack.c.b16 %v5560, %v5544
    %v7369 = vpack.c.b16 %v5561, %v5545
    %v7370 = vpack.c.b16 %v5562, %v5546
    %v7371 = vpack.c.b16 %v5563, %v5547
    %v7372 = vpack.c.b16 %v5564, %v5548
    %v7373 = vpack.c.b16 %v5565, %v5549
    %v7374 = vpack.c.b16 %v5566, %v5550
    %v7375 = vpack.c.b16 %v5567, %v5551
    %v7376 = vpack.c.b16 %v5568, %v5552
    %v7377 = vpack.c.b16 %v5569, %v5553
    %v7378 = vpack.c.b16 %v5586, %v5570
    %v7379 = vpack.c.b16 %v5587, %v5571
    %v7380 = vpack.c.b16 %v5588, %v5572
    %v7381 = vpack.c.b16 %v5589, %v5573
    %v7382 = vpack.c.b16 %v5590, %v5574
    %v7383 = vpack.c.b16 %v5591, %v5575
    %v7384 = vpack.c.b16 %v5592, %v5576
    %v7385 = vpack.c.b16 %v5593, %v5577
    %v7386 = vpack.c.b16 %v5594, %v5578
    %v7387 = vpack.c.b16 %v5595, %v5579
    %v7388 = vpack.c.b16 %v5596, %v5580
    %v7389 = vpack.c.b16 %v5597, %v5581
    %v7390 = vpack.c.b16 %v5598, %v5582
    %v7391 = vpack.c.b16 %v5599, %v5583
    %v7392 = vpack.c.b16 %v5600, %v5584
    %v7393 = vpack.c.b16 %v5601, %v5585
    %v7394 = vpack.c.b16 %v5618, %v5602
    %v7395 = vpack.c.b16 %v5619, %v5603
    %v7396 = vpack.c.b16 %v5620, %v5604
    %v7397 = vpack.c.b16 %v5621, %v5605
    %v7398 = vpack.c.b16 %v5622, %v5606
    %v7399 = vpack.c.b16 %v5623, %v5607
    %v7400 = vpack.c.b16 %v5624, %v5608
    %v7401 = vpack.c.b16 %v5625, %v5609
    %v7402 = vpack.c.b16 %v5626, %v5610
    %v7403 = vpack.c.b16 %v5627, %v5611
    %v7404 = vpack.c.b16 %v5628, %v5612
    %v7405 = vpack.c.b16 %v5629, %v5613
    %v7406 = vpack.c.b16 %v5630, %v5614
    %v7407 = vpack.c.b16 %v5631, %v5615
    %v7408 = vpack.c.b16 %v5632, %v5616
    %v7409 = vpack.c.b16 %v5633, %v5617
    %v7410 = vpack.c.b16 %v5650, %v5634
    %v7411 = vpack.c.b16 %v5651, %v5635
    %v7412 = vpack.c.b16 %v5652, %v5636
    %v7413 = vpack.c.b16 %v5653, %v5637
    %v7414 = vpack.c.b16 %v5654, %v5638
    %v7415 = vpack.c.b16 %v5655, %v5639
    %v7416 = vpack.c.b16 %v5656, %v5640
    %v7417 = vpack.c.b16 %v5657, %v5641
    %v7418 = vpack.c.b16 %v5658, %v5642
    %v7419 = vpack.c.b16 %v5659, %v5643
    %v7420 = vpack.c.b16 %v5660, %v5644
    %v7421 = vpack.c.b16 %v5661, %v5645
    %v7422 = vpack.c.b16 %v5662, %v5646
    %v7423 = vpack.c.b16 %v5663, %v5647
    %v7424 = vpack.c.b16 %v5664, %v5648
    %v7425 = vpack.c.b16 %v5665, %v5649
    %v7426 = vpack.c.b16 %v5682, %v5666
    %v7427 = vpack.c.b16 %v5683, %v5667
    %v7428 = vpack.c.b16 %v5684, %v5668
    %v7429 = vpack.c.b16 %v5685, %v5669
    %v7430 = vpack.c.b16 %v5686, %v5670
    %v7431 = vpack.c.b16 %v5687, %v5671
    %v7432 = vpack.c.b16 %v5688, %v5672
    %v7433 = vpack.c.b16 %v5689, %v5673
    %v7434 = vpack.c.b16 %v5690, %v5674
    %v7435 = vpack.c.b16 %v5691, %v5675
    %v7436 = vpack.c.b16 %v5692, %v5676
    %v7437 = vpack.c.b16 %v5693, %v5677
    %v7438 = vpack.c.b16 %v5694, %v5678
    %v7439 = vpack.c.b16 %v5695, %v5679
    %v7440 = vpack.c.b16 %v5696, %v5680
    %v7441 = vpack.c.b16 %v5697, %v5681
    %v7442 = vpack.c.b16 %v5714, %v5698
    %v7443 = vpack.c.b16 %v5715, %v5699
    %v7444 = vpack.c.b16 %v5716, %v5700
    %v7445 = vpack.c.b16 %v5717, %v5701
    %v7446 = vpack.c.b16 %v5718, %v5702
    %v7447 = vpack.c.b16 %v5719, %v5703
    %v7448 = vpack.c.b16 %v5720, %v5704
    %v7449 = vpack.c.b16 %v5721, %v5705
    %v7450 = vpack.c.b16 %v5722, %v5706
    %v7451 = vpack.c.b16 %v5723, %v5707
    %v7452 = vpack.c.b16 %v5724, %v5708
    %v7453 = vpack.c.b16 %v5725, %v5709
    %v7454 = vpack.c.b16 %v5726, %v5710
    %v7455 = vpack.c.b16 %v5727, %v5711
    %v7456 = vpack.c.b16 %v5728, %v5712
    %v7457 = vpack.c.b16 %v5729, %v5713
    %v7458 = vpack.c.b16 %v5746, %v5730
    %v7459 = vpack.c.b16 %v5747, %v5731
    %v7460 = vpack.c.b16 %v5748, %v5732
    %v7461 = vpack.c.b16 %v5749, %v5733
    %v7462 = vpack.c.b16 %v5750, %v5734
    %v7463 = vpack.c.b16 %v5751, %v5735
    %v7464 = vpack.c.b16 %v5752, %v5736
    %v7465 = vpack.c.b16 %v5753, %v5737
    %v7466 = vpack.c.b16 %v5754, %v5738
    %v7467 = vpack.c.b16 %v5755, %v5739
    %v7468 = vpack.c.b16 %v5756, %v5740
    %v7469 = vpack.c.b16 %v5757, %v5741
    %v7470 = vpack.c.b16 %v5758, %v5742
    %v7471 = vpack.c.b16 %v5759, %v5743
    %v7472 = vpack.c.b16 %v5760, %v5744
    %v7473 = vpack.c.b16 %v5761, %v5745
    %v7474 = vpack.c.b16 %v5778, %v5762
    %v7475 = vpack.c.b16 %v5779, %v5763
    %v7476 = vpack.c.b16 %v5780, %v5764
    %v7477 = vpack.c.b16 %v5781, %v5765
    %v7478 = vpack.c.b16 %v5782, %v5766
    %v7479 = vpack.c.b16 %v5783, %v5767
    %v7480 = vpack.c.b16 %v5784, %v5768
    %v7481 = vpack.c.b16 %v5785, %v5769
    %v7482 = vpack.c.b16 %v5786, %v5770
    %v7483 = vpack.c.b16 %v5787, %v5771
    %v7484 = vpack.c.b16 %v5788, %v5772
    %v7485 = vpack.c.b16 %v5789, %v5773
    %v7486 = vpack.c.b16 %v5790, %v5774
    %v7487 = vpack.c.b16 %v5791, %v5775
    %v7488 = vpack.c.b16 %v5792, %v5776
    %v7489 = vpack.c.b16 %v5793, %v5777
    %v7490 = vpack.c.b16 %v5810, %v5794
    %v7491 = vpack.c.b16 %v5811, %v5795
    %v7492 = vpack.c.b16 %v5812, %v5796
    %v7493 = vpack.c.b16 %v5813, %v5797
    %v7494 = vpack.c.b16 %v5814, %v5798
    %v7495 = vpack.c.b16 %v5815, %v5799
    %v7496 = vpack.c.b16 %v5816, %v5800
    %v7497 = vpack.c.b16 %v5817, %v5801
    %v7498 = vpack.c.b16 %v5818, %v5802
    %v7499 = vpack.c.b16 %v5819, %v5803
    %v7500 = vpack.c.b16 %v5820, %v5804
    %v7501 = vpack.c.b16 %v5821, %v5805
    %v7502 = vpack.c.b16 %v5822, %v5806
    %v7503 = vpack.c.b16 %v5823, %v5807
    %v7504 = vpack.c.b16 %v5824, %v5808
    %v7505 = vpack.c.b16 %v5825, %v5809
    %v7506 = vpack.c.b16 %v5842, %v5826
    %v7507 = vpack.c.b16 %v5843, %v5827
    %v7508 = vpack.c.b16 %v5844, %v5828
    %v7509 = vpack.c.b16 %v5845, %v5829
    %v7510 = vpack.c.b16 %v5846, %v5830
    %v7511 = vpack.c.b16 %v5847, %v5831
    %v7512 = vpack.c.b16 %v5848, %v5832
    %v7513 = vpack.c.b16 %v5849, %v5833
    %v7514 = vpack.c.b16 %v5850, %v5834
    %v7515 = vpack.c.b16 %v5851, %v5835
    %v7516 = vpack.c.b16 %v5852, %v5836
    %v7517 = vpack.c.b16 %v5853, %v5837
    %v7518 = vpack.c.b16 %v5854, %v5838
    %v7519 = vpack.c.b16 %v5855, %v5839
    %v7520 = vpack.c.b16 %v5856, %v5840
    %v7521 = vpack.c.b16 %v5857, %v5841
    %v7522 = vpack.c.b16 %v5874, %v5858
    %v7523 = vpack.c.b16 %v5875, %v5859
    %v7524 = vpack.c.b16 %v5876, %v5860
    %v7525 = vpack.c.b16 %v5877, %v5861
    %v7526 = vpack.c.b16 %v5878, %v5862
    %v7527 = vpack.c.b16 %v5879, %v5863
    %v7528 = vpack.c.b16 %v5880, %v5864
    %v7529 = vpack.c.b16 %v5881, %v5865
    %v7530 = vpack.c.b16 %v5882, %v5866
    %v7531 = vpack.c.b16 %v5883, %v5867
    %v7532 = vpack.c.b16 %v5884, %v5868
    %v7533 = vpack.c.b16 %v5885, %v5869
    %v7534 = vpack.c.b16 %v5886, %v5870
    %v7535 = vpack.c.b16 %v5887, %v5871
    %v7536 = vpack.c.b16 %v5888, %v5872
    %v7537 = vpack.c.b16 %v5889, %v5873
    %v7538 = vpack.c.b16 %v5906, %v5890
    %v7539 = vpack.c.b16 %v5907, %v5891
    %v7540 = vpack.c.b16 %v5908, %v5892
    %v7541 = vpack.c.b16 %v5909, %v5893
    %v7542 = vpack.c.b16 %v5910, %v5894
    %v7543 = vpack.c.b16 %v5911, %v5895
    %v7544 = vpack.c.b16 %v5912, %v5896
    %v7545 = vpack.c.b16 %v5913, %v5897
    %v7546 = vpack.c.b16 %v5914, %v5898
    %v7547 = vpack.c.b16 %v5915, %v5899
    %v7548 = vpack.c.b16 %v5916, %v5900
    %v7549 = vpack.c.b16 %v5917, %v5901
    %v7550 = vpack.c.b16 %v5918, %v5902
    %v7551 = vpack.c.b16 %v5919, %v5903
    %v7552 = vpack.c.b16 %v5920, %v5904
    %v7553 = vpack.c.b16 %v5921, %v5905
    %v7554 = vpack.c.b16 %v5938, %v5922
    %v7555 = vpack.c.b16 %v5939, %v5923
    %v7556 = vpack.c.b16 %v5940, %v5924
    %v7557 = vpack.c.b16 %v5941, %v5925
    %v7558 = vpack.c.b16 %v5942, %v5926
    %v7559 = vpack.c.b16 %v5943, %v5927
    %v7560 = vpack.c.b16 %v5944, %v5928
    %v7561 = vpack.c.b16 %v5945, %v5929
    %v7562 = vpack.c.b16 %v5946, %v5930
    %v7563 = vpack.c.b16 %v5947, %v5931
    %v7564 = vpack.c.b16 %v5948, %v5932
    %v7565 = vpack.c.b16 %v5949, %v5933
    %v7566 = vpack.c.b16 %v5950, %v5934
    %v7567 = vpack.c.b16 %v5951, %v5935
    %v7568 = vpack.c.b16 %v5952, %v5936
    %v7569 = vpack.c.b16 %v5953, %v5937
    %v7570 = vpack.c.b16 %v5970, %v5954
    %v7571 = vpack.c.b16 %v5971, %v5955
    %v7572 = vpack.c.b16 %v5972, %v5956
    %v7573 = vpack.c.b16 %v5973, %v5957
    %v7574 = vpack.c.b16 %v5974, %v5958
    %v7575 = vpack.c.b16 %v5975, %v5959
    %v7576 = vpack.c.b16 %v5976, %v5960
    %v7577 = vpack.c.b16 %v5977, %v5961
    %v7578 = vpack.c.b16 %v5978, %v5962
    %v7579 = vpack.c.b16 %v5979, %v5963
    %v7580 = vpack.c.b16 %v5980, %v5964
    %v7581 = vpack.c.b16 %v5981, %v5965
    %v7582 = vpack.c.b16 %v5982, %v5966
    %v7583 = vpack.c.b16 %v5983, %v5967
    %v7584 = vpack.c.b16 %v5984, %v5968
    %v7585 = vpack.c.b16 %v5985, %v5969
    %v7586 = vpack.c.b16 %v6002, %v5986
    %v7587 = vpack.c.b16 %v6003, %v5987
    %v7588 = vpack.c.b16 %v6004, %v5988
    %v7589 = vpack.c.b16 %v6005, %v5989
    %v7590 = vpack.c.b16 %v6006, %v5990
    %v7591 = vpack.c.b16 %v6007, %v5991
    %v7592 = vpack.c.b16 %v6008, %v5992
    %v7593 = vpack.c.b16 %v6009, %v5993
    %v7594 = vpack.c.b16 %v6010, %v5994
    %v7595 = vpack.c.b16 %v6011, %v5995
    %v7596 = vpack.c.b16 %v6012, %v5996
    %v7597 = vpack.c.b16 %v6013, %v5997
    %v7598 = vpack.c.b16 %v6014, %v5998
    %v7599 = vpack.c.b16 %v6015, %v5999
    %v7600 = vpack.c.b16 %v6016, %v6000
    %v7601 = vpack.c.b16 %v6017, %v6001
    %v7602 = vpack.c.b16 %v6034, %v6018
    %v7603 = vpack.c.b16 %v6035, %v6019
    %v7604 = vpack.c.b16 %v6036, %v6020
    %v7605 = vpack.c.b16 %v6037, %v6021
    %v7606 = vpack.c.b16 %v6038, %v6022
    %v7607 = vpack.c.b16 %v6039, %v6023
    %v7608 = vpack.c.b16 %v6040, %v6024
    %v7609 = vpack.c.b16 %v6041, %v6025
    %v7610 = vpack.c.b16 %v6042, %v6026
    %v7611 = vpack.c.b16 %v6043, %v6027
    %v7612 = vpack.c.b16 %v6044, %v6028
    %v7613 = vpack.c.b16 %v6045, %v6029
    %v7614 = vpack.c.b16 %v6046, %v6030
    %v7615 = vpack.c.b16 %v6047, %v6031
    %v7616 = vpack.c.b16 %v6048, %v6032
    %v7617 = vpack.c.b16 %v6049, %v6033
    %v7618 = vpack.c.b16 %v6066, %v6050
    %v7619 = vpack.c.b16 %v6067, %v6051
    %v7620 = vpack.c.b16 %v6068, %v6052
    %v7621 = vpack.c.b16 %v6069, %v6053
    %v7622 = vpack.c.b16 %v6070, %v6054
    %v7623 = vpack.c.b16 %v6071, %v6055
    %v7624 = vpack.c.b16 %v6072, %v6056
    %v7625 = vpack.c.b16 %v6073, %v6057
    %v7626 = vpack.c.b16 %v6074, %v6058
    %v7627 = vpack.c.b16 %v6075, %v6059
    %v7628 = vpack.c.b16 %v6076, %v6060
    %v7629 = vpack.c.b16 %v6077, %v6061
    %v7630 = vpack.c.b16 %v6078, %v6062
    %v7631 = vpack.c.b16 %v6079, %v6063
    %v7632 = vpack.c.b16 %v6080, %v6064
    %v7633 = vpack.c.b16 %v6081, %v6065
    %v7634 = vpack.c.b16 %v6098, %v6082
    %v7635 = vpack.c.b16 %v6099, %v6083
    %v7636 = vpack.c.b16 %v6100, %v6084
    %v7637 = vpack.c.b16 %v6101, %v6085
    %v7638 = vpack.c.b16 %v6102, %v6086
    %v7639 = vpack.c.b16 %v6103, %v6087
    %v7640 = vpack.c.b16 %v6104, %v6088
    %v7641 = vpack.c.b16 %v6105, %v6089
    %v7642 = vpack.c.b16 %v6106, %v6090
    %v7643 = vpack.c.b16 %v6107, %v6091
    %v7644 = vpack.c.b16 %v6108, %v6092
    %v7645 = vpack.c.b16 %v6109, %v6093
    %v7646 = vpack.c.b16 %v6110, %v6094
    %v7647 = vpack.c.b16 %v6111, %v6095
    %v7648 = vpack.c.b16 %v6112, %v6096
    %v7649 = vpack.c.b16 %v6113, %v6097
    %v7650 = vpack.c.b16 %v6130, %v6114
    %v7651 = vpack.c.b16 %v6131, %v6115
    %v7652 = vpack.c.b16 %v6132, %v6116
    %v7653 = vpack.c.b16 %v6133, %v6117
    %v7654 = vpack.c.b16 %v6134, %v6118
    %v7655 = vpack.c.b16 %v6135, %v6119
    %v7656 = vpack.c.b16 %v6136, %v6120
    %v7657 = vpack.c.b16 %v6137, %v6121
    %v7658 = vpack.c.b16 %v6138, %v6122
    %v7659 = vpack.c.b16 %v6139, %v6123
    %v7660 = vpack.c.b16 %v6140, %v6124
    %v7661 = vpack.c.b16 %v6141, %v6125
    %v7662 = vpack.c.b16 %v6142, %v6126
    %v7663 = vpack.c.b16 %v6143, %v6127
    %v7664 = vpack.c.b16 %v6144, %v6128
    %v7665 = vpack.c.b16 %v6145, %v6129
    %v7666 = vpack.c.b16 %v6162, %v6146
    %v7667 = vpack.c.b16 %v6163, %v6147
    %v7668 = vpack.c.b16 %v6164, %v6148
    %v7669 = vpack.c.b16 %v6165, %v6149
    %v7670 = vpack.c.b16 %v6166, %v6150
    %v7671 = vpack.c.b16 %v6167, %v6151
    %v7672 = vpack.c.b16 %v6168, %v6152
    %v7673 = vpack.c.b16 %v6169, %v6153
    %v7674 = vpack.c.b16 %v6170, %v6154
    %v7675 = vpack.c.b16 %v6171, %v6155
    %v7676 = vpack.c.b16 %v6172, %v6156
    %v7677 = vpack.c.b16 %v6173, %v6157
    %v7678 = vpack.c.b16 %v6174, %v6158
    %v7679 = vpack.c.b16 %v6175, %v6159
    %v7680 = vpack.c.b16 %v6176, %v6160
    %v7681 = vpack.c.b16 %v6177, %v6161
    %v7682 = vpack.c.b16 %v6194, %v6178
    %v7683 = vpack.c.b16 %v6195, %v6179
    %v7684 = vpack.c.b16 %v6196, %v6180
    %v7685 = vpack.c.b16 %v6197, %v6181
    %v7686 = vpack.c.b16 %v6198, %v6182
    %v7687 = vpack.c.b16 %v6199, %v6183
    %v7688 = vpack.c.b16 %v6200, %v6184
    %v7689 = vpack.c.b16 %v6201, %v6185
    %v7690 = vpack.c.b16 %v6202, %v6186
    %v7691 = vpack.c.b16 %v6203, %v6187
    %v7692 = vpack.c.b16 %v6204, %v6188
    %v7693 = vpack.c.b16 %v6205, %v6189
    %v7694 = vpack.c.b16 %v6206, %v6190
    %v7695 = vpack.c.b16 %v6207, %v6191
    %v7696 = vpack.c.b16 %v6208, %v6192
    %v7697 = vpack.c.b16 %v6209, %v6193
    %v7698 = vpack.c.b16 %v6226, %v6210
    %v7699 = vpack.c.b16 %v6227, %v6211
    %v7700 = vpack.c.b16 %v6228, %v6212
    %v7701 = vpack.c.b16 %v6229, %v6213
    %v7702 = vpack.c.b16 %v6230, %v6214
    %v7703 = vpack.c.b16 %v6231, %v6215
    %v7704 = vpack.c.b16 %v6232, %v6216
    %v7705 = vpack.c.b16 %v6233, %v6217
    %v7706 = vpack.c.b16 %v6234, %v6218
    %v7707 = vpack.c.b16 %v6235, %v6219
    %v7708 = vpack.c.b16 %v6236, %v6220
    %v7709 = vpack.c.b16 %v6237, %v6221
    %v7710 = vpack.c.b16 %v6238, %v6222
    %v7711 = vpack.c.b16 %v6239, %v6223
    %v7712 = vpack.c.b16 %v6240, %v6224
    %v7713 = vpack.c.b16 %v6241, %v6225
    %v7714 = vpack.c.b16 %v6258, %v6242
    %v7715 = vpack.c.b16 %v6259, %v6243
    %v7716 = vpack.c.b16 %v6260, %v6244
    %v7717 = vpack.c.b16 %v6261, %v6245
    %v7718 = vpack.c.b16 %v6262, %v6246
    %v7719 = vpack.c.b16 %v6263, %v6247
    %v7720 = vpack.c.b16 %v6264, %v6248
    %v7721 = vpack.c.b16 %v6265, %v6249
    %v7722 = vpack.c.b16 %v6266, %v6250
    %v7723 = vpack.c.b16 %v6267, %v6251
    %v7724 = vpack.c.b16 %v6268, %v6252
    %v7725 = vpack.c.b16 %v6269, %v6253
    %v7726 = vpack.c.b16 %v6270, %v6254
    %v7727 = vpack.c.b16 %v6271, %v6255
    %v7728 = vpack.c.b16 %v6272, %v6256
    %v7729 = vpack.c.b16 %v6273, %v6257
    %v7730 = vpack.c.b16 %v6290, %v6274
    %v7731 = vpack.c.b16 %v6291, %v6275
    %v7732 = vpack.c.b16 %v6292, %v6276
    %v7733 = vpack.c.b16 %v6293, %v6277
    %v7734 = vpack.c.b16 %v6294, %v6278
    %v7735 = vpack.c.b16 %v6295, %v6279
    %v7736 = vpack.c.b16 %v6296, %v6280
    %v7737 = vpack.c.b16 %v6297, %v6281
    %v7738 = vpack.c.b16 %v6298, %v6282
    %v7739 = vpack.c.b16 %v6299, %v6283
    %v7740 = vpack.c.b16 %v6300, %v6284
    %v7741 = vpack.c.b16 %v6301, %v6285
    %v7742 = vpack.c.b16 %v6302, %v6286
    %v7743 = vpack.c.b16 %v6303, %v6287
    %v7744 = vpack.c.b16 %v6304, %v6288
    %v7745 = vpack.c.b16 %v6305, %v6289
    %v7746 = vpack.c.b16 %v6322, %v6306
    %v7747 = vpack.c.b16 %v6323, %v6307
    %v7748 = vpack.c.b16 %v6324, %v6308
    %v7749 = vpack.c.b16 %v6325, %v6309
    %v7750 = vpack.c.b16 %v6326, %v6310
    %v7751 = vpack.c.b16 %v6327, %v6311
    %v7752 = vpack.c.b16 %v6328, %v6312
    %v7753 = vpack.c.b16 %v6329, %v6313
    %v7754 = vpack.c.b16 %v6330, %v6314
    %v7755 = vpack.c.b16 %v6331, %v6315
    %v7756 = vpack.c.b16 %v6332, %v6316
    %v7757 = vpack.c.b16 %v6333, %v6317
    %v7758 = vpack.c.b16 %v6334, %v6318
    %v7759 = vpack.c.b16 %v6335, %v6319
    %v7760 = vpack.c.b16 %v6336, %v6320
    %v7761 = vpack.c.b16 %v6337, %v6321
    %v7762 = vpack.c.b16 %v6354, %v6338
    %v7763 = vpack.c.b16 %v6355, %v6339
    %v7764 = vpack.c.b16 %v6356, %v6340
    %v7765 = vpack.c.b16 %v6357, %v6341
    %v7766 = vpack.c.b16 %v6358, %v6342
    %v7767 = vpack.c.b16 %v6359, %v6343
    %v7768 = vpack.c.b16 %v6360, %v6344
    %v7769 = vpack.c.b16 %v6361, %v6345
    %v7770 = vpack.c.b16 %v6362, %v6346
    %v7771 = vpack.c.b16 %v6363, %v6347
    %v7772 = vpack.c.b16 %v6364, %v6348
    %v7773 = vpack.c.b16 %v6365, %v6349
    %v7774 = vpack.c.b16 %v6366, %v6350
    %v7775 = vpack.c.b16 %v6367, %v6351
    %v7776 = vpack.c.b16 %v6368, %v6352
    %v7777 = vpack.c.b16 %v6369, %v6353
    %v7778 = vpack.c.b16 %v6386, %v6370
    %v7779 = vpack.c.b16 %v6387, %v6371
    %v7780 = vpack.c.b16 %v6388, %v6372
    %v7781 = vpack.c.b16 %v6389, %v6373
    %v7782 = vpack.c.b16 %v6390, %v6374
    %v7783 = vpack.c.b16 %v6391, %v6375
    %v7784 = vpack.c.b16 %v6392, %v6376
    %v7785 = vpack.c.b16 %v6393, %v6377
    %v7786 = vpack.c.b16 %v6394, %v6378
    %v7787 = vpack.c.b16 %v6395, %v6379
    %v7788 = vpack.c.b16 %v6396, %v6380
    %v7789 = vpack.c.b16 %v6397, %v6381
    %v7790 = vpack.c.b16 %v6398, %v6382
    %v7791 = vpack.c.b16 %v6399, %v6383
    %v7792 = vpack.c.b16 %v6400, %v6384
    %v7793 = vpack.c.b16 %v6401, %v6385
    %v7794 = vpack.c.b16 %v6418, %v6402
    %v7795 = vpack.c.b16 %v6419, %v6403
    %v7796 = vpack.c.b16 %v6420, %v6404
    %v7797 = vpack.c.b16 %v6421, %v6405
    %v7798 = vpack.c.b16 %v6422, %v6406
    %v7799 = vpack.c.b16 %v6423, %v6407
    %v7800 = vpack.c.b16 %v6424, %v6408
    %v7801 = vpack.c.b16 %v6425, %v6409
    %v7802 = vpack.c.b16 %v6426, %v6410
    %v7803 = vpack.c.b16 %v6427, %v6411
    %v7804 = vpack.c.b16 %v6428, %v6412
    %v7805 = vpack.c.b16 %v6429, %v6413
    %v7806 = vpack.c.b16 %v6430, %v6414
    %v7807 = vpack.c.b16 %v6431, %v6415
    %v7808 = vpack.c.b16 %v6432, %v6416
    %v7809 = vpack.c.b16 %v6433, %v6417
    %v7810 = vpack.c.b16 %v6450, %v6434
    %v7811 = vpack.c.b16 %v6451, %v6435
    %v7812 = vpack.c.b16 %v6452, %v6436
    %v7813 = vpack.c.b16 %v6453, %v6437
    %v7814 = vpack.c.b16 %v6454, %v6438
    %v7815 = vpack.c.b16 %v6455, %v6439
    %v7816 = vpack.c.b16 %v6456, %v6440
    %v7817 = vpack.c.b16 %v6457, %v6441
    %v7818 = vpack.c.b16 %v6458, %v6442
    %v7819 = vpack.c.b16 %v6459, %v6443
    %v7820 = vpack.c.b16 %v6460, %v6444
    %v7821 = vpack.c.b16 %v6461, %v6445
    %v7822 = vpack.c.b16 %v6462, %v6446
    %v7823 = vpack.c.b16 %v6463, %v6447
    %v7824 = vpack.c.b16 %v6464, %v6448
    %v7825 = vpack.c.b16 %v6465, %v6449
    %v7826 = vpack.c.b16 %v6482, %v6466
    %v7827 = vpack.c.b16 %v6483, %v6467
    %v7828 = vpack.c.b16 %v6484, %v6468
    %v7829 = vpack.c.b16 %v6485, %v6469
    %v7830 = vpack.c.b16 %v6486, %v6470
    %v7831 = vpack.c.b16 %v6487, %v6471
    %v7832 = vpack.c.b16 %v6488, %v6472
    %v7833 = vpack.c.b16 %v6489, %v6473
    %v7834 = vpack.c.b16 %v6490, %v6474
    %v7835 = vpack.c.b16 %v6491, %v6475
    %v7836 = vpack.c.b16 %v6492, %v6476
    %v7837 = vpack.c.b16 %v6493, %v6477
    %v7838 = vpack.c.b16 %v6494, %v6478
    %v7839 = vpack.c.b16 %v6495, %v6479
    %v7840 = vpack.c.b16 %v6496, %v6480
    %v7841 = vpack.c.b16 %v6497, %v6481
    %v7842 = vpack.c.b16 %v6514, %v6498
    %v7843 = vpack.c.b16 %v6515, %v6499
    %v7844 = vpack.c.b16 %v6516, %v6500
    %v7845 = vpack.c.b16 %v6517, %v6501
    %v7846 = vpack.c.b16 %v6518, %v6502
    %v7847 = vpack.c.b16 %v6519, %v6503
    %v7848 = vpack.c.b16 %v6520, %v6504
    %v7849 = vpack.c.b16 %v6521, %v6505
    %v7850 = vpack.c.b16 %v6522, %v6506
    %v7851 = vpack.c.b16 %v6523, %v6507
    %v7852 = vpack.c.b16 %v6524, %v6508
    %v7853 = vpack.c.b16 %v6525, %v6509
    %v7854 = vpack.c.b16 %v6526, %v6510
    %v7855 = vpack.c.b16 %v6527, %v6511
    %v7856 = vpack.c.b16 %v6528, %v6512
    %v7857 = vpack.c.b16 %v6529, %v6513
    %v7858 = vpack.c.b16 %v6546, %v6530
    %v7859 = vpack.c.b16 %v6547, %v6531
    %v7860 = vpack.c.b16 %v6548, %v6532
    %v7861 = vpack.c.b16 %v6549, %v6533
    %v7862 = vpack.c.b16 %v6550, %v6534
    %v7863 = vpack.c.b16 %v6551, %v6535
    %v7864 = vpack.c.b16 %v6552, %v6536
    %v7865 = vpack.c.b16 %v6553, %v6537
    %v7866 = vpack.c.b16 %v6554, %v6538
    %v7867 = vpack.c.b16 %v6555, %v6539
    %v7868 = vpack.c.b16 %v6556, %v6540
    %v7869 = vpack.c.b16 %v6557, %v6541
    %v7870 = vpack.c.b16 %v6558, %v6542
    %v7871 = vpack.c.b16 %v6559, %v6543
    %v7872 = vpack.c.b16 %v6560, %v6544
    %v7873 = vpack.c.b16 %v6561, %v6545
    %v7874 = vpack.c.b16 %v6578, %v6562
    %v7875 = vpack.c.b16 %v6579, %v6563
    %v7876 = vpack.c.b16 %v6580, %v6564
    %v7877 = vpack.c.b16 %v6581, %v6565
    %v7878 = vpack.c.b16 %v6582, %v6566
    %v7879 = vpack.c.b16 %v6583, %v6567
    %v7880 = vpack.c.b16 %v6584, %v6568
    %v7881 = vpack.c.b16 %v6585, %v6569
    %v7882 = vpack.c.b16 %v6586, %v6570
    %v7883 = vpack.c.b16 %v6587, %v6571
    %v7884 = vpack.c.b16 %v6588, %v6572
    %v7885 = vpack.c.b16 %v6589, %v6573
    %v7886 = vpack.c.b16 %v6590, %v6574
    %v7887 = vpack.c.b16 %v6591, %v6575
    %v7888 = vpack.c.b16 %v6592, %v6576
    %v7889 = vpack.c.b16 %v6593, %v6577
    %v7890 = vpack.c.b16 %v6610, %v6594
    %v7891 = vpack.c.b16 %v6611, %v6595
    %v7892 = vpack.c.b16 %v6612, %v6596
    %v7893 = vpack.c.b16 %v6613, %v6597
    %v7894 = vpack.c.b16 %v6614, %v6598
    %v7895 = vpack.c.b16 %v6615, %v6599
    %v7896 = vpack.c.b16 %v6616, %v6600
    %v7897 = vpack.c.b16 %v6617, %v6601
    %v7898 = vpack.c.b16 %v6618, %v6602
    %v7899 = vpack.c.b16 %v6619, %v6603
    %v7900 = vpack.c.b16 %v6620, %v6604
    %v7901 = vpack.c.b16 %v6621, %v6605
    %v7902 = vpack.c.b16 %v6622, %v6606
    %v7903 = vpack.c.b16 %v6623, %v6607
    %v7904 = vpack.c.b16 %v6624, %v6608
    %v7905 = vpack.c.b16 %v6625, %v6609
    %v7906 = vpack.c.b16 %v6642, %v6626
    %v7907 = vpack.c.b16 %v6643, %v6627
    %v7908 = vpack.c.b16 %v6644, %v6628
    %v7909 = vpack.c.b16 %v6645, %v6629
    %v7910 = vpack.c.b16 %v6646, %v6630
    %v7911 = vpack.c.b16 %v6647, %v6631
    %v7912 = vpack.c.b16 %v6648, %v6632
    %v7913 = vpack.c.b16 %v6649, %v6633
    %v7914 = vpack.c.b16 %v6650, %v6634
    %v7915 = vpack.c.b16 %v6651, %v6635
    %v7916 = vpack.c.b16 %v6652, %v6636
    %v7917 = vpack.c.b16 %v6653, %v6637
    %v7918 = vpack.c.b16 %v6654, %v6638
    %v7919 = vpack.c.b16 %v6655, %v6639
    %v7920 = vpack.c.b16 %v6656, %v6640
    %v7921 = vpack.c.b16 %v6657, %v6641
    %v7922 = vpack.c.b16 %v6674, %v6658
    %v7923 = vpack.c.b16 %v6675, %v6659
    %v7924 = vpack.c.b16 %v6676, %v6660
    %v7925 = vpack.c.b16 %v6677, %v6661
    %v7926 = vpack.c.b16 %v6678, %v6662
    %v7927 = vpack.c.b16 %v6679, %v6663
    %v7928 = vpack.c.b16 %v6680, %v6664
    %v7929 = vpack.c.b16 %v6681, %v6665
    %v7930 = vpack.c.b16 %v6682, %v6666
    %v7931 = vpack.c.b16 %v6683, %v6667
    %v7932 = vpack.c.b16 %v6684, %v6668
    %v7933 = vpack.c.b16 %v6685, %v6669
    %v7934 = vpack.c.b16 %v6686, %v6670
    %v7935 = vpack.c.b16 %v6687, %v6671
    %v7936 = vpack.c.b16 %v6688, %v6672
    %v7937 = vpack.c.b16 %v6689, %v6673
    %v7938 = vpack.c.b16 %v6706, %v6690
    %v7939 = vpack.c.b16 %v6707, %v6691
    %v7940 = vpack.c.b16 %v6708, %v6692
    %v7941 = vpack.c.b16 %v6709, %v6693
    %v7942 = vpack.c.b16 %v6710, %v6694
    %v7943 = vpack.c.b16 %v6711, %v6695
    %v7944 = vpack.c.b16 %v6712, %v6696
    %v7945 = vpack.c.b16 %v6713, %v6697
    %v7946 = vpack.c.b16 %v6714, %v6698
    %v7947 = vpack.c.b16 %v6715, %v6699
    %v7948 = vpack.c.b16 %v6716, %v6700
    %v7949 = vpack.c.b16 %v6717, %v6701
    %v7950 = vpack.c.b16 %v6718, %v6702
    %v7951 = vpack.c.b16 %v6719, %v6703
    %v7952 = vpack.c.b16 %v6720, %v6704
    %v7953 = vpack.c.b16 %v6721, %v6705
    %v7954 = vpack.c.b16 %v6738, %v6722
    %v7955 = vpack.c.b16 %v6739, %v6723
    %v7956 = vpack.c.b16 %v6740, %v6724
    %v7957 = vpack.c.b16 %v6741, %v6725
    %v7958 = vpack.c.b16 %v6742, %v6726
    %v7959 = vpack.c.b16 %v6743, %v6727
    %v7960 = vpack.c.b16 %v6744, %v6728
    %v7961 = vpack.c.b16 %v6745, %v6729
    %v7962 = vpack.c.b16 %v6746, %v6730
    %v7963 = vpack.c.b16 %v6747, %v6731
    %v7964 = vpack.c.b16 %v6748, %v6732
    %v7965 = vpack.c.b16 %v6749, %v6733
    %v7966 = vpack.c.b16 %v6750, %v6734
    %v7967 = vpack.c.b16 %v6751, %v6735
    %v7968 = vpack.c.b16 %v6752, %v6736
    %v7969 = vpack.c.b16 %v6753, %v6737
    %v7970 = vpack.c.b16 %v6770, %v6754
    %v7971 = vpack.c.b16 %v6771, %v6755
    %v7972 = vpack.c.b16 %v6772, %v6756
    %v7973 = vpack.c.b16 %v6773, %v6757
    %v7974 = vpack.c.b16 %v6774, %v6758
    %v7975 = vpack.c.b16 %v6775, %v6759
    %v7976 = vpack.c.b16 %v6776, %v6760
    %v7977 = vpack.c.b16 %v6777, %v6761
    %v7978 = vpack.c.b16 %v6778, %v6762
    %v7979 = vpack.c.b16 %v6779, %v6763
    %v7980 = vpack.c.b16 %v6780, %v6764
    %v7981 = vpack.c.b16 %v6781, %v6765
    %v7982 = vpack.c.b16 %v6782, %v6766
    %v7983 = vpack.c.b16 %v6783, %v6767
    %v7984 = vpack.c.b16 %v6784, %v6768
    %v7985 = vpack.c.b16 %v6785, %v6769
    %v7986 = vpack.c.b16 %v6802, %v6786
    %v7987 = vpack.c.b16 %v6803, %v6787
    %v7988 = vpack.c.b16 %v6804, %v6788
    %v7989 = vpack.c.b16 %v6805, %v6789
    %v7990 = vpack.c.b16 %v6806, %v6790
    %v7991 = vpack.c.b16 %v6807, %v6791
    %v7992 = vpack.c.b16 %v6808, %v6792
    %v7993 = vpack.c.b16 %v6809, %v6793
    %v7994 = vpack.c.b16 %v6810, %v6794
    %v7995 = vpack.c.b16 %v6811, %v6795
    %v7996 = vpack.c.b16 %v6812, %v6796
    %v7997 = vpack.c.b16 %v6813, %v6797
    %v7998 = vpack.c.b16 %v6814, %v6798
    %v7999 = vpack.c.b16 %v6815, %v6799
    %v8000 = vpack.c.b16 %v6816, %v6800
    %v8001 = vpack.c.b16 %v6817, %v6801
    %v8002 = vpack.c.b16 %v6834, %v6818
    %v8003 = vpack.c.b16 %v6835, %v6819
    %v8004 = vpack.c.b16 %v6836, %v6820
    %v8005 = vpack.c.b16 %v6837, %v6821
    %v8006 = vpack.c.b16 %v6838, %v6822
    %v8007 = vpack.c.b16 %v6839, %v6823
    %v8008 = vpack.c.b16 %v6840, %v6824
    %v8009 = vpack.c.b16 %v6841, %v6825
    %v8010 = vpack.c.b16 %v6842, %v6826
    %v8011 = vpack.c.b16 %v6843, %v6827
    %v8012 = vpack.c.b16 %v6844, %v6828
    %v8013 = vpack.c.b16 %v6845, %v6829
    %v8014 = vpack.c.b16 %v6846, %v6830
    %v8015 = vpack.c.b16 %v6847, %v6831
    %v8016 = vpack.c.b16 %v6848, %v6832
    %v8017 = vpack.c.b16 %v6849, %v6833
    %v8018 = vpack.c.b16 %v6866, %v6850
    %v8019 = vpack.c.b16 %v6867, %v6851
    %v8020 = vpack.c.b16 %v6868, %v6852
    %v8021 = vpack.c.b16 %v6869, %v6853
    %v8022 = vpack.c.b16 %v6870, %v6854
    %v8023 = vpack.c.b16 %v6871, %v6855
    %v8024 = vpack.c.b16 %v6872, %v6856
    %v8025 = vpack.c.b16 %v6873, %v6857
    %v8026 = vpack.c.b16 %v6874, %v6858
    %v8027 = vpack.c.b16 %v6875, %v6859
    %v8028 = vpack.c.b16 %v6876, %v6860
    %v8029 = vpack.c.b16 %v6877, %v6861
    %v8030 = vpack.c.b16 %v6878, %v6862
    %v8031 = vpack.c.b16 %v6879, %v6863
    %v8032 = vpack.c.b16 %v6880, %v6864
    %v8033 = vpack.c.b16 %v6881, %v6865
    %v8034 = vpack.c.b16 %v6898, %v6882
    %v8035 = vpack.c.b16 %v6899, %v6883
    %v8036 = vpack.c.b16 %v6900, %v6884
    %v8037 = vpack.c.b16 %v6901, %v6885
    %v8038 = vpack.c.b16 %v6902, %v6886
    %v8039 = vpack.c.b16 %v6903, %v6887
    %v8040 = vpack.c.b16 %v6904, %v6888
    %v8041 = vpack.c.b16 %v6905, %v6889
    %v8042 = vpack.c.b16 %v6906, %v6890
    %v8043 = vpack.c.b16 %v6907, %v6891
    %v8044 = vpack.c.b16 %v6908, %v6892
    %v8045 = vpack.c.b16 %v6909, %v6893
    %v8046 = vpack.c.b16 %v6910, %v6894
    %v8047 = vpack.c.b16 %v6911, %v6895
    %v8048 = vpack.c.b16 %v6912, %v6896
    %v8049 = vpack.c.b16 %v6913, %v6897
    %v8050 = vpack.c.b16 %v6930, %v6914
    %v8051 = vpack.c.b16 %v6931, %v6915
    %v8052 = vpack.c.b16 %v6932, %v6916
    %v8053 = vpack.c.b16 %v6933, %v6917
    %v8054 = vpack.c.b16 %v6934, %v6918
    %v8055 = vpack.c.b16 %v6935, %v6919
    %v8056 = vpack.c.b16 %v6936, %v6920
    %v8057 = vpack.c.b16 %v6937, %v6921
    %v8058 = vpack.c.b16 %v6938, %v6922
    %v8059 = vpack.c.b16 %v6939, %v6923
    %v8060 = vpack.c.b16 %v6940, %v6924
    %v8061 = vpack.c.b16 %v6941, %v6925
    %v8062 = vpack.c.b16 %v6942, %v6926
    %v8063 = vpack.c.b16 %v6943, %v6927
    %v8064 = vpack.c.b16 %v6944, %v6928
    %v8065 = vpack.c.b16 %v6945, %v6929
    %v8066 = vpack.c.b16 %v6962, %v6946
    %v8067 = vpack.c.b16 %v6963, %v6947
    %v8068 = vpack.c.b16 %v6964, %v6948
    %v8069 = vpack.c.b16 %v6965, %v6949
    %v8070 = vpack.c.b16 %v6966, %v6950
    %v8071 = vpack.c.b16 %v6967, %v6951
    %v8072 = vpack.c.b16 %v6968, %v6952
    %v8073 = vpack.c.b16 %v6969, %v6953
    %v8074 = vpack.c.b16 %v6970, %v6954
    %v8075 = vpack.c.b16 %v6971, %v6955
    %v8076 = vpack.c.b16 %v6972, %v6956
    %v8077 = vpack.c.b16 %v6973, %v6957
    %v8078 = vpack.c.b16 %v6974, %v6958
    %v8079 = vpack.c.b16 %v6975, %v6959
    %v8080 = vpack.c.b16 %v6976, %v6960
    %v8081 = vpack.c.b16 %v6977, %v6961
    %v8082 = vpack.c.b16 %v6994, %v6978
    %v8083 = vpack.c.b16 %v6995, %v6979
    %v8084 = vpack.c.b16 %v6996, %v6980
    %v8085 = vpack.c.b16 %v6997, %v6981
    %v8086 = vpack.c.b16 %v6998, %v6982
    %v8087 = vpack.c.b16 %v6999, %v6983
    %v8088 = vpack.c.b16 %v7000, %v6984
    %v8089 = vpack.c.b16 %v7001, %v6985
    %v8090 = vpack.c.b16 %v7002, %v6986
    %v8091 = vpack.c.b16 %v7003, %v6987
    %v8092 = vpack.c.b16 %v7004, %v6988
    %v8093 = vpack.c.b16 %v7005, %v6989
    %v8094 = vpack.c.b16 %v7006, %v6990
    %v8095 = vpack.c.b16 %v7007, %v6991
    %v8096 = vpack.c.b16 %v7008, %v6992
    %v8097 = vpack.c.b16 %v7009, %v6993
    %v8098 = vpack.c.b16 %v7026, %v7010
    %v8099 = vpack.c.b16 %v7027, %v7011
    %v8100 = vpack.c.b16 %v7028, %v7012
    %v8101 = vpack.c.b16 %v7029, %v7013
    %v8102 = vpack.c.b16 %v7030, %v7014
    %v8103 = vpack.c.b16 %v7031, %v7015
    %v8104 = vpack.c.b16 %v7032, %v7016
    %v8105 = vpack.c.b16 %v7033, %v7017
    %v8106 = vpack.c.b16 %v7034, %v7018
    %v8107 = vpack.c.b16 %v7035, %v7019
    %v8108 = vpack.c.b16 %v7036, %v7020
    %v8109 = vpack.c.b16 %v7037, %v7021
    %v8110 = vpack.c.b16 %v7038, %v7022
    %v8111 = vpack.c.b16 %v7039, %v7023
    %v8112 = vpack.c.b16 %v7040, %v7024
    %v8113 = vpack.c.b16 %v7041, %v7025
    %v8114 = vpack.c.b16 %v7058, %v7042
    %v8115 = vpack.c.b16 %v7059, %v7043
    %v8116 = vpack.c.b16 %v7060, %v7044
    %v8117 = vpack.c.b16 %v7061, %v7045
    %v8118 = vpack.c.b16 %v7062, %v7046
    %v8119 = vpack.c.b16 %v7063, %v7047
    %v8120 = vpack.c.b16 %v7064, %v7048
    %v8121 = vpack.c.b16 %v7065, %v7049
    %v8122 = vpack.c.b16 %v7066, %v7050
    %v8123 = vpack.c.b16 %v7067, %v7051
    %v8124 = vpack.c.b16 %v7068, %v7052
    %v8125 = vpack.c.b16 %v7069, %v7053
    %v8126 = vpack.c.b16 %v7070, %v7054
    %v8127 = vpack.c.b16 %v7071, %v7055
    %v8128 = vpack.c.b16 %v7072, %v7056
    %v8129 = vpack.c.b16 %v7073, %v7057
    %v8130 = vpack.c.b16 %v7090, %v7074
    %v8131 = vpack.c.b16 %v7091, %v7075
    %v8132 = vpack.c.b16 %v7092, %v7076
    %v8133 = vpack.c.b16 %v7093, %v7077
    %v8134 = vpack.c.b16 %v7094, %v7078
    %v8135 = vpack.c.b16 %v7095, %v7079
    %v8136 = vpack.c.b16 %v7096, %v7080
    %v8137 = vpack.c.b16 %v7097, %v7081
    %v8138 = vpack.c.b16 %v7098, %v7082
    %v8139 = vpack.c.b16 %v7099, %v7083
    %v8140 = vpack.c.b16 %v7100, %v7084
    %v8141 = vpack.c.b16 %v7101, %v7085
    %v8142 = vpack.c.b16 %v7102, %v7086
    %v8143 = vpack.c.b16 %v7103, %v7087
    %v8144 = vpack.c.b16 %v7104, %v7088
    %v8145 = vpack.c.b16 %v7105, %v7089
    %v8146 = vpack.c.b16 %v7122, %v7106
    %v8147 = vpack.c.b16 %v7123, %v7107
    %v8148 = vpack.c.b16 %v7124, %v7108
    %v8149 = vpack.c.b16 %v7125, %v7109
    %v8150 = vpack.c.b16 %v7126, %v7110
    %v8151 = vpack.c.b16 %v7127, %v7111
    %v8152 = vpack.c.b16 %v7128, %v7112
    %v8153 = vpack.c.b16 %v7129, %v7113
    %v8154 = vpack.c.b16 %v7130, %v7114
    %v8155 = vpack.c.b16 %v7131, %v7115
    %v8156 = vpack.c.b16 %v7132, %v7116
    %v8157 = vpack.c.b16 %v7133, %v7117
    %v8158 = vpack.c.b16 %v7134, %v7118
    %v8159 = vpack.c.b16 %v7135, %v7119
    %v8160 = vpack.c.b16 %v7136, %v7120
    %v8161 = vpack.c.b16 %v7137, %v7121
    %9186 = vmatprep.subr.bf16.mxu0 %v7139
    %9187 = vmatpush1.bf16.msra.mxu0 %v7138
    %9188 = vmatprep.subr.bf16.mxu0 %v7155
    %9189 = vmatpush1.bf16.msra.mxu0 %v7154
    %9190 = vmatprep.subr.bf16.mxu0 %v7171
    %9191 = vmatpush1.bf16.msra.mxu0 %v7170
    %9192 = vmatprep.subr.bf16.mxu0 %v7187
    %9193 = vmatpush1.bf16.msra.mxu0 %v7186
    %9194 = vmatprep.subr.bf16.mxu0 %v7203
    %9195 = vmatpush1.bf16.msra.mxu0 %v7202
    %9196 = vmatprep.subr.bf16.mxu0 %v7219
    %9197 = vmatpush1.bf16.msra.mxu0 %v7218
    %9198 = vmatprep.subr.bf16.mxu0 %v7235
    %9199 = vmatpush1.bf16.msra.mxu0 %v7234
    %9200 = vmatprep.subr.bf16.mxu0 %v7251
    %9201 = vmatpush1.bf16.msra.mxu0 %v7250
    %9202 = vmatprep.subr.bf16.mxu0 %v7267
    %9203 = vmatpush1.bf16.msra.mxu0 %v7266
    %9204 = vmatprep.subr.bf16.mxu0 %v7283
    %9205 = vmatpush1.bf16.msra.mxu0 %v7282
    %9206 = vmatprep.subr.bf16.mxu0 %v7299
    %9207 = vmatpush1.bf16.msra.mxu0 %v7298
    %9208 = vmatprep.subr.bf16.mxu0 %v7315
    %9209 = vmatpush1.bf16.msra.mxu0 %v7314
    %9210 = vmatprep.subr.bf16.mxu0 %v7331
    %9211 = vmatpush1.bf16.msra.mxu0 %v7330
    %9212 = vmatprep.subr.bf16.mxu0 %v7347
    %9213 = vmatpush1.bf16.msra.mxu0 %v7346
    %9214 = vmatprep.subr.bf16.mxu0 %v7363
    %9215 = vmatpush1.bf16.msra.mxu0 %v7362
    %9216 = vmatprep.subr.bf16.mxu0 %v7379
    %9217 = vmatpush1.bf16.msra.mxu0 %v7378
    %9218 = vmatprep.mubr.bf16.mxu0 %v2951
    %9219 = vmatmul.mubr.bf16.gmra.mrb[0].mxu0 %v2950
    %v9220 = vpop.f32.mrb[0].mxu0
    %v9221 = vadd.f32 %v3989, %v9220
    %v9222 = vpop.f32.mrb[0].mxu0
    %v9223 = vadd.f32 %v3993, %v9222
    %v9224 = vpop.f32.mrb[0].mxu0
    %v9225 = vpop.f32.mrb[0].mxu0
    %9226 = vdwg.mxu0
    %9227 = vmatprep.subr.bf16.mxu0 %v7395
    %9228 = vmatpush1.bf16.msra.mxu0 %v7394
    %9229 = vmatprep.subr.bf16.mxu0 %v7411
    %9230 = vmatpush1.bf16.msra.mxu0 %v7410
    %9231 = vmatprep.subr.bf16.mxu0 %v7427
    %9232 = vmatpush1.bf16.msra.mxu0 %v7426
    %9233 = vmatprep.subr.bf16.mxu0 %v7443
    %9234 = vmatpush1.bf16.msra.mxu0 %v7442
    %9235 = vmatprep.subr.bf16.mxu0 %v7459
    %9236 = vmatpush1.bf16.msra.mxu0 %v7458
    %9237 = vmatprep.subr.bf16.mxu0 %v7475
    %9238 = vmatpush1.bf16.msra.mxu0 %v7474
    %9239 = vmatprep.subr.bf16.mxu0 %v7491
    %9240 = vmatpush1.bf16.msra.mxu0 %v7490
    %9241 = vmatprep.subr.bf16.mxu0 %v7507
    %9242 = vmatpush1.bf16.msra.mxu0 %v7506
    %9243 = vmatprep.subr.bf16.mxu0 %v7523
    %9244 = vmatpush1.bf16.msra.mxu0 %v7522
    %9245 = vmatprep.subr.bf16.mxu0 %v7539
    %9246 = vmatpush1.bf16.msra.mxu0 %v7538
    %9247 = vmatprep.subr.bf16.mxu0 %v7555
    %9248 = vmatpush1.bf16.msra.mxu0 %v7554
    %9249 = vmatprep.subr.bf16.mxu0 %v7571
    %9250 = vmatpush1.bf16.msra.mxu0 %v7570
    %9251 = vmatprep.subr.bf16.mxu0 %v7587
    %9252 = vmatpush1.bf16.msra.mxu0 %v7586
    %9253 = vmatprep.subr.bf16.mxu0 %v7603
    %9254 = vmatpush1.bf16.msra.mxu0 %v7602
    %9255 = vmatprep.subr.bf16.mxu0 %v7619
    %9256 = vmatpush1.bf16.msra.mxu0 %v7618
    %9257 = vmatprep.subr.bf16.mxu0 %v7635
    %9258 = vmatpush1.bf16.msra.mxu0 %v7634
    %9259 = vmatprep.mubr.bf16.mxu0 %v2953
    %9260 = vmatmul.mubr.bf16.gmra.mrb[0].mxu0 %v2952
    %v9261 = vpop.f32.mrb[0].mxu0
    %v9262 = vadd.f32 %v9221, %v9261
    %v9263 = vpop.f32.mrb[0].mxu0
    %v9264 = vadd.f32 %v9223, %v9263
    %v9265 = vpop.f32.mrb[0].mxu0
    %v9266 = vpop.f32.mrb[0].mxu0
    %9267 = vdwg.mxu0
    %9268 = vmatprep.subr.bf16.mxu0 %v7651
    %9269 = vmatpush1.bf16.msra.mxu0 %v7650
    %9270 = vmatprep.subr.bf16.mxu0 %v7667
    %9271 = vmatpush1.bf16.msra.mxu0 %v7666
    %9272 = vmatprep.subr.bf16.mxu0 %v7683
    %9273 = vmatpush1.bf16.msra.mxu0 %v7682
    %9274 = vmatprep.subr.bf16.mxu0 %v7699
    %9275 = vmatpush1.bf16.msra.mxu0 %v7698
    %9276 = vmatprep.subr.bf16.mxu0 %v7715
    %9277 = vmatpush1.bf16.msra.mxu0 %v7714
    %9278 = vmatprep.subr.bf16.mxu0 %v7731
    %9279 = vmatpush1.bf16.msra.mxu0 %v7730
    %9280 = vmatprep.subr.bf16.mxu0 %v7747
    %9281 = vmatpush1.bf16.msra.mxu0 %v7746
    %9282 = vmatprep.subr.bf16.mxu0 %v7763
    %9283 = vmatpush1.bf16.msra.mxu0 %v7762
    %9284 = vmatprep.subr.bf16.mxu0 %v7779
    %9285 = vmatpush1.bf16.msra.mxu0 %v7778
    %9286 = vmatprep.subr.bf16.mxu0 %v7795
    %9287 = vmatpush1.bf16.msra.mxu0 %v7794
    %9288 = vmatprep.subr.bf16.mxu0 %v7811
    %9289 = vmatpush1.bf16.msra.mxu0 %v7810
    %9290 = vmatprep.subr.bf16.mxu0 %v7827
    %9291 = vmatpush1.bf16.msra.mxu0 %v7826
    %9292 = vmatprep.subr.bf16.mxu0 %v7843
    %9293 = vmatpush1.bf16.msra.mxu0 %v7842
    %9294 = vmatprep.subr.bf16.mxu0 %v7859
    %9295 = vmatpush1.bf16.msra.mxu0 %v7858
    %9296 = vmatprep.subr.bf16.mxu0 %v7875
    %9297 = vmatpush1.bf16.msra.mxu0 %v7874
    %9298 = vmatprep.subr.bf16.mxu0 %v7891
    %9299 = vmatpush1.bf16.msra.mxu0 %v7890
    %9300 = vmatprep.mubr.bf16.mxu0 %v2955
    %9301 = vmatmul.mubr.bf16.gmra.mrb[0].mxu0 %v2954
    %v9302 = vpop.f32.mrb[0].mxu0
    %v9303 = vadd.f32 %v9262, %v9302
    %v9304 = vpop.f32.mrb[0].mxu0
    %v9305 = vadd.f32 %v9264, %v9304
    %v9306 = vpop.f32.mrb[0].mxu0
    %v9307 = vpop.f32.mrb[0].mxu0
    %9308 = vdwg.mxu0
    %9309 = vmatprep.subr.bf16.mxu0 %v7907
    %9310 = vmatpush1.bf16.msra.mxu0 %v7906
    %9311 = vmatprep.subr.bf16.mxu0 %v7923
    %9312 = vmatpush1.bf16.msra.mxu0 %v7922
    %9313 = vmatprep.subr.bf16.mxu0 %v7939
    %9314 = vmatpush1.bf16.msra.mxu0 %v7938
    %9315 = vmatprep.subr.bf16.mxu0 %v7955
    %9316 = vmatpush1.bf16.msra.mxu0 %v7954
    %9317 = vmatprep.subr.bf16.mxu0 %v7971
    %9318 = vmatpush1.bf16.msra.mxu0 %v7970
    %9319 = vmatprep.subr.bf16.mxu0 %v7987
    %9320 = vmatpush1.bf16.msra.mxu0 %v7986
    %9321 = vmatprep.subr.bf16.mxu0 %v8003
    %9322 = vmatpush1.bf16.msra.mxu0 %v8002
    %9323 = vmatprep.subr.bf16.mxu0 %v8019
    %9324 = vmatpush1.bf16.msra.mxu0 %v8018
    %9325 = vmatprep.subr.bf16.mxu0 %v8035
    %9326 = vmatpush1.bf16.msra.mxu0 %v8034
    %9327 = vmatprep.subr.bf16.mxu0 %v8051
    %9328 = vmatpush1.bf16.msra.mxu0 %v8050
    %9329 = vmatprep.subr.bf16.mxu0 %v8067
    %9330 = vmatpush1.bf16.msra.mxu0 %v8066
    %9331 = vmatprep.subr.bf16.mxu0 %v8083
    %9332 = vmatpush1.bf16.msra.mxu0 %v8082
    %9333 = vmatprep.subr.bf16.mxu0 %v8099
    %9334 = vmatpush1.bf16.msra.mxu0 %v8098
    %9335 = vmatprep.subr.bf16.mxu0 %v8115
    %9336 = vmatpush1.bf16.msra.mxu0 %v8114
    %9337 = vmatprep.subr.bf16.mxu0 %v8131
    %9338 = vmatpush1.bf16.msra.mxu0 %v8130
    %9339 = vmatprep.subr.bf16.mxu0 %v8147
    %9340 = vmatpush1.bf16.msra.mxu0 %v8146
    %9341 = vmatprep.mubr.bf16.mxu0 %v2957
    %9342 = vmatmul.mubr.bf16.gmra.mrb[0].mxu0 %v2956
    %v9343 = vpop.f32.mrb[0].mxu0
    %v9344 = vadd.f32 %v9303, %v9343
    %v9345 = vpop.f32.mrb[0].mxu0
    %v9346 = vadd.f32 %v9305, %v9345
    %v9347 = vpop.f32.mrb[0].mxu0
    %v9348 = vpop.f32.mrb[0].mxu0
    %9349 = vdwg.mxu0
    %9350 = vmatprep.subr.bf16.mxu0 %v7141
    %9351 = vmatpush1.bf16.msra.mxu0 %v7140
    %9352 = vmatprep.subr.bf16.mxu0 %v7157
    %9353 = vmatpush1.bf16.msra.mxu0 %v7156
    %9354 = vmatprep.subr.bf16.mxu0 %v7173
    %9355 = vmatpush1.bf16.msra.mxu0 %v7172
    %9356 = vmatprep.subr.bf16.mxu0 %v7189
    %9357 = vmatpush1.bf16.msra.mxu0 %v7188
    %9358 = vmatprep.subr.bf16.mxu0 %v7205
    %9359 = vmatpush1.bf16.msra.mxu0 %v7204
    %9360 = vmatprep.subr.bf16.mxu0 %v7221
    %9361 = vmatpush1.bf16.msra.mxu0 %v7220
    %9362 = vmatprep.subr.bf16.mxu0 %v7237
    %9363 = vmatpush1.bf16.msra.mxu0 %v7236
    %9364 = vmatprep.subr.bf16.mxu0 %v7253
    %9365 = vmatpush1.bf16.msra.mxu0 %v7252
    %9366 = vmatprep.subr.bf16.mxu0 %v7269
    %9367 = vmatpush1.bf16.msra.mxu0 %v7268
    %9368 = vmatprep.subr.bf16.mxu0 %v7285
    %9369 = vmatpush1.bf16.msra.mxu0 %v7284
    %9370 = vmatprep.subr.bf16.mxu0 %v7301
    %9371 = vmatpush1.bf16.msra.mxu0 %v7300
    %9372 = vmatprep.subr.bf16.mxu0 %v7317
    %9373 = vmatpush1.bf16.msra.mxu0 %v7316
    %9374 = vmatprep.subr.bf16.mxu0 %v7333
    %9375 = vmatpush1.bf16.msra.mxu0 %v7332
    %9376 = vmatprep.subr.bf16.mxu0 %v7349
    %9377 = vmatpush1.bf16.msra.mxu0 %v7348
    %9378 = vmatprep.subr.bf16.mxu0 %v7365
    %9379 = vmatpush1.bf16.msra.mxu0 %v7364
    %9380 = vmatprep.subr.bf16.mxu0 %v7381
    %9381 = vmatpush1.bf16.msra.mxu0 %v7380
    %9382 = vmatprep.mubr.bf16.mxu0 %v2951
    %9383 = vmatmul.mubr.bf16.gmra.mrb[0].mxu0 %v2950
    %v9384 = vpop.f32.mrb[0].mxu0
    %v9385 = vadd.f32 %v3997, %v9384
    %v9386 = vpop.f32.mrb[0].mxu0
    %v9387 = vadd.f32 %v4001, %v9386
    %v9388 = vpop.f32.mrb[0].mxu0
    %v9389 = vpop.f32.mrb[0].mxu0
    %9390 = vdwg.mxu0
    %9391 = vmatprep.subr.bf16.mxu0 %v7397
    %9392 = vmatpush1.bf16.msra.mxu0 %v7396
    %9393 = vmatprep.subr.bf16.mxu0 %v7413
    %9394 = vmatpush1.bf16.msra.mxu0 %v7412
    %9395 = vmatprep.subr.bf16.mxu0 %v7429
    %9396 = vmatpush1.bf16.msra.mxu0 %v7428
    %9397 = vmatprep.subr.bf16.mxu0 %v7445
    %9398 = vmatpush1.bf16.msra.mxu0 %v7444
    %9399 = vmatprep.subr.bf16.mxu0 %v7461
    %9400 = vmatpush1.bf16.msra.mxu0 %v7460
    %9401 = vmatprep.subr.bf16.mxu0 %v7477
    %9402 = vmatpush1.bf16.msra.mxu0 %v7476
    %9403 = vmatprep.subr.bf16.mxu0 %v7493
    %9404 = vmatpush1.bf16.msra.mxu0 %v7492
    %9405 = vmatprep.subr.bf16.mxu0 %v7509
    %9406 = vmatpush1.bf16.msra.mxu0 %v7508
    %9407 = vmatprep.subr.bf16.mxu0 %v7525
    %9408 = vmatpush1.bf16.msra.mxu0 %v7524
    %9409 = vmatprep.subr.bf16.mxu0 %v7541
    %9410 = vmatpush1.bf16.msra.mxu0 %v7540
    %9411 = vmatprep.subr.bf16.mxu0 %v7557
    %9412 = vmatpush1.bf16.msra.mxu0 %v7556
    %9413 = vmatprep.subr.bf16.mxu0 %v7573
    %9414 = vmatpush1.bf16.msra.mxu0 %v7572
    %9415 = vmatprep.subr.bf16.mxu0 %v7589
    %9416 = vmatpush1.bf16.msra.mxu0 %v7588
    %9417 = vmatprep.subr.bf16.mxu0 %v7605
    %9418 = vmatpush1.bf16.msra.mxu0 %v7604
    %9419 = vmatprep.subr.bf16.mxu0 %v7621
    %9420 = vmatpush1.bf16.msra.mxu0 %v7620
    %9421 = vmatprep.subr.bf16.mxu0 %v7637
    %9422 = vmatpush1.bf16.msra.mxu0 %v7636
    %9423 = vmatprep.mubr.bf16.mxu0 %v2953
    %9424 = vmatmul.mubr.bf16.gmra.mrb[0].mxu0 %v2952
    %v9425 = vpop.f32.mrb[0].mxu0
    %v9426 = vadd.f32 %v9385, %v9425
    %v9427 = vpop.f32.mrb[0].mxu0
    %v9428 = vadd.f32 %v9387, %v9427
    %v9429 = vpop.f32.mrb[0].mxu0
    %v9430 = vpop.f32.mrb[0].mxu0
    %9431 = vdwg.mxu0
    %9432 = vmatprep.subr.bf16.mxu0 %v7653
    %9433 = vmatpush1.bf16.msra.mxu0 %v7652
    %9434 = vmatprep.subr.bf16.mxu0 %v7669
    %9435 = vmatpush1.bf16.msra.mxu0 %v7668
    %9436 = vmatprep.subr.bf16.mxu0 %v7685
    %9437 = vmatpush1.bf16.msra.mxu0 %v7684
    %9438 = vmatprep.subr.bf16.mxu0 %v7701
    %9439 = vmatpush1.bf16.msra.mxu0 %v7700
    %9440 = vmatprep.subr.bf16.mxu0 %v7717
    %9441 = vmatpush1.bf16.msra.mxu0 %v7716
    %9442 = vmatprep.subr.bf16.mxu0 %v7733
    %9443 = vmatpush1.bf16.msra.mxu0 %v7732
    %9444 = vmatprep.subr.bf16.mxu0 %v7749
    %9445 = vmatpush1.bf16.msra.mxu0 %v7748
    %9446 = vmatprep.subr.bf16.mxu0 %v7765
    %9447 = vmatpush1.bf16.msra.mxu0 %v7764
    %9448 = vmatprep.subr.bf16.mxu0 %v7781
    %9449 = vmatpush1.bf16.msra.mxu0 %v7780
    %9450 = vmatprep.subr.bf16.mxu0 %v7797
    %9451 = vmatpush1.bf16.msra.mxu0 %v7796
    %9452 = vmatprep.subr.bf16.mxu0 %v7813
    %9453 = vmatpush1.bf16.msra.mxu0 %v7812
    %9454 = vmatprep.subr.bf16.mxu0 %v7829
    %9455 = vmatpush1.bf16.msra.mxu0 %v7828
    %9456 = vmatprep.subr.bf16.mxu0 %v7845
    %9457 = vmatpush1.bf16.msra.mxu0 %v7844
    %9458 = vmatprep.subr.bf16.mxu0 %v7861
    %9459 = vmatpush1.bf16.msra.mxu0 %v7860
    %9460 = vmatprep.subr.bf16.mxu0 %v7877
    %9461 = vmatpush1.bf16.msra.mxu0 %v7876
    %9462 = vmatprep.subr.bf16.mxu0 %v7893
    %9463 = vmatpush1.bf16.msra.mxu0 %v7892
    %9464 = vmatprep.mubr.bf16.mxu0 %v2955
    %9465 = vmatmul.mubr.bf16.gmra.mrb[0].mxu0 %v2954
    %v9466 = vpop.f32.mrb[0].mxu0
    %v9467 = vadd.f32 %v9426, %v9466
    %v9468 = vpop.f32.mrb[0].mxu0
    %v9469 = vadd.f32 %v9428, %v9468
    %v9470 = vpop.f32.mrb[0].mxu0
    %v9471 = vpop.f32.mrb[0].mxu0
    %9472 = vdwg.mxu0
    %9473 = vmatprep.subr.bf16.mxu0 %v7909
    %9474 = vmatpush1.bf16.msra.mxu0 %v7908
    %9475 = vmatprep.subr.bf16.mxu0 %v7925
    %9476 = vmatpush1.bf16.msra.mxu0 %v7924
    %9477 = vmatprep.subr.bf16.mxu0 %v7941
    %9478 = vmatpush1.bf16.msra.mxu0 %v7940
    %9479 = vmatprep.subr.bf16.mxu0 %v7957
    %9480 = vmatpush1.bf16.msra.mxu0 %v7956
    %9481 = vmatprep.subr.bf16.mxu0 %v7973
    %9482 = vmatpush1.bf16.msra.mxu0 %v7972
    %9483 = vmatprep.subr.bf16.mxu0 %v7989
    %9484 = vmatpush1.bf16.msra.mxu0 %v7988
    %9485 = vmatprep.subr.bf16.mxu0 %v8005
    %9486 = vmatpush1.bf16.msra.mxu0 %v8004
    %9487 = vmatprep.subr.bf16.mxu0 %v8021
    %9488 = vmatpush1.bf16.msra.mxu0 %v8020
    %9489 = vmatprep.subr.bf16.mxu0 %v8037
    %9490 = vmatpush1.bf16.msra.mxu0 %v8036
    %9491 = vmatprep.subr.bf16.mxu0 %v8053
    %9492 = vmatpush1.bf16.msra.mxu0 %v8052
    %9493 = vmatprep.subr.bf16.mxu0 %v8069
    %9494 = vmatpush1.bf16.msra.mxu0 %v8068
    %9495 = vmatprep.subr.bf16.mxu0 %v8085
    %9496 = vmatpush1.bf16.msra.mxu0 %v8084
    %9497 = vmatprep.subr.bf16.mxu0 %v8101
    %9498 = vmatpush1.bf16.msra.mxu0 %v8100
    %9499 = vmatprep.subr.bf16.mxu0 %v8117
    %9500 = vmatpush1.bf16.msra.mxu0 %v8116
    %9501 = vmatprep.subr.bf16.mxu0 %v8133
    %9502 = vmatpush1.bf16.msra.mxu0 %v8132
    %9503 = vmatprep.subr.bf16.mxu0 %v8149
    %9504 = vmatpush1.bf16.msra.mxu0 %v8148
    %9505 = vmatprep.mubr.bf16.mxu0 %v2957
    %9506 = vmatmul.mubr.bf16.gmra.mrb[0].mxu0 %v2956
    %v9507 = vpop.f32.mrb[0].mxu0
    %v9508 = vadd.f32 %v9467, %v9507
    %v9509 = vpop.f32.mrb[0].mxu0
    %v9510 = vadd.f32 %v9469, %v9509
    %v9511 = vpop.f32.mrb[0].mxu0
    %v9512 = vpop.f32.mrb[0].mxu0
    %9513 = vdwg.mxu0
    %9514 = vmatprep.subr.bf16.mxu0 %v7143
    %9515 = vmatpush1.bf16.msra.mxu0 %v7142
    %9516 = vmatprep.subr.bf16.mxu0 %v7159
    %9517 = vmatpush1.bf16.msra.mxu0 %v7158
    %9518 = vmatprep.subr.bf16.mxu0 %v7175
    %9519 = vmatpush1.bf16.msra.mxu0 %v7174
    %9520 = vmatprep.subr.bf16.mxu0 %v7191
    %9521 = vmatpush1.bf16.msra.mxu0 %v7190
    %9522 = vmatprep.subr.bf16.mxu0 %v7207
    %9523 = vmatpush1.bf16.msra.mxu0 %v7206
    %9524 = vmatprep.subr.bf16.mxu0 %v7223
    %9525 = vmatpush1.bf16.msra.mxu0 %v7222
    %9526 = vmatprep.subr.bf16.mxu0 %v7239
    %9527 = vmatpush1.bf16.msra.mxu0 %v7238
    %9528 = vmatprep.subr.bf16.mxu0 %v7255
    %9529 = vmatpush1.bf16.msra.mxu0 %v7254
    %9530 = vmatprep.subr.bf16.mxu0 %v7271
    %9531 = vmatpush1.bf16.msra.mxu0 %v7270
    %9532 = vmatprep.subr.bf16.mxu0 %v7287
    %9533 = vmatpush1.bf16.msra.mxu0 %v7286
    %9534 = vmatprep.subr.bf16.mxu0 %v7303
    %9535 = vmatpush1.bf16.msra.mxu0 %v7302
    %9536 = vmatprep.subr.bf16.mxu0 %v7319
    %9537 = vmatpush1.bf16.msra.mxu0 %v7318
    %9538 = vmatprep.subr.bf16.mxu0 %v7335
    %9539 = vmatpush1.bf16.msra.mxu0 %v7334
    %9540 = vmatprep.subr.bf16.mxu0 %v7351
    %9541 = vmatpush1.bf16.msra.mxu0 %v7350
    %9542 = vmatprep.subr.bf16.mxu0 %v7367
    %9543 = vmatpush1.bf16.msra.mxu0 %v7366
    %9544 = vmatprep.subr.bf16.mxu0 %v7383
    %9545 = vmatpush1.bf16.msra.mxu0 %v7382
    %9546 = vmatprep.mubr.bf16.mxu0 %v2951
    %9547 = vmatmul.mubr.bf16.gmra.mrb[0].mxu0 %v2950
    %v9548 = vpop.f32.mrb[0].mxu0
    %v9549 = vadd.f32 %v4005, %v9548
    %v9550 = vpop.f32.mrb[0].mxu0
    %v9551 = vadd.f32 %v4009, %v9550
    %v9552 = vpop.f32.mrb[0].mxu0
    %v9553 = vpop.f32.mrb[0].mxu0
    %9554 = vdwg.mxu0
    %9555 = vmatprep.subr.bf16.mxu0 %v7399
    %9556 = vmatpush1.bf16.msra.mxu0 %v7398
    %9557 = vmatprep.subr.bf16.mxu0 %v7415
    %9558 = vmatpush1.bf16.msra.mxu0 %v7414
    %9559 = vmatprep.subr.bf16.mxu0 %v7431
    %9560 = vmatpush1.bf16.msra.mxu0 %v7430
    %9561 = vmatprep.subr.bf16.mxu0 %v7447
    %9562 = vmatpush1.bf16.msra.mxu0 %v7446
    %9563 = vmatprep.subr.bf16.mxu0 %v7463
    %9564 = vmatpush1.bf16.msra.mxu0 %v7462
    %9565 = vmatprep.subr.bf16.mxu0 %v7479
    %9566 = vmatpush1.bf16.msra.mxu0 %v7478
    %9567 = vmatprep.subr.bf16.mxu0 %v7495
    %9568 = vmatpush1.bf16.msra.mxu0 %v7494
    %9569 = vmatprep.subr.bf16.mxu0 %v7511
    %9570 = vmatpush1.bf16.msra.mxu0 %v7510
    %9571 = vmatprep.subr.bf16.mxu0 %v7527
    %9572 = vmatpush1.bf16.msra.mxu0 %v7526
    %9573 = vmatprep.subr.bf16.mxu0 %v7543
    %9574 = vmatpush1.bf16.msra.mxu0 %v7542
    %9575 = vmatprep.subr.bf16.mxu0 %v7559
    %9576 = vmatpush1.bf16.msra.mxu0 %v7558
    %9577 = vmatprep.subr.bf16.mxu0 %v7575
    %9578 = vmatpush1.bf16.msra.mxu0 %v7574
    %9579 = vmatprep.subr.bf16.mxu0 %v7591
    %9580 = vmatpush1.bf16.msra.mxu0 %v7590
    %9581 = vmatprep.subr.bf16.mxu0 %v7607
    %9582 = vmatpush1.bf16.msra.mxu0 %v7606
    %9583 = vmatprep.subr.bf16.mxu0 %v7623
    %9584 = vmatpush1.bf16.msra.mxu0 %v7622
    %9585 = vmatprep.subr.bf16.mxu0 %v7639
    %9586 = vmatpush1.bf16.msra.mxu0 %v7638
    %9587 = vmatprep.mubr.bf16.mxu0 %v2953
    %9588 = vmatmul.mubr.bf16.gmra.mrb[0].mxu0 %v2952
    %v9589 = vpop.f32.mrb[0].mxu0
    %v9590 = vadd.f32 %v9549, %v9589
    %v9591 = vpop.f32.mrb[0].mxu0
    %v9592 = vadd.f32 %v9551, %v9591
    %v9593 = vpop.f32.mrb[0].mxu0
    %v9594 = vpop.f32.mrb[0].mxu0
    %9595 = vdwg.mxu0
    %9596 = vmatprep.subr.bf16.mxu0 %v7655
    %9597 = vmatpush1.bf16.msra.mxu0 %v7654
    %9598 = vmatprep.subr.bf16.mxu0 %v7671
    %9599 = vmatpush1.bf16.msra.mxu0 %v7670
    %9600 = vmatprep.subr.bf16.mxu0 %v7687
    %9601 = vmatpush1.bf16.msra.mxu0 %v7686
    %9602 = vmatprep.subr.bf16.mxu0 %v7703
    %9603 = vmatpush1.bf16.msra.mxu0 %v7702
    %9604 = vmatprep.subr.bf16.mxu0 %v7719
    %9605 = vmatpush1.bf16.msra.mxu0 %v7718
    %9606 = vmatprep.subr.bf16.mxu0 %v7735
    %9607 = vmatpush1.bf16.msra.mxu0 %v7734
    %9608 = vmatprep.subr.bf16.mxu0 %v7751
    %9609 = vmatpush1.bf16.msra.mxu0 %v7750
    %9610 = vmatprep.subr.bf16.mxu0 %v7767
    %9611 = vmatpush1.bf16.msra.mxu0 %v7766
    %9612 = vmatprep.subr.bf16.mxu0 %v7783
    %9613 = vmatpush1.bf16.msra.mxu0 %v7782
    %9614 = vmatprep.subr.bf16.mxu0 %v7799
    %9615 = vmatpush1.bf16.msra.mxu0 %v7798
    %9616 = vmatprep.subr.bf16.mxu0 %v7815
    %9617 = vmatpush1.bf16.msra.mxu0 %v7814
    %9618 = vmatprep.subr.bf16.mxu0 %v7831
    %9619 = vmatpush1.bf16.msra.mxu0 %v7830
    %9620 = vmatprep.subr.bf16.mxu0 %v7847
    %9621 = vmatpush1.bf16.msra.mxu0 %v7846
    %9622 = vmatprep.subr.bf16.mxu0 %v7863
    %9623 = vmatpush1.bf16.msra.mxu0 %v7862
    %9624 = vmatprep.subr.bf16.mxu0 %v7879
    %9625 = vmatpush1.bf16.msra.mxu0 %v7878
    %9626 = vmatprep.subr.bf16.mxu0 %v7895
    %9627 = vmatpush1.bf16.msra.mxu0 %v7894
    %9628 = vmatprep.mubr.bf16.mxu0 %v2955
    %9629 = vmatmul.mubr.bf16.gmra.mrb[0].mxu0 %v2954
    %v9630 = vpop.f32.mrb[0].mxu0
    %v9631 = vadd.f32 %v9590, %v9630
    %v9632 = vpop.f32.mrb[0].mxu0
    %v9633 = vadd.f32 %v9592, %v9632
    %v9634 = vpop.f32.mrb[0].mxu0
    %v9635 = vpop.f32.mrb[0].mxu0
    %9636 = vdwg.mxu0
    %9637 = vmatprep.subr.bf16.mxu0 %v7911
    %9638 = vmatpush1.bf16.msra.mxu0 %v7910
    %9639 = vmatprep.subr.bf16.mxu0 %v7927
    %9640 = vmatpush1.bf16.msra.mxu0 %v7926
    %9641 = vmatprep.subr.bf16.mxu0 %v7943
    %9642 = vmatpush1.bf16.msra.mxu0 %v7942
    %9643 = vmatprep.subr.bf16.mxu0 %v7959
    %9644 = vmatpush1.bf16.msra.mxu0 %v7958
    %9645 = vmatprep.subr.bf16.mxu0 %v7975
    %9646 = vmatpush1.bf16.msra.mxu0 %v7974
    %9647 = vmatprep.subr.bf16.mxu0 %v7991
    %9648 = vmatpush1.bf16.msra.mxu0 %v7990
    %9649 = vmatprep.subr.bf16.mxu0 %v8007
    %9650 = vmatpush1.bf16.msra.mxu0 %v8006
    %9651 = vmatprep.subr.bf16.mxu0 %v8023
    %9652 = vmatpush1.bf16.msra.mxu0 %v8022
    %9653 = vmatprep.subr.bf16.mxu0 %v8039
    %9654 = vmatpush1.bf16.msra.mxu0 %v8038
    %9655 = vmatprep.subr.bf16.mxu0 %v8055
    %9656 = vmatpush1.bf16.msra.mxu0 %v8054
    %9657 = vmatprep.subr.bf16.mxu0 %v8071
    %9658 = vmatpush1.bf16.msra.mxu0 %v8070
    %9659 = vmatprep.subr.bf16.mxu0 %v8087
    %9660 = vmatpush1.bf16.msra.mxu0 %v8086
    %9661 = vmatprep.subr.bf16.mxu0 %v8103
    %9662 = vmatpush1.bf16.msra.mxu0 %v8102
    %9663 = vmatprep.subr.bf16.mxu0 %v8119
    %9664 = vmatpush1.bf16.msra.mxu0 %v8118
    %9665 = vmatprep.subr.bf16.mxu0 %v8135
    %9666 = vmatpush1.bf16.msra.mxu0 %v8134
    %9667 = vmatprep.subr.bf16.mxu0 %v8151
    %9668 = vmatpush1.bf16.msra.mxu0 %v8150
    %9669 = vmatprep.mubr.bf16.mxu0 %v2957
    %9670 = vmatmul.mubr.bf16.gmra.mrb[0].mxu0 %v2956
    %v9671 = vpop.f32.mrb[0].mxu0
    %v9672 = vadd.f32 %v9631, %v9671
    %v9673 = vpop.f32.mrb[0].mxu0
    %v9674 = vadd.f32 %v9633, %v9673
    %v9675 = vpop.f32.mrb[0].mxu0
    %v9676 = vpop.f32.mrb[0].mxu0
    %9677 = vdwg.mxu0
    %9678 = vmatprep.subr.bf16.mxu0 %v7145
    %9679 = vmatpush1.bf16.msra.mxu0 %v7144
    %9680 = vmatprep.subr.bf16.mxu0 %v7161
    %9681 = vmatpush1.bf16.msra.mxu0 %v7160
    %9682 = vmatprep.subr.bf16.mxu0 %v7177
    %9683 = vmatpush1.bf16.msra.mxu0 %v7176
    %9684 = vmatprep.subr.bf16.mxu0 %v7193
    %9685 = vmatpush1.bf16.msra.mxu0 %v7192
    %9686 = vmatprep.subr.bf16.mxu0 %v7209
    %9687 = vmatpush1.bf16.msra.mxu0 %v7208
    %9688 = vmatprep.subr.bf16.mxu0 %v7225
    %9689 = vmatpush1.bf16.msra.mxu0 %v7224
    %9690 = vmatprep.subr.bf16.mxu0 %v7241
    %9691 = vmatpush1.bf16.msra.mxu0 %v7240
    %9692 = vmatprep.subr.bf16.mxu0 %v7257
    %9693 = vmatpush1.bf16.msra.mxu0 %v7256
    %9694 = vmatprep.subr.bf16.mxu0 %v7273
    %9695 = vmatpush1.bf16.msra.mxu0 %v7272
    %9696 = vmatprep.subr.bf16.mxu0 %v7289
    %9697 = vmatpush1.bf16.msra.mxu0 %v7288
    %9698 = vmatprep.subr.bf16.mxu0 %v7305
    %9699 = vmatpush1.bf16.msra.mxu0 %v7304
    %9700 = vmatprep.subr.bf16.mxu0 %v7321
    %9701 = vmatpush1.bf16.msra.mxu0 %v7320
    %9702 = vmatprep.subr.bf16.mxu0 %v7337
    %9703 = vmatpush1.bf16.msra.mxu0 %v7336
    %9704 = vmatprep.subr.bf16.mxu0 %v7353
    %9705 = vmatpush1.bf16.msra.mxu0 %v7352
    %9706 = vmatprep.subr.bf16.mxu0 %v7369
    %9707 = vmatpush1.bf16.msra.mxu0 %v7368
    %9708 = vmatprep.subr.bf16.mxu0 %v7385
    %9709 = vmatpush1.bf16.msra.mxu0 %v7384
    %9710 = vmatprep.mubr.bf16.mxu0 %v2951
    %9711 = vmatmul.mubr.bf16.gmra.mrb[0].mxu0 %v2950
    %v9712 = vpop.f32.mrb[0].mxu0
    %v9713 = vadd.f32 %v4013, %v9712
    %v9714 = vpop.f32.mrb[0].mxu0
    %v9715 = vadd.f32 %v4017, %v9714
    %v9716 = vpop.f32.mrb[0].mxu0
    %v9717 = vpop.f32.mrb[0].mxu0
    %9718 = vdwg.mxu0
    %9719 = vmatprep.subr.bf16.mxu0 %v7401
    %9720 = vmatpush1.bf16.msra.mxu0 %v7400
    %9721 = vmatprep.subr.bf16.mxu0 %v7417
    %9722 = vmatpush1.bf16.msra.mxu0 %v7416
    %9723 = vmatprep.subr.bf16.mxu0 %v7433
    %9724 = vmatpush1.bf16.msra.mxu0 %v7432
    %9725 = vmatprep.subr.bf16.mxu0 %v7449
    %9726 = vmatpush1.bf16.msra.mxu0 %v7448
    %9727 = vmatprep.subr.bf16.mxu0 %v7465
    %9728 = vmatpush1.bf16.msra.mxu0 %v7464
    %9729 = vmatprep.subr.bf16.mxu0 %v7481
    %9730 = vmatpush1.bf16.msra.mxu0 %v7480
    %9731 = vmatprep.subr.bf16.mxu0 %v7497
    %9732 = vmatpush1.bf16.msra.mxu0 %v7496
    %9733 = vmatprep.subr.bf16.mxu0 %v7513
    %9734 = vmatpush1.bf16.msra.mxu0 %v7512
    %9735 = vmatprep.subr.bf16.mxu0 %v7529
    %9736 = vmatpush1.bf16.msra.mxu0 %v7528
    %9737 = vmatprep.subr.bf16.mxu0 %v7545
    %9738 = vmatpush1.bf16.msra.mxu0 %v7544
    %9739 = vmatprep.subr.bf16.mxu0 %v7561
    %9740 = vmatpush1.bf16.msra.mxu0 %v7560
    %9741 = vmatprep.subr.bf16.mxu0 %v7577
    %9742 = vmatpush1.bf16.msra.mxu0 %v7576
    %9743 = vmatprep.subr.bf16.mxu0 %v7593
    %9744 = vmatpush1.bf16.msra.mxu0 %v7592
    %9745 = vmatprep.subr.bf16.mxu0 %v7609
    %9746 = vmatpush1.bf16.msra.mxu0 %v7608
    %9747 = vmatprep.subr.bf16.mxu0 %v7625
    %9748 = vmatpush1.bf16.msra.mxu0 %v7624
    %9749 = vmatprep.subr.bf16.mxu0 %v7641
    %9750 = vmatpush1.bf16.msra.mxu0 %v7640
    %9751 = vmatprep.mubr.bf16.mxu0 %v2953
    %9752 = vmatmul.mubr.bf16.gmra.mrb[0].mxu0 %v2952
    %v9753 = vpop.f32.mrb[0].mxu0
    %v9754 = vadd.f32 %v9713, %v9753
    %v9755 = vpop.f32.mrb[0].mxu0
    %v9756 = vadd.f32 %v9715, %v9755
    %v9757 = vpop.f32.mrb[0].mxu0
    %v9758 = vpop.f32.mrb[0].mxu0
    %9759 = vdwg.mxu0
    %9760 = vmatprep.subr.bf16.mxu0 %v7657
    %9761 = vmatpush1.bf16.msra.mxu0 %v7656
    %9762 = vmatprep.subr.bf16.mxu0 %v7673
    %9763 = vmatpush1.bf16.msra.mxu0 %v7672
    %9764 = vmatprep.subr.bf16.mxu0 %v7689
    %9765 = vmatpush1.bf16.msra.mxu0 %v7688
    %9766 = vmatprep.subr.bf16.mxu0 %v7705
    %9767 = vmatpush1.bf16.msra.mxu0 %v7704
    %9768 = vmatprep.subr.bf16.mxu0 %v7721
    %9769 = vmatpush1.bf16.msra.mxu0 %v7720
    %9770 = vmatprep.subr.bf16.mxu0 %v7737
    %9771 = vmatpush1.bf16.msra.mxu0 %v7736
    %9772 = vmatprep.subr.bf16.mxu0 %v7753
    %9773 = vmatpush1.bf16.msra.mxu0 %v7752
    %9774 = vmatprep.subr.bf16.mxu0 %v7769
    %9775 = vmatpush1.bf16.msra.mxu0 %v7768
    %9776 = vmatprep.subr.bf16.mxu0 %v7785
    %9777 = vmatpush1.bf16.msra.mxu0 %v7784
    %9778 = vmatprep.subr.bf16.mxu0 %v7801
    %9779 = vmatpush1.bf16.msra.mxu0 %v7800
    %9780 = vmatprep.subr.bf16.mxu0 %v7817
    %9781 = vmatpush1.bf16.msra.mxu0 %v7816
    %9782 = vmatprep.subr.bf16.mxu0 %v7833
    %9783 = vmatpush1.bf16.msra.mxu0 %v7832
    %9784 = vmatprep.subr.bf16.mxu0 %v7849
    %9785 = vmatpush1.bf16.msra.mxu0 %v7848
    %9786 = vmatprep.subr.bf16.mxu0 %v7865
    %9787 = vmatpush1.bf16.msra.mxu0 %v7864
    %9788 = vmatprep.subr.bf16.mxu0 %v7881
    %9789 = vmatpush1.bf16.msra.mxu0 %v7880
    %9790 = vmatprep.subr.bf16.mxu0 %v7897
    %9791 = vmatpush1.bf16.msra.mxu0 %v7896
    %9792 = vmatprep.mubr.bf16.mxu0 %v2955
    %9793 = vmatmul.mubr.bf16.gmra.mrb[0].mxu0 %v2954
    %v9794 = vpop.f32.mrb[0].mxu0
    %v9795 = vadd.f32 %v9754, %v9794
    %v9796 = vpop.f32.mrb[0].mxu0
    %v9797 = vadd.f32 %v9756, %v9796
    %v9798 = vpop.f32.mrb[0].mxu0
    %v9799 = vpop.f32.mrb[0].mxu0
    %9800 = vdwg.mxu0
    %9801 = vmatprep.subr.bf16.mxu0 %v7913
    %9802 = vmatpush1.bf16.msra.mxu0 %v7912
    %9803 = vmatprep.subr.bf16.mxu0 %v7929
    %9804 = vmatpush1.bf16.msra.mxu0 %v7928
    %9805 = vmatprep.subr.bf16.mxu0 %v7945
    %9806 = vmatpush1.bf16.msra.mxu0 %v7944
    %9807 = vmatprep.subr.bf16.mxu0 %v7961
    %9808 = vmatpush1.bf16.msra.mxu0 %v7960
    %9809 = vmatprep.subr.bf16.mxu0 %v7977
    %9810 = vmatpush1.bf16.msra.mxu0 %v7976
    %9811 = vmatprep.subr.bf16.mxu0 %v7993
    %9812 = vmatpush1.bf16.msra.mxu0 %v7992
    %9813 = vmatprep.subr.bf16.mxu0 %v8009
    %9814 = vmatpush1.bf16.msra.mxu0 %v8008
    %9815 = vmatprep.subr.bf16.mxu0 %v8025
    %9816 = vmatpush1.bf16.msra.mxu0 %v8024
    %9817 = vmatprep.subr.bf16.mxu0 %v8041
    %9818 = vmatpush1.bf16.msra.mxu0 %v8040
    %9819 = vmatprep.subr.bf16.mxu0 %v8057
    %9820 = vmatpush1.bf16.msra.mxu0 %v8056
    %9821 = vmatprep.subr.bf16.mxu0 %v8073
    %9822 = vmatpush1.bf16.msra.mxu0 %v8072
    %9823 = vmatprep.subr.bf16.mxu0 %v8089
    %9824 = vmatpush1.bf16.msra.mxu0 %v8088
    %9825 = vmatprep.subr.bf16.mxu0 %v8105
    %9826 = vmatpush1.bf16.msra.mxu0 %v8104
    %9827 = vmatprep.subr.bf16.mxu0 %v8121
    %9828 = vmatpush1.bf16.msra.mxu0 %v8120
    %9829 = vmatprep.subr.bf16.mxu0 %v8137
    %9830 = vmatpush1.bf16.msra.mxu0 %v8136
    %9831 = vmatprep.subr.bf16.mxu0 %v8153
    %9832 = vmatpush1.bf16.msra.mxu0 %v8152
    %9833 = vmatprep.mubr.bf16.mxu0 %v2957
    %9834 = vmatmul.mubr.bf16.gmra.mrb[0].mxu0 %v2956
    %v9835 = vpop.f32.mrb[0].mxu0
    %v9836 = vadd.f32 %v9795, %v9835
    %v9837 = vpop.f32.mrb[0].mxu0
    %v9838 = vadd.f32 %v9797, %v9837
    %v9839 = vpop.f32.mrb[0].mxu0
    %v9840 = vpop.f32.mrb[0].mxu0
    %9841 = vdwg.mxu0
    %9842 = vmatprep.subr.bf16.mxu0 %v7147
    %9843 = vmatpush1.bf16.msra.mxu0 %v7146
    %9844 = vmatprep.subr.bf16.mxu0 %v7163
    %9845 = vmatpush1.bf16.msra.mxu0 %v7162
    %9846 = vmatprep.subr.bf16.mxu0 %v7179
    %9847 = vmatpush1.bf16.msra.mxu0 %v7178
    %9848 = vmatprep.subr.bf16.mxu0 %v7195
    %9849 = vmatpush1.bf16.msra.mxu0 %v7194
    %9850 = vmatprep.subr.bf16.mxu0 %v7211
    %9851 = vmatpush1.bf16.msra.mxu0 %v7210
    %9852 = vmatprep.subr.bf16.mxu0 %v7227
    %9853 = vmatpush1.bf16.msra.mxu0 %v7226
    %9854 = vmatprep.subr.bf16.mxu0 %v7243
    %9855 = vmatpush1.bf16.msra.mxu0 %v7242
    %9856 = vmatprep.subr.bf16.mxu0 %v7259
    %9857 = vmatpush1.bf16.msra.mxu0 %v7258
    %9858 = vmatprep.subr.bf16.mxu0 %v7275
    %9859 = vmatpush1.bf16.msra.mxu0 %v7274
    %9860 = vmatprep.subr.bf16.mxu0 %v7291
    %9861 = vmatpush1.bf16.msra.mxu0 %v7290
    %9862 = vmatprep.subr.bf16.mxu0 %v7307
    %9863 = vmatpush1.bf16.msra.mxu0 %v7306
    %9864 = vmatprep.subr.bf16.mxu0 %v7323
    %9865 = vmatpush1.bf16.msra.mxu0 %v7322
    %9866 = vmatprep.subr.bf16.mxu0 %v7339
    %9867 = vmatpush1.bf16.msra.mxu0 %v7338
    %9868 = vmatprep.subr.bf16.mxu0 %v7355
    %9869 = vmatpush1.bf16.msra.mxu0 %v7354
    %9870 = vmatprep.subr.bf16.mxu0 %v7371
    %9871 = vmatpush1.bf16.msra.mxu0 %v7370
    %9872 = vmatprep.subr.bf16.mxu0 %v7387
    %9873 = vmatpush1.bf16.msra.mxu0 %v7386
    %9874 = vmatprep.mubr.bf16.mxu0 %v2951
    %9875 = vmatmul.mubr.bf16.gmra.mrb[0].mxu0 %v2950
    %v9876 = vpop.f32.mrb[0].mxu0
    %v9877 = vadd.f32 %v4021, %v9876
    %v9878 = vpop.f32.mrb[0].mxu0
    %v9879 = vadd.f32 %v4025, %v9878
    %v9880 = vpop.f32.mrb[0].mxu0
    %v9881 = vpop.f32.mrb[0].mxu0
    %9882 = vdwg.mxu0
    %9883 = vmatprep.subr.bf16.mxu0 %v7403
    %9884 = vmatpush1.bf16.msra.mxu0 %v7402
    %9885 = vmatprep.subr.bf16.mxu0 %v7419
    %9886 = vmatpush1.bf16.msra.mxu0 %v7418
    %9887 = vmatprep.subr.bf16.mxu0 %v7435
    %9888 = vmatpush1.bf16.msra.mxu0 %v7434
    %9889 = vmatprep.subr.bf16.mxu0 %v7451
    %9890 = vmatpush1.bf16.msra.mxu0 %v7450
    %9891 = vmatprep.subr.bf16.mxu0 %v7467
    %9892 = vmatpush1.bf16.msra.mxu0 %v7466
    %9893 = vmatprep.subr.bf16.mxu0 %v7483
    %9894 = vmatpush1.bf16.msra.mxu0 %v7482
    %9895 = vmatprep.subr.bf16.mxu0 %v7499
    %9896 = vmatpush1.bf16.msra.mxu0 %v7498
    %9897 = vmatprep.subr.bf16.mxu0 %v7515
    %9898 = vmatpush1.bf16.msra.mxu0 %v7514
    %9899 = vmatprep.subr.bf16.mxu0 %v7531
    %9900 = vmatpush1.bf16.msra.mxu0 %v7530
    %9901 = vmatprep.subr.bf16.mxu0 %v7547
    %9902 = vmatpush1.bf16.msra.mxu0 %v7546
    %9903 = vmatprep.subr.bf16.mxu0 %v7563
    %9904 = vmatpush1.bf16.msra.mxu0 %v7562
    %9905 = vmatprep.subr.bf16.mxu0 %v7579
    %9906 = vmatpush1.bf16.msra.mxu0 %v7578
    %9907 = vmatprep.subr.bf16.mxu0 %v7595
    %9908 = vmatpush1.bf16.msra.mxu0 %v7594
    %9909 = vmatprep.subr.bf16.mxu0 %v7611
    %9910 = vmatpush1.bf16.msra.mxu0 %v7610
    %9911 = vmatprep.subr.bf16.mxu0 %v7627
    %9912 = vmatpush1.bf16.msra.mxu0 %v7626
    %9913 = vmatprep.subr.bf16.mxu0 %v7643
    %9914 = vmatpush1.bf16.msra.mxu0 %v7642
    %9915 = vmatprep.mubr.bf16.mxu0 %v2953
    %9916 = vmatmul.mubr.bf16.gmra.mrb[0].mxu0 %v2952
    %v9917 = vpop.f32.mrb[0].mxu0
    %v9918 = vadd.f32 %v9877, %v9917
    %v9919 = vpop.f32.mrb[0].mxu0
    %v9920 = vadd.f32 %v9879, %v9919
    %v9921 = vpop.f32.mrb[0].mxu0
    %v9922 = vpop.f32.mrb[0].mxu0
    %9923 = vdwg.mxu0
    %9924 = vmatprep.subr.bf16.mxu0 %v7659
    %9925 = vmatpush1.bf16.msra.mxu0 %v7658
    %9926 = vmatprep.subr.bf16.mxu0 %v7675
    %9927 = vmatpush1.bf16.msra.mxu0 %v7674
    %9928 = vmatprep.subr.bf16.mxu0 %v7691
    %9929 = vmatpush1.bf16.msra.mxu0 %v7690
    %9930 = vmatprep.subr.bf16.mxu0 %v7707
    %9931 = vmatpush1.bf16.msra.mxu0 %v7706
    %9932 = vmatprep.subr.bf16.mxu0 %v7723
    %9933 = vmatpush1.bf16.msra.mxu0 %v7722
    %9934 = vmatprep.subr.bf16.mxu0 %v7739
    %9935 = vmatpush1.bf16.msra.mxu0 %v7738
    %9936 = vmatprep.subr.bf16.mxu0 %v7755
    %9937 = vmatpush1.bf16.msra.mxu0 %v7754
    %9938 = vmatprep.subr.bf16.mxu0 %v7771
    %9939 = vmatpush1.bf16.msra.mxu0 %v7770
    %9940 = vmatprep.subr.bf16.mxu0 %v7787
    %9941 = vmatpush1.bf16.msra.mxu0 %v7786
    %9942 = vmatprep.subr.bf16.mxu0 %v7803
    %9943 = vmatpush1.bf16.msra.mxu0 %v7802
    %9944 = vmatprep.subr.bf16.mxu0 %v7819
    %9945 = vmatpush1.bf16.msra.mxu0 %v7818
    %9946 = vmatprep.subr.bf16.mxu0 %v7835
    %9947 = vmatpush1.bf16.msra.mxu0 %v7834
    %9948 = vmatprep.subr.bf16.mxu0 %v7851
    %9949 = vmatpush1.bf16.msra.mxu0 %v7850
    %9950 = vmatprep.subr.bf16.mxu0 %v7867
    %9951 = vmatpush1.bf16.msra.mxu0 %v7866
    %9952 = vmatprep.subr.bf16.mxu0 %v7883
    %9953 = vmatpush1.bf16.msra.mxu0 %v7882
    %9954 = vmatprep.subr.bf16.mxu0 %v7899
    %9955 = vmatpush1.bf16.msra.mxu0 %v7898
    %9956 = vmatprep.mubr.bf16.mxu0 %v2955
    %9957 = vmatmul.mubr.bf16.gmra.mrb[0].mxu0 %v2954
    %v9958 = vpop.f32.mrb[0].mxu0
    %v9959 = vadd.f32 %v9918, %v9958
    %v9960 = vpop.f32.mrb[0].mxu0
    %v9961 = vadd.f32 %v9920, %v9960
    %v9962 = vpop.f32.mrb[0].mxu0
    %v9963 = vpop.f32.mrb[0].mxu0
    %9964 = vdwg.mxu0
    %9965 = vmatprep.subr.bf16.mxu0 %v7915
    %9966 = vmatpush1.bf16.msra.mxu0 %v7914
    %9967 = vmatprep.subr.bf16.mxu0 %v7931
    %9968 = vmatpush1.bf16.msra.mxu0 %v7930
    %9969 = vmatprep.subr.bf16.mxu0 %v7947
    %9970 = vmatpush1.bf16.msra.mxu0 %v7946
    %9971 = vmatprep.subr.bf16.mxu0 %v7963
    %9972 = vmatpush1.bf16.msra.mxu0 %v7962
    %9973 = vmatprep.subr.bf16.mxu0 %v7979
    %9974 = vmatpush1.bf16.msra.mxu0 %v7978
    %9975 = vmatprep.subr.bf16.mxu0 %v7995
    %9976 = vmatpush1.bf16.msra.mxu0 %v7994
    %9977 = vmatprep.subr.bf16.mxu0 %v8011
    %9978 = vmatpush1.bf16.msra.mxu0 %v8010
    %9979 = vmatprep.subr.bf16.mxu0 %v8027
    %9980 = vmatpush1.bf16.msra.mxu0 %v8026
    %9981 = vmatprep.subr.bf16.mxu0 %v8043
    %9982 = vmatpush1.bf16.msra.mxu0 %v8042
    %9983 = vmatprep.subr.bf16.mxu0 %v8059
    %9984 = vmatpush1.bf16.msra.mxu0 %v8058
    %9985 = vmatprep.subr.bf16.mxu0 %v8075
    %9986 = vmatpush1.bf16.msra.mxu0 %v8074
    %9987 = vmatprep.subr.bf16.mxu0 %v8091
    %9988 = vmatpush1.bf16.msra.mxu0 %v8090
    %9989 = vmatprep.subr.bf16.mxu0 %v8107
    %9990 = vmatpush1.bf16.msra.mxu0 %v8106
    %9991 = vmatprep.subr.bf16.mxu0 %v8123
    %9992 = vmatpush1.bf16.msra.mxu0 %v8122
    %9993 = vmatprep.subr.bf16.mxu0 %v8139
    %9994 = vmatpush1.bf16.msra.mxu0 %v8138
    %9995 = vmatprep.subr.bf16.mxu0 %v8155
    %9996 = vmatpush1.bf16.msra.mxu0 %v8154
    %9997 = vmatprep.mubr.bf16.mxu0 %v2957
    %9998 = vmatmul.mubr.bf16.gmra.mrb[0].mxu0 %v2956
    %v9999 = vpop.f32.mrb[0].mxu0
    %v10000 = vadd.f32 %v9959, %v9999
    %v10001 = vpop.f32.mrb[0].mxu0
    %v10002 = vadd.f32 %v9961, %v10001
    %v10003 = vpop.f32.mrb[0].mxu0
    %v10004 = vpop.f32.mrb[0].mxu0
    %10005 = vdwg.mxu0
    %10006 = vmatprep.subr.bf16.mxu0 %v7149
    %10007 = vmatpush1.bf16.msra.mxu0 %v7148
    %10008 = vmatprep.subr.bf16.mxu0 %v7165
    %10009 = vmatpush1.bf16.msra.mxu0 %v7164
    %10010 = vmatprep.subr.bf16.mxu0 %v7181
    %10011 = vmatpush1.bf16.msra.mxu0 %v7180
    %10012 = vmatprep.subr.bf16.mxu0 %v7197
    %10013 = vmatpush1.bf16.msra.mxu0 %v7196
    %10014 = vmatprep.subr.bf16.mxu0 %v7213
    %10015 = vmatpush1.bf16.msra.mxu0 %v7212
    %10016 = vmatprep.subr.bf16.mxu0 %v7229
    %10017 = vmatpush1.bf16.msra.mxu0 %v7228
    %10018 = vmatprep.subr.bf16.mxu0 %v7245
    %10019 = vmatpush1.bf16.msra.mxu0 %v7244
    %10020 = vmatprep.subr.bf16.mxu0 %v7261
    %10021 = vmatpush1.bf16.msra.mxu0 %v7260
    %10022 = vmatprep.subr.bf16.mxu0 %v7277
    %10023 = vmatpush1.bf16.msra.mxu0 %v7276
    %10024 = vmatprep.subr.bf16.mxu0 %v7293
    %10025 = vmatpush1.bf16.msra.mxu0 %v7292
    %10026 = vmatprep.subr.bf16.mxu0 %v7309
    %10027 = vmatpush1.bf16.msra.mxu0 %v7308
    %10028 = vmatprep.subr.bf16.mxu0 %v7325
    %10029 = vmatpush1.bf16.msra.mxu0 %v7324
    %10030 = vmatprep.subr.bf16.mxu0 %v7341
    %10031 = vmatpush1.bf16.msra.mxu0 %v7340
    %10032 = vmatprep.subr.bf16.mxu0 %v7357
    %10033 = vmatpush1.bf16.msra.mxu0 %v7356
    %10034 = vmatprep.subr.bf16.mxu0 %v7373
    %10035 = vmatpush1.bf16.msra.mxu0 %v7372
    %10036 = vmatprep.subr.bf16.mxu0 %v7389
    %10037 = vmatpush1.bf16.msra.mxu0 %v7388
    %10038 = vmatprep.mubr.bf16.mxu0 %v2951
    %10039 = vmatmul.mubr.bf16.gmra.mrb[0].mxu0 %v2950
    %v10040 = vpop.f32.mrb[0].mxu0
    %v10041 = vadd.f32 %v4029, %v10040
    %v10042 = vpop.f32.mrb[0].mxu0
    %v10043 = vadd.f32 %v4033, %v10042
    %v10044 = vpop.f32.mrb[0].mxu0
    %v10045 = vpop.f32.mrb[0].mxu0
    %10046 = vdwg.mxu0
    %10047 = vmatprep.subr.bf16.mxu0 %v7405
    %10048 = vmatpush1.bf16.msra.mxu0 %v7404
    %10049 = vmatprep.subr.bf16.mxu0 %v7421
    %10050 = vmatpush1.bf16.msra.mxu0 %v7420
    %10051 = vmatprep.subr.bf16.mxu0 %v7437
    %10052 = vmatpush1.bf16.msra.mxu0 %v7436
    %10053 = vmatprep.subr.bf16.mxu0 %v7453
    %10054 = vmatpush1.bf16.msra.mxu0 %v7452
    %10055 = vmatprep.subr.bf16.mxu0 %v7469
    %10056 = vmatpush1.bf16.msra.mxu0 %v7468
    %10057 = vmatprep.subr.bf16.mxu0 %v7485
    %10058 = vmatpush1.bf16.msra.mxu0 %v7484
    %10059 = vmatprep.subr.bf16.mxu0 %v7501
    %10060 = vmatpush1.bf16.msra.mxu0 %v7500
    %10061 = vmatprep.subr.bf16.mxu0 %v7517
    %10062 = vmatpush1.bf16.msra.mxu0 %v7516
    %10063 = vmatprep.subr.bf16.mxu0 %v7533
    %10064 = vmatpush1.bf16.msra.mxu0 %v7532
    %10065 = vmatprep.subr.bf16.mxu0 %v7549
    %10066 = vmatpush1.bf16.msra.mxu0 %v7548
    %10067 = vmatprep.subr.bf16.mxu0 %v7565
    %10068 = vmatpush1.bf16.msra.mxu0 %v7564
    %10069 = vmatprep.subr.bf16.mxu0 %v7581
    %10070 = vmatpush1.bf16.msra.mxu0 %v7580
    %10071 = vmatprep.subr.bf16.mxu0 %v7597
    %10072 = vmatpush1.bf16.msra.mxu0 %v7596
    %10073 = vmatprep.subr.bf16.mxu0 %v7613
    %10074 = vmatpush1.bf16.msra.mxu0 %v7612
    %10075 = vmatprep.subr.bf16.mxu0 %v7629
    %10076 = vmatpush1.bf16.msra.mxu0 %v7628
    %10077 = vmatprep.subr.bf16.mxu0 %v7645
    %10078 = vmatpush1.bf16.msra.mxu0 %v7644
    %10079 = vmatprep.mubr.bf16.mxu0 %v2953
    %10080 = vmatmul.mubr.bf16.gmra.mrb[0].mxu0 %v2952
    %v10081 = vpop.f32.mrb[0].mxu0
    %v10082 = vadd.f32 %v10041, %v10081
    %v10083 = vpop.f32.mrb[0].mxu0
    %v10084 = vadd.f32 %v10043, %v10083
    %v10085 = vpop.f32.mrb[0].mxu0
    %v10086 = vpop.f32.mrb[0].mxu0
    %10087 = vdwg.mxu0
    %10088 = vmatprep.subr.bf16.mxu0 %v7661
    %10089 = vmatpush1.bf16.msra.mxu0 %v7660
    %10090 = vmatprep.subr.bf16.mxu0 %v7677
    %10091 = vmatpush1.bf16.msra.mxu0 %v7676
    %10092 = vmatprep.subr.bf16.mxu0 %v7693
    %10093 = vmatpush1.bf16.msra.mxu0 %v7692
    %10094 = vmatprep.subr.bf16.mxu0 %v7709
    %10095 = vmatpush1.bf16.msra.mxu0 %v7708
    %10096 = vmatprep.subr.bf16.mxu0 %v7725
    %10097 = vmatpush1.bf16.msra.mxu0 %v7724
    %10098 = vmatprep.subr.bf16.mxu0 %v7741
    %10099 = vmatpush1.bf16.msra.mxu0 %v7740
    %10100 = vmatprep.subr.bf16.mxu0 %v7757
    %10101 = vmatpush1.bf16.msra.mxu0 %v7756
    %10102 = vmatprep.subr.bf16.mxu0 %v7773
    %10103 = vmatpush1.bf16.msra.mxu0 %v7772
    %10104 = vmatprep.subr.bf16.mxu0 %v7789
    %10105 = vmatpush1.bf16.msra.mxu0 %v7788
    %10106 = vmatprep.subr.bf16.mxu0 %v7805
    %10107 = vmatpush1.bf16.msra.mxu0 %v7804
    %10108 = vmatprep.subr.bf16.mxu0 %v7821
    %10109 = vmatpush1.bf16.msra.mxu0 %v7820
    %10110 = vmatprep.subr.bf16.mxu0 %v7837
    %10111 = vmatpush1.bf16.msra.mxu0 %v7836
    %10112 = vmatprep.subr.bf16.mxu0 %v7853
    %10113 = vmatpush1.bf16.msra.mxu0 %v7852
    %10114 = vmatprep.subr.bf16.mxu0 %v7869
    %10115 = vmatpush1.bf16.msra.mxu0 %v7868
    %10116 = vmatprep.subr.bf16.mxu0 %v7885
    %10117 = vmatpush1.bf16.msra.mxu0 %v7884
    %10118 = vmatprep.subr.bf16.mxu0 %v7901
    %10119 = vmatpush1.bf16.msra.mxu0 %v7900
    %10120 = vmatprep.mubr.bf16.mxu0 %v2955
    %10121 = vmatmul.mubr.bf16.gmra.mrb[0].mxu0 %v2954
    %v10122 = vpop.f32.mrb[0].mxu0
    %v10123 = vadd.f32 %v10082, %v10122
    %v10124 = vpop.f32.mrb[0].mxu0
    %v10125 = vadd.f32 %v10084, %v10124
    %v10126 = vpop.f32.mrb[0].mxu0
    %v10127 = vpop.f32.mrb[0].mxu0
    %10128 = vdwg.mxu0
    %10129 = vmatprep.subr.bf16.mxu0 %v7917
    %10130 = vmatpush1.bf16.msra.mxu0 %v7916
    %10131 = vmatprep.subr.bf16.mxu0 %v7933
    %10132 = vmatpush1.bf16.msra.mxu0 %v7932
    %10133 = vmatprep.subr.bf16.mxu0 %v7949
    %10134 = vmatpush1.bf16.msra.mxu0 %v7948
    %10135 = vmatprep.subr.bf16.mxu0 %v7965
    %10136 = vmatpush1.bf16.msra.mxu0 %v7964
    %10137 = vmatprep.subr.bf16.mxu0 %v7981
    %10138 = vmatpush1.bf16.msra.mxu0 %v7980
    %10139 = vmatprep.subr.bf16.mxu0 %v7997
    %10140 = vmatpush1.bf16.msra.mxu0 %v7996
    %10141 = vmatprep.subr.bf16.mxu0 %v8013
    %10142 = vmatpush1.bf16.msra.mxu0 %v8012
    %10143 = vmatprep.subr.bf16.mxu0 %v8029
    %10144 = vmatpush1.bf16.msra.mxu0 %v8028
    %10145 = vmatprep.subr.bf16.mxu0 %v8045
    %10146 = vmatpush1.bf16.msra.mxu0 %v8044
    %10147 = vmatprep.subr.bf16.mxu0 %v8061
    %10148 = vmatpush1.bf16.msra.mxu0 %v8060
    %10149 = vmatprep.subr.bf16.mxu0 %v8077
    %10150 = vmatpush1.bf16.msra.mxu0 %v8076
    %10151 = vmatprep.subr.bf16.mxu0 %v8093
    %10152 = vmatpush1.bf16.msra.mxu0 %v8092
    %10153 = vmatprep.subr.bf16.mxu0 %v8109
    %10154 = vmatpush1.bf16.msra.mxu0 %v8108
    %10155 = vmatprep.subr.bf16.mxu0 %v8125
    %10156 = vmatpush1.bf16.msra.mxu0 %v8124
    %10157 = vmatprep.subr.bf16.mxu0 %v8141
    %10158 = vmatpush1.bf16.msra.mxu0 %v8140
    %10159 = vmatprep.subr.bf16.mxu0 %v8157
    %10160 = vmatpush1.bf16.msra.mxu0 %v8156
    %10161 = vmatprep.mubr.bf16.mxu0 %v2957
    %10162 = vmatmul.mubr.bf16.gmra.mrb[0].mxu0 %v2956
    %v10163 = vpop.f32.mrb[0].mxu0
    %v10164 = vadd.f32 %v10123, %v10163
    %v10165 = vpop.f32.mrb[0].mxu0
    %v10166 = vadd.f32 %v10125, %v10165
    %v10167 = vpop.f32.mrb[0].mxu0
    %v10168 = vpop.f32.mrb[0].mxu0
    %10169 = vdwg.mxu0
    %10170 = vmatprep.subr.bf16.mxu0 %v7151
    %10171 = vmatpush1.bf16.msra.mxu0 %v7150
    %10172 = vmatprep.subr.bf16.mxu0 %v7167
    %10173 = vmatpush1.bf16.msra.mxu0 %v7166
    %10174 = vmatprep.subr.bf16.mxu0 %v7183
    %10175 = vmatpush1.bf16.msra.mxu0 %v7182
    %10176 = vmatprep.subr.bf16.mxu0 %v7199
    %10177 = vmatpush1.bf16.msra.mxu0 %v7198
    %10178 = vmatprep.subr.bf16.mxu0 %v7215
    %10179 = vmatpush1.bf16.msra.mxu0 %v7214
    %10180 = vmatprep.subr.bf16.mxu0 %v7231
    %10181 = vmatpush1.bf16.msra.mxu0 %v7230
    %10182 = vmatprep.subr.bf16.mxu0 %v7247
    %10183 = vmatpush1.bf16.msra.mxu0 %v7246
    %10184 = vmatprep.subr.bf16.mxu0 %v7263
    %10185 = vmatpush1.bf16.msra.mxu0 %v7262
    %10186 = vmatprep.subr.bf16.mxu0 %v7279
    %10187 = vmatpush1.bf16.msra.mxu0 %v7278
    %10188 = vmatprep.subr.bf16.mxu0 %v7295
    %10189 = vmatpush1.bf16.msra.mxu0 %v7294
    %10190 = vmatprep.subr.bf16.mxu0 %v7311
    %10191 = vmatpush1.bf16.msra.mxu0 %v7310
    %10192 = vmatprep.subr.bf16.mxu0 %v7327
    %10193 = vmatpush1.bf16.msra.mxu0 %v7326
    %10194 = vmatprep.subr.bf16.mxu0 %v7343
    %10195 = vmatpush1.bf16.msra.mxu0 %v7342
    %10196 = vmatprep.subr.bf16.mxu0 %v7359
    %10197 = vmatpush1.bf16.msra.mxu0 %v7358
    %10198 = vmatprep.subr.bf16.mxu0 %v7375
    %10199 = vmatpush1.bf16.msra.mxu0 %v7374
    %10200 = vmatprep.subr.bf16.mxu0 %v7391
    %10201 = vmatpush1.bf16.msra.mxu0 %v7390
    %10202 = vmatprep.mubr.bf16.mxu0 %v2951
    %10203 = vmatmul.mubr.bf16.gmra.mrb[0].mxu0 %v2950
    %v10204 = vpop.f32.mrb[0].mxu0
    %v10205 = vadd.f32 %v4037, %v10204
    %v10206 = vpop.f32.mrb[0].mxu0
    %v10207 = vadd.f32 %v4041, %v10206
    %v10208 = vpop.f32.mrb[0].mxu0
    %v10209 = vpop.f32.mrb[0].mxu0
    %10210 = vdwg.mxu0
    %10211 = vmatprep.subr.bf16.mxu0 %v7407
    %10212 = vmatpush1.bf16.msra.mxu0 %v7406
    %10213 = vmatprep.subr.bf16.mxu0 %v7423
    %10214 = vmatpush1.bf16.msra.mxu0 %v7422
    %10215 = vmatprep.subr.bf16.mxu0 %v7439
    %10216 = vmatpush1.bf16.msra.mxu0 %v7438
    %10217 = vmatprep.subr.bf16.mxu0 %v7455
    %10218 = vmatpush1.bf16.msra.mxu0 %v7454
    %10219 = vmatprep.subr.bf16.mxu0 %v7471
    %10220 = vmatpush1.bf16.msra.mxu0 %v7470
    %10221 = vmatprep.subr.bf16.mxu0 %v7487
    %10222 = vmatpush1.bf16.msra.mxu0 %v7486
    %10223 = vmatprep.subr.bf16.mxu0 %v7503
    %10224 = vmatpush1.bf16.msra.mxu0 %v7502
    %10225 = vmatprep.subr.bf16.mxu0 %v7519
    %10226 = vmatpush1.bf16.msra.mxu0 %v7518
    %10227 = vmatprep.subr.bf16.mxu0 %v7535
    %10228 = vmatpush1.bf16.msra.mxu0 %v7534
    %10229 = vmatprep.subr.bf16.mxu0 %v7551
    %10230 = vmatpush1.bf16.msra.mxu0 %v7550
    %10231 = vmatprep.subr.bf16.mxu0 %v7567
    %10232 = vmatpush1.bf16.msra.mxu0 %v7566
    %10233 = vmatprep.subr.bf16.mxu0 %v7583
    %10234 = vmatpush1.bf16.msra.mxu0 %v7582
    %10235 = vmatprep.subr.bf16.mxu0 %v7599
    %10236 = vmatpush1.bf16.msra.mxu0 %v7598
    %10237 = vmatprep.subr.bf16.mxu0 %v7615
    %10238 = vmatpush1.bf16.msra.mxu0 %v7614
    %10239 = vmatprep.subr.bf16.mxu0 %v7631
    %10240 = vmatpush1.bf16.msra.mxu0 %v7630
    %10241 = vmatprep.subr.bf16.mxu0 %v7647
    %10242 = vmatpush1.bf16.msra.mxu0 %v7646
    %10243 = vmatprep.mubr.bf16.mxu0 %v2953
    %10244 = vmatmul.mubr.bf16.gmra.mrb[0].mxu0 %v2952
    %v10245 = vpop.f32.mrb[0].mxu0
    %v10246 = vadd.f32 %v10205, %v10245
    %v10247 = vpop.f32.mrb[0].mxu0
    %v10248 = vadd.f32 %v10207, %v10247
    %v10249 = vpop.f32.mrb[0].mxu0
    %v10250 = vpop.f32.mrb[0].mxu0
    %10251 = vdwg.mxu0
    %10252 = vmatprep.subr.bf16.mxu0 %v7663
    %10253 = vmatpush1.bf16.msra.mxu0 %v7662
    %10254 = vmatprep.subr.bf16.mxu0 %v7679
    %10255 = vmatpush1.bf16.msra.mxu0 %v7678
    %10256 = vmatprep.subr.bf16.mxu0 %v7695
    %10257 = vmatpush1.bf16.msra.mxu0 %v7694
    %10258 = vmatprep.subr.bf16.mxu0 %v7711
    %10259 = vmatpush1.bf16.msra.mxu0 %v7710
    %10260 = vmatprep.subr.bf16.mxu0 %v7727
    %10261 = vmatpush1.bf16.msra.mxu0 %v7726
    %10262 = vmatprep.subr.bf16.mxu0 %v7743
    %10263 = vmatpush1.bf16.msra.mxu0 %v7742
    %10264 = vmatprep.subr.bf16.mxu0 %v7759
    %10265 = vmatpush1.bf16.msra.mxu0 %v7758
    %10266 = vmatprep.subr.bf16.mxu0 %v7775
    %10267 = vmatpush1.bf16.msra.mxu0 %v7774
    %10268 = vmatprep.subr.bf16.mxu0 %v7791
    %10269 = vmatpush1.bf16.msra.mxu0 %v7790
    %10270 = vmatprep.subr.bf16.mxu0 %v7807
    %10271 = vmatpush1.bf16.msra.mxu0 %v7806
    %10272 = vmatprep.subr.bf16.mxu0 %v7823
    %10273 = vmatpush1.bf16.msra.mxu0 %v7822
    %10274 = vmatprep.subr.bf16.mxu0 %v7839
    %10275 = vmatpush1.bf16.msra.mxu0 %v7838
    %10276 = vmatprep.subr.bf16.mxu0 %v7855
    %10277 = vmatpush1.bf16.msra.mxu0 %v7854
    %10278 = vmatprep.subr.bf16.mxu0 %v7871
    %10279 = vmatpush1.bf16.msra.mxu0 %v7870
    %10280 = vmatprep.subr.bf16.mxu0 %v7887
    %10281 = vmatpush1.bf16.msra.mxu0 %v7886
    %10282 = vmatprep.subr.bf16.mxu0 %v7903
    %10283 = vmatpush1.bf16.msra.mxu0 %v7902
    %10284 = vmatprep.mubr.bf16.mxu0 %v2955
    %10285 = vmatmul.mubr.bf16.gmra.mrb[0].mxu0 %v2954
    %v10286 = vpop.f32.mrb[0].mxu0
    %v10287 = vadd.f32 %v10246, %v10286
    %v10288 = vpop.f32.mrb[0].mxu0
    %v10289 = vadd.f32 %v10248, %v10288
    %v10290 = vpop.f32.mrb[0].mxu0
    %v10291 = vpop.f32.mrb[0].mxu0
    %10292 = vdwg.mxu0
    %10293 = vmatprep.subr.bf16.mxu0 %v7919
    %10294 = vmatpush1.bf16.msra.mxu0 %v7918
    %10295 = vmatprep.subr.bf16.mxu0 %v7935
    %10296 = vmatpush1.bf16.msra.mxu0 %v7934
    %10297 = vmatprep.subr.bf16.mxu0 %v7951
    %10298 = vmatpush1.bf16.msra.mxu0 %v7950
    %10299 = vmatprep.subr.bf16.mxu0 %v7967
    %10300 = vmatpush1.bf16.msra.mxu0 %v7966
    %10301 = vmatprep.subr.bf16.mxu0 %v7983
    %10302 = vmatpush1.bf16.msra.mxu0 %v7982
    %10303 = vmatprep.subr.bf16.mxu0 %v7999
    %10304 = vmatpush1.bf16.msra.mxu0 %v7998
    %10305 = vmatprep.subr.bf16.mxu0 %v8015
    %10306 = vmatpush1.bf16.msra.mxu0 %v8014
    %10307 = vmatprep.subr.bf16.mxu0 %v8031
    %10308 = vmatpush1.bf16.msra.mxu0 %v8030
    %10309 = vmatprep.subr.bf16.mxu0 %v8047
    %10310 = vmatpush1.bf16.msra.mxu0 %v8046
    %10311 = vmatprep.subr.bf16.mxu0 %v8063
    %10312 = vmatpush1.bf16.msra.mxu0 %v8062
    %10313 = vmatprep.subr.bf16.mxu0 %v8079
    %10314 = vmatpush1.bf16.msra.mxu0 %v8078
    %10315 = vmatprep.subr.bf16.mxu0 %v8095
    %10316 = vmatpush1.bf16.msra.mxu0 %v8094
    %10317 = vmatprep.subr.bf16.mxu0 %v8111
    %10318 = vmatpush1.bf16.msra.mxu0 %v8110
    %10319 = vmatprep.subr.bf16.mxu0 %v8127
    %10320 = vmatpush1.bf16.msra.mxu0 %v8126
    %10321 = vmatprep.subr.bf16.mxu0 %v8143
    %10322 = vmatpush1.bf16.msra.mxu0 %v8142
    %10323 = vmatprep.subr.bf16.mxu0 %v8159
    %10324 = vmatpush1.bf16.msra.mxu0 %v8158
    %10325 = vmatprep.mubr.bf16.mxu0 %v2957
    %10326 = vmatmul.mubr.bf16.gmra.mrb[0].mxu0 %v2956
    %v10327 = vpop.f32.mrb[0].mxu0
    %v10328 = vadd.f32 %v10287, %v10327
    %v10329 = vpop.f32.mrb[0].mxu0
    %v10330 = vadd.f32 %v10289, %v10329
    %v10331 = vpop.f32.mrb[0].mxu0
    %v10332 = vpop.f32.mrb[0].mxu0
    %10333 = vdwg.mxu0
    %10334 = vmatprep.subr.bf16.mxu0 %v7153
    %10335 = vmatpush1.bf16.msra.mxu0 %v7152
    %10336 = vmatprep.subr.bf16.mxu0 %v7169
    %10337 = vmatpush1.bf16.msra.mxu0 %v7168
    %10338 = vmatprep.subr.bf16.mxu0 %v7185
    %10339 = vmatpush1.bf16.msra.mxu0 %v7184
    %10340 = vmatprep.subr.bf16.mxu0 %v7201
    %10341 = vmatpush1.bf16.msra.mxu0 %v7200
    %10342 = vmatprep.subr.bf16.mxu0 %v7217
    %10343 = vmatpush1.bf16.msra.mxu0 %v7216
    %10344 = vmatprep.subr.bf16.mxu0 %v7233
    %10345 = vmatpush1.bf16.msra.mxu0 %v7232
    %10346 = vmatprep.subr.bf16.mxu0 %v7249
    %10347 = vmatpush1.bf16.msra.mxu0 %v7248
    %10348 = vmatprep.subr.bf16.mxu0 %v7265
    %10349 = vmatpush1.bf16.msra.mxu0 %v7264
    %10350 = vmatprep.subr.bf16.mxu0 %v7281
    %10351 = vmatpush1.bf16.msra.mxu0 %v7280
    %10352 = vmatprep.subr.bf16.mxu0 %v7297
    %10353 = vmatpush1.bf16.msra.mxu0 %v7296
    %10354 = vmatprep.subr.bf16.mxu0 %v7313
    %10355 = vmatpush1.bf16.msra.mxu0 %v7312
    %10356 = vmatprep.subr.bf16.mxu0 %v7329
    %10357 = vmatpush1.bf16.msra.mxu0 %v7328
    %10358 = vmatprep.subr.bf16.mxu0 %v7345
    %10359 = vmatpush1.bf16.msra.mxu0 %v7344
    %10360 = vmatprep.subr.bf16.mxu0 %v7361
    %10361 = vmatpush1.bf16.msra.mxu0 %v7360
    %10362 = vmatprep.subr.bf16.mxu0 %v7377
    %10363 = vmatpush1.bf16.msra.mxu0 %v7376
    %10364 = vmatprep.subr.bf16.mxu0 %v7393
    %10365 = vmatpush1.bf16.msra.mxu0 %v7392
    %10366 = vmatprep.mubr.bf16.mxu0 %v2951
    %10367 = vmatmul.mubr.bf16.gmra.mrb[0].mxu0 %v2950
    %v10368 = vpop.f32.mrb[0].mxu0
    %v10369 = vadd.f32 %v4045, %v10368
    %v10370 = vpop.f32.mrb[0].mxu0
    %v10371 = vadd.f32 %v4049, %v10370
    %v10372 = vpop.f32.mrb[0].mxu0
    %v10373 = vpop.f32.mrb[0].mxu0
    %10374 = vdwg.mxu0
    %10375 = vmatprep.subr.bf16.mxu0 %v7409
    %10376 = vmatpush1.bf16.msra.mxu0 %v7408
    %10377 = vmatprep.subr.bf16.mxu0 %v7425
    %10378 = vmatpush1.bf16.msra.mxu0 %v7424
    %10379 = vmatprep.subr.bf16.mxu0 %v7441
    %10380 = vmatpush1.bf16.msra.mxu0 %v7440
    %10381 = vmatprep.subr.bf16.mxu0 %v7457
    %10382 = vmatpush1.bf16.msra.mxu0 %v7456
    %10383 = vmatprep.subr.bf16.mxu0 %v7473
    %10384 = vmatpush1.bf16.msra.mxu0 %v7472
    %10385 = vmatprep.subr.bf16.mxu0 %v7489
    %10386 = vmatpush1.bf16.msra.mxu0 %v7488
    %10387 = vmatprep.subr.bf16.mxu0 %v7505
    %10388 = vmatpush1.bf16.msra.mxu0 %v7504
    %10389 = vmatprep.subr.bf16.mxu0 %v7521
    %10390 = vmatpush1.bf16.msra.mxu0 %v7520
    %10391 = vmatprep.subr.bf16.mxu0 %v7537
    %10392 = vmatpush1.bf16.msra.mxu0 %v7536
    %10393 = vmatprep.subr.bf16.mxu0 %v7553
    %10394 = vmatpush1.bf16.msra.mxu0 %v7552
    %10395 = vmatprep.subr.bf16.mxu0 %v7569
    %10396 = vmatpush1.bf16.msra.mxu0 %v7568
    %10397 = vmatprep.subr.bf16.mxu0 %v7585
    %10398 = vmatpush1.bf16.msra.mxu0 %v7584
    %10399 = vmatprep.subr.bf16.mxu0 %v7601
    %10400 = vmatpush1.bf16.msra.mxu0 %v7600
    %10401 = vmatprep.subr.bf16.mxu0 %v7617
    %10402 = vmatpush1.bf16.msra.mxu0 %v7616
    %10403 = vmatprep.subr.bf16.mxu0 %v7633
    %10404 = vmatpush1.bf16.msra.mxu0 %v7632
    %10405 = vmatprep.subr.bf16.mxu0 %v7649
    %10406 = vmatpush1.bf16.msra.mxu0 %v7648
    %10407 = vmatprep.mubr.bf16.mxu0 %v2953
    %10408 = vmatmul.mubr.bf16.gmra.mrb[0].mxu0 %v2952
    %v10409 = vpop.f32.mrb[0].mxu0
    %v10410 = vadd.f32 %v10369, %v10409
    %v10411 = vpop.f32.mrb[0].mxu0
    %v10412 = vadd.f32 %v10371, %v10411
    %v10413 = vpop.f32.mrb[0].mxu0
    %v10414 = vpop.f32.mrb[0].mxu0
    %10415 = vdwg.mxu0
    %10416 = vmatprep.subr.bf16.mxu0 %v7665
    %10417 = vmatpush1.bf16.msra.mxu0 %v7664
    %10418 = vmatprep.subr.bf16.mxu0 %v7681
    %10419 = vmatpush1.bf16.msra.mxu0 %v7680
    %10420 = vmatprep.subr.bf16.mxu0 %v7697
    %10421 = vmatpush1.bf16.msra.mxu0 %v7696
    %10422 = vmatprep.subr.bf16.mxu0 %v7713
    %10423 = vmatpush1.bf16.msra.mxu0 %v7712
    %10424 = vmatprep.subr.bf16.mxu0 %v7729
    %10425 = vmatpush1.bf16.msra.mxu0 %v7728
    %10426 = vmatprep.subr.bf16.mxu0 %v7745
    %10427 = vmatpush1.bf16.msra.mxu0 %v7744
    %10428 = vmatprep.subr.bf16.mxu0 %v7761
    %10429 = vmatpush1.bf16.msra.mxu0 %v7760
    %10430 = vmatprep.subr.bf16.mxu0 %v7777
    %10431 = vmatpush1.bf16.msra.mxu0 %v7776
    %10432 = vmatprep.subr.bf16.mxu0 %v7793
    %10433 = vmatpush1.bf16.msra.mxu0 %v7792
    %10434 = vmatprep.subr.bf16.mxu0 %v7809
    %10435 = vmatpush1.bf16.msra.mxu0 %v7808
    %10436 = vmatprep.subr.bf16.mxu0 %v7825
    %10437 = vmatpush1.bf16.msra.mxu0 %v7824
    %10438 = vmatprep.subr.bf16.mxu0 %v7841
    %10439 = vmatpush1.bf16.msra.mxu0 %v7840
    %10440 = vmatprep.subr.bf16.mxu0 %v7857
    %10441 = vmatpush1.bf16.msra.mxu0 %v7856
    %10442 = vmatprep.subr.bf16.mxu0 %v7873
    %10443 = vmatpush1.bf16.msra.mxu0 %v7872
    %10444 = vmatprep.subr.bf16.mxu0 %v7889
    %10445 = vmatpush1.bf16.msra.mxu0 %v7888
    %10446 = vmatprep.subr.bf16.mxu0 %v7905
    %10447 = vmatpush1.bf16.msra.mxu0 %v7904
    %10448 = vmatprep.mubr.bf16.mxu0 %v2955
    %10449 = vmatmul.mubr.bf16.gmra.mrb[0].mxu0 %v2954
    %v10450 = vpop.f32.mrb[0].mxu0
    %v10451 = vadd.f32 %v10410, %v10450
    %v10452 = vpop.f32.mrb[0].mxu0
    %v10453 = vadd.f32 %v10412, %v10452
    %v10454 = vpop.f32.mrb[0].mxu0
    %v10455 = vpop.f32.mrb[0].mxu0
    %10456 = vdwg.mxu0
    %10457 = vmatprep.subr.bf16.mxu0 %v7921
    %10458 = vmatpush1.bf16.msra.mxu0 %v7920
    %10459 = vmatprep.subr.bf16.mxu0 %v7937
    %10460 = vmatpush1.bf16.msra.mxu0 %v7936
    %10461 = vmatprep.subr.bf16.mxu0 %v7953
    %10462 = vmatpush1.bf16.msra.mxu0 %v7952
    %10463 = vmatprep.subr.bf16.mxu0 %v7969
    %10464 = vmatpush1.bf16.msra.mxu0 %v7968
    %10465 = vmatprep.subr.bf16.mxu0 %v7985
    %10466 = vmatpush1.bf16.msra.mxu0 %v7984
    %10467 = vmatprep.subr.bf16.mxu0 %v8001
    %10468 = vmatpush1.bf16.msra.mxu0 %v8000
    %10469 = vmatprep.subr.bf16.mxu0 %v8017
    %10470 = vmatpush1.bf16.msra.mxu0 %v8016
    %10471 = vmatprep.subr.bf16.mxu0 %v8033
    %10472 = vmatpush1.bf16.msra.mxu0 %v8032
    %10473 = vmatprep.subr.bf16.mxu0 %v8049
    %10474 = vmatpush1.bf16.msra.mxu0 %v8048
    %10475 = vmatprep.subr.bf16.mxu0 %v8065
    %10476 = vmatpush1.bf16.msra.mxu0 %v8064
    %10477 = vmatprep.subr.bf16.mxu0 %v8081
    %10478 = vmatpush1.bf16.msra.mxu0 %v8080
    %10479 = vmatprep.subr.bf16.mxu0 %v8097
    %10480 = vmatpush1.bf16.msra.mxu0 %v8096
    %10481 = vmatprep.subr.bf16.mxu0 %v8113
    %10482 = vmatpush1.bf16.msra.mxu0 %v8112
    %10483 = vmatprep.subr.bf16.mxu0 %v8129
    %10484 = vmatpush1.bf16.msra.mxu0 %v8128
    %10485 = vmatprep.subr.bf16.mxu0 %v8145
    %10486 = vmatpush1.bf16.msra.mxu0 %v8144
    %10487 = vmatprep.subr.bf16.mxu0 %v8161
    %10488 = vmatpush1.bf16.msra.mxu0 %v8160
    %10489 = vmatprep.mubr.bf16.mxu0 %v2957
    %10490 = vmatmul.mubr.bf16.gmra.mrb[0].mxu0 %v2956
    %v10491 = vpop.f32.mrb[0].mxu0
    %v10492 = vadd.f32 %v10451, %v10491
    %v10493 = vpop.f32.mrb[0].mxu0
    %v10494 = vadd.f32 %v10453, %v10493
    %v10495 = vpop.f32.mrb[0].mxu0
    %v10496 = vpop.f32.mrb[0].mxu0
    %10497 = vdwg.mxu0
    %v10498 = vtanh.pop %v9344
    %v10499 = vtanh.pop %v9346
    %v10500 = vtanh.pop %v9508
    %v10501 = vtanh.pop %v9510
    %v10502 = vtanh.pop %v9672
    %v10503 = vtanh.pop %v9674
    %v10504 = vtanh.pop %v9836
    %v10505 = vtanh.pop %v9838
    %v10506 = vtanh.pop %v10000
    %v10507 = vtanh.pop %v10002
    %v10508 = vtanh.pop %v10164
    %v10509 = vtanh.pop %v10166
    %v10510 = vtanh.pop %v10328
    %v10511 = vtanh.pop %v10330
    %v10512 = vtanh.pop %v10492
    %v10513 = vtanh.pop %v10494
    %v10514 = vpack.c.bf16 %v10498, %v10498
    %v10515 = vpack.c.bf16 %v10499, %v10499
    %v10516 = vpack.c.bf16 %v10500, %v10500
    %v10517 = vpack.c.bf16 %v10501, %v10501
    %v10518 = vpack.c.bf16 %v10502, %v10502
    %v10519 = vpack.c.bf16 %v10503, %v10503
    %v10520 = vpack.c.bf16 %v10504, %v10504
    %v10521 = vpack.c.bf16 %v10505, %v10505
    %v10522 = vpack.c.bf16 %v10506, %v10506
    %v10523 = vpack.c.bf16 %v10507, %v10507
    %v10524 = vpack.c.bf16 %v10508, %v10508
    %v10525 = vpack.c.bf16 %v10509, %v10509
    %v10526 = vpack.c.bf16 %v10510, %v10510
    %v10527 = vpack.c.bf16 %v10511, %v10511
    %v10528 = vpack.c.bf16 %v10512, %v10512
    %v10529 = vpack.c.bf16 %v10513, %v10513
    %v10530 = vld [vmem:[#allocation23] sm:$0xf]
    %v10531 = vld [vmem:[#allocation23 + $0x4] sm:$0xf]
    %v10532 = vld [vmem:[#allocation23 + $0x8] sm:$0xf]
    %v10533 = vld [vmem:[#allocation23 + $0xc] sm:$0xf]
    %v10534 = vld [vmem:[#allocation23 + $0x10] sm:$0xf]
    %v10535 = vld [vmem:[#allocation23 + $0x14] sm:$0xf]
    %v10536 = vld [vmem:[#allocation23 + $0x18] sm:$0xf]
    %v10537 = vld [vmem:[#allocation23 + $0x1c] sm:$0xf]
    %v10538 = vld [vmem:[#allocation23 + $0x20] sm:$0xf]
    %v10539 = vld [vmem:[#allocation23 + $0x24] sm:$0xf]
    %v10540 = vld [vmem:[#allocation23 + $0x28] sm:$0xf]
    %v10541 = vld [vmem:[#allocation23 + $0x2c] sm:$0xf]
    %v10542 = vld [vmem:[#allocation23 + $0x30] sm:$0xf]
    %v10543 = vld [vmem:[#allocation23 + $0x34] sm:$0xf]
    %v10544 = vld [vmem:[#allocation23 + $0x38] sm:$0xf]
    %v10545 = vld [vmem:[#allocation23 + $0x3c] sm:$0xf]
    %v10546 = vld [vmem:[#allocation23 + $0x40] sm:$0xf]
    %v10547 = vld [vmem:[#allocation23 + $0x44] sm:$0xf]
    %v10548 = vld [vmem:[#allocation23 + $0x48] sm:$0xf]
    %v10549 = vld [vmem:[#allocation23 + $0x4c] sm:$0xf]
    %v10550 = vld [vmem:[#allocation23 + $0x50] sm:$0xf]
    %v10551 = vld [vmem:[#allocation23 + $0x54] sm:$0xf]
    %v10552 = vld [vmem:[#allocation23 + $0x58] sm:$0xf]
    %v10553 = vld [vmem:[#allocation23 + $0x5c] sm:$0xf]
    %v10554 = vld [vmem:[#allocation23 + $0x60] sm:$0xf]
    %v10555 = vld [vmem:[#allocation23 + $0x64] sm:$0xf]
    %v10556 = vld [vmem:[#allocation23 + $0x68] sm:$0xf]
    %v10557 = vld [vmem:[#allocation23 + $0x6c] sm:$0xf]
    %v10558 = vld [vmem:[#allocation23 + $0x70] sm:$0xf]
    %v10559 = vld [vmem:[#allocation23 + $0x74] sm:$0xf]
    %v10560 = vld [vmem:[#allocation23 + $0x78] sm:$0xf]
    %v10561 = vld [vmem:[#allocation23 + $0x7c] sm:$0xf]
    %v10562 = vld [vmem:[#allocation23 + $0x80] sm:$0xf]
    %v10563 = vld [vmem:[#allocation23 + $0x84] sm:$0xf]
    %v10564 = vld [vmem:[#allocation23 + $0x88] sm:$0xf]
    %v10565 = vld [vmem:[#allocation23 + $0x8c] sm:$0xf]
    %v10566 = vld [vmem:[#allocation23 + $0x90] sm:$0xf]
    %v10567 = vld [vmem:[#allocation23 + $0x94] sm:$0xf]
    %v10568 = vld [vmem:[#allocation23 + $0x98] sm:$0xf]
    %v10569 = vld [vmem:[#allocation23 + $0x9c] sm:$0xf]
    %v10570 = vld [vmem:[#allocation23 + $0xa0] sm:$0xf]
    %v10571 = vld [vmem:[#allocation23 + $0xa4] sm:$0xf]
    %v10572 = vld [vmem:[#allocation23 + $0xa8] sm:$0xf]
    %v10573 = vld [vmem:[#allocation23 + $0xac] sm:$0xf]
    %v10574 = vld [vmem:[#allocation23 + $0xb0] sm:$0xf]
    %v10575 = vld [vmem:[#allocation23 + $0xb4] sm:$0xf]
    %v10576 = vld [vmem:[#allocation23 + $0xb8] sm:$0xf]
    %v10577 = vld [vmem:[#allocation23 + $0xbc] sm:$0xf]
    %v10578 = vld [vmem:[#allocation23 + $0xc0] sm:$0xf]
    %v10579 = vld [vmem:[#allocation23 + $0xc4] sm:$0xf]
    %v10580 = vld [vmem:[#allocation23 + $0xc8] sm:$0xf]
    %v10581 = vld [vmem:[#allocation23 + $0xcc] sm:$0xf]
    %v10582 = vld [vmem:[#allocation23 + $0xd0] sm:$0xf]
    %v10583 = vld [vmem:[#allocation23 + $0xd4] sm:$0xf]
    %v10584 = vld [vmem:[#allocation23 + $0xd8] sm:$0xf]
    %v10585 = vld [vmem:[#allocation23 + $0xdc] sm:$0xf]
    %v10586 = vld [vmem:[#allocation23 + $0xe0] sm:$0xf]
    %v10587 = vld [vmem:[#allocation23 + $0xe4] sm:$0xf]
    %v10588 = vld [vmem:[#allocation23 + $0xe8] sm:$0xf]
    %v10589 = vld [vmem:[#allocation23 + $0xec] sm:$0xf]
    %v10590 = vld [vmem:[#allocation23 + $0xf0] sm:$0xf]
    %v10591 = vld [vmem:[#allocation23 + $0xf4] sm:$0xf]
    %v10592 = vld [vmem:[#allocation23 + $0xf8] sm:$0xf]
    %v10593 = vld [vmem:[#allocation23 + $0xfc] sm:$0xf]
    %v10594 = vld [vmem:[#allocation23 + $0x100] sm:$0xf]
    %v10595 = vld [vmem:[#allocation23 + $0x104] sm:$0xf]
    %v10596 = vld [vmem:[#allocation23 + $0x108] sm:$0xf]
    %v10597 = vld [vmem:[#allocation23 + $0x10c] sm:$0xf]
    %v10598 = vld [vmem:[#allocation23 + $0x110] sm:$0xf]
    %v10599 = vld [vmem:[#allocation23 + $0x114] sm:$0xf]
    %v10600 = vld [vmem:[#allocation23 + $0x118] sm:$0xf]
    %v10601 = vld [vmem:[#allocation23 + $0x11c] sm:$0xf]
    %v10602 = vld [vmem:[#allocation23 + $0x120] sm:$0xf]
    %v10603 = vld [vmem:[#allocation23 + $0x124] sm:$0xf]
    %v10604 = vld [vmem:[#allocation23 + $0x128] sm:$0xf]
    %v10605 = vld [vmem:[#allocation23 + $0x12c] sm:$0xf]
    %v10606 = vld [vmem:[#allocation23 + $0x130] sm:$0xf]
    %v10607 = vld [vmem:[#allocation23 + $0x134] sm:$0xf]
    %v10608 = vld [vmem:[#allocation23 + $0x138] sm:$0xf]
    %v10609 = vld [vmem:[#allocation23 + $0x13c] sm:$0xf]
    %v10610 = vld [vmem:[#allocation23 + $0x140] sm:$0xf]
    %v10611 = vld [vmem:[#allocation23 + $0x144] sm:$0xf]
    %v10612 = vld [vmem:[#allocation23 + $0x148] sm:$0xf]
    %v10613 = vld [vmem:[#allocation23 + $0x14c] sm:$0xf]
    %v10614 = vld [vmem:[#allocation23 + $0x150] sm:$0xf]
    %v10615 = vld [vmem:[#allocation23 + $0x154] sm:$0xf]
    %v10616 = vld [vmem:[#allocation23 + $0x158] sm:$0xf]
    %v10617 = vld [vmem:[#allocation23 + $0x15c] sm:$0xf]
    %v10618 = vld [vmem:[#allocation23 + $0x160] sm:$0xf]
    %v10619 = vld [vmem:[#allocation23 + $0x164] sm:$0xf]
    %v10620 = vld [vmem:[#allocation23 + $0x168] sm:$0xf]
    %v10621 = vld [vmem:[#allocation23 + $0x16c] sm:$0xf]
    %v10622 = vld [vmem:[#allocation23 + $0x170] sm:$0xf]
    %v10623 = vld [vmem:[#allocation23 + $0x174] sm:$0xf]
    %v10624 = vld [vmem:[#allocation23 + $0x178] sm:$0xf]
    %v10625 = vld [vmem:[#allocation23 + $0x17c] sm:$0xf]
    %v10626 = vld [vmem:[#allocation23 + $0x180] sm:$0xf]
    %v10627 = vld [vmem:[#allocation23 + $0x184] sm:$0xf]
    %v10628 = vld [vmem:[#allocation23 + $0x188] sm:$0xf]
    %v10629 = vld [vmem:[#allocation23 + $0x18c] sm:$0xf]
    %v10630 = vld [vmem:[#allocation23 + $0x190] sm:$0xf]
    %v10631 = vld [vmem:[#allocation23 + $0x194] sm:$0xf]
    %v10632 = vld [vmem:[#allocation23 + $0x198] sm:$0xf]
    %v10633 = vld [vmem:[#allocation23 + $0x19c] sm:$0xf]
    %v10634 = vld [vmem:[#allocation23 + $0x1a0] sm:$0xf]
    %v10635 = vld [vmem:[#allocation23 + $0x1a4] sm:$0xf]
    %v10636 = vld [vmem:[#allocation23 + $0x1a8] sm:$0xf]
    %v10637 = vld [vmem:[#allocation23 + $0x1ac] sm:$0xf]
    %v10638 = vld [vmem:[#allocation23 + $0x1b0] sm:$0xf]
    %v10639 = vld [vmem:[#allocation23 + $0x1b4] sm:$0xf]
    %v10640 = vld [vmem:[#allocation23 + $0x1b8] sm:$0xf]
    %v10641 = vld [vmem:[#allocation23 + $0x1bc] sm:$0xf]
    %v10642 = vld [vmem:[#allocation23 + $0x1c0] sm:$0xf]
    %v10643 = vld [vmem:[#allocation23 + $0x1c4] sm:$0xf]
    %v10644 = vld [vmem:[#allocation23 + $0x1c8] sm:$0xf]
    %v10645 = vld [vmem:[#allocation23 + $0x1cc] sm:$0xf]
    %v10646 = vld [vmem:[#allocation23 + $0x1d0] sm:$0xf]
    %v10647 = vld [vmem:[#allocation23 + $0x1d4] sm:$0xf]
    %v10648 = vld [vmem:[#allocation23 + $0x1d8] sm:$0xf]
    %v10649 = vld [vmem:[#allocation23 + $0x1dc] sm:$0xf]
    %v10650 = vld [vmem:[#allocation23 + $0x1e0] sm:$0xf]
    %v10651 = vld [vmem:[#allocation23 + $0x1e4] sm:$0xf]
    %v10652 = vld [vmem:[#allocation23 + $0x1e8] sm:$0xf]
    %v10653 = vld [vmem:[#allocation23 + $0x1ec] sm:$0xf]
    %v10654 = vld [vmem:[#allocation23 + $0x1f0] sm:$0xf]
    %v10655 = vld [vmem:[#allocation23 + $0x1f4] sm:$0xf]
    %v10656 = vld [vmem:[#allocation23 + $0x1f8] sm:$0xf]
    %v10657 = vld [vmem:[#allocation23 + $0x1fc] sm:$0xf]
    %v10658 = vld [vmem:[#allocation23 + $0x200] sm:$0xf]
    %v10659 = vld [vmem:[#allocation23 + $0x204] sm:$0xf]
    %v10660 = vld [vmem:[#allocation23 + $0x208] sm:$0xf]
    %v10661 = vld [vmem:[#allocation23 + $0x20c] sm:$0xf]
    %v10662 = vld [vmem:[#allocation23 + $0x210] sm:$0xf]
    %v10663 = vld [vmem:[#allocation23 + $0x214] sm:$0xf]
    %v10664 = vld [vmem:[#allocation23 + $0x218] sm:$0xf]
    %v10665 = vld [vmem:[#allocation23 + $0x21c] sm:$0xf]
    %v10666 = vld [vmem:[#allocation23 + $0x220] sm:$0xf]
    %v10667 = vld [vmem:[#allocation23 + $0x224] sm:$0xf]
    %v10668 = vld [vmem:[#allocation23 + $0x228] sm:$0xf]
    %v10669 = vld [vmem:[#allocation23 + $0x22c] sm:$0xf]
    %v10670 = vld [vmem:[#allocation23 + $0x230] sm:$0xf]
    %v10671 = vld [vmem:[#allocation23 + $0x234] sm:$0xf]
    %v10672 = vld [vmem:[#allocation23 + $0x238] sm:$0xf]
    %v10673 = vld [vmem:[#allocation23 + $0x23c] sm:$0xf]
    %v10674 = vld [vmem:[#allocation23 + $0x240] sm:$0xf]
    %v10675 = vld [vmem:[#allocation23 + $0x244] sm:$0xf]
    %v10676 = vld [vmem:[#allocation23 + $0x248] sm:$0xf]
    %v10677 = vld [vmem:[#allocation23 + $0x24c] sm:$0xf]
    %v10678 = vld [vmem:[#allocation23 + $0x250] sm:$0xf]
    %v10679 = vld [vmem:[#allocation23 + $0x254] sm:$0xf]
    %v10680 = vld [vmem:[#allocation23 + $0x258] sm:$0xf]
    %v10681 = vld [vmem:[#allocation23 + $0x25c] sm:$0xf]
    %v10682 = vld [vmem:[#allocation23 + $0x260] sm:$0xf]
    %v10683 = vld [vmem:[#allocation23 + $0x264] sm:$0xf]
    %v10684 = vld [vmem:[#allocation23 + $0x268] sm:$0xf]
    %v10685 = vld [vmem:[#allocation23 + $0x26c] sm:$0xf]
    %v10686 = vld [vmem:[#allocation23 + $0x270] sm:$0xf]
    %v10687 = vld [vmem:[#allocation23 + $0x274] sm:$0xf]
    %v10688 = vld [vmem:[#allocation23 + $0x278] sm:$0xf]
    %v10689 = vld [vmem:[#allocation23 + $0x27c] sm:$0xf]
    %v10690 = vld [vmem:[#allocation23 + $0x280] sm:$0xf]
    %v10691 = vld [vmem:[#allocation23 + $0x284] sm:$0xf]
    %v10692 = vld [vmem:[#allocation23 + $0x288] sm:$0xf]
    %v10693 = vld [vmem:[#allocation23 + $0x28c] sm:$0xf]
    %v10694 = vld [vmem:[#allocation23 + $0x290] sm:$0xf]
    %v10695 = vld [vmem:[#allocation23 + $0x294] sm:$0xf]
    %v10696 = vld [vmem:[#allocation23 + $0x298] sm:$0xf]
    %v10697 = vld [vmem:[#allocation23 + $0x29c] sm:$0xf]
    %v10698 = vld [vmem:[#allocation23 + $0x2a0] sm:$0xf]
    %v10699 = vld [vmem:[#allocation23 + $0x2a4] sm:$0xf]
    %v10700 = vld [vmem:[#allocation23 + $0x2a8] sm:$0xf]
    %v10701 = vld [vmem:[#allocation23 + $0x2ac] sm:$0xf]
    %v10702 = vld [vmem:[#allocation23 + $0x2b0] sm:$0xf]
    %v10703 = vld [vmem:[#allocation23 + $0x2b4] sm:$0xf]
    %v10704 = vld [vmem:[#allocation23 + $0x2b8] sm:$0xf]
    %v10705 = vld [vmem:[#allocation23 + $0x2bc] sm:$0xf]
    %v10706 = vld [vmem:[#allocation23 + $0x2c0] sm:$0xf]
    %v10707 = vld [vmem:[#allocation23 + $0x2c4] sm:$0xf]
    %v10708 = vld [vmem:[#allocation23 + $0x2c8] sm:$0xf]
    %v10709 = vld [vmem:[#allocation23 + $0x2cc] sm:$0xf]
    %v10710 = vld [vmem:[#allocation23 + $0x2d0] sm:$0xf]
    %v10711 = vld [vmem:[#allocation23 + $0x2d4] sm:$0xf]
    %v10712 = vld [vmem:[#allocation23 + $0x2d8] sm:$0xf]
    %v10713 = vld [vmem:[#allocation23 + $0x2dc] sm:$0xf]
    %v10714 = vld [vmem:[#allocation23 + $0x2e0] sm:$0xf]
    %v10715 = vld [vmem:[#allocation23 + $0x2e4] sm:$0xf]
    %v10716 = vld [vmem:[#allocation23 + $0x2e8] sm:$0xf]
    %v10717 = vld [vmem:[#allocation23 + $0x2ec] sm:$0xf]
    %v10718 = vld [vmem:[#allocation23 + $0x2f0] sm:$0xf]
    %v10719 = vld [vmem:[#allocation23 + $0x2f4] sm:$0xf]
    %v10720 = vld [vmem:[#allocation23 + $0x2f8] sm:$0xf]
    %v10721 = vld [vmem:[#allocation23 + $0x2fc] sm:$0xf]
    %v10722 = vld [vmem:[#allocation23 + $0x300] sm:$0xf]
    %v10723 = vld [vmem:[#allocation23 + $0x304] sm:$0xf]
    %v10724 = vld [vmem:[#allocation23 + $0x308] sm:$0xf]
    %v10725 = vld [vmem:[#allocation23 + $0x30c] sm:$0xf]
    %v10726 = vld [vmem:[#allocation23 + $0x310] sm:$0xf]
    %v10727 = vld [vmem:[#allocation23 + $0x314] sm:$0xf]
    %v10728 = vld [vmem:[#allocation23 + $0x318] sm:$0xf]
    %v10729 = vld [vmem:[#allocation23 + $0x31c] sm:$0xf]
    %v10730 = vld [vmem:[#allocation23 + $0x320] sm:$0xf]
    %v10731 = vld [vmem:[#allocation23 + $0x324] sm:$0xf]
    %v10732 = vld [vmem:[#allocation23 + $0x328] sm:$0xf]
    %v10733 = vld [vmem:[#allocation23 + $0x32c] sm:$0xf]
    %v10734 = vld [vmem:[#allocation23 + $0x330] sm:$0xf]
    %v10735 = vld [vmem:[#allocation23 + $0x334] sm:$0xf]
    %v10736 = vld [vmem:[#allocation23 + $0x338] sm:$0xf]
    %v10737 = vld [vmem:[#allocation23 + $0x33c] sm:$0xf]
    %v10738 = vld [vmem:[#allocation23 + $0x340] sm:$0xf]
    %v10739 = vld [vmem:[#allocation23 + $0x344] sm:$0xf]
    %v10740 = vld [vmem:[#allocation23 + $0x348] sm:$0xf]
    %v10741 = vld [vmem:[#allocation23 + $0x34c] sm:$0xf]
    %v10742 = vld [vmem:[#allocation23 + $0x350] sm:$0xf]
    %v10743 = vld [vmem:[#allocation23 + $0x354] sm:$0xf]
    %v10744 = vld [vmem:[#allocation23 + $0x358] sm:$0xf]
    %v10745 = vld [vmem:[#allocation23 + $0x35c] sm:$0xf]
    %v10746 = vld [vmem:[#allocation23 + $0x360] sm:$0xf]
    %v10747 = vld [vmem:[#allocation23 + $0x364] sm:$0xf]
    %v10748 = vld [vmem:[#allocation23 + $0x368] sm:$0xf]
    %v10749 = vld [vmem:[#allocation23 + $0x36c] sm:$0xf]
    %v10750 = vld [vmem:[#allocation23 + $0x370] sm:$0xf]
    %v10751 = vld [vmem:[#allocation23 + $0x374] sm:$0xf]
    %v10752 = vld [vmem:[#allocation23 + $0x378] sm:$0xf]
    %v10753 = vld [vmem:[#allocation23 + $0x37c] sm:$0xf]
    %v10754 = vld [vmem:[#allocation23 + $0x380] sm:$0xf]
    %v10755 = vld [vmem:[#allocation23 + $0x384] sm:$0xf]
    %v10756 = vld [vmem:[#allocation23 + $0x388] sm:$0xf]
    %v10757 = vld [vmem:[#allocation23 + $0x38c] sm:$0xf]
    %v10758 = vld [vmem:[#allocation23 + $0x390] sm:$0xf]
    %v10759 = vld [vmem:[#allocation23 + $0x394] sm:$0xf]
    %v10760 = vld [vmem:[#allocation23 + $0x398] sm:$0xf]
    %v10761 = vld [vmem:[#allocation23 + $0x39c] sm:$0xf]
    %v10762 = vld [vmem:[#allocation23 + $0x3a0] sm:$0xf]
    %v10763 = vld [vmem:[#allocation23 + $0x3a4] sm:$0xf]
    %v10764 = vld [vmem:[#allocation23 + $0x3a8] sm:$0xf]
    %v10765 = vld [vmem:[#allocation23 + $0x3ac] sm:$0xf]
    %v10766 = vld [vmem:[#allocation23 + $0x3b0] sm:$0xf]
    %v10767 = vld [vmem:[#allocation23 + $0x3b4] sm:$0xf]
    %v10768 = vld [vmem:[#allocation23 + $0x3b8] sm:$0xf]
    %v10769 = vld [vmem:[#allocation23 + $0x3bc] sm:$0xf]
    %v10770 = vld [vmem:[#allocation23 + $0x3c0] sm:$0xf]
    %v10771 = vld [vmem:[#allocation23 + $0x3c4] sm:$0xf]
    %v10772 = vld [vmem:[#allocation23 + $0x3c8] sm:$0xf]
    %v10773 = vld [vmem:[#allocation23 + $0x3cc] sm:$0xf]
    %v10774 = vld [vmem:[#allocation23 + $0x3d0] sm:$0xf]
    %v10775 = vld [vmem:[#allocation23 + $0x3d4] sm:$0xf]
    %v10776 = vld [vmem:[#allocation23 + $0x3d8] sm:$0xf]
    %v10777 = vld [vmem:[#allocation23 + $0x3dc] sm:$0xf]
    %v10778 = vld [vmem:[#allocation23 + $0x3e0] sm:$0xf]
    %v10779 = vld [vmem:[#allocation23 + $0x3e4] sm:$0xf]
    %v10780 = vld [vmem:[#allocation23 + $0x3e8] sm:$0xf]
    %v10781 = vld [vmem:[#allocation23 + $0x3ec] sm:$0xf]
    %v10782 = vld [vmem:[#allocation23 + $0x3f0] sm:$0xf]
    %v10783 = vld [vmem:[#allocation23 + $0x3f4] sm:$0xf]
    %v10784 = vld [vmem:[#allocation23 + $0x3f8] sm:$0xf]
    %v10785 = vld [vmem:[#allocation23 + $0x3fc] sm:$0xf]
    %v10786 = vld [vmem:[#allocation25] sm:$0x1]
    %v10788 = vlaneseq
    %v10789 = vshrl.u32 %v10788, 7
    %v10790 = vsub.s32 0, %v10789
    %v10791 = vrot.slane %v10786, %v10790
    %v11049 = vunpack.c.l.b16 %v10530
    %v11050 = vunpack.c.l.b16 %v10531
    %v11051 = vunpack.c.l.b16 %v10532
    %v11052 = vunpack.c.l.b16 %v10533
    %v11053 = vunpack.c.l.b16 %v10534
    %v11054 = vunpack.c.l.b16 %v10535
    %v11055 = vunpack.c.l.b16 %v10536
    %v11056 = vunpack.c.l.b16 %v10537
    %v11057 = vunpack.c.l.b16 %v10538
    %v11058 = vunpack.c.l.b16 %v10539
    %v11059 = vunpack.c.l.b16 %v10540
    %v11060 = vunpack.c.l.b16 %v10541
    %v11061 = vunpack.c.l.b16 %v10542
    %v11062 = vunpack.c.l.b16 %v10543
    %v11063 = vunpack.c.l.b16 %v10544
    %v11064 = vunpack.c.l.b16 %v10545
    %v11065 = vunpack.c.l.b16 %v10546
    %v11066 = vunpack.c.l.b16 %v10547
    %v11067 = vunpack.c.l.b16 %v10548
    %v11068 = vunpack.c.l.b16 %v10549
    %v11069 = vunpack.c.l.b16 %v10550
    %v11070 = vunpack.c.l.b16 %v10551
    %v11071 = vunpack.c.l.b16 %v10552
    %v11072 = vunpack.c.l.b16 %v10553
    %v11073 = vunpack.c.l.b16 %v10554
    %v11074 = vunpack.c.l.b16 %v10555
    %v11075 = vunpack.c.l.b16 %v10556
    %v11076 = vunpack.c.l.b16 %v10557
    %v11077 = vunpack.c.l.b16 %v10558
    %v11078 = vunpack.c.l.b16 %v10559
    %v11079 = vunpack.c.l.b16 %v10560
    %v11080 = vunpack.c.l.b16 %v10561
    %v11081 = vunpack.c.l.b16 %v10562
    %v11082 = vunpack.c.l.b16 %v10563
    %v11083 = vunpack.c.l.b16 %v10564
    %v11084 = vunpack.c.l.b16 %v10565
    %v11085 = vunpack.c.l.b16 %v10566
    %v11086 = vunpack.c.l.b16 %v10567
    %v11087 = vunpack.c.l.b16 %v10568
    %v11088 = vunpack.c.l.b16 %v10569
    %v11089 = vunpack.c.l.b16 %v10570
    %v11090 = vunpack.c.l.b16 %v10571
    %v11091 = vunpack.c.l.b16 %v10572
    %v11092 = vunpack.c.l.b16 %v10573
    %v11093 = vunpack.c.l.b16 %v10574
    %v11094 = vunpack.c.l.b16 %v10575
    %v11095 = vunpack.c.l.b16 %v10576
    %v11096 = vunpack.c.l.b16 %v10577
    %v11097 = vunpack.c.l.b16 %v10578
    %v11098 = vunpack.c.l.b16 %v10579
    %v11099 = vunpack.c.l.b16 %v10580
    %v11100 = vunpack.c.l.b16 %v10581
    %v11101 = vunpack.c.l.b16 %v10582
    %v11102 = vunpack.c.l.b16 %v10583
    %v11103 = vunpack.c.l.b16 %v10584
    %v11104 = vunpack.c.l.b16 %v10585
    %v11105 = vunpack.c.l.b16 %v10586
    %v11106 = vunpack.c.l.b16 %v10587
    %v11107 = vunpack.c.l.b16 %v10588
    %v11108 = vunpack.c.l.b16 %v10589
    %v11109 = vunpack.c.l.b16 %v10590
    %v11110 = vunpack.c.l.b16 %v10591
    %v11111 = vunpack.c.l.b16 %v10592
    %v11112 = vunpack.c.l.b16 %v10593
    %v11113 = vunpack.c.l.b16 %v10594
    %v11114 = vunpack.c.l.b16 %v10595
    %v11115 = vunpack.c.l.b16 %v10596
    %v11116 = vunpack.c.l.b16 %v10597
    %v11117 = vunpack.c.l.b16 %v10598
    %v11118 = vunpack.c.l.b16 %v10599
    %v11119 = vunpack.c.l.b16 %v10600
    %v11120 = vunpack.c.l.b16 %v10601
    %v11121 = vunpack.c.l.b16 %v10602
    %v11122 = vunpack.c.l.b16 %v10603
    %v11123 = vunpack.c.l.b16 %v10604
    %v11124 = vunpack.c.l.b16 %v10605
    %v11125 = vunpack.c.l.b16 %v10606
    %v11126 = vunpack.c.l.b16 %v10607
    %v11127 = vunpack.c.l.b16 %v10608
    %v11128 = vunpack.c.l.b16 %v10609
    %v11129 = vunpack.c.l.b16 %v10610
    %v11130 = vunpack.c.l.b16 %v10611
    %v11131 = vunpack.c.l.b16 %v10612
    %v11132 = vunpack.c.l.b16 %v10613
    %v11133 = vunpack.c.l.b16 %v10614
    %v11134 = vunpack.c.l.b16 %v10615
    %v11135 = vunpack.c.l.b16 %v10616
    %v11136 = vunpack.c.l.b16 %v10617
    %v11137 = vunpack.c.l.b16 %v10618
    %v11138 = vunpack.c.l.b16 %v10619
    %v11139 = vunpack.c.l.b16 %v10620
    %v11140 = vunpack.c.l.b16 %v10621
    %v11141 = vunpack.c.l.b16 %v10622
    %v11142 = vunpack.c.l.b16 %v10623
    %v11143 = vunpack.c.l.b16 %v10624
    %v11144 = vunpack.c.l.b16 %v10625
    %v11145 = vunpack.c.l.b16 %v10626
    %v11146 = vunpack.c.l.b16 %v10627
    %v11147 = vunpack.c.l.b16 %v10628
    %v11148 = vunpack.c.l.b16 %v10629
    %v11149 = vunpack.c.l.b16 %v10630
    %v11150 = vunpack.c.l.b16 %v10631
    %v11151 = vunpack.c.l.b16 %v10632
    %v11152 = vunpack.c.l.b16 %v10633
    %v11153 = vunpack.c.l.b16 %v10634
    %v11154 = vunpack.c.l.b16 %v10635
    %v11155 = vunpack.c.l.b16 %v10636
    %v11156 = vunpack.c.l.b16 %v10637
    %v11157 = vunpack.c.l.b16 %v10638
    %v11158 = vunpack.c.l.b16 %v10639
    %v11159 = vunpack.c.l.b16 %v10640
    %v11160 = vunpack.c.l.b16 %v10641
    %v11161 = vunpack.c.l.b16 %v10642
    %v11162 = vunpack.c.l.b16 %v10643
    %v11163 = vunpack.c.l.b16 %v10644
    %v11164 = vunpack.c.l.b16 %v10645
    %v11165 = vunpack.c.l.b16 %v10646
    %v11166 = vunpack.c.l.b16 %v10647
    %v11167 = vunpack.c.l.b16 %v10648
    %v11168 = vunpack.c.l.b16 %v10649
    %v11169 = vunpack.c.l.b16 %v10650
    %v11170 = vunpack.c.l.b16 %v10651
    %v11171 = vunpack.c.l.b16 %v10652
    %v11172 = vunpack.c.l.b16 %v10653
    %v11173 = vunpack.c.l.b16 %v10654
    %v11174 = vunpack.c.l.b16 %v10655
    %v11175 = vunpack.c.l.b16 %v10656
    %v11176 = vunpack.c.l.b16 %v10657
    %v11177 = vunpack.c.l.b16 %v10658
    %v11178 = vunpack.c.l.b16 %v10659
    %v11179 = vunpack.c.l.b16 %v10660
    %v11180 = vunpack.c.l.b16 %v10661
    %v11181 = vunpack.c.l.b16 %v10662
    %v11182 = vunpack.c.l.b16 %v10663
    %v11183 = vunpack.c.l.b16 %v10664
    %v11184 = vunpack.c.l.b16 %v10665
    %v11185 = vunpack.c.l.b16 %v10666
    %v11186 = vunpack.c.l.b16 %v10667
    %v11187 = vunpack.c.l.b16 %v10668
    %v11188 = vunpack.c.l.b16 %v10669
    %v11189 = vunpack.c.l.b16 %v10670
    %v11190 = vunpack.c.l.b16 %v10671
    %v11191 = vunpack.c.l.b16 %v10672
    %v11192 = vunpack.c.l.b16 %v10673
    %v11193 = vunpack.c.l.b16 %v10674
    %v11194 = vunpack.c.l.b16 %v10675
    %v11195 = vunpack.c.l.b16 %v10676
    %v11196 = vunpack.c.l.b16 %v10677
    %v11197 = vunpack.c.l.b16 %v10678
    %v11198 = vunpack.c.l.b16 %v10679
    %v11199 = vunpack.c.l.b16 %v10680
    %v11200 = vunpack.c.l.b16 %v10681
    %v11201 = vunpack.c.l.b16 %v10682
    %v11202 = vunpack.c.l.b16 %v10683
    %v11203 = vunpack.c.l.b16 %v10684
    %v11204 = vunpack.c.l.b16 %v10685
    %v11205 = vunpack.c.l.b16 %v10686
    %v11206 = vunpack.c.l.b16 %v10687
    %v11207 = vunpack.c.l.b16 %v10688
    %v11208 = vunpack.c.l.b16 %v10689
    %v11209 = vunpack.c.l.b16 %v10690
    %v11210 = vunpack.c.l.b16 %v10691
    %v11211 = vunpack.c.l.b16 %v10692
    %v11212 = vunpack.c.l.b16 %v10693
    %v11213 = vunpack.c.l.b16 %v10694
    %v11214 = vunpack.c.l.b16 %v10695
    %v11215 = vunpack.c.l.b16 %v10696
    %v11216 = vunpack.c.l.b16 %v10697
    %v11217 = vunpack.c.l.b16 %v10698
    %v11218 = vunpack.c.l.b16 %v10699
    %v11219 = vunpack.c.l.b16 %v10700
    %v11220 = vunpack.c.l.b16 %v10701
    %v11221 = vunpack.c.l.b16 %v10702
    %v11222 = vunpack.c.l.b16 %v10703
    %v11223 = vunpack.c.l.b16 %v10704
    %v11224 = vunpack.c.l.b16 %v10705
    %v11225 = vunpack.c.l.b16 %v10706
    %v11226 = vunpack.c.l.b16 %v10707
    %v11227 = vunpack.c.l.b16 %v10708
    %v11228 = vunpack.c.l.b16 %v10709
    %v11229 = vunpack.c.l.b16 %v10710
    %v11230 = vunpack.c.l.b16 %v10711
    %v11231 = vunpack.c.l.b16 %v10712
    %v11232 = vunpack.c.l.b16 %v10713
    %v11233 = vunpack.c.l.b16 %v10714
    %v11234 = vunpack.c.l.b16 %v10715
    %v11235 = vunpack.c.l.b16 %v10716
    %v11236 = vunpack.c.l.b16 %v10717
    %v11237 = vunpack.c.l.b16 %v10718
    %v11238 = vunpack.c.l.b16 %v10719
    %v11239 = vunpack.c.l.b16 %v10720
    %v11240 = vunpack.c.l.b16 %v10721
    %v11241 = vunpack.c.l.b16 %v10722
    %v11242 = vunpack.c.l.b16 %v10723
    %v11243 = vunpack.c.l.b16 %v10724
    %v11244 = vunpack.c.l.b16 %v10725
    %v11245 = vunpack.c.l.b16 %v10726
    %v11246 = vunpack.c.l.b16 %v10727
    %v11247 = vunpack.c.l.b16 %v10728
    %v11248 = vunpack.c.l.b16 %v10729
    %v11249 = vunpack.c.l.b16 %v10730
    %v11250 = vunpack.c.l.b16 %v10731
    %v11251 = vunpack.c.l.b16 %v10732
    %v11252 = vunpack.c.l.b16 %v10733
    %v11253 = vunpack.c.l.b16 %v10734
    %v11254 = vunpack.c.l.b16 %v10735
    %v11255 = vunpack.c.l.b16 %v10736
    %v11256 = vunpack.c.l.b16 %v10737
    %v11257 = vunpack.c.l.b16 %v10738
    %v11258 = vunpack.c.l.b16 %v10739
    %v11259 = vunpack.c.l.b16 %v10740
    %v11260 = vunpack.c.l.b16 %v10741
    %v11261 = vunpack.c.l.b16 %v10742
    %v11262 = vunpack.c.l.b16 %v10743
    %v11263 = vunpack.c.l.b16 %v10744
    %v11264 = vunpack.c.l.b16 %v10745
    %v11265 = vunpack.c.l.b16 %v10746
    %v11266 = vunpack.c.l.b16 %v10747
    %v11267 = vunpack.c.l.b16 %v10748
    %v11268 = vunpack.c.l.b16 %v10749
    %v11269 = vunpack.c.l.b16 %v10750
    %v11270 = vunpack.c.l.b16 %v10751
    %v11271 = vunpack.c.l.b16 %v10752
    %v11272 = vunpack.c.l.b16 %v10753
    %v11273 = vunpack.c.l.b16 %v10754
    %v11274 = vunpack.c.l.b16 %v10755
    %v11275 = vunpack.c.l.b16 %v10756
    %v11276 = vunpack.c.l.b16 %v10757
    %v11277 = vunpack.c.l.b16 %v10758
    %v11278 = vunpack.c.l.b16 %v10759
    %v11279 = vunpack.c.l.b16 %v10760
    %v11280 = vunpack.c.l.b16 %v10761
    %v11281 = vunpack.c.l.b16 %v10762
    %v11282 = vunpack.c.l.b16 %v10763
    %v11283 = vunpack.c.l.b16 %v10764
    %v11284 = vunpack.c.l.b16 %v10765
    %v11285 = vunpack.c.l.b16 %v10766
    %v11286 = vunpack.c.l.b16 %v10767
    %v11287 = vunpack.c.l.b16 %v10768
    %v11288 = vunpack.c.l.b16 %v10769
    %v11289 = vunpack.c.l.b16 %v10770
    %v11290 = vunpack.c.l.b16 %v10771
    %v11291 = vunpack.c.l.b16 %v10772
    %v11292 = vunpack.c.l.b16 %v10773
    %v11293 = vunpack.c.l.b16 %v10774
    %v11294 = vunpack.c.l.b16 %v10775
    %v11295 = vunpack.c.l.b16 %v10776
    %v11296 = vunpack.c.l.b16 %v10777
    %v11297 = vunpack.c.l.b16 %v10778
    %v11298 = vunpack.c.l.b16 %v10779
    %v11299 = vunpack.c.l.b16 %v10780
    %v11300 = vunpack.c.l.b16 %v10781
    %v11301 = vunpack.c.l.b16 %v10782
    %v11302 = vunpack.c.l.b16 %v10783
    %v11303 = vunpack.c.l.b16 %v10784
    %v11304 = vunpack.c.l.b16 %v10785
    %v11305 = vpack.c.b16 %v11050, %v11049
    %v11306 = vpack.c.b16 %v11052, %v11051
    %v11307 = vpack.c.b16 %v11054, %v11053
    %v11308 = vpack.c.b16 %v11056, %v11055
    %v11309 = vpack.c.b16 %v11058, %v11057
    %v11310 = vpack.c.b16 %v11060, %v11059
    %v11311 = vpack.c.b16 %v11062, %v11061
    %v11312 = vpack.c.b16 %v11064, %v11063
    %v11313 = vpack.c.b16 %v11066, %v11065
    %v11314 = vpack.c.b16 %v11068, %v11067
    %v11315 = vpack.c.b16 %v11070, %v11069
    %v11316 = vpack.c.b16 %v11072, %v11071
    %v11317 = vpack.c.b16 %v11074, %v11073
    %v11318 = vpack.c.b16 %v11076, %v11075
    %v11319 = vpack.c.b16 %v11078, %v11077
    %v11320 = vpack.c.b16 %v11080, %v11079
    %v11321 = vpack.c.b16 %v11082, %v11081
    %v11322 = vpack.c.b16 %v11084, %v11083
    %v11323 = vpack.c.b16 %v11086, %v11085
    %v11324 = vpack.c.b16 %v11088, %v11087
    %v11325 = vpack.c.b16 %v11090, %v11089
    %v11326 = vpack.c.b16 %v11092, %v11091
    %v11327 = vpack.c.b16 %v11094, %v11093
    %v11328 = vpack.c.b16 %v11096, %v11095
    %v11329 = vpack.c.b16 %v11098, %v11097
    %v11330 = vpack.c.b16 %v11100, %v11099
    %v11331 = vpack.c.b16 %v11102, %v11101
    %v11332 = vpack.c.b16 %v11104, %v11103
    %v11333 = vpack.c.b16 %v11106, %v11105
    %v11334 = vpack.c.b16 %v11108, %v11107
    %v11335 = vpack.c.b16 %v11110, %v11109
    %v11336 = vpack.c.b16 %v11112, %v11111
    %v11337 = vpack.c.b16 %v11114, %v11113
    %v11338 = vpack.c.b16 %v11116, %v11115
    %v11339 = vpack.c.b16 %v11118, %v11117
    %v11340 = vpack.c.b16 %v11120, %v11119
    %v11341 = vpack.c.b16 %v11122, %v11121
    %v11342 = vpack.c.b16 %v11124, %v11123
    %v11343 = vpack.c.b16 %v11126, %v11125
    %v11344 = vpack.c.b16 %v11128, %v11127
    %v11345 = vpack.c.b16 %v11130, %v11129
    %v11346 = vpack.c.b16 %v11132, %v11131
    %v11347 = vpack.c.b16 %v11134, %v11133
    %v11348 = vpack.c.b16 %v11136, %v11135
    %v11349 = vpack.c.b16 %v11138, %v11137
    %v11350 = vpack.c.b16 %v11140, %v11139
    %v11351 = vpack.c.b16 %v11142, %v11141
    %v11352 = vpack.c.b16 %v11144, %v11143
    %v11353 = vpack.c.b16 %v11146, %v11145
    %v11354 = vpack.c.b16 %v11148, %v11147
    %v11355 = vpack.c.b16 %v11150, %v11149
    %v11356 = vpack.c.b16 %v11152, %v11151
    %v11357 = vpack.c.b16 %v11154, %v11153
    %v11358 = vpack.c.b16 %v11156, %v11155
    %v11359 = vpack.c.b16 %v11158, %v11157
    %v11360 = vpack.c.b16 %v11160, %v11159
    %v11361 = vpack.c.b16 %v11162, %v11161
    %v11362 = vpack.c.b16 %v11164, %v11163
    %v11363 = vpack.c.b16 %v11166, %v11165
    %v11364 = vpack.c.b16 %v11168, %v11167
    %v11365 = vpack.c.b16 %v11170, %v11169
    %v11366 = vpack.c.b16 %v11172, %v11171
    %v11367 = vpack.c.b16 %v11174, %v11173
    %v11368 = vpack.c.b16 %v11176, %v11175
    %v11369 = vpack.c.b16 %v11178, %v11177
    %v11370 = vpack.c.b16 %v11180, %v11179
    %v11371 = vpack.c.b16 %v11182, %v11181
    %v11372 = vpack.c.b16 %v11184, %v11183
    %v11373 = vpack.c.b16 %v11186, %v11185
    %v11374 = vpack.c.b16 %v11188, %v11187
    %v11375 = vpack.c.b16 %v11190, %v11189
    %v11376 = vpack.c.b16 %v11192, %v11191
    %v11377 = vpack.c.b16 %v11194, %v11193
    %v11378 = vpack.c.b16 %v11196, %v11195
    %v11379 = vpack.c.b16 %v11198, %v11197
    %v11380 = vpack.c.b16 %v11200, %v11199
    %v11381 = vpack.c.b16 %v11202, %v11201
    %v11382 = vpack.c.b16 %v11204, %v11203
    %v11383 = vpack.c.b16 %v11206, %v11205
    %v11384 = vpack.c.b16 %v11208, %v11207
    %v11385 = vpack.c.b16 %v11210, %v11209
    %v11386 = vpack.c.b16 %v11212, %v11211
    %v11387 = vpack.c.b16 %v11214, %v11213
    %v11388 = vpack.c.b16 %v11216, %v11215
    %v11389 = vpack.c.b16 %v11218, %v11217
    %v11390 = vpack.c.b16 %v11220, %v11219
    %v11391 = vpack.c.b16 %v11222, %v11221
    %v11392 = vpack.c.b16 %v11224, %v11223
    %v11393 = vpack.c.b16 %v11226, %v11225
    %v11394 = vpack.c.b16 %v11228, %v11227
    %v11395 = vpack.c.b16 %v11230, %v11229
    %v11396 = vpack.c.b16 %v11232, %v11231
    %v11397 = vpack.c.b16 %v11234, %v11233
    %v11398 = vpack.c.b16 %v11236, %v11235
    %v11399 = vpack.c.b16 %v11238, %v11237
    %v11400 = vpack.c.b16 %v11240, %v11239
    %v11401 = vpack.c.b16 %v11242, %v11241
    %v11402 = vpack.c.b16 %v11244, %v11243
    %v11403 = vpack.c.b16 %v11246, %v11245
    %v11404 = vpack.c.b16 %v11248, %v11247
    %v11405 = vpack.c.b16 %v11250, %v11249
    %v11406 = vpack.c.b16 %v11252, %v11251
    %v11407 = vpack.c.b16 %v11254, %v11253
    %v11408 = vpack.c.b16 %v11256, %v11255
    %v11409 = vpack.c.b16 %v11258, %v11257
    %v11410 = vpack.c.b16 %v11260, %v11259
    %v11411 = vpack.c.b16 %v11262, %v11261
    %v11412 = vpack.c.b16 %v11264, %v11263
    %v11413 = vpack.c.b16 %v11266, %v11265
    %v11414 = vpack.c.b16 %v11268, %v11267
    %v11415 = vpack.c.b16 %v11270, %v11269
    %v11416 = vpack.c.b16 %v11272, %v11271
    %v11417 = vpack.c.b16 %v11274, %v11273
    %v11418 = vpack.c.b16 %v11276, %v11275
    %v11419 = vpack.c.b16 %v11278, %v11277
    %v11420 = vpack.c.b16 %v11280, %v11279
    %v11421 = vpack.c.b16 %v11282, %v11281
    %v11422 = vpack.c.b16 %v11284, %v11283
    %v11423 = vpack.c.b16 %v11286, %v11285
    %v11424 = vpack.c.b16 %v11288, %v11287
    %v11425 = vpack.c.b16 %v11290, %v11289
    %v11426 = vpack.c.b16 %v11292, %v11291
    %v11427 = vpack.c.b16 %v11294, %v11293
    %v11428 = vpack.c.b16 %v11296, %v11295
    %v11429 = vpack.c.b16 %v11298, %v11297
    %v11430 = vpack.c.b16 %v11300, %v11299
    %v11431 = vpack.c.b16 %v11302, %v11301
    %v11432 = vpack.c.b16 %v11304, %v11303
    %11561 = vmatprep.subr.bf16.mxu0 0
    %11562 = vmatpush1.bf16.msra.mxu0 %v11305
    %11563 = vmatprep.subr.bf16.mxu0 0
    %11564 = vmatpush1.bf16.msra.mxu0 %v11306
    %11565 = vmatprep.subr.bf16.mxu0 0
    %11566 = vmatpush1.bf16.msra.mxu0 %v11307
    %11567 = vmatprep.subr.bf16.mxu0 0
    %11568 = vmatpush1.bf16.msra.mxu0 %v11308
    %11569 = vmatprep.subr.bf16.mxu0 0
    %11570 = vmatpush1.bf16.msra.mxu0 %v11309
    %11571 = vmatprep.subr.bf16.mxu0 0
    %11572 = vmatpush1.bf16.msra.mxu0 %v11310
    %11573 = vmatprep.subr.bf16.mxu0 0
    %11574 = vmatpush1.bf16.msra.mxu0 %v11311
    %11575 = vmatprep.subr.bf16.mxu0 0
    %11576 = vmatpush1.bf16.msra.mxu0 %v11312
    %11577 = vmatprep.subr.bf16.mxu0 0
    %11578 = vmatpush1.bf16.msra.mxu0 %v11313
    %11579 = vmatprep.subr.bf16.mxu0 0
    %11580 = vmatpush1.bf16.msra.mxu0 %v11314
    %11581 = vmatprep.subr.bf16.mxu0 0
    %11582 = vmatpush1.bf16.msra.mxu0 %v11315
    %11583 = vmatprep.subr.bf16.mxu0 0
    %11584 = vmatpush1.bf16.msra.mxu0 %v11316
    %11585 = vmatprep.subr.bf16.mxu0 0
    %11586 = vmatpush1.bf16.msra.mxu0 %v11317
    %11587 = vmatprep.subr.bf16.mxu0 0
    %11588 = vmatpush1.bf16.msra.mxu0 %v11318
    %11589 = vmatprep.subr.bf16.mxu0 0
    %11590 = vmatpush1.bf16.msra.mxu0 %v11319
    %11591 = vmatprep.subr.bf16.mxu0 0
    %11592 = vmatpush1.bf16.msra.mxu0 %v11320
    %11593 = vmatprep.mubr.bf16.mxu0 %v10515
    %11594 = vmatmul.mubr.bf16.gmra.mrb[0].mxu0 %v10514
    %v11595 = vpop.f32.mrb[0].mxu0
    %v11596 = vadd.f32 %v10791, %v11595
    %v11597 = vpop.f32.mrb[0].mxu0
    %v11598 = vpop.f32.mrb[0].mxu0
    %v11599 = vpop.f32.mrb[0].mxu0
    %11600 = vdwg.mxu0
    %11601 = vmatprep.subr.bf16.mxu0 0
    %11602 = vmatpush1.bf16.msra.mxu0 %v11321
    %11603 = vmatprep.subr.bf16.mxu0 0
    %11604 = vmatpush1.bf16.msra.mxu0 %v11322
    %11605 = vmatprep.subr.bf16.mxu0 0
    %11606 = vmatpush1.bf16.msra.mxu0 %v11323
    %11607 = vmatprep.subr.bf16.mxu0 0
    %11608 = vmatpush1.bf16.msra.mxu0 %v11324
    %11609 = vmatprep.subr.bf16.mxu0 0
    %11610 = vmatpush1.bf16.msra.mxu0 %v11325
    %11611 = vmatprep.subr.bf16.mxu0 0
    %11612 = vmatpush1.bf16.msra.mxu0 %v11326
    %11613 = vmatprep.subr.bf16.mxu0 0
    %11614 = vmatpush1.bf16.msra.mxu0 %v11327
    %11615 = vmatprep.subr.bf16.mxu0 0
    %11616 = vmatpush1.bf16.msra.mxu0 %v11328
    %11617 = vmatprep.subr.bf16.mxu0 0
    %11618 = vmatpush1.bf16.msra.mxu0 %v11329
    %11619 = vmatprep.subr.bf16.mxu0 0
    %11620 = vmatpush1.bf16.msra.mxu0 %v11330
    %11621 = vmatprep.subr.bf16.mxu0 0
    %11622 = vmatpush1.bf16.msra.mxu0 %v11331
    %11623 = vmatprep.subr.bf16.mxu0 0
    %11624 = vmatpush1.bf16.msra.mxu0 %v11332
    %11625 = vmatprep.subr.bf16.mxu0 0
    %11626 = vmatpush1.bf16.msra.mxu0 %v11333
    %11627 = vmatprep.subr.bf16.mxu0 0
    %11628 = vmatpush1.bf16.msra.mxu0 %v11334
    %11629 = vmatprep.subr.bf16.mxu0 0
    %11630 = vmatpush1.bf16.msra.mxu0 %v11335
    %11631 = vmatprep.subr.bf16.mxu0 0
    %11632 = vmatpush1.bf16.msra.mxu0 %v11336
    %11633 = vmatprep.mubr.bf16.mxu0 %v10517
    %11634 = vmatmul.mubr.bf16.gmra.mrb[0].mxu0 %v10516
    %v11635 = vpop.f32.mrb[0].mxu0
    %v11636 = vadd.f32 %v11596, %v11635
    %v11637 = vpop.f32.mrb[0].mxu0
    %v11638 = vpop.f32.mrb[0].mxu0
    %v11639 = vpop.f32.mrb[0].mxu0
    %11640 = vdwg.mxu0
    %11641 = vmatprep.subr.bf16.mxu0 0
    %11642 = vmatpush1.bf16.msra.mxu0 %v11337
    %11643 = vmatprep.subr.bf16.mxu0 0
    %11644 = vmatpush1.bf16.msra.mxu0 %v11338
    %11645 = vmatprep.subr.bf16.mxu0 0
    %11646 = vmatpush1.bf16.msra.mxu0 %v11339
    %11647 = vmatprep.subr.bf16.mxu0 0
    %11648 = vmatpush1.bf16.msra.mxu0 %v11340
    %11649 = vmatprep.subr.bf16.mxu0 0
    %11650 = vmatpush1.bf16.msra.mxu0 %v11341
    %11651 = vmatprep.subr.bf16.mxu0 0
    %11652 = vmatpush1.bf16.msra.mxu0 %v11342
    %11653 = vmatprep.subr.bf16.mxu0 0
    %11654 = vmatpush1.bf16.msra.mxu0 %v11343
    %11655 = vmatprep.subr.bf16.mxu0 0
    %11656 = vmatpush1.bf16.msra.mxu0 %v11344
    %11657 = vmatprep.subr.bf16.mxu0 0
    %11658 = vmatpush1.bf16.msra.mxu0 %v11345
    %11659 = vmatprep.subr.bf16.mxu0 0
    %11660 = vmatpush1.bf16.msra.mxu0 %v11346
    %11661 = vmatprep.subr.bf16.mxu0 0
    %11662 = vmatpush1.bf16.msra.mxu0 %v11347
    %11663 = vmatprep.subr.bf16.mxu0 0
    %11664 = vmatpush1.bf16.msra.mxu0 %v11348
    %11665 = vmatprep.subr.bf16.mxu0 0
    %11666 = vmatpush1.bf16.msra.mxu0 %v11349
    %11667 = vmatprep.subr.bf16.mxu0 0
    %11668 = vmatpush1.bf16.msra.mxu0 %v11350
    %11669 = vmatprep.subr.bf16.mxu0 0
    %11670 = vmatpush1.bf16.msra.mxu0 %v11351
    %11671 = vmatprep.subr.bf16.mxu0 0
    %11672 = vmatpush1.bf16.msra.mxu0 %v11352
    %11673 = vmatprep.mubr.bf16.mxu0 %v10519
    %11674 = vmatmul.mubr.bf16.gmra.mrb[0].mxu0 %v10518
    %v11675 = vpop.f32.mrb[0].mxu0
    %v11676 = vadd.f32 %v11636, %v11675
    %v11677 = vpop.f32.mrb[0].mxu0
    %v11678 = vpop.f32.mrb[0].mxu0
    %v11679 = vpop.f32.mrb[0].mxu0
    %11680 = vdwg.mxu0
    %11681 = vmatprep.subr.bf16.mxu0 0
    %11682 = vmatpush1.bf16.msra.mxu0 %v11353
    %11683 = vmatprep.subr.bf16.mxu0 0
    %11684 = vmatpush1.bf16.msra.mxu0 %v11354
    %11685 = vmatprep.subr.bf16.mxu0 0
    %11686 = vmatpush1.bf16.msra.mxu0 %v11355
    %11687 = vmatprep.subr.bf16.mxu0 0
    %11688 = vmatpush1.bf16.msra.mxu0 %v11356
    %11689 = vmatprep.subr.bf16.mxu0 0
    %11690 = vmatpush1.bf16.msra.mxu0 %v11357
    %11691 = vmatprep.subr.bf16.mxu0 0
    %11692 = vmatpush1.bf16.msra.mxu0 %v11358
    %11693 = vmatprep.subr.bf16.mxu0 0
    %11694 = vmatpush1.bf16.msra.mxu0 %v11359
    %11695 = vmatprep.subr.bf16.mxu0 0
    %11696 = vmatpush1.bf16.msra.mxu0 %v11360
    %11697 = vmatprep.subr.bf16.mxu0 0
    %11698 = vmatpush1.bf16.msra.mxu0 %v11361
    %11699 = vmatprep.subr.bf16.mxu0 0
    %11700 = vmatpush1.bf16.msra.mxu0 %v11362
    %11701 = vmatprep.subr.bf16.mxu0 0
    %11702 = vmatpush1.bf16.msra.mxu0 %v11363
    %11703 = vmatprep.subr.bf16.mxu0 0
    %11704 = vmatpush1.bf16.msra.mxu0 %v11364
    %11705 = vmatprep.subr.bf16.mxu0 0
    %11706 = vmatpush1.bf16.msra.mxu0 %v11365
    %11707 = vmatprep.subr.bf16.mxu0 0
    %11708 = vmatpush1.bf16.msra.mxu0 %v11366
    %11709 = vmatprep.subr.bf16.mxu0 0
    %11710 = vmatpush1.bf16.msra.mxu0 %v11367
    %11711 = vmatprep.subr.bf16.mxu0 0
    %11712 = vmatpush1.bf16.msra.mxu0 %v11368
    %11713 = vmatprep.mubr.bf16.mxu0 %v10521
    %11714 = vmatmul.mubr.bf16.gmra.mrb[0].mxu0 %v10520
    %v11715 = vpop.f32.mrb[0].mxu0
    %v11716 = vadd.f32 %v11676, %v11715
    %v11717 = vpop.f32.mrb[0].mxu0
    %v11718 = vpop.f32.mrb[0].mxu0
    %v11719 = vpop.f32.mrb[0].mxu0
    %11720 = vdwg.mxu0
    %11721 = vmatprep.subr.bf16.mxu0 0
    %11722 = vmatpush1.bf16.msra.mxu0 %v11369
    %11723 = vmatprep.subr.bf16.mxu0 0
    %11724 = vmatpush1.bf16.msra.mxu0 %v11370
    %11725 = vmatprep.subr.bf16.mxu0 0
    %11726 = vmatpush1.bf16.msra.mxu0 %v11371
    %11727 = vmatprep.subr.bf16.mxu0 0
    %11728 = vmatpush1.bf16.msra.mxu0 %v11372
    %11729 = vmatprep.subr.bf16.mxu0 0
    %11730 = vmatpush1.bf16.msra.mxu0 %v11373
    %11731 = vmatprep.subr.bf16.mxu0 0
    %11732 = vmatpush1.bf16.msra.mxu0 %v11374
    %11733 = vmatprep.subr.bf16.mxu0 0
    %11734 = vmatpush1.bf16.msra.mxu0 %v11375
    %11735 = vmatprep.subr.bf16.mxu0 0
    %11736 = vmatpush1.bf16.msra.mxu0 %v11376
    %11737 = vmatprep.subr.bf16.mxu0 0
    %11738 = vmatpush1.bf16.msra.mxu0 %v11377
    %11739 = vmatprep.subr.bf16.mxu0 0
    %11740 = vmatpush1.bf16.msra.mxu0 %v11378
    %11741 = vmatprep.subr.bf16.mxu0 0
    %11742 = vmatpush1.bf16.msra.mxu0 %v11379
    %11743 = vmatprep.subr.bf16.mxu0 0
    %11744 = vmatpush1.bf16.msra.mxu0 %v11380
    %11745 = vmatprep.subr.bf16.mxu0 0
    %11746 = vmatpush1.bf16.msra.mxu0 %v11381
    %11747 = vmatprep.subr.bf16.mxu0 0
    %11748 = vmatpush1.bf16.msra.mxu0 %v11382
    %11749 = vmatprep.subr.bf16.mxu0 0
    %11750 = vmatpush1.bf16.msra.mxu0 %v11383
    %11751 = vmatprep.subr.bf16.mxu0 0
    %11752 = vmatpush1.bf16.msra.mxu0 %v11384
    %11753 = vmatprep.mubr.bf16.mxu0 %v10523
    %11754 = vmatmul.mubr.bf16.gmra.mrb[0].mxu0 %v10522
    %v11755 = vpop.f32.mrb[0].mxu0
    %v11756 = vadd.f32 %v11716, %v11755
    %v11757 = vpop.f32.mrb[0].mxu0
    %v11758 = vpop.f32.mrb[0].mxu0
    %v11759 = vpop.f32.mrb[0].mxu0
    %11760 = vdwg.mxu0
    %11761 = vmatprep.subr.bf16.mxu0 0
    %11762 = vmatpush1.bf16.msra.mxu0 %v11385
    %11763 = vmatprep.subr.bf16.mxu0 0
    %11764 = vmatpush1.bf16.msra.mxu0 %v11386
    %11765 = vmatprep.subr.bf16.mxu0 0
    %11766 = vmatpush1.bf16.msra.mxu0 %v11387
    %11767 = vmatprep.subr.bf16.mxu0 0
    %11768 = vmatpush1.bf16.msra.mxu0 %v11388
    %11769 = vmatprep.subr.bf16.mxu0 0
    %11770 = vmatpush1.bf16.msra.mxu0 %v11389
    %11771 = vmatprep.subr.bf16.mxu0 0
    %11772 = vmatpush1.bf16.msra.mxu0 %v11390
    %11773 = vmatprep.subr.bf16.mxu0 0
    %11774 = vmatpush1.bf16.msra.mxu0 %v11391
    %11775 = vmatprep.subr.bf16.mxu0 0
    %11776 = vmatpush1.bf16.msra.mxu0 %v11392
    %11777 = vmatprep.subr.bf16.mxu0 0
    %11778 = vmatpush1.bf16.msra.mxu0 %v11393
    %11779 = vmatprep.subr.bf16.mxu0 0
    %11780 = vmatpush1.bf16.msra.mxu0 %v11394
    %11781 = vmatprep.subr.bf16.mxu0 0
    %11782 = vmatpush1.bf16.msra.mxu0 %v11395
    %11783 = vmatprep.subr.bf16.mxu0 0
    %11784 = vmatpush1.bf16.msra.mxu0 %v11396
    %11785 = vmatprep.subr.bf16.mxu0 0
    %11786 = vmatpush1.bf16.msra.mxu0 %v11397
    %11787 = vmatprep.subr.bf16.mxu0 0
    %11788 = vmatpush1.bf16.msra.mxu0 %v11398
    %11789 = vmatprep.subr.bf16.mxu0 0
    %11790 = vmatpush1.bf16.msra.mxu0 %v11399
    %11791 = vmatprep.subr.bf16.mxu0 0
    %11792 = vmatpush1.bf16.msra.mxu0 %v11400
    %11793 = vmatprep.mubr.bf16.mxu0 %v10525
    %11794 = vmatmul.mubr.bf16.gmra.mrb[0].mxu0 %v10524
    %v11795 = vpop.f32.mrb[0].mxu0
    %v11796 = vadd.f32 %v11756, %v11795
    %v11797 = vpop.f32.mrb[0].mxu0
    %v11798 = vpop.f32.mrb[0].mxu0
    %v11799 = vpop.f32.mrb[0].mxu0
    %11800 = vdwg.mxu0
    %11801 = vmatprep.subr.bf16.mxu0 0
    %11802 = vmatpush1.bf16.msra.mxu0 %v11401
    %11803 = vmatprep.subr.bf16.mxu0 0
    %11804 = vmatpush1.bf16.msra.mxu0 %v11402
    %11805 = vmatprep.subr.bf16.mxu0 0
    %11806 = vmatpush1.bf16.msra.mxu0 %v11403
    %11807 = vmatprep.subr.bf16.mxu0 0
    %11808 = vmatpush1.bf16.msra.mxu0 %v11404
    %11809 = vmatprep.subr.bf16.mxu0 0
    %11810 = vmatpush1.bf16.msra.mxu0 %v11405
    %11811 = vmatprep.subr.bf16.mxu0 0
    %11812 = vmatpush1.bf16.msra.mxu0 %v11406
    %11813 = vmatprep.subr.bf16.mxu0 0
    %11814 = vmatpush1.bf16.msra.mxu0 %v11407
    %11815 = vmatprep.subr.bf16.mxu0 0
    %11816 = vmatpush1.bf16.msra.mxu0 %v11408
    %11817 = vmatprep.subr.bf16.mxu0 0
    %11818 = vmatpush1.bf16.msra.mxu0 %v11409
    %11819 = vmatprep.subr.bf16.mxu0 0
    %11820 = vmatpush1.bf16.msra.mxu0 %v11410
    %11821 = vmatprep.subr.bf16.mxu0 0
    %11822 = vmatpush1.bf16.msra.mxu0 %v11411
    %11823 = vmatprep.subr.bf16.mxu0 0
    %11824 = vmatpush1.bf16.msra.mxu0 %v11412
    %11825 = vmatprep.subr.bf16.mxu0 0
    %11826 = vmatpush1.bf16.msra.mxu0 %v11413
    %11827 = vmatprep.subr.bf16.mxu0 0
    %11828 = vmatpush1.bf16.msra.mxu0 %v11414
    %11829 = vmatprep.subr.bf16.mxu0 0
    %11830 = vmatpush1.bf16.msra.mxu0 %v11415
    %11831 = vmatprep.subr.bf16.mxu0 0
    %11832 = vmatpush1.bf16.msra.mxu0 %v11416
    %11833 = vmatprep.mubr.bf16.mxu0 %v10527
    %11834 = vmatmul.mubr.bf16.gmra.mrb[0].mxu0 %v10526
    %v11835 = vpop.f32.mrb[0].mxu0
    %v11836 = vadd.f32 %v11796, %v11835
    %v11837 = vpop.f32.mrb[0].mxu0
    %v11838 = vpop.f32.mrb[0].mxu0
    %v11839 = vpop.f32.mrb[0].mxu0
    %11840 = vdwg.mxu0
    %11841 = vmatprep.subr.bf16.mxu0 0
    %11842 = vmatpush1.bf16.msra.mxu0 %v11417
    %11843 = vmatprep.subr.bf16.mxu0 0
    %11844 = vmatpush1.bf16.msra.mxu0 %v11418
    %11845 = vmatprep.subr.bf16.mxu0 0
    %11846 = vmatpush1.bf16.msra.mxu0 %v11419
    %11847 = vmatprep.subr.bf16.mxu0 0
    %11848 = vmatpush1.bf16.msra.mxu0 %v11420
    %11849 = vmatprep.subr.bf16.mxu0 0
    %11850 = vmatpush1.bf16.msra.mxu0 %v11421
    %11851 = vmatprep.subr.bf16.mxu0 0
    %11852 = vmatpush1.bf16.msra.mxu0 %v11422
    %11853 = vmatprep.subr.bf16.mxu0 0
    %11854 = vmatpush1.bf16.msra.mxu0 %v11423
    %11855 = vmatprep.subr.bf16.mxu0 0
    %11856 = vmatpush1.bf16.msra.mxu0 %v11424
    %11857 = vmatprep.subr.bf16.mxu0 0
    %11858 = vmatpush1.bf16.msra.mxu0 %v11425
    %11859 = vmatprep.subr.bf16.mxu0 0
    %11860 = vmatpush1.bf16.msra.mxu0 %v11426
    %11861 = vmatprep.subr.bf16.mxu0 0
    %11862 = vmatpush1.bf16.msra.mxu0 %v11427
    %11863 = vmatprep.subr.bf16.mxu0 0
    %11864 = vmatpush1.bf16.msra.mxu0 %v11428
    %11865 = vmatprep.subr.bf16.mxu0 0
    %11866 = vmatpush1.bf16.msra.mxu0 %v11429
    %11867 = vmatprep.subr.bf16.mxu0 0
    %11868 = vmatpush1.bf16.msra.mxu0 %v11430
    %11869 = vmatprep.subr.bf16.mxu0 0
    %11870 = vmatpush1.bf16.msra.mxu0 %v11431
    %11871 = vmatprep.subr.bf16.mxu0 0
    %11872 = vmatpush1.bf16.msra.mxu0 %v11432
    %11873 = vmatprep.mubr.bf16.mxu0 %v10529
    %11874 = vmatmul.mubr.bf16.gmra.mrb[0].mxu0 %v10528
    %v11875 = vpop.f32.mrb[0].mxu0
    %v11876 = vadd.f32 %v11836, %v11875
    %v11877 = vpop.f32.mrb[0].mxu0
    %v11878 = vpop.f32.mrb[0].mxu0
    %v11879 = vpop.f32.mrb[0].mxu0
    %11880 = vdwg.mxu0
    %v11881 = vlaneseq
    %v11882 = vand.u32 %v11881, 127
    %vm11883 = vcmp.ge.s32.totalorder %v11882, 45
    %vm11884 = vcmp.lt.s32.totalorder %v11882, 50
    %vm11885 = vmand %vm11883, %vm11884
    %v11886 = vsel %vm11885, %v11876, -1e+30
    %11887 = vmax.xlane.f32.xlu0 %v11886
    %v11888 = vpop.xlane.xlu0 %11887
    %v11889 = vsub.f32 %v11886, %v11888
    %v11890 = vmul.f32 %v11889, 1.442695
    %v11891 = vpow.pop %v11890
    %11892 = vadd.xlane.f32.xlu0 %v11891
    %v11893 = vpop.xlane.xlu0 %11892
    %v11894 = vrcp.pop %v11893
    %v11895 = vmul.f32 %v11891, %v11894
    %v11896 = vsel %vm11885, %v11895, %v11876
    %11897 = vst [vmem:[#allocation26] sm:$0xff] %v11896
    // Predicated region
    $region122: #{tpu_custom_call.1} parent=1 // pred_check
      _
    $region123: #{tpu_custom_call.1} parent=1 // pred_check_branch
      %11899 = sbr.rel (0) target = $region125
    $region124: #{tpu_custom_call.1} parent=1 // pred_region
      %s11901 = ssub.s32 128, 128
      %11902 = vsyncadd [#allocation4], %s11901
      %s11904 = sshll.u32 [#allocation26], 4
      %s11905 = int_to_ptr.vmem [resolvable:$true] %s11904
      %11907 = dma.vmem_to_hbm [thread:$0]  %s11905, 128, %s15, [#allocation4]
    $region125: #{tpu_custom_call.1} parent=1 // pred_fallthru
      _
    // Predicated region
    $region126: #{tpu_custom_call.1} parent=1 // pred_check
      _
    $region127: #{tpu_custom_call.1} parent=1 // pred_check_branch
      %11909 = sbr.rel (0) target = $region129
    $region128: #{tpu_custom_call.1} parent=1 // pred_region
      %11910 = dma.done [#allocation4], 128
    $region129: #{tpu_custom_call.1} parent=1 // pred_fallthru
      _
    %11911 = vsyncpa [#allocation3], 1
    %11912 = vsyncpa [#allocation6], 1
    %11913 = vsyncpa [#allocation9], 1
    %11914 = vsyncpa [#allocation12], 1
    %11915 = vsyncpa [#allocation15], 1
    %11916 = vsyncpa [#allocation18], 1
    %11917 = vsyncpa [#allocation21], 1
    %11918 = vsyncpa [#allocation24], 1
    %11919 = vsyncpa [#allocation4], 1

</llo_original>
